<compile_context>
chip_gen: v7x
topology: tpu7x:2x2x1
jax: 0.10.0
libtpu: 0.0.40
codegen_flags: <defaults>
</compile_context>

<pallas_src>
import functools

import jax
import jax.numpy as jnp
from jax.experimental import pallas as pl
from jax.experimental.pallas import tpu as pltpu


def _round_up(x, m):
    return ((x + m - 1) // m) * m


def _padded_vmem_bytes(shape, dtype):
    """Rough (8/16, 128)-padded VMEM footprint of one buffer."""
    dt = jnp.dtype(dtype)
    if len(shape) < 2:
        return _round_up(int(shape[0]) if shape else 1, 128) * dt.itemsize
    sub = {4: 8, 2: 16, 1: 32}.get(dt.itemsize, 8)
    lead = 1
    for s in shape[:-2]:
        lead *= int(s)
    return (lead * _round_up(int(shape[-2]), sub)
            * _round_up(int(shape[-1]), 128) * dt.itemsize)


# ---------------------------------------------------------------------------
# Fused whole-network kernel
# ---------------------------------------------------------------------------

def _make_feature_modifier_kernel(*, H, W, dilation, pad, bns, sum_initial,
                                  bf16_staging):
    """Kernel ref order:
       x,
       neck1: w1,b1,w2f,b2,w3,b3,   ds1: w,b,
       neck2: w1,b1,w2f,b2,w3,b3,   ds2: w,b,
       neck3: w1,b1,w2f,b2,w3,b3,
       out,
       ext1,g1, ext2,g2, ext3,g3   (scratch)
    """
    f32 = jnp.float32
    HW = H * W
    d = dilation
    stage_dt = jnp.bfloat16 if bf16_staging else f32

    # static tap deltas in flattened H*W row space, t = kh*3 + kw
    taps = []
    for kh in range(3):
        for kw in range(3):
            dh, dw = (kh - 1) * d, (kw - 1) * d
            taps.append((kh * 3 + kw, dh * W + dw, dw))

    def _col_index(bn):
        # w-coordinate of every output row, broadcast over bn lanes
        m = jax.lax.broadcasted_iota(jnp.int32, (HW, bn), 0)
        if W & (W - 1) == 0:                       # power-of-two fast path
            return m & (W - 1)
        return jax.lax.rem(m, W)

    def _bypass(y, wrefs, ext_ref, g_ref, bn, relu):
        """BypassLayer: conv1(1x1)+bn -> dilated conv2(3x3)+bn -> conv3(1x1)+bn
        on (a + b).  BN scales are folded into the weights; only biases here."""
        w1, b1, w2f, b2, w3, b3 = wrefs
        cdt = w1.dtype
        slot = g_ref.shape[1] // 9                 # lane-aligned K slot per tap

        # conv1 (1x1) + bias
        a = jnp.dot(y.astype(cdt), w1[...], preferred_element_type=f32)
        a = a + b1[...]                            # (HW, bn) f32

        # stage `a` into the zero-row-padded scratch (pad bands already zero)
        ext_ref[pl.ds(pad, HW), :] = a.astype(stage_dt)

        # W-edge validity masks (depend only on the static column index)
        wcol = _col_index(bn)
        m_neg = wcol >= d                          # valid where w - d >= 0
        m_pos = wcol < (W - d)                     # valid where w + d <  W

        # gather the 9 shifted windows into one K-major tile (K-fused matmul).
        # Each store targets lanes [t*slot, t*slot + bn) -- tile-aligned offset.
        for t, delta, dw in taps:
            tap = ext_ref[pl.ds(pad + delta, HW), :]
            if dw < 0:
                tap = jnp.where(m_neg, tap, jnp.zeros_like(tap))
            elif dw > 0:
                tap = jnp.where(m_pos, tap, jnp.zeros_like(tap))
            g_ref[:, t * slot:t * slot + bn] = tap.astype(g_ref.dtype)

        # dilated 3x3 conv (+ folded bn2) as a single matmul over K = 9*slot
        b = jnp.dot(g_ref[...], w2f[...], preferred_element_type=f32)
        b = b + b2[...]

        # conv3 (1x1) + bias on (a + b), optional fused ReLU
        o = jnp.dot((a + b).astype(cdt), w3[...], preferred_element_type=f32)
        o = o + b3[...]
        if relu:
            o = jnp.maximum(o, 0.0)
        return o                                    # f32

    def kernel(*refs):
        it = iter(refs)
        x_ref = next(it)
        n1 = tuple(next(it) for _ in range(6))
        d1w, d1b = next(it), next(it)
        n2 = tuple(next(it) for _ in range(6))
        d2w, d2b = next(it), next(it)
        n3 = tuple(next(it) for _ in range(6))
        o_ref = next(it)
        ext1, g1, ext2, g2, ext3, g3 = (next(it) for _ in range(6))

        # Zero only the pad bands of each staging scratch and (where the K slot
        # is wider than bn) the gather tiles.  Done every grid step: under
        # "parallel" sharding each TensorCore has its own scratch instance.
        for ext in (ext1, ext2, ext3):
            cols = ext.shape[1]
            ext[pl.ds(0, pad), :] = jnp.zeros((pad, cols), ext.dtype)
            ext[pl.ds(pad + HW, pad), :] = jnp.zeros((pad, cols), ext.dtype)
        for gref, bn in ((g1, bns[0]), (g2, bns[1]), (g3, bns[2])):
            if gref.shape[1] != 9 * bn:            # padded K slots exist
                gref[...] = jnp.zeros(gref.shape, gref.dtype)

        x = x_ref[...]                             # (HW, Cin) bf16
        cdt = n1[0].dtype

        # neck1 + ReLU
        f = _bypass(x, n1, ext1, g1, bns[0], relu=True)
        # ds1 (1x1) + folded bn
        y = jnp.dot(f.astype(cdt), d1w[...], preferred_element_type=f32) + d1b[...]
        # neck2 + ReLU
        gact = _bypass(y, n2, ext2, g2, bns[1], relu=True)
        # ds2 (1x1) + folded bn
        z = jnp.dot(gact.astype(cdt), d2w[...], preferred_element_type=f32) + d2b[...]
        if sum_initial:
            z = z + f                              # residual from neck1 output
        # neck3 (no ReLU)
        out = _bypass(z, n3, ext3, g3, bns[2], relu=False)
        o_ref[...] = out.astype(o_ref.dtype)

    return kernel


# ---------------------------------------------------------------------------
# Wrapper
# ---------------------------------------------------------------------------

def feature_modifier_forward(x_nchw, params, *, sum_initial_layer=True,
                             dilation=4, bf16_staging=False):
    N, C, H, W = x_nchw.shape
    HW = H * W
    assert HW % 16 == 0, "H*W must be a multiple of 16 (bf16 sublane tiling)"
    cdt = params["neck1"]["w1"].dtype

    # NCHW -> flattened channels-last rows; bf16 activations feed the MXU.
    x2d = jnp.transpose(x_nchw, (0, 2, 3, 1)).reshape(N * HW, C).astype(cdt)

    bn1 = params["neck1"]["w1"].shape[1]
    bn2 = params["neck2"]["w1"].shape[1]
    bn3 = params["neck3"]["w1"].shape[1]
    c_mid = params["ds1"]["w"].shape[1]
    c_out = params["ds2"]["w"].shape[1]
    if sum_initial_layer:
        assert C == c_out, "residual requires in_channels == out_channels"

    # zero-row padding for the flattened dilated-conv staging scratch
    pad = _round_up(dilation * W + dilation, 16)

    def flat_w2(w2, bn):
        # (9, bn, bn) -> (9*slot, bn), each tap in its own lane-aligned K slot
        slot = _round_up(bn, 128)
        if slot == bn:
            return w2.reshape(9 * bn, bn), 9 * slot
        w2p = jnp.zeros((9, slot, bn), w2.dtype).at[:, :bn, :].set(w2)
        return w2p.reshape(9 * slot, bn), 9 * slot

    w2f_1, kp1 = flat_w2(params["neck1"]["w2"], bn1)
    w2f_2, kp2 = flat_w2(params["neck2"]["w2"], bn2)
    w2f_3, kp3 = flat_w2(params["neck3"]["w2"], bn3)

    def const_spec(a):
        nd = a.ndim
        return pl.BlockSpec(tuple(a.shape), lambda n, _nd=nd: (0,) * _nd)

    args = [x2d]
    in_specs = [pl.BlockSpec((HW, C), lambda n: (n, 0))]

    def add_neck(p, w2f):
        for a in (p["w1"], p["b1"], w2f, p["b2"], p["w3"], p["b3"]):
            args.append(a)
            in_specs.append(const_spec(a))

    def add_ds(p):
        for a in (p["w"], p["b"]):
            args.append(a)
            in_specs.append(const_spec(a))

    add_neck(params["neck1"], w2f_1)
    add_ds(params["ds1"])
    add_neck(params["neck2"], w2f_2)
    add_ds(params["ds2"])
    add_neck(params["neck3"], w2f_3)

    stage_dt = jnp.bfloat16 if bf16_staging else jnp.float32
    ext_rows = 2 * pad + HW
    scratch_defs = [
        ((ext_rows, bn1), stage_dt), ((HW, kp1), cdt),
        ((ext_rows, bn2), stage_dt), ((HW, kp2), cdt),
        ((ext_rows, bn3), stage_dt), ((HW, kp3), cdt),
    ]
    scratch_shapes = [pltpu.VMEM(s, d) for s, d in scratch_defs]

    kernel = _make_feature_modifier_kernel(
        H=H, W=W, dilation=dilation, pad=pad, bns=(bn1, bn2, bn3),
        sum_initial=sum_initial_layer, bf16_staging=bf16_staging)

    # Honest VMEM budget: double-buffered I/O blocks + scratch + headroom.
    block_defs = ([((HW, C), x2d.dtype)]
                  + [(tuple(a.shape), a.dtype) for a in args[1:]]
                  + [((HW, c_out), jnp.float32)])
    vmem_limit = (2 * sum(_padded_vmem_bytes(s, d) for s, d in block_defs)
                  + sum(_padded_vmem_bytes(s, d) for s, d in scratch_defs)
                  + (6 << 20))
    vmem_limit = int(min(_round_up(vmem_limit, 1 << 20), 64 << 20))

    # Advisory cost estimate.
    M = N * HW

    def stage_flops(cin, bn, cout):
        return 2 * M * cin * bn + 2 * M * (9 * bn) * bn + 2 * M * bn * cout

    flops = (stage_flops(C, bn1, C) + 2 * M * C * c_mid
             + stage_flops(c_mid, bn2, c_mid) + 2 * M * c_mid * c_out
             + stage_flops(c_out, bn3, c_out))
    bytes_accessed = (sum(int(a.size) * a.dtype.itemsize for a in args)
                      + M * c_out * 4)
    cost = pl.CostEstimate(flops=int(flops), transcendentals=0,
                           bytes_accessed=int(bytes_accessed))

    out2d = pl.pallas_call(
        kernel,
        out_shape=jax.ShapeDtypeStruct((M, c_out), jnp.float32),
        grid_spec=pltpu.PrefetchScalarGridSpec(
            num_scalar_prefetch=0,
            grid=(N,),
            in_specs=in_specs,
            out_specs=pl.BlockSpec((HW, c_out), lambda n: (n, 0)),
            scratch_shapes=scratch_shapes),
        compiler_params=pltpu.CompilerParams(
            dimension_semantics=("parallel",),
            vmem_limit_bytes=vmem_limit),
        cost_estimate=cost,
    )(*args)

    return jnp.transpose(out2d.reshape(N, H, W, c_out), (0, 3, 1, 2))


# ---------------------------------------------------------------------------
# Parameter creation (eval-mode BN folded into weights: w' = w * scale, + bias)
# ---------------------------------------------------------------------------

def _bn_scale_bias(key, c, eps=1e-5):
    kg, kb, km, kv = jax.random.split(key, 4)
    gamma = 1.0 + 0.1 * jax.random.normal(kg, (c,), jnp.float32)
    beta = 0.1 * jax.random.normal(kb, (c,), jnp.float32)
    mean = 0.1 * jax.random.normal(km, (c,), jnp.float32)
    var = 1.0 + 0.1 * jnp.abs(jax.random.normal(kv, (c,), jnp.float32))
    scale = gamma * jax.lax.rsqrt(var + eps)
    bias = beta - mean * scale
    return scale, bias


def conv1x1_bn_folded(kw_key, bn_key, cin, cout, dtype):
    # PyTorch (cout, cin, 1, 1) -> matmul (cin, cout), BN scale folded in.
    w = jax.random.normal(kw_key, (cout, cin, 1, 1), jnp.float32) / jnp.sqrt(float(cin))
    w = jnp.transpose(w[:, :, 0, 0], (1, 0))
    s, b = _bn_scale_bias(bn_key, cout)
    return (w * s[None, :]).astype(dtype), b.reshape(1, cout)


def conv3x3_bn_folded(kw_key, bn_key, cin, cout, dtype):
    # PyTorch (cout, cin, 3, 3) -> (9, cin, cout), tap t = kh*3 + kw.
    w = jax.random.normal(kw_key, (cout, cin, 3, 3), jnp.float32) / jnp.sqrt(9.0 * cin)
    w = jnp.transpose(w, (2, 3, 1, 0)).reshape(9, cin, cout)
    s, b = _bn_scale_bias(bn_key, cout)
    return (w * s[None, None, :]).astype(dtype), b.reshape(1, cout)


def init_bypass(key, channels, dtype):
    bn_ch = channels // 4 if channels >= 16 else channels
    ks = jax.random.split(key, 6)
    w1, b1 = conv1x1_bn_folded(ks[0], ks[1], channels, bn_ch, dtype)
    w2, b2 = conv3x3_bn_folded(ks[2], ks[3], bn_ch, bn_ch, dtype)
    w3, b3 = conv1x1_bn_folded(ks[4], ks[5], bn_ch, channels, dtype)
    return dict(w1=w1, b1=b1, w2=w2, b2=b2, w3=w3, b3=b3)


def init_feature_modifier(key, in_channels, out_channels, dtype=jnp.bfloat16):
    ks = jax.random.split(key, 7)
    ds1_w, ds1_b = conv1x1_bn_folded(ks[1], ks[2], in_channels, 512, dtype)
    ds2_w, ds2_b = conv1x1_bn_folded(ks[4], ks[5], 512, out_channels, dtype)
    return dict(
        neck1=init_bypass(ks[0], in_channels, dtype),
        ds1=dict(w=ds1_w, b=ds1_b),
        neck2=init_bypass(ks[3], 512, dtype),
        ds2=dict(w=ds2_w, b=ds2_b),
        neck3=init_bypass(ks[6], out_channels, dtype),
    )


# ------------------- pure-JAX reference (same precision) --------------------

def reference_forward(x_nchw, params, *, sum_initial_layer=True, dilation=4,
                      compute_dtype=jnp.bfloat16):
    f32 = jnp.float32
    x = jnp.transpose(x_nchw, (0, 2, 3, 1))

    def conv1x1(t, w, b):
        cin, cout = w.shape
        y = jnp.dot(t.reshape(-1, cin).astype(compute_dtype), w,
                    preferred_element_type=f32) + b
        return y.reshape(t.shape[:-1] + (cout,))

    def conv3x3(t, w9, b):
        cin, cout = w9.shape[1], w9.shape[2]
        k = w9.reshape(3, 3, cin, cout)
        y = jax.lax.conv_general_dilated(
            t.astype(compute_dtype), k, window_strides=(1, 1),
            padding=((dilation, dilation), (dilation, dilation)),
            rhs_dilation=(dilation, dilation),
            dimension_numbers=("NHWC", "HWIO", "NHWC"),
            preferred_element_type=f32)
        return y + b.reshape(1, 1, 1, cout)

    def bypass(t, p, relu):
        a = conv1x1(t, p["w1"], p["b1"])
        bb = conv3x3(a, p["w2"], p["b2"])
        o = conv1x1(a + bb, p["w3"], p["b3"])
        return jnp.maximum(o, 0.0) if relu else o

    f = bypass(x, params["neck1"], True)
    y = conv1x1(f, params["ds1"]["w"], params["ds1"]["b"])
    g = bypass(y, params["neck2"], True)
    z = conv1x1(g, params["ds2"]["w"], params["ds2"]["b"])
    t_in = z + f if sum_initial_layer else z
    out = bypass(t_in, params["neck3"], False)
    return jnp.transpose(out, (0, 3, 1, 2))


# --------------------------------- main --------------------------------------

if __name__ == "__main__":
    key = jax.random.PRNGKey(0)
    k_params, k_x = jax.random.split(key)

    in_channels = 64
    out_channels = 64
    N, H, W = 2, 8, 8

    params = init_feature_modifier(k_params, in_channels, out_channels)
    x = jax.random.normal(k_x, (N, in_channels, H, W), jnp.float32)  # NCHW

    fwd = jax.jit(functools.partial(feature_modifier_forward,
                                    sum_initial_layer=True))
    out = fwd(x, params)
    jax.block_until_ready(out)

    assert out.shape == (N, out_channels, H, W), out.shape
    assert out.dtype == jnp.float32
    assert bool(jnp.all(jnp.isfinite(out)))

    # Cross-check against a pure-JAX/XLA reference with identical (folded,
    # bf16-input / f32-accumulate) precision -- catches any tap/shift bug.
    ref = jax.jit(functools.partial(reference_forward,
                                    sum_initial_layer=True))(x, params)
    jax.block_until_ready(ref)
    err = float(jnp.max(jnp.abs(out - ref)))
    assert bool(jnp.allclose(out, ref, atol=2e-2, rtol=2e-2)), (
        "max |diff| = %f" % err)

    print("KERNEL_OK")
</pallas_src>

<mosaic_0001>
module attributes {stable_mosaic.version = 11 : i64} {
  func.func @kernel(%arg0: i32, %arg1: memref<64x64xbf16, #tpu.memory_space<vmem>>, %arg2: memref<64x16xbf16, #tpu.memory_space<vmem>>, %arg3: memref<1x16xf32, #tpu.memory_space<vmem>>, %arg4: memref<1152x16xbf16, #tpu.memory_space<vmem>>, %arg5: memref<1x16xf32, #tpu.memory_space<vmem>>, %arg6: memref<16x64xbf16, #tpu.memory_space<vmem>>, %arg7: memref<1x64xf32, #tpu.memory_space<vmem>>, %arg8: memref<64x512xbf16, #tpu.memory_space<vmem>>, %arg9: memref<1x512xf32, #tpu.memory_space<vmem>>, %arg10: memref<512x128xbf16, #tpu.memory_space<vmem>>, %arg11: memref<1x128xf32, #tpu.memory_space<vmem>>, %arg12: memref<1152x128xbf16, #tpu.memory_space<vmem>>, %arg13: memref<1x128xf32, #tpu.memory_space<vmem>>, %arg14: memref<128x512xbf16, #tpu.memory_space<vmem>>, %arg15: memref<1x512xf32, #tpu.memory_space<vmem>>, %arg16: memref<512x64xbf16, #tpu.memory_space<vmem>>, %arg17: memref<1x64xf32, #tpu.memory_space<vmem>>, %arg18: memref<64x16xbf16, #tpu.memory_space<vmem>>, %arg19: memref<1x16xf32, #tpu.memory_space<vmem>>, %arg20: memref<1152x16xbf16, #tpu.memory_space<vmem>>, %arg21: memref<1x16xf32, #tpu.memory_space<vmem>>, %arg22: memref<16x64xbf16, #tpu.memory_space<vmem>>, %arg23: memref<1x64xf32, #tpu.memory_space<vmem>>, %arg24: memref<64x64xf32, #tpu.memory_space<vmem>>, %arg25: memref<160x16xf32, #tpu.memory_space<vmem>>, %arg26: memref<64x1152xbf16, #tpu.memory_space<vmem>>, %arg27: memref<160x128xf32, #tpu.memory_space<vmem>>, %arg28: memref<64x1152xbf16, #tpu.memory_space<vmem>>, %arg29: memref<160x16xf32, #tpu.memory_space<vmem>>, %arg30: memref<64x1152xbf16, #tpu.memory_space<vmem>>) attributes {dimension_semantics = [#tpu.dimension_semantics<parallel>], iteration_bounds = array<i64: 2>, scalar_prefetch = 0 : i64, scratch_operands = 6 : i64, tpu.core_type = #tpu.core_type<tc>, window_params = [{transform_indices = @transform_0, window_bounds = array<i64: 64, 64>}, {pipeline_mode = #tpu.pipeline_mode<synchronous>, transform_indices = @transform_1, window_bounds = array<i64: 64, 16>}, {pipeline_mode = #tpu.pipeline_mode<synchronous>, transform_indices = @transform_2, window_bounds = array<i64: 1, 16>}, {pipeline_mode = #tpu.pipeline_mode<synchronous>, transform_indices = @transform_3, window_bounds = array<i64: 1152, 16>}, {pipeline_mode = #tpu.pipeline_mode<synchronous>, transform_indices = @transform_4, window_bounds = array<i64: 1, 16>}, {pipeline_mode = #tpu.pipeline_mode<synchronous>, transform_indices = @transform_5, window_bounds = array<i64: 16, 64>}, {pipeline_mode = #tpu.pipeline_mode<synchronous>, transform_indices = @transform_6, window_bounds = array<i64: 1, 64>}, {pipeline_mode = #tpu.pipeline_mode<synchronous>, transform_indices = @transform_7, window_bounds = array<i64: 64, 512>}, {pipeline_mode = #tpu.pipeline_mode<synchronous>, transform_indices = @transform_8, window_bounds = array<i64: 1, 512>}, {pipeline_mode = #tpu.pipeline_mode<synchronous>, transform_indices = @transform_9, window_bounds = array<i64: 512, 128>}, {pipeline_mode = #tpu.pipeline_mode<synchronous>, transform_indices = @transform_10, window_bounds = array<i64: 1, 128>}, {pipeline_mode = #tpu.pipeline_mode<synchronous>, transform_indices = @transform_11, window_bounds = array<i64: 1152, 128>}, {pipeline_mode = #tpu.pipeline_mode<synchronous>, transform_indices = @transform_12, window_bounds = array<i64: 1, 128>}, {pipeline_mode = #tpu.pipeline_mode<synchronous>, transform_indices = @transform_13, window_bounds = array<i64: 128, 512>}, {pipeline_mode = #tpu.pipeline_mode<synchronous>, transform_indices = @transform_14, window_bounds = array<i64: 1, 512>}, {pipeline_mode = #tpu.pipeline_mode<synchronous>, transform_indices = @transform_15, window_bounds = array<i64: 512, 64>}, {pipeline_mode = #tpu.pipeline_mode<synchronous>, transform_indices = @transform_16, window_bounds = array<i64: 1, 64>}, {pipeline_mode = #tpu.pipeline_mode<synchronous>, transform_indices = @transform_17, window_bounds = array<i64: 64, 16>}, {pipeline_mode = #tpu.pipeline_mode<synchronous>, transform_indices = @transform_18, window_bounds = array<i64: 1, 16>}, {pipeline_mode = #tpu.pipeline_mode<synchronous>, transform_indices = @transform_19, window_bounds = array<i64: 1152, 16>}, {pipeline_mode = #tpu.pipeline_mode<synchronous>, transform_indices = @transform_20, window_bounds = array<i64: 1, 16>}, {pipeline_mode = #tpu.pipeline_mode<synchronous>, transform_indices = @transform_21, window_bounds = array<i64: 16, 64>}, {pipeline_mode = #tpu.pipeline_mode<synchronous>, transform_indices = @transform_22, window_bounds = array<i64: 1, 64>}, {transform_indices = @transform_23, window_bounds = array<i64: 64, 64>}]} {
    %cst = arith.constant 0.000000e+00 : f32
    %0 = vector.broadcast %cst : f32 to vector<48x16xf32>
    %c0 = arith.constant 0 : index
    %c0_0 = arith.constant 0 : index
    %1 = vector.load %arg25[%c0, %c0_0] : memref<160x16xf32, #tpu.memory_space<vmem>>, vector<48x16xf32>
    tpu.vector_store %arg25[%c0, %c0_0], %0 {strides = array<i32>} : memref<160x16xf32, #tpu.memory_space<vmem>>, vector<48x16xf32>,
    %cst_1 = arith.constant 0.000000e+00 : f32
    %2 = vector.broadcast %cst_1 : f32 to vector<48x16xf32>
    %c112 = arith.constant 112 : index
    %c0_2 = arith.constant 0 : index
    %3 = vector.load %arg25[%c112, %c0_2] : memref<160x16xf32, #tpu.memory_space<vmem>>, vector<48x16xf32>
    tpu.vector_store %arg25[%c112, %c0_2], %2 {strides = array<i32>} : memref<160x16xf32, #tpu.memory_space<vmem>>, vector<48x16xf32>,
    %cst_3 = arith.constant 0.000000e+00 : f32
    %4 = vector.broadcast %cst_3 : f32 to vector<48x128xf32>
    %c0_4 = arith.constant 0 : index
    %c0_5 = arith.constant 0 : index
    %5 = vector.load %arg27[%c0_4, %c0_5] : memref<160x128xf32, #tpu.memory_space<vmem>>, vector<48x128xf32>
    tpu.vector_store %arg27[%c0_4, %c0_5], %4 {strides = array<i32>} : memref<160x128xf32, #tpu.memory_space<vmem>>, vector<48x128xf32>,
    %cst_6 = arith.constant 0.000000e+00 : f32
    %6 = vector.broadcast %cst_6 : f32 to vector<48x128xf32>
    %c112_7 = arith.constant 112 : index
    %c0_8 = arith.constant 0 : index
    %7 = vector.load %arg27[%c112_7, %c0_8] : memref<160x128xf32, #tpu.memory_space<vmem>>, vector<48x128xf32>
    tpu.vector_store %arg27[%c112_7, %c0_8], %6 {strides = array<i32>} : memref<160x128xf32, #tpu.memory_space<vmem>>, vector<48x128xf32>,
    %cst_9 = arith.constant 0.000000e+00 : f32
    %8 = vector.broadcast %cst_9 : f32 to vector<48x16xf32>
    %c0_10 = arith.constant 0 : index
    %c0_11 = arith.constant 0 : index
    %9 = vector.load %arg29[%c0_10, %c0_11] : memref<160x16xf32, #tpu.memory_space<vmem>>, vector<48x16xf32>
    tpu.vector_store %arg29[%c0_10, %c0_11], %8 {strides = array<i32>} : memref<160x16xf32, #tpu.memory_space<vmem>>, vector<48x16xf32>,
    %cst_12 = arith.constant 0.000000e+00 : f32
    %10 = vector.broadcast %cst_12 : f32 to vector<48x16xf32>
    %c112_13 = arith.constant 112 : index
    %c0_14 = arith.constant 0 : index
    %11 = vector.load %arg29[%c112_13, %c0_14] : memref<160x16xf32, #tpu.memory_space<vmem>>, vector<48x16xf32>
    tpu.vector_store %arg29[%c112_13, %c0_14], %10 {strides = array<i32>} : memref<160x16xf32, #tpu.memory_space<vmem>>, vector<48x16xf32>,
    %cst_15 = arith.constant 0.000000e+00 : bf16
    %12 = vector.broadcast %cst_15 : bf16 to vector<64x1152xbf16>
    %c0_16 = arith.constant 0 : index
    %c0_17 = arith.constant 0 : index
    %13 = vector.load %arg26[%c0_16, %c0_17] : memref<64x1152xbf16, #tpu.memory_space<vmem>>, vector<64x1152xbf16>
    tpu.vector_store %arg26[%c0_16, %c0_17], %12 {strides = array<i32>} : memref<64x1152xbf16, #tpu.memory_space<vmem>>, vector<64x1152xbf16>,
    %cst_18 = arith.constant 0.000000e+00 : bf16
    %14 = vector.broadcast %cst_18 : bf16 to vector<64x1152xbf16>
    %c0_19 = arith.constant 0 : index
    %c0_20 = arith.constant 0 : index
    %15 = vector.load %arg30[%c0_19, %c0_20] : memref<64x1152xbf16, #tpu.memory_space<vmem>>, vector<64x1152xbf16>
    tpu.vector_store %arg30[%c0_19, %c0_20], %14 {strides = array<i32>} : memref<64x1152xbf16, #tpu.memory_space<vmem>>, vector<64x1152xbf16>,
    %c0_21 = arith.constant 0 : index
    %c0_22 = arith.constant 0 : index
    %16 = vector.load %arg1[%c0_21, %c0_22] : memref<64x64xbf16, #tpu.memory_space<vmem>>, vector<64x64xbf16>
    %c0_23 = arith.constant 0 : index
    %c0_24 = arith.constant 0 : index
    %17 = vector.load %arg2[%c0_23, %c0_24] : memref<64x16xbf16, #tpu.memory_space<vmem>>, vector<64x16xbf16>
    %cst_25 = arith.constant dense<0.000000e+00> : vector<64x16xf32>
    %18 = tpu.matmul %16, %17, %cst_25 {dimension_numbers = #tpu.dot_dimension_numbers<[1], [0], [0], [1], [0, 0, 1, 1], [], []>} : vector<64x64xbf16>, vector<64x16xbf16>, vector<64x16xf32> -> vector<64x16xf32>
    %c0_26 = arith.constant 0 : index
    %c0_27 = arith.constant 0 : index
    %19 = vector.load %arg3[%c0_26, %c0_27] : memref<1x16xf32, #tpu.memory_space<vmem>>, vector<1x16xf32>
    %20 = vector.broadcast %19 : vector<1x16xf32> to vector<64x16xf32>
    %21 = arith.addf %18, %20 : vector<64x16xf32>
    %c48 = arith.constant 48 : index
    %c0_28 = arith.constant 0 : index
    %22 = vector.load %arg25[%c48, %c0_28] : memref<160x16xf32, #tpu.memory_space<vmem>>, vector<64x16xf32>
    tpu.vector_store %arg25[%c48, %c0_28], %21 {strides = array<i32>} : memref<160x16xf32, #tpu.memory_space<vmem>>, vector<64x16xf32>,
    %23 = tpu.iota {dimensions = array<i32: 0>} : vector<64x16xi32>
    %c7_i32 = arith.constant 7 : i32
    %24 = vector.broadcast %c7_i32 : i32 to vector<64x16xi32>
    %25 = arith.andi %23, %24 : vector<64x16xi32>
    %c4_i32 = arith.constant 4 : i32
    %26 = vector.broadcast %c4_i32 : i32 to vector<64x16xi32>
    %27 = arith.cmpi sge, %25, %26 : vector<64x16xi32>
    %c4_i32_29 = arith.constant 4 : i32
    %28 = vector.broadcast %c4_i32_29 : i32 to vector<64x16xi32>
    %29 = arith.cmpi slt, %25, %28 : vector<64x16xi32>
    %c12 = arith.constant 12 : index
    %c0_30 = arith.constant 0 : index
    %30 = vector.load %arg25[%c12, %c0_30] : memref<160x16xf32, #tpu.memory_space<vmem>>, vector<64x16xf32>
    %cst_31 = arith.constant 0.000000e+00 : f32
    %31 = vector.broadcast %cst_31 : f32 to vector<64x16xf32>
    %32 = arith.select %27, %30, %31 : vector<64x16xi1>, vector<64x16xf32>
    %33 = arith.truncf %32 : vector<64x16xf32> to vector<64x16xbf16>
    %c0_32 = arith.constant 0 : index
    %c0_33 = arith.constant 0 : index
    %34 = vector.load %arg26[%c0_32, %c0_33] : memref<64x1152xbf16, #tpu.memory_space<vmem>>, vector<64x16xbf16>
    tpu.vector_store %arg26[%c0_32, %c0_33], %33 {strides = array<i32>} : memref<64x1152xbf16, #tpu.memory_space<vmem>>, vector<64x16xbf16>,
    %c16 = arith.constant 16 : index
    %c0_34 = arith.constant 0 : index
    %35 = vector.load %arg25[%c16, %c0_34] : memref<160x16xf32, #tpu.memory_space<vmem>>, vector<64x16xf32>
    %36 = arith.truncf %35 : vector<64x16xf32> to vector<64x16xbf16>
    %c0_35 = arith.constant 0 : index
    %c128 = arith.constant 128 : index
    %37 = vector.load %arg26[%c0_35, %c128] : memref<64x1152xbf16, #tpu.memory_space<vmem>>, vector<64x16xbf16>
    tpu.vector_store %arg26[%c0_35, %c128], %36 {strides = array<i32>} : memref<64x1152xbf16, #tpu.memory_space<vmem>>, vector<64x16xbf16>,
    %c20 = arith.constant 20 : index
    %c0_36 = arith.constant 0 : index
    %38 = vector.load %arg25[%c20, %c0_36] : memref<160x16xf32, #tpu.memory_space<vmem>>, vector<64x16xf32>
    %cst_37 = arith.constant 0.000000e+00 : f32
    %39 = vector.broadcast %cst_37 : f32 to vector<64x16xf32>
    %40 = arith.select %29, %38, %39 : vector<64x16xi1>, vector<64x16xf32>
    %41 = arith.truncf %40 : vector<64x16xf32> to vector<64x16xbf16>
    %c0_38 = arith.constant 0 : index
    %c256 = arith.constant 256 : index
    %42 = vector.load %arg26[%c0_38, %c256] : memref<64x1152xbf16, #tpu.memory_space<vmem>>, vector<64x16xbf16>
    tpu.vector_store %arg26[%c0_38, %c256], %41 {strides = array<i32>} : memref<64x1152xbf16, #tpu.memory_space<vmem>>, vector<64x16xbf16>,
    %c44 = arith.constant 44 : index
    %c0_39 = arith.constant 0 : index
    %43 = vector.load %arg25[%c44, %c0_39] : memref<160x16xf32, #tpu.memory_space<vmem>>, vector<64x16xf32>
    %cst_40 = arith.constant 0.000000e+00 : f32
    %44 = vector.broadcast %cst_40 : f32 to vector<64x16xf32>
    %45 = arith.select %27, %43, %44 : vector<64x16xi1>, vector<64x16xf32>
    %46 = arith.truncf %45 : vector<64x16xf32> to vector<64x16xbf16>
    %c0_41 = arith.constant 0 : index
    %c384 = arith.constant 384 : index
    %47 = vector.load %arg26[%c0_41, %c384] : memref<64x1152xbf16, #tpu.memory_space<vmem>>, vector<64x16xbf16>
    tpu.vector_store %arg26[%c0_41, %c384], %46 {strides = array<i32>} : memref<64x1152xbf16, #tpu.memory_space<vmem>>, vector<64x16xbf16>,
    %c48_42 = arith.constant 48 : index
    %c0_43 = arith.constant 0 : index
    %48 = vector.load %arg25[%c48_42, %c0_43] : memref<160x16xf32, #tpu.memory_space<vmem>>, vector<64x16xf32>
    %49 = arith.truncf %48 : vector<64x16xf32> to vector<64x16xbf16>
    %c0_44 = arith.constant 0 : index
    %c512 = arith.constant 512 : index
    %50 = vector.load %arg26[%c0_44, %c512] : memref<64x1152xbf16, #tpu.memory_space<vmem>>, vector<64x16xbf16>
    tpu.vector_store %arg26[%c0_44, %c512], %49 {strides = array<i32>} : memref<64x1152xbf16, #tpu.memory_space<vmem>>, vector<64x16xbf16>,
    %c52 = arith.constant 52 : index
    %c0_45 = arith.constant 0 : index
    %51 = vector.load %arg25[%c52, %c0_45] : memref<160x16xf32, #tpu.memory_space<vmem>>, vector<64x16xf32>
    %cst_46 = arith.constant 0.000000e+00 : f32
    %52 = vector.broadcast %cst_46 : f32 to vector<64x16xf32>
    %53 = arith.select %29, %51, %52 : vector<64x16xi1>, vector<64x16xf32>
    %54 = arith.truncf %53 : vector<64x16xf32> to vector<64x16xbf16>
    %c0_47 = arith.constant 0 : index
    %c640 = arith.constant 640 : index
    %55 = vector.load %arg26[%c0_47, %c640] : memref<64x1152xbf16, #tpu.memory_space<vmem>>, vector<64x16xbf16>
    tpu.vector_store %arg26[%c0_47, %c640], %54 {strides = array<i32>} : memref<64x1152xbf16, #tpu.memory_space<vmem>>, vector<64x16xbf16>,
    %c76 = arith.constant 76 : index
    %c0_48 = arith.constant 0 : index
    %56 = vector.load %arg25[%c76, %c0_48] : memref<160x16xf32, #tpu.memory_space<vmem>>, vector<64x16xf32>
    %cst_49 = arith.constant 0.000000e+00 : f32
    %57 = vector.broadcast %cst_49 : f32 to vector<64x16xf32>
    %58 = arith.select %27, %56, %57 : vector<64x16xi1>, vector<64x16xf32>
    %59 = arith.truncf %58 : vector<64x16xf32> to vector<64x16xbf16>
    %c0_50 = arith.constant 0 : index
    %c768 = arith.constant 768 : index
    %60 = vector.load %arg26[%c0_50, %c768] : memref<64x1152xbf16, #tpu.memory_space<vmem>>, vector<64x16xbf16>
    tpu.vector_store %arg26[%c0_50, %c768], %59 {strides = array<i32>} : memref<64x1152xbf16, #tpu.memory_space<vmem>>, vector<64x16xbf16>,
    %c80 = arith.constant 80 : index
    %c0_51 = arith.constant 0 : index
    %61 = vector.load %arg25[%c80, %c0_51] : memref<160x16xf32, #tpu.memory_space<vmem>>, vector<64x16xf32>
    %62 = arith.truncf %61 : vector<64x16xf32> to vector<64x16xbf16>
    %c0_52 = arith.constant 0 : index
    %c896 = arith.constant 896 : index
    %63 = vector.load %arg26[%c0_52, %c896] : memref<64x1152xbf16, #tpu.memory_space<vmem>>, vector<64x16xbf16>
    tpu.vector_store %arg26[%c0_52, %c896], %62 {strides = array<i32>} : memref<64x1152xbf16, #tpu.memory_space<vmem>>, vector<64x16xbf16>,
    %c84 = arith.constant 84 : index
    %c0_53 = arith.constant 0 : index
    %64 = vector.load %arg25[%c84, %c0_53] : memref<160x16xf32, #tpu.memory_space<vmem>>, vector<64x16xf32>
    %cst_54 = arith.constant 0.000000e+00 : f32
    %65 = vector.broadcast %cst_54 : f32 to vector<64x16xf32>
    %66 = arith.select %29, %64, %65 : vector<64x16xi1>, vector<64x16xf32>
    %67 = arith.truncf %66 : vector<64x16xf32> to vector<64x16xbf16>
    %c0_55 = arith.constant 0 : index
    %c1024 = arith.constant 1024 : index
    %68 = vector.load %arg26[%c0_55, %c1024] : memref<64x1152xbf16, #tpu.memory_space<vmem>>, vector<64x16xbf16>
    tpu.vector_store %arg26[%c0_55, %c1024], %67 {strides = array<i32>} : memref<64x1152xbf16, #tpu.memory_space<vmem>>, vector<64x16xbf16>,
    %c0_56 = arith.constant 0 : index
    %c0_57 = arith.constant 0 : index
    %69 = vector.load %arg26[%c0_56, %c0_57] : memref<64x1152xbf16, #tpu.memory_space<vmem>>, vector<64x1152xbf16>
    %c0_58 = arith.constant 0 : index
    %c0_59 = arith.constant 0 : index
    %70 = vector.load %arg4[%c0_58, %c0_59] : memref<1152x16xbf16, #tpu.memory_space<vmem>>, vector<1152x16xbf16>
    %cst_60 = arith.constant dense<0.000000e+00> : vector<64x16xf32>
    %71 = tpu.matmul %69, %70, %cst_60 {dimension_numbers = #tpu.dot_dimension_numbers<[1], [0], [0], [1], [0, 0, 1, 1], [], []>} : vector<64x1152xbf16>, vector<1152x16xbf16>, vector<64x16xf32> -> vector<64x16xf32>
    %c0_61 = arith.constant 0 : index
    %c0_62 = arith.constant 0 : index
    %72 = vector.load %arg5[%c0_61, %c0_62] : memref<1x16xf32, #tpu.memory_space<vmem>>, vector<1x16xf32>
    %73 = vector.broadcast %72 : vector<1x16xf32> to vector<64x16xf32>
    %74 = arith.addf %71, %73 : vector<64x16xf32>
    %75 = arith.addf %21, %74 : vector<64x16xf32>
    %76 = arith.truncf %75 : vector<64x16xf32> to vector<64x16xbf16>
    %c0_63 = arith.constant 0 : index
    %c0_64 = arith.constant 0 : index
    %77 = vector.load %arg6[%c0_63, %c0_64] : memref<16x64xbf16, #tpu.memory_space<vmem>>, vector<16x64xbf16>
    %cst_65 = arith.constant dense<0.000000e+00> : vector<64x64xf32>
    %78 = tpu.matmul %76, %77, %cst_65 {dimension_numbers = #tpu.dot_dimension_numbers<[1], [0], [0], [1], [0, 0, 1, 1], [], []>} : vector<64x16xbf16>, vector<16x64xbf16>, vector<64x64xf32> -> vector<64x64xf32>
    %c0_66 = arith.constant 0 : index
    %c0_67 = arith.constant 0 : index
    %79 = vector.load %arg7[%c0_66, %c0_67] : memref<1x64xf32, #tpu.memory_space<vmem>>, vector<1x64xf32>
    %80 = vector.broadcast %79 : vector<1x64xf32> to vector<64x64xf32>
    %81 = arith.addf %78, %80 : vector<64x64xf32>
    %cst_68 = arith.constant 0.000000e+00 : f32
    %82 = vector.broadcast %cst_68 : f32 to vector<64x64xf32>
    %83 = arith.maximumf %81, %82 : vector<64x64xf32>
    %84 = arith.truncf %83 : vector<64x64xf32> to vector<64x64xbf16>
    %c0_69 = arith.constant 0 : index
    %c0_70 = arith.constant 0 : index
    %85 = vector.load %arg8[%c0_69, %c0_70] : memref<64x512xbf16, #tpu.memory_space<vmem>>, vector<64x512xbf16>
    %cst_71 = arith.constant dense<0.000000e+00> : vector<64x512xf32>
    %86 = tpu.matmul %84, %85, %cst_71 {dimension_numbers = #tpu.dot_dimension_numbers<[1], [0], [0], [1], [0, 0, 1, 1], [], []>} : vector<64x64xbf16>, vector<64x512xbf16>, vector<64x512xf32> -> vector<64x512xf32>
    %c0_72 = arith.constant 0 : index
    %c0_73 = arith.constant 0 : index
    %87 = vector.load %arg9[%c0_72, %c0_73] : memref<1x512xf32, #tpu.memory_space<vmem>>, vector<1x512xf32>
    %88 = vector.broadcast %87 : vector<1x512xf32> to vector<64x512xf32>
    %89 = arith.addf %86, %88 : vector<64x512xf32>
    %90 = arith.truncf %89 : vector<64x512xf32> to vector<64x512xbf16>
    %c0_74 = arith.constant 0 : index
    %c0_75 = arith.constant 0 : index
    %91 = vector.load %arg10[%c0_74, %c0_75] : memref<512x128xbf16, #tpu.memory_space<vmem>>, vector<512x128xbf16>
    %cst_76 = arith.constant dense<0.000000e+00> : vector<64x128xf32>
    %92 = tpu.matmul %90, %91, %cst_76 {dimension_numbers = #tpu.dot_dimension_numbers<[1], [0], [0], [1], [0, 0, 1, 1], [], []>} : vector<64x512xbf16>, vector<512x128xbf16>, vector<64x128xf32> -> vector<64x128xf32>
    %c0_77 = arith.constant 0 : index
    %c0_78 = arith.constant 0 : index
    %93 = vector.load %arg11[%c0_77, %c0_78] : memref<1x128xf32, #tpu.memory_space<vmem>>, vector<1x128xf32>
    %94 = vector.broadcast %93 : vector<1x128xf32> to vector<64x128xf32>
    %95 = arith.addf %92, %94 : vector<64x128xf32>
    %c48_79 = arith.constant 48 : index
    %c0_80 = arith.constant 0 : index
    %96 = vector.load %arg27[%c48_79, %c0_80] : memref<160x128xf32, #tpu.memory_space<vmem>>, vector<64x128xf32>
    tpu.vector_store %arg27[%c48_79, %c0_80], %95 {strides = array<i32>} : memref<160x128xf32, #tpu.memory_space<vmem>>, vector<64x128xf32>,
    %97 = tpu.iota {dimensions = array<i32: 0>} : vector<64x128xi32>
    %c7_i32_81 = arith.constant 7 : i32
    %98 = vector.broadcast %c7_i32_81 : i32 to vector<64x128xi32>
    %99 = arith.andi %97, %98 : vector<64x128xi32>
    %c4_i32_82 = arith.constant 4 : i32
    %100 = vector.broadcast %c4_i32_82 : i32 to vector<64x128xi32>
    %101 = arith.cmpi sge, %99, %100 : vector<64x128xi32>
    %c4_i32_83 = arith.constant 4 : i32
    %102 = vector.broadcast %c4_i32_83 : i32 to vector<64x128xi32>
    %103 = arith.cmpi slt, %99, %102 : vector<64x128xi32>
    %c12_84 = arith.constant 12 : index
    %c0_85 = arith.constant 0 : index
    %104 = vector.load %arg27[%c12_84, %c0_85] : memref<160x128xf32, #tpu.memory_space<vmem>>, vector<64x128xf32>
    %cst_86 = arith.constant 0.000000e+00 : f32
    %105 = vector.broadcast %cst_86 : f32 to vector<64x128xf32>
    %106 = arith.select %101, %104, %105 : vector<64x128xi1>, vector<64x128xf32>
    %107 = arith.truncf %106 : vector<64x128xf32> to vector<64x128xbf16>
    %c0_87 = arith.constant 0 : index
    %c0_88 = arith.constant 0 : index
    %108 = vector.load %arg28[%c0_87, %c0_88] : memref<64x1152xbf16, #tpu.memory_space<vmem>>, vector<64x128xbf16>
    tpu.vector_store %arg28[%c0_87, %c0_88], %107 {strides = array<i32>} : memref<64x1152xbf16, #tpu.memory_space<vmem>>, vector<64x128xbf16>,
    %c16_89 = arith.constant 16 : index
    %c0_90 = arith.constant 0 : index
    %109 = vector.load %arg27[%c16_89, %c0_90] : memref<160x128xf32, #tpu.memory_space<vmem>>, vector<64x128xf32>
    %110 = arith.truncf %109 : vector<64x128xf32> to vector<64x128xbf16>
    %c0_91 = arith.constant 0 : index
    %c128_92 = arith.constant 128 : index
    %111 = vector.load %arg28[%c0_91, %c128_92] : memref<64x1152xbf16, #tpu.memory_space<vmem>>, vector<64x128xbf16>
    tpu.vector_store %arg28[%c0_91, %c128_92], %110 {strides = array<i32>} : memref<64x1152xbf16, #tpu.memory_space<vmem>>, vector<64x128xbf16>,
    %c20_93 = arith.constant 20 : index
    %c0_94 = arith.constant 0 : index
    %112 = vector.load %arg27[%c20_93, %c0_94] : memref<160x128xf32, #tpu.memory_space<vmem>>, vector<64x128xf32>
    %cst_95 = arith.constant 0.000000e+00 : f32
    %113 = vector.broadcast %cst_95 : f32 to vector<64x128xf32>
    %114 = arith.select %103, %112, %113 : vector<64x128xi1>, vector<64x128xf32>
    %115 = arith.truncf %114 : vector<64x128xf32> to vector<64x128xbf16>
    %c0_96 = arith.constant 0 : index
    %c256_97 = arith.constant 256 : index
    %116 = vector.load %arg28[%c0_96, %c256_97] : memref<64x1152xbf16, #tpu.memory_space<vmem>>, vector<64x128xbf16>
    tpu.vector_store %arg28[%c0_96, %c256_97], %115 {strides = array<i32>} : memref<64x1152xbf16, #tpu.memory_space<vmem>>, vector<64x128xbf16>,
    %c44_98 = arith.constant 44 : index
    %c0_99 = arith.constant 0 : index
    %117 = vector.load %arg27[%c44_98, %c0_99] : memref<160x128xf32, #tpu.memory_space<vmem>>, vector<64x128xf32>
    %cst_100 = arith.constant 0.000000e+00 : f32
    %118 = vector.broadcast %cst_100 : f32 to vector<64x128xf32>
    %119 = arith.select %101, %117, %118 : vector<64x128xi1>, vector<64x128xf32>
    %120 = arith.truncf %119 : vector<64x128xf32> to vector<64x128xbf16>
    %c0_101 = arith.constant 0 : index
    %c384_102 = arith.constant 384 : index
    %121 = vector.load %arg28[%c0_101, %c384_102] : memref<64x1152xbf16, #tpu.memory_space<vmem>>, vector<64x128xbf16>
    tpu.vector_store %arg28[%c0_101, %c384_102], %120 {strides = array<i32>} : memref<64x1152xbf16, #tpu.memory_space<vmem>>, vector<64x128xbf16>,
    %c48_103 = arith.constant 48 : index
    %c0_104 = arith.constant 0 : index
    %122 = vector.load %arg27[%c48_103, %c0_104] : memref<160x128xf32, #tpu.memory_space<vmem>>, vector<64x128xf32>
    %123 = arith.truncf %122 : vector<64x128xf32> to vector<64x128xbf16>
    %c0_105 = arith.constant 0 : index
    %c512_106 = arith.constant 512 : index
    %124 = vector.load %arg28[%c0_105, %c512_106] : memref<64x1152xbf16, #tpu.memory_space<vmem>>, vector<64x128xbf16>
    tpu.vector_store %arg28[%c0_105, %c512_106], %123 {strides = array<i32>} : memref<64x1152xbf16, #tpu.memory_space<vmem>>, vector<64x128xbf16>,
    %c52_107 = arith.constant 52 : index
    %c0_108 = arith.constant 0 : index
    %125 = vector.load %arg27[%c52_107, %c0_108] : memref<160x128xf32, #tpu.memory_space<vmem>>, vector<64x128xf32>
    %cst_109 = arith.constant 0.000000e+00 : f32
    %126 = vector.broadcast %cst_109 : f32 to vector<64x128xf32>
    %127 = arith.select %103, %125, %126 : vector<64x128xi1>, vector<64x128xf32>
    %128 = arith.truncf %127 : vector<64x128xf32> to vector<64x128xbf16>
    %c0_110 = arith.constant 0 : index
    %c640_111 = arith.constant 640 : index
    %129 = vector.load %arg28[%c0_110, %c640_111] : memref<64x1152xbf16, #tpu.memory_space<vmem>>, vector<64x128xbf16>
    tpu.vector_store %arg28[%c0_110, %c640_111], %128 {strides = array<i32>} : memref<64x1152xbf16, #tpu.memory_space<vmem>>, vector<64x128xbf16>,
    %c76_112 = arith.constant 76 : index
    %c0_113 = arith.constant 0 : index
    %130 = vector.load %arg27[%c76_112, %c0_113] : memref<160x128xf32, #tpu.memory_space<vmem>>, vector<64x128xf32>
    %cst_114 = arith.constant 0.000000e+00 : f32
    %131 = vector.broadcast %cst_114 : f32 to vector<64x128xf32>
    %132 = arith.select %101, %130, %131 : vector<64x128xi1>, vector<64x128xf32>
    %133 = arith.truncf %132 : vector<64x128xf32> to vector<64x128xbf16>
    %c0_115 = arith.constant 0 : index
    %c768_116 = arith.constant 768 : index
    %134 = vector.load %arg28[%c0_115, %c768_116] : memref<64x1152xbf16, #tpu.memory_space<vmem>>, vector<64x128xbf16>
    tpu.vector_store %arg28[%c0_115, %c768_116], %133 {strides = array<i32>} : memref<64x1152xbf16, #tpu.memory_space<vmem>>, vector<64x128xbf16>,
    %c80_117 = arith.constant 80 : index
    %c0_118 = arith.constant 0 : index
    %135 = vector.load %arg27[%c80_117, %c0_118] : memref<160x128xf32, #tpu.memory_space<vmem>>, vector<64x128xf32>
    %136 = arith.truncf %135 : vector<64x128xf32> to vector<64x128xbf16>
    %c0_119 = arith.constant 0 : index
    %c896_120 = arith.constant 896 : index
    %137 = vector.load %arg28[%c0_119, %c896_120] : memref<64x1152xbf16, #tpu.memory_space<vmem>>, vector<64x128xbf16>
    tpu.vector_store %arg28[%c0_119, %c896_120], %136 {strides = array<i32>} : memref<64x1152xbf16, #tpu.memory_space<vmem>>, vector<64x128xbf16>,
    %c84_121 = arith.constant 84 : index
    %c0_122 = arith.constant 0 : index
    %138 = vector.load %arg27[%c84_121, %c0_122] : memref<160x128xf32, #tpu.memory_space<vmem>>, vector<64x128xf32>
    %cst_123 = arith.constant 0.000000e+00 : f32
    %139 = vector.broadcast %cst_123 : f32 to vector<64x128xf32>
    %140 = arith.select %103, %138, %139 : vector<64x128xi1>, vector<64x128xf32>
    %141 = arith.truncf %140 : vector<64x128xf32> to vector<64x128xbf16>
    %c0_124 = arith.constant 0 : index
    %c1024_125 = arith.constant 1024 : index
    %142 = vector.load %arg28[%c0_124, %c1024_125] : memref<64x1152xbf16, #tpu.memory_space<vmem>>, vector<64x128xbf16>
    tpu.vector_store %arg28[%c0_124, %c1024_125], %141 {strides = array<i32>} : memref<64x1152xbf16, #tpu.memory_space<vmem>>, vector<64x128xbf16>,
    %c0_126 = arith.constant 0 : index
    %c0_127 = arith.constant 0 : index
    %143 = vector.load %arg28[%c0_126, %c0_127] : memref<64x1152xbf16, #tpu.memory_space<vmem>>, vector<64x1152xbf16>
    %c0_128 = arith.constant 0 : index
    %c0_129 = arith.constant 0 : index
    %144 = vector.load %arg12[%c0_128, %c0_129] : memref<1152x128xbf16, #tpu.memory_space<vmem>>, vector<1152x128xbf16>
    %cst_130 = arith.constant dense<0.000000e+00> : vector<64x128xf32>
    %145 = tpu.matmul %143, %144, %cst_130 {dimension_numbers = #tpu.dot_dimension_numbers<[1], [0], [0], [1], [0, 0, 1, 1], [], []>} : vector<64x1152xbf16>, vector<1152x128xbf16>, vector<64x128xf32> -> vector<64x128xf32>
    %c0_131 = arith.constant 0 : index
    %c0_132 = arith.constant 0 : index
    %146 = vector.load %arg13[%c0_131, %c0_132] : memref<1x128xf32, #tpu.memory_space<vmem>>, vector<1x128xf32>
    %147 = vector.broadcast %146 : vector<1x128xf32> to vector<64x128xf32>
    %148 = arith.addf %145, %147 : vector<64x128xf32>
    %149 = arith.addf %95, %148 : vector<64x128xf32>
    %150 = arith.truncf %149 : vector<64x128xf32> to vector<64x128xbf16>
    %c0_133 = arith.constant 0 : index
    %c0_134 = arith.constant 0 : index
    %151 = vector.load %arg14[%c0_133, %c0_134] : memref<128x512xbf16, #tpu.memory_space<vmem>>, vector<128x512xbf16>
    %cst_135 = arith.constant dense<0.000000e+00> : vector<64x512xf32>
    %152 = tpu.matmul %150, %151, %cst_135 {dimension_numbers = #tpu.dot_dimension_numbers<[1], [0], [0], [1], [0, 0, 1, 1], [], []>} : vector<64x128xbf16>, vector<128x512xbf16>, vector<64x512xf32> -> vector<64x512xf32>
    %c0_136 = arith.constant 0 : index
    %c0_137 = arith.constant 0 : index
    %153 = vector.load %arg15[%c0_136, %c0_137] : memref<1x512xf32, #tpu.memory_space<vmem>>, vector<1x512xf32>
    %154 = vector.broadcast %153 : vector<1x512xf32> to vector<64x512xf32>
    %155 = arith.addf %152, %154 : vector<64x512xf32>
    %cst_138 = arith.constant 0.000000e+00 : f32
    %156 = vector.broadcast %cst_138 : f32 to vector<64x512xf32>
    %157 = arith.maximumf %155, %156 : vector<64x512xf32>
    %158 = arith.truncf %157 : vector<64x512xf32> to vector<64x512xbf16>
    %c0_139 = arith.constant 0 : index
    %c0_140 = arith.constant 0 : index
    %159 = vector.load %arg16[%c0_139, %c0_140] : memref<512x64xbf16, #tpu.memory_space<vmem>>, vector<512x64xbf16>
    %cst_141 = arith.constant dense<0.000000e+00> : vector<64x64xf32>
    %160 = tpu.matmul %158, %159, %cst_141 {dimension_numbers = #tpu.dot_dimension_numbers<[1], [0], [0], [1], [0, 0, 1, 1], [], []>} : vector<64x512xbf16>, vector<512x64xbf16>, vector<64x64xf32> -> vector<64x64xf32>
    %c0_142 = arith.constant 0 : index
    %c0_143 = arith.constant 0 : index
    %161 = vector.load %arg17[%c0_142, %c0_143] : memref<1x64xf32, #tpu.memory_space<vmem>>, vector<1x64xf32>
    %162 = vector.broadcast %161 : vector<1x64xf32> to vector<64x64xf32>
    %163 = arith.addf %160, %162 : vector<64x64xf32>
    %164 = arith.addf %163, %83 : vector<64x64xf32>
    %165 = arith.truncf %164 : vector<64x64xf32> to vector<64x64xbf16>
    %c0_144 = arith.constant 0 : index
    %c0_145 = arith.constant 0 : index
    %166 = vector.load %arg18[%c0_144, %c0_145] : memref<64x16xbf16, #tpu.memory_space<vmem>>, vector<64x16xbf16>
    %cst_146 = arith.constant dense<0.000000e+00> : vector<64x16xf32>
    %167 = tpu.matmul %165, %166, %cst_146 {dimension_numbers = #tpu.dot_dimension_numbers<[1], [0], [0], [1], [0, 0, 1, 1], [], []>} : vector<64x64xbf16>, vector<64x16xbf16>, vector<64x16xf32> -> vector<64x16xf32>
    %c0_147 = arith.constant 0 : index
    %c0_148 = arith.constant 0 : index
    %168 = vector.load %arg19[%c0_147, %c0_148] : memref<1x16xf32, #tpu.memory_space<vmem>>, vector<1x16xf32>
    %169 = vector.broadcast %168 : vector<1x16xf32> to vector<64x16xf32>
    %170 = arith.addf %167, %169 : vector<64x16xf32>
    %c48_149 = arith.constant 48 : index
    %c0_150 = arith.constant 0 : index
    %171 = vector.load %arg29[%c48_149, %c0_150] : memref<160x16xf32, #tpu.memory_space<vmem>>, vector<64x16xf32>
    tpu.vector_store %arg29[%c48_149, %c0_150], %170 {strides = array<i32>} : memref<160x16xf32, #tpu.memory_space<vmem>>, vector<64x16xf32>,
    %172 = tpu.iota {dimensions = array<i32: 0>} : vector<64x16xi32>
    %c7_i32_151 = arith.constant 7 : i32
    %173 = vector.broadcast %c7_i32_151 : i32 to vector<64x16xi32>
    %174 = arith.andi %172, %173 : vector<64x16xi32>
    %c4_i32_152 = arith.constant 4 : i32
    %175 = vector.broadcast %c4_i32_152 : i32 to vector<64x16xi32>
    %176 = arith.cmpi sge, %174, %175 : vector<64x16xi32>
    %c4_i32_153 = arith.constant 4 : i32
    %177 = vector.broadcast %c4_i32_153 : i32 to vector<64x16xi32>
    %178 = arith.cmpi slt, %174, %177 : vector<64x16xi32>
    %c12_154 = arith.constant 12 : index
    %c0_155 = arith.constant 0 : index
    %179 = vector.load %arg29[%c12_154, %c0_155] : memref<160x16xf32, #tpu.memory_space<vmem>>, vector<64x16xf32>
    %cst_156 = arith.constant 0.000000e+00 : f32
    %180 = vector.broadcast %cst_156 : f32 to vector<64x16xf32>
    %181 = arith.select %176, %179, %180 : vector<64x16xi1>, vector<64x16xf32>
    %182 = arith.truncf %181 : vector<64x16xf32> to vector<64x16xbf16>
    %c0_157 = arith.constant 0 : index
    %c0_158 = arith.constant 0 : index
    %183 = vector.load %arg30[%c0_157, %c0_158] : memref<64x1152xbf16, #tpu.memory_space<vmem>>, vector<64x16xbf16>
    tpu.vector_store %arg30[%c0_157, %c0_158], %182 {strides = array<i32>} : memref<64x1152xbf16, #tpu.memory_space<vmem>>, vector<64x16xbf16>,
    %c16_159 = arith.constant 16 : index
    %c0_160 = arith.constant 0 : index
    %184 = vector.load %arg29[%c16_159, %c0_160] : memref<160x16xf32, #tpu.memory_space<vmem>>, vector<64x16xf32>
    %185 = arith.truncf %184 : vector<64x16xf32> to vector<64x16xbf16>
    %c0_161 = arith.constant 0 : index
    %c128_162 = arith.constant 128 : index
    %186 = vector.load %arg30[%c0_161, %c128_162] : memref<64x1152xbf16, #tpu.memory_space<vmem>>, vector<64x16xbf16>
    tpu.vector_store %arg30[%c0_161, %c128_162], %185 {strides = array<i32>} : memref<64x1152xbf16, #tpu.memory_space<vmem>>, vector<64x16xbf16>,
    %c20_163 = arith.constant 20 : index
    %c0_164 = arith.constant 0 : index
    %187 = vector.load %arg29[%c20_163, %c0_164] : memref<160x16xf32, #tpu.memory_space<vmem>>, vector<64x16xf32>
    %cst_165 = arith.constant 0.000000e+00 : f32
    %188 = vector.broadcast %cst_165 : f32 to vector<64x16xf32>
    %189 = arith.select %178, %187, %188 : vector<64x16xi1>, vector<64x16xf32>
    %190 = arith.truncf %189 : vector<64x16xf32> to vector<64x16xbf16>
    %c0_166 = arith.constant 0 : index
    %c256_167 = arith.constant 256 : index
    %191 = vector.load %arg30[%c0_166, %c256_167] : memref<64x1152xbf16, #tpu.memory_space<vmem>>, vector<64x16xbf16>
    tpu.vector_store %arg30[%c0_166, %c256_167], %190 {strides = array<i32>} : memref<64x1152xbf16, #tpu.memory_space<vmem>>, vector<64x16xbf16>,
    %c44_168 = arith.constant 44 : index
    %c0_169 = arith.constant 0 : index
    %192 = vector.load %arg29[%c44_168, %c0_169] : memref<160x16xf32, #tpu.memory_space<vmem>>, vector<64x16xf32>
    %cst_170 = arith.constant 0.000000e+00 : f32
    %193 = vector.broadcast %cst_170 : f32 to vector<64x16xf32>
    %194 = arith.select %176, %192, %193 : vector<64x16xi1>, vector<64x16xf32>
    %195 = arith.truncf %194 : vector<64x16xf32> to vector<64x16xbf16>
    %c0_171 = arith.constant 0 : index
    %c384_172 = arith.constant 384 : index
    %196 = vector.load %arg30[%c0_171, %c384_172] : memref<64x1152xbf16, #tpu.memory_space<vmem>>, vector<64x16xbf16>
    tpu.vector_store %arg30[%c0_171, %c384_172], %195 {strides = array<i32>} : memref<64x1152xbf16, #tpu.memory_space<vmem>>, vector<64x16xbf16>,
    %c48_173 = arith.constant 48 : index
    %c0_174 = arith.constant 0 : index
    %197 = vector.load %arg29[%c48_173, %c0_174] : memref<160x16xf32, #tpu.memory_space<vmem>>, vector<64x16xf32>
    %198 = arith.truncf %197 : vector<64x16xf32> to vector<64x16xbf16>
    %c0_175 = arith.constant 0 : index
    %c512_176 = arith.constant 512 : index
    %199 = vector.load %arg30[%c0_175, %c512_176] : memref<64x1152xbf16, #tpu.memory_space<vmem>>, vector<64x16xbf16>
    tpu.vector_store %arg30[%c0_175, %c512_176], %198 {strides = array<i32>} : memref<64x1152xbf16, #tpu.memory_space<vmem>>, vector<64x16xbf16>,
    %c52_177 = arith.constant 52 : index
    %c0_178 = arith.constant 0 : index
    %200 = vector.load %arg29[%c52_177, %c0_178] : memref<160x16xf32, #tpu.memory_space<vmem>>, vector<64x16xf32>
    %cst_179 = arith.constant 0.000000e+00 : f32
    %201 = vector.broadcast %cst_179 : f32 to vector<64x16xf32>
    %202 = arith.select %178, %200, %201 : vector<64x16xi1>, vector<64x16xf32>
    %203 = arith.truncf %202 : vector<64x16xf32> to vector<64x16xbf16>
    %c0_180 = arith.constant 0 : index
    %c640_181 = arith.constant 640 : index
    %204 = vector.load %arg30[%c0_180, %c640_181] : memref<64x1152xbf16, #tpu.memory_space<vmem>>, vector<64x16xbf16>
    tpu.vector_store %arg30[%c0_180, %c640_181], %203 {strides = array<i32>} : memref<64x1152xbf16, #tpu.memory_space<vmem>>, vector<64x16xbf16>,
    %c76_182 = arith.constant 76 : index
    %c0_183 = arith.constant 0 : index
    %205 = vector.load %arg29[%c76_182, %c0_183] : memref<160x16xf32, #tpu.memory_space<vmem>>, vector<64x16xf32>
    %cst_184 = arith.constant 0.000000e+00 : f32
    %206 = vector.broadcast %cst_184 : f32 to vector<64x16xf32>
    %207 = arith.select %176, %205, %206 : vector<64x16xi1>, vector<64x16xf32>
    %208 = arith.truncf %207 : vector<64x16xf32> to vector<64x16xbf16>
    %c0_185 = arith.constant 0 : index
    %c768_186 = arith.constant 768 : index
    %209 = vector.load %arg30[%c0_185, %c768_186] : memref<64x1152xbf16, #tpu.memory_space<vmem>>, vector<64x16xbf16>
    tpu.vector_store %arg30[%c0_185, %c768_186], %208 {strides = array<i32>} : memref<64x1152xbf16, #tpu.memory_space<vmem>>, vector<64x16xbf16>,
    %c80_187 = arith.constant 80 : index
    %c0_188 = arith.constant 0 : index
    %210 = vector.load %arg29[%c80_187, %c0_188] : memref<160x16xf32, #tpu.memory_space<vmem>>, vector<64x16xf32>
    %211 = arith.truncf %210 : vector<64x16xf32> to vector<64x16xbf16>
    %c0_189 = arith.constant 0 : index
    %c896_190 = arith.constant 896 : index
    %212 = vector.load %arg30[%c0_189, %c896_190] : memref<64x1152xbf16, #tpu.memory_space<vmem>>, vector<64x16xbf16>
    tpu.vector_store %arg30[%c0_189, %c896_190], %211 {strides = array<i32>} : memref<64x1152xbf16, #tpu.memory_space<vmem>>, vector<64x16xbf16>,
    %c84_191 = arith.constant 84 : index
    %c0_192 = arith.constant 0 : index
    %213 = vector.load %arg29[%c84_191, %c0_192] : memref<160x16xf32, #tpu.memory_space<vmem>>, vector<64x16xf32>
    %cst_193 = arith.constant 0.000000e+00 : f32
    %214 = vector.broadcast %cst_193 : f32 to vector<64x16xf32>
    %215 = arith.select %178, %213, %214 : vector<64x16xi1>, vector<64x16xf32>
    %216 = arith.truncf %215 : vector<64x16xf32> to vector<64x16xbf16>
    %c0_194 = arith.constant 0 : index
    %c1024_195 = arith.constant 1024 : index
    %217 = vector.load %arg30[%c0_194, %c1024_195] : memref<64x1152xbf16, #tpu.memory_space<vmem>>, vector<64x16xbf16>
    tpu.vector_store %arg30[%c0_194, %c1024_195], %216 {strides = array<i32>} : memref<64x1152xbf16, #tpu.memory_space<vmem>>, vector<64x16xbf16>,
    %c0_196 = arith.constant 0 : index
    %c0_197 = arith.constant 0 : index
    %218 = vector.load %arg30[%c0_196, %c0_197] : memref<64x1152xbf16, #tpu.memory_space<vmem>>, vector<64x1152xbf16>
    %c0_198 = arith.constant 0 : index
    %c0_199 = arith.constant 0 : index
    %219 = vector.load %arg20[%c0_198, %c0_199] : memref<1152x16xbf16, #tpu.memory_space<vmem>>, vector<1152x16xbf16>
    %cst_200 = arith.constant dense<0.000000e+00> : vector<64x16xf32>
    %220 = tpu.matmul %218, %219, %cst_200 {dimension_numbers = #tpu.dot_dimension_numbers<[1], [0], [0], [1], [0, 0, 1, 1], [], []>} : vector<64x1152xbf16>, vector<1152x16xbf16>, vector<64x16xf32> -> vector<64x16xf32>
    %c0_201 = arith.constant 0 : index
    %c0_202 = arith.constant 0 : index
    %221 = vector.load %arg21[%c0_201, %c0_202] : memref<1x16xf32, #tpu.memory_space<vmem>>, vector<1x16xf32>
    %222 = vector.broadcast %221 : vector<1x16xf32> to vector<64x16xf32>
    %223 = arith.addf %220, %222 : vector<64x16xf32>
    %224 = arith.addf %170, %223 : vector<64x16xf32>
    %225 = arith.truncf %224 : vector<64x16xf32> to vector<64x16xbf16>
    %c0_203 = arith.constant 0 : index
    %c0_204 = arith.constant 0 : index
    %226 = vector.load %arg22[%c0_203, %c0_204] : memref<16x64xbf16, #tpu.memory_space<vmem>>, vector<16x64xbf16>
    %cst_205 = arith.constant dense<0.000000e+00> : vector<64x64xf32>
    %227 = tpu.matmul %225, %226, %cst_205 {dimension_numbers = #tpu.dot_dimension_numbers<[1], [0], [0], [1], [0, 0, 1, 1], [], []>} : vector<64x16xbf16>, vector<16x64xbf16>, vector<64x64xf32> -> vector<64x64xf32>
    %c0_206 = arith.constant 0 : index
    %c0_207 = arith.constant 0 : index
    %228 = vector.load %arg23[%c0_206, %c0_207] : memref<1x64xf32, #tpu.memory_space<vmem>>, vector<1x64xf32>
    %229 = vector.broadcast %228 : vector<1x64xf32> to vector<64x64xf32>
    %230 = arith.addf %227, %229 : vector<64x64xf32>
    %c0_208 = arith.constant 0 : index
    %c0_209 = arith.constant 0 : index
    %231 = vector.load %arg24[%c0_208, %c0_209] : memref<64x64xf32, #tpu.memory_space<vmem>>, vector<64x64xf32>
    tpu.vector_store %arg24[%c0_208, %c0_209], %230 {strides = array<i32>} : memref<64x64xf32, #tpu.memory_space<vmem>>, vector<64x64xf32>,
    return
  }
  func.func @transform_0(%arg0: i32) -> (i32, i32) {
    %c0_i32 = arith.constant 0 : i32
    %c0_i32_0 = arith.constant 0 : i32
    return %arg0, %c0_i32 : i32, i32
  }
  func.func @transform_1(%arg0: i32) -> (i32, i32) {
    %c0_i32 = arith.constant 0 : i32
    %c0_i32_0 = arith.constant 0 : i32
    %c0_i32_1 = arith.constant 0 : i32
    return %c0_i32, %c0_i32_0 : i32, i32
  }
  func.func @transform_2(%arg0: i32) -> (i32, i32) {
    %c0_i32 = arith.constant 0 : i32
    %c0_i32_0 = arith.constant 0 : i32
    %c0_i32_1 = arith.constant 0 : i32
    return %c0_i32, %c0_i32_0 : i32, i32
  }
  func.func @transform_3(%arg0: i32) -> (i32, i32) {
    %c0_i32 = arith.constant 0 : i32
    %c0_i32_0 = arith.constant 0 : i32
    %c0_i32_1 = arith.constant 0 : i32
    return %c0_i32, %c0_i32_0 : i32, i32
  }
  func.func @transform_4(%arg0: i32) -> (i32, i32) {
    %c0_i32 = arith.constant 0 : i32
    %c0_i32_0 = arith.constant 0 : i32
    %c0_i32_1 = arith.constant 0 : i32
    return %c0_i32, %c0_i32_0 : i32, i32
  }
  func.func @transform_5(%arg0: i32) -> (i32, i32) {
    %c0_i32 = arith.constant 0 : i32
    %c0_i32_0 = arith.constant 0 : i32
    %c0_i32_1 = arith.constant 0 : i32
    return %c0_i32, %c0_i32_0 : i32, i32
  }
  func.func @transform_6(%arg0: i32) -> (i32, i32) {
    %c0_i32 = arith.constant 0 : i32
    %c0_i32_0 = arith.constant 0 : i32
    %c0_i32_1 = arith.constant 0 : i32
    return %c0_i32, %c0_i32_0 : i32, i32
  }
  func.func @transform_7(%arg0: i32) -> (i32, i32) {
    %c0_i32 = arith.constant 0 : i32
    %c0_i32_0 = arith.constant 0 : i32
    %c0_i32_1 = arith.constant 0 : i32
    return %c0_i32, %c0_i32_0 : i32, i32
  }
  func.func @transform_8(%arg0: i32) -> (i32, i32) {
    %c0_i32 = arith.constant 0 : i32
    %c0_i32_0 = arith.constant 0 : i32
    %c0_i32_1 = arith.constant 0 : i32
    return %c0_i32, %c0_i32_0 : i32, i32
  }
  func.func @transform_9(%arg0: i32) -> (i32, i32) {
    %c0_i32 = arith.constant 0 : i32
    %c0_i32_0 = arith.constant 0 : i32
    %c0_i32_1 = arith.constant 0 : i32
    return %c0_i32, %c0_i32_0 : i32, i32
  }
  func.func @transform_10(%arg0: i32) -> (i32, i32) {
    %c0_i32 = arith.constant 0 : i32
    %c0_i32_0 = arith.constant 0 : i32
    %c0_i32_1 = arith.constant 0 : i32
    return %c0_i32, %c0_i32_0 : i32, i32
  }
  func.func @transform_11(%arg0: i32) -> (i32, i32) {
    %c0_i32 = arith.constant 0 : i32
    %c0_i32_0 = arith.constant 0 : i32
    %c0_i32_1 = arith.constant 0 : i32
    return %c0_i32, %c0_i32_0 : i32, i32
  }
  func.func @transform_12(%arg0: i32) -> (i32, i32) {
    %c0_i32 = arith.constant 0 : i32
    %c0_i32_0 = arith.constant 0 : i32
    %c0_i32_1 = arith.constant 0 : i32
    return %c0_i32, %c0_i32_0 : i32, i32
  }
  func.func @transform_13(%arg0: i32) -> (i32, i32) {
    %c0_i32 = arith.constant 0 : i32
    %c0_i32_0 = arith.constant 0 : i32
    %c0_i32_1 = arith.constant 0 : i32
    return %c0_i32, %c0_i32_0 : i32, i32
  }
  func.func @transform_14(%arg0: i32) -> (i32, i32) {
    %c0_i32 = arith.constant 0 : i32
    %c0_i32_0 = arith.constant 0 : i32
    %c0_i32_1 = arith.constant 0 : i32
    return %c0_i32, %c0_i32_0 : i32, i32
  }
  func.func @transform_15(%arg0: i32) -> (i32, i32) {
    %c0_i32 = arith.constant 0 : i32
    %c0_i32_0 = arith.constant 0 : i32
    %c0_i32_1 = arith.constant 0 : i32
    return %c0_i32, %c0_i32_0 : i32, i32
  }
  func.func @transform_16(%arg0: i32) -> (i32, i32) {
    %c0_i32 = arith.constant 0 : i32
    %c0_i32_0 = arith.constant 0 : i32
    %c0_i32_1 = arith.constant 0 : i32
    return %c0_i32, %c0_i32_0 : i32, i32
  }
  func.func @transform_17(%arg0: i32) -> (i32, i32) {
    %c0_i32 = arith.constant 0 : i32
    %c0_i32_0 = arith.constant 0 : i32
    %c0_i32_1 = arith.constant 0 : i32
    return %c0_i32, %c0_i32_0 : i32, i32
  }
  func.func @transform_18(%arg0: i32) -> (i32, i32) {
    %c0_i32 = arith.constant 0 : i32
    %c0_i32_0 = arith.constant 0 : i32
    %c0_i32_1 = arith.constant 0 : i32
    return %c0_i32, %c0_i32_0 : i32, i32
  }
  func.func @transform_19(%arg0: i32) -> (i32, i32) {
    %c0_i32 = arith.constant 0 : i32
    %c0_i32_0 = arith.constant 0 : i32
    %c0_i32_1 = arith.constant 0 : i32
    return %c0_i32, %c0_i32_0 : i32, i32
  }
  func.func @transform_20(%arg0: i32) -> (i32, i32) {
    %c0_i32 = arith.constant 0 : i32
    %c0_i32_0 = arith.constant 0 : i32
    %c0_i32_1 = arith.constant 0 : i32
    return %c0_i32, %c0_i32_0 : i32, i32
  }
  func.func @transform_21(%arg0: i32) -> (i32, i32) {
    %c0_i32 = arith.constant 0 : i32
    %c0_i32_0 = arith.constant 0 : i32
    %c0_i32_1 = arith.constant 0 : i32
    return %c0_i32, %c0_i32_0 : i32, i32
  }
  func.func @transform_22(%arg0: i32) -> (i32, i32) {
    %c0_i32 = arith.constant 0 : i32
    %c0_i32_0 = arith.constant 0 : i32
    %c0_i32_1 = arith.constant 0 : i32
    return %c0_i32, %c0_i32_0 : i32, i32
  }
  func.func @transform_23(%arg0: i32) -> (i32, i32) {
    %c0_i32 = arith.constant 0 : i32
    %c0_i32_0 = arith.constant 0 : i32
    return %arg0, %c0_i32 : i32, i32
  }
}

</mosaic_0001>

<llo_original>
// kernel: feature_modifier_forward.1
$region0: #{feature_modifier_forward.1}
  #allocation0 [shape = 'u32[]', space=smem, size = 0x4, offset = 0x4, fixed_abs, tag = 'smem constant byte address 0x4 - core index']
  #allocation1 [shape = 'u32[144,128]{1,0:T(1,128)}', space=vmem, size = 0x12000, scoped, tag = 'internal scratch']
  #allocation2 [shape = 'f32[160,16]{1,0:T(8,128)}', space=vmem, size = 0x14000, scoped, tag = 'scratch operand']
  #allocation3 [shape = 'bf16[64,1152]{1,0:T(16,128)(2,1)}', space=vmem, size = 0x24000, scoped, tag = 'scratch operand']
  #allocation4 [shape = 'f32[160,128]{1,0:T(8,128)}', space=vmem, size = 0x14000, scoped, tag = 'scratch operand']
  #allocation5 [shape = 'bf16[64,1152]{1,0:T(16,128)(2,1)}', space=vmem, size = 0x24000, scoped, tag = 'scratch operand']
  #allocation6 [shape = 'f32[160,16]{1,0:T(8,128)}', space=vmem, size = 0x14000, scoped, tag = 'scratch operand']
  #allocation7 [shape = 'bf16[64,1152]{1,0:T(16,128)(2,1)}', space=vmem, size = 0x24000, scoped, tag = 'scratch operand']
  %s0 = inlined_call_operand.vmem [shape: bf16[128,64], index: 0, kind: input, shape index: {}]
  %s1 = inlined_call_operand.vmem [shape: bf16[64,16], index: 1, kind: input, shape index: {}]
  %s2 = inlined_call_operand.vmem [shape: f32[1,16], index: 2, kind: input, shape index: {}]
  %s3 = inlined_call_operand.vmem [shape: bf16[1152,16], index: 3, kind: input, shape index: {}]
  %s4 = inlined_call_operand.vmem [shape: f32[1,16], index: 4, kind: input, shape index: {}]
  %s5 = inlined_call_operand.vmem [shape: bf16[16,64], index: 5, kind: input, shape index: {}]
  %s6 = inlined_call_operand.vmem [shape: f32[1,64], index: 6, kind: input, shape index: {}]
  %s7 = inlined_call_operand.vmem [shape: bf16[64,512], index: 7, kind: input, shape index: {}]
  %s8 = inlined_call_operand.vmem [shape: f32[1,512], index: 8, kind: input, shape index: {}]
  %s9 = inlined_call_operand.vmem [shape: bf16[512,128], index: 9, kind: input, shape index: {}]
  %s10 = inlined_call_operand.vmem [shape: f32[1,128], index: 10, kind: input, shape index: {}]
  %s11 = inlined_call_operand.vmem [shape: bf16[1152,128], index: 11, kind: input, shape index: {}]
  %s12 = inlined_call_operand.vmem [shape: f32[1,128], index: 12, kind: input, shape index: {}]
  %s13 = inlined_call_operand.vmem [shape: bf16[128,512], index: 13, kind: input, shape index: {}]
  %s14 = inlined_call_operand.vmem [shape: f32[1,512], index: 14, kind: input, shape index: {}]
  %s15 = inlined_call_operand.vmem [shape: bf16[512,64], index: 15, kind: input, shape index: {}]
  %s16 = inlined_call_operand.vmem [shape: f32[1,64], index: 16, kind: input, shape index: {}]
  %s17 = inlined_call_operand.vmem [shape: bf16[64,16], index: 17, kind: input, shape index: {}]
  %s18 = inlined_call_operand.vmem [shape: f32[1,16], index: 18, kind: input, shape index: {}]
  %s19 = inlined_call_operand.vmem [shape: bf16[1152,16], index: 19, kind: input, shape index: {}]
  %s20 = inlined_call_operand.vmem [shape: f32[1,16], index: 20, kind: input, shape index: {}]
  %s21 = inlined_call_operand.vmem [shape: bf16[16,64], index: 21, kind: input, shape index: {}]
  %s22 = inlined_call_operand.vmem [shape: f32[1,64], index: 22, kind: input, shape index: {}]
  %s23 = inlined_call_operand.hbm [shape: f32[128,64], index: 23, kind: output, shape index: {}]
  %s24 = sld [smem:[#allocation0]]
  $region125: #{feature_modifier_forward.1} parent=0
    _
  %s26 = ssub.s32 1, %s24
  %s27 = scalar_select 0, %s26, %s24
  $region1: #{feature_modifier_forward.1} parent=0
    #allocation8 [shape = 'u8[65536]{0}', space=vmem, size = 0x10000, scoped, tag = 'output window, operand 0']
    #allocation9 [shape = 's32[2]{0}', space=sflag, size = 0x8, scoped, tag = 'scoped memory for feature_modifier_forward.1']
    %28 = vsyncpa [#allocation9], 0
    %s29 = scalar_lea.sflag [#allocation9], 1
    %30 = vsyncpa %s29, 0
    loop: start=0, step=1, limit=4
    $region2: #{feature_modifier_forward.1} parent=1 // loop_pre_header
      _
    $region3: #{feature_modifier_forward.1} parent=1 // loop_header
      %s32 = sphi 0, %s36
      %p33 = scmp.ge.s32.totalorder %s32, 4
      %s42 = sphi 0, %s44
      %s45 = sphi 0, %s42
      %s46 = sphi 0, %s45
      %s62 = sphi 0, %s46
      %s66 = sphi 0, %s66
      %s68 = sphi 0, %s66
      %s69 = sphi 0, %s68
      %s83 = sphi 0, %s69
      %s87 = sphi 0, %s87
      %s89 = sphi 0, %s87
      %s90 = sphi 0, %s89
      %s104 = sphi 0, %s90
      %s108 = sphi 0, %s108
      %s110 = sphi 0, %s108
      %s111 = sphi 0, %s110
      %s125 = sphi 0, %s111
      %s129 = sphi 0, %s129
      %s131 = sphi 0, %s129
      %s132 = sphi 0, %s131
      %s146 = sphi 0, %s132
      %s150 = sphi 0, %s150
      %s152 = sphi 0, %s150
      %s153 = sphi 0, %s152
      %s167 = sphi 0, %s153
      %s171 = sphi 0, %s171
      %s173 = sphi 0, %s171
      %s174 = sphi 0, %s173
      %s188 = sphi 0, %s174
      %s192 = sphi 0, %s192
      %s194 = sphi 0, %s192
      %s195 = sphi 0, %s194
      %s209 = sphi 0, %s195
      %s213 = sphi 0, %s213
      %s215 = sphi 0, %s213
      %s216 = sphi 0, %s215
      %s230 = sphi 0, %s216
      %s234 = sphi 0, %s234
      %s236 = sphi 0, %s234
      %s237 = sphi 0, %s236
      %s251 = sphi 0, %s237
      %s255 = sphi 0, %s255
      %s257 = sphi 0, %s255
      %s258 = sphi 0, %s257
      %s272 = sphi 0, %s258
      %s276 = sphi 0, %s276
      %s278 = sphi 0, %s276
      %s279 = sphi 0, %s278
      %s293 = sphi 0, %s279
      %s297 = sphi 0, %s297
      %s299 = sphi 0, %s297
      %s300 = sphi 0, %s299
      %s314 = sphi 0, %s300
      %s318 = sphi 0, %s318
      %s320 = sphi 0, %s318
      %s321 = sphi 0, %s320
      %s335 = sphi 0, %s321
      %s339 = sphi 0, %s339
      %s341 = sphi 0, %s339
      %s342 = sphi 0, %s341
      %s356 = sphi 0, %s342
      %s360 = sphi 0, %s360
      %s362 = sphi 0, %s360
      %s363 = sphi 0, %s362
      %s377 = sphi 0, %s363
      %s381 = sphi 0, %s381
      %s383 = sphi 0, %s381
      %s384 = sphi 0, %s383
      %s398 = sphi 0, %s384
      %s402 = sphi 0, %s402
      %s404 = sphi 0, %s402
      %s405 = sphi 0, %s404
      %s419 = sphi 0, %s405
      %s423 = sphi 0, %s423
      %s425 = sphi 0, %s423
      %s426 = sphi 0, %s425
      %s440 = sphi 0, %s426
      %s444 = sphi 0, %s444
      %s446 = sphi 0, %s444
      %s447 = sphi 0, %s446
      %s461 = sphi 0, %s447
      %s465 = sphi 0, %s465
      %s467 = sphi 0, %s465
      %s468 = sphi 0, %s467
      %s482 = sphi 0, %s468
      %s486 = sphi 0, %s486
      %s488 = sphi 0, %s486
      %s489 = sphi 0, %s488
      %s503 = sphi 0, %s489
      %s507 = sphi 0, %s507
      %s509 = sphi 0, %s507
      %s510 = sphi 0, %s509
      %s524 = sphi 0, %s510
      %s530 = sphi 0, %s532
      %s533 = sphi 0, %s530
      %s534 = sphi 0, %s533
      %s550 = sphi 0, %s534
    $region4: #{feature_modifier_forward.1} parent=1 // loop_header_branch
      %35 = sbr.rel (%p33) target = $region8
    $region5: #{feature_modifier_forward.1} parent=1 // loop_body
      %s37 = ssub.s32 %s32, 1
      %s38 = ssub.s32 %s32, 2
      %s39 = sadd.s32 %s32, 1
      %s40 = ssub.s32 %s32, %s39
      %p41 = scmp.eq.s32.totalorder %s40, 0
      %s43 = sadd.s32 %s42, 1
      %s44 = scalar_select %p41, %s42, %s43
      %p47 = pneg %p41
      %p48 = scmp.eq.s32.totalorder %s32, 1
      %p49 = por %p47, %p48
      %p50 = scmp.ne.s32.totalorder %s42, %s45
      %p51 = scmp.eq.s32.totalorder %s32, 0
      %p52 = por %p50, %p51
      %p53 = scmp.ne.s32.totalorder %s42, %s45
      %p54 = scmp.eq.s32.totalorder %s37, 1
      %p55 = por %p53, %p54
      %p56 = scmp.ne.s32.totalorder %s45, %s46
      %p57 = scmp.eq.s32.totalorder %s37, 0
      %p58 = por %p56, %p57
      %p59 = scmp.ne.s32.totalorder %s45, %s46
      %p60 = scmp.eq.s32.totalorder %s38, 1
      %p61 = por %p59, %p60
      %p63 = scmp.ne.s32.totalorder %s46, %s62
      %p64 = scmp.eq.s32.totalorder %s38, 0
      %p65 = por %p63, %p64
      %s67 = sadd.s32 %s66, 1
      %p70 = scmp.eq.s32.totalorder %s32, 1
      %p71 = scmp.ne.s32.totalorder %s66, %s68
      %p72 = scmp.eq.s32.totalorder %s32, 0
      %p73 = por %p71, %p72
      %p74 = scmp.ne.s32.totalorder %s66, %s68
      %p75 = scmp.eq.s32.totalorder %s37, 1
      %p76 = por %p74, %p75
      %p77 = scmp.ne.s32.totalorder %s68, %s69
      %p78 = scmp.eq.s32.totalorder %s37, 0
      %p79 = por %p77, %p78
      %p80 = scmp.ne.s32.totalorder %s68, %s69
      %p81 = scmp.eq.s32.totalorder %s38, 1
      %p82 = por %p80, %p81
      %p84 = scmp.ne.s32.totalorder %s69, %s83
      %p85 = scmp.eq.s32.totalorder %s38, 0
      %p86 = por %p84, %p85
      %s88 = sadd.s32 %s87, 1
      %p91 = scmp.eq.s32.totalorder %s32, 1
      %p92 = scmp.ne.s32.totalorder %s87, %s89
      %p93 = scmp.eq.s32.totalorder %s32, 0
      %p94 = por %p92, %p93
      %p95 = scmp.ne.s32.totalorder %s87, %s89
      %p96 = scmp.eq.s32.totalorder %s37, 1
      %p97 = por %p95, %p96
      %p98 = scmp.ne.s32.totalorder %s89, %s90
      %p99 = scmp.eq.s32.totalorder %s37, 0
      %p100 = por %p98, %p99
      %p101 = scmp.ne.s32.totalorder %s89, %s90
      %p102 = scmp.eq.s32.totalorder %s38, 1
      %p103 = por %p101, %p102
      %p105 = scmp.ne.s32.totalorder %s90, %s104
      %p106 = scmp.eq.s32.totalorder %s38, 0
      %p107 = por %p105, %p106
      %s109 = sadd.s32 %s108, 1
      %p112 = scmp.eq.s32.totalorder %s32, 1
      %p113 = scmp.ne.s32.totalorder %s108, %s110
      %p114 = scmp.eq.s32.totalorder %s32, 0
      %p115 = por %p113, %p114
      %p116 = scmp.ne.s32.totalorder %s108, %s110
      %p117 = scmp.eq.s32.totalorder %s37, 1
      %p118 = por %p116, %p117
      %p119 = scmp.ne.s32.totalorder %s110, %s111
      %p120 = scmp.eq.s32.totalorder %s37, 0
      %p121 = por %p119, %p120
      %p122 = scmp.ne.s32.totalorder %s110, %s111
      %p123 = scmp.eq.s32.totalorder %s38, 1
      %p124 = por %p122, %p123
      %p126 = scmp.ne.s32.totalorder %s111, %s125
      %p127 = scmp.eq.s32.totalorder %s38, 0
      %p128 = por %p126, %p127
      %s130 = sadd.s32 %s129, 1
      %p133 = scmp.eq.s32.totalorder %s32, 1
      %p134 = scmp.ne.s32.totalorder %s129, %s131
      %p135 = scmp.eq.s32.totalorder %s32, 0
      %p136 = por %p134, %p135
      %p137 = scmp.ne.s32.totalorder %s129, %s131
      %p138 = scmp.eq.s32.totalorder %s37, 1
      %p139 = por %p137, %p138
      %p140 = scmp.ne.s32.totalorder %s131, %s132
      %p141 = scmp.eq.s32.totalorder %s37, 0
      %p142 = por %p140, %p141
      %p143 = scmp.ne.s32.totalorder %s131, %s132
      %p144 = scmp.eq.s32.totalorder %s38, 1
      %p145 = por %p143, %p144
      %p147 = scmp.ne.s32.totalorder %s132, %s146
      %p148 = scmp.eq.s32.totalorder %s38, 0
      %p149 = por %p147, %p148
      %s151 = sadd.s32 %s150, 1
      %p154 = scmp.eq.s32.totalorder %s32, 1
      %p155 = scmp.ne.s32.totalorder %s150, %s152
      %p156 = scmp.eq.s32.totalorder %s32, 0
      %p157 = por %p155, %p156
      %p158 = scmp.ne.s32.totalorder %s150, %s152
      %p159 = scmp.eq.s32.totalorder %s37, 1
      %p160 = por %p158, %p159
      %p161 = scmp.ne.s32.totalorder %s152, %s153
      %p162 = scmp.eq.s32.totalorder %s37, 0
      %p163 = por %p161, %p162
      %p164 = scmp.ne.s32.totalorder %s152, %s153
      %p165 = scmp.eq.s32.totalorder %s38, 1
      %p166 = por %p164, %p165
      %p168 = scmp.ne.s32.totalorder %s153, %s167
      %p169 = scmp.eq.s32.totalorder %s38, 0
      %p170 = por %p168, %p169
      %s172 = sadd.s32 %s171, 1
      %p175 = scmp.eq.s32.totalorder %s32, 1
      %p176 = scmp.ne.s32.totalorder %s171, %s173
      %p177 = scmp.eq.s32.totalorder %s32, 0
      %p178 = por %p176, %p177
      %p179 = scmp.ne.s32.totalorder %s171, %s173
      %p180 = scmp.eq.s32.totalorder %s37, 1
      %p181 = por %p179, %p180
      %p182 = scmp.ne.s32.totalorder %s173, %s174
      %p183 = scmp.eq.s32.totalorder %s37, 0
      %p184 = por %p182, %p183
      %p185 = scmp.ne.s32.totalorder %s173, %s174
      %p186 = scmp.eq.s32.totalorder %s38, 1
      %p187 = por %p185, %p186
      %p189 = scmp.ne.s32.totalorder %s174, %s188
      %p190 = scmp.eq.s32.totalorder %s38, 0
      %p191 = por %p189, %p190
      %s193 = sadd.s32 %s192, 1
      %p196 = scmp.eq.s32.totalorder %s32, 1
      %p197 = scmp.ne.s32.totalorder %s192, %s194
      %p198 = scmp.eq.s32.totalorder %s32, 0
      %p199 = por %p197, %p198
      %p200 = scmp.ne.s32.totalorder %s192, %s194
      %p201 = scmp.eq.s32.totalorder %s37, 1
      %p202 = por %p200, %p201
      %p203 = scmp.ne.s32.totalorder %s194, %s195
      %p204 = scmp.eq.s32.totalorder %s37, 0
      %p205 = por %p203, %p204
      %p206 = scmp.ne.s32.totalorder %s194, %s195
      %p207 = scmp.eq.s32.totalorder %s38, 1
      %p208 = por %p206, %p207
      %p210 = scmp.ne.s32.totalorder %s195, %s209
      %p211 = scmp.eq.s32.totalorder %s38, 0
      %p212 = por %p210, %p211
      %s214 = sadd.s32 %s213, 1
      %p217 = scmp.eq.s32.totalorder %s32, 1
      %p218 = scmp.ne.s32.totalorder %s213, %s215
      %p219 = scmp.eq.s32.totalorder %s32, 0
      %p220 = por %p218, %p219
      %p221 = scmp.ne.s32.totalorder %s213, %s215
      %p222 = scmp.eq.s32.totalorder %s37, 1
      %p223 = por %p221, %p222
      %p224 = scmp.ne.s32.totalorder %s215, %s216
      %p225 = scmp.eq.s32.totalorder %s37, 0
      %p226 = por %p224, %p225
      %p227 = scmp.ne.s32.totalorder %s215, %s216
      %p228 = scmp.eq.s32.totalorder %s38, 1
      %p229 = por %p227, %p228
      %p231 = scmp.ne.s32.totalorder %s216, %s230
      %p232 = scmp.eq.s32.totalorder %s38, 0
      %p233 = por %p231, %p232
      %s235 = sadd.s32 %s234, 1
      %p238 = scmp.eq.s32.totalorder %s32, 1
      %p239 = scmp.ne.s32.totalorder %s234, %s236
      %p240 = scmp.eq.s32.totalorder %s32, 0
      %p241 = por %p239, %p240
      %p242 = scmp.ne.s32.totalorder %s234, %s236
      %p243 = scmp.eq.s32.totalorder %s37, 1
      %p244 = por %p242, %p243
      %p245 = scmp.ne.s32.totalorder %s236, %s237
      %p246 = scmp.eq.s32.totalorder %s37, 0
      %p247 = por %p245, %p246
      %p248 = scmp.ne.s32.totalorder %s236, %s237
      %p249 = scmp.eq.s32.totalorder %s38, 1
      %p250 = por %p248, %p249
      %p252 = scmp.ne.s32.totalorder %s237, %s251
      %p253 = scmp.eq.s32.totalorder %s38, 0
      %p254 = por %p252, %p253
      %s256 = sadd.s32 %s255, 1
      %p259 = scmp.eq.s32.totalorder %s32, 1
      %p260 = scmp.ne.s32.totalorder %s255, %s257
      %p261 = scmp.eq.s32.totalorder %s32, 0
      %p262 = por %p260, %p261
      %p263 = scmp.ne.s32.totalorder %s255, %s257
      %p264 = scmp.eq.s32.totalorder %s37, 1
      %p265 = por %p263, %p264
      %p266 = scmp.ne.s32.totalorder %s257, %s258
      %p267 = scmp.eq.s32.totalorder %s37, 0
      %p268 = por %p266, %p267
      %p269 = scmp.ne.s32.totalorder %s257, %s258
      %p270 = scmp.eq.s32.totalorder %s38, 1
      %p271 = por %p269, %p270
      %p273 = scmp.ne.s32.totalorder %s258, %s272
      %p274 = scmp.eq.s32.totalorder %s38, 0
      %p275 = por %p273, %p274
      %s277 = sadd.s32 %s276, 1
      %p280 = scmp.eq.s32.totalorder %s32, 1
      %p281 = scmp.ne.s32.totalorder %s276, %s278
      %p282 = scmp.eq.s32.totalorder %s32, 0
      %p283 = por %p281, %p282
      %p284 = scmp.ne.s32.totalorder %s276, %s278
      %p285 = scmp.eq.s32.totalorder %s37, 1
      %p286 = por %p284, %p285
      %p287 = scmp.ne.s32.totalorder %s278, %s279
      %p288 = scmp.eq.s32.totalorder %s37, 0
      %p289 = por %p287, %p288
      %p290 = scmp.ne.s32.totalorder %s278, %s279
      %p291 = scmp.eq.s32.totalorder %s38, 1
      %p292 = por %p290, %p291
      %p294 = scmp.ne.s32.totalorder %s279, %s293
      %p295 = scmp.eq.s32.totalorder %s38, 0
      %p296 = por %p294, %p295
      %s298 = sadd.s32 %s297, 1
      %p301 = scmp.eq.s32.totalorder %s32, 1
      %p302 = scmp.ne.s32.totalorder %s297, %s299
      %p303 = scmp.eq.s32.totalorder %s32, 0
      %p304 = por %p302, %p303
      %p305 = scmp.ne.s32.totalorder %s297, %s299
      %p306 = scmp.eq.s32.totalorder %s37, 1
      %p307 = por %p305, %p306
      %p308 = scmp.ne.s32.totalorder %s299, %s300
      %p309 = scmp.eq.s32.totalorder %s37, 0
      %p310 = por %p308, %p309
      %p311 = scmp.ne.s32.totalorder %s299, %s300
      %p312 = scmp.eq.s32.totalorder %s38, 1
      %p313 = por %p311, %p312
      %p315 = scmp.ne.s32.totalorder %s300, %s314
      %p316 = scmp.eq.s32.totalorder %s38, 0
      %p317 = por %p315, %p316
      %s319 = sadd.s32 %s318, 1
      %p322 = scmp.eq.s32.totalorder %s32, 1
      %p323 = scmp.ne.s32.totalorder %s318, %s320
      %p324 = scmp.eq.s32.totalorder %s32, 0
      %p325 = por %p323, %p324
      %p326 = scmp.ne.s32.totalorder %s318, %s320
      %p327 = scmp.eq.s32.totalorder %s37, 1
      %p328 = por %p326, %p327
      %p329 = scmp.ne.s32.totalorder %s320, %s321
      %p330 = scmp.eq.s32.totalorder %s37, 0
      %p331 = por %p329, %p330
      %p332 = scmp.ne.s32.totalorder %s320, %s321
      %p333 = scmp.eq.s32.totalorder %s38, 1
      %p334 = por %p332, %p333
      %p336 = scmp.ne.s32.totalorder %s321, %s335
      %p337 = scmp.eq.s32.totalorder %s38, 0
      %p338 = por %p336, %p337
      %s340 = sadd.s32 %s339, 1
      %p343 = scmp.eq.s32.totalorder %s32, 1
      %p344 = scmp.ne.s32.totalorder %s339, %s341
      %p345 = scmp.eq.s32.totalorder %s32, 0
      %p346 = por %p344, %p345
      %p347 = scmp.ne.s32.totalorder %s339, %s341
      %p348 = scmp.eq.s32.totalorder %s37, 1
      %p349 = por %p347, %p348
      %p350 = scmp.ne.s32.totalorder %s341, %s342
      %p351 = scmp.eq.s32.totalorder %s37, 0
      %p352 = por %p350, %p351
      %p353 = scmp.ne.s32.totalorder %s341, %s342
      %p354 = scmp.eq.s32.totalorder %s38, 1
      %p355 = por %p353, %p354
      %p357 = scmp.ne.s32.totalorder %s342, %s356
      %p358 = scmp.eq.s32.totalorder %s38, 0
      %p359 = por %p357, %p358
      %s361 = sadd.s32 %s360, 1
      %p364 = scmp.eq.s32.totalorder %s32, 1
      %p365 = scmp.ne.s32.totalorder %s360, %s362
      %p366 = scmp.eq.s32.totalorder %s32, 0
      %p367 = por %p365, %p366
      %p368 = scmp.ne.s32.totalorder %s360, %s362
      %p369 = scmp.eq.s32.totalorder %s37, 1
      %p370 = por %p368, %p369
      %p371 = scmp.ne.s32.totalorder %s362, %s363
      %p372 = scmp.eq.s32.totalorder %s37, 0
      %p373 = por %p371, %p372
      %p374 = scmp.ne.s32.totalorder %s362, %s363
      %p375 = scmp.eq.s32.totalorder %s38, 1
      %p376 = por %p374, %p375
      %p378 = scmp.ne.s32.totalorder %s363, %s377
      %p379 = scmp.eq.s32.totalorder %s38, 0
      %p380 = por %p378, %p379
      %s382 = sadd.s32 %s381, 1
      %p385 = scmp.eq.s32.totalorder %s32, 1
      %p386 = scmp.ne.s32.totalorder %s381, %s383
      %p387 = scmp.eq.s32.totalorder %s32, 0
      %p388 = por %p386, %p387
      %p389 = scmp.ne.s32.totalorder %s381, %s383
      %p390 = scmp.eq.s32.totalorder %s37, 1
      %p391 = por %p389, %p390
      %p392 = scmp.ne.s32.totalorder %s383, %s384
      %p393 = scmp.eq.s32.totalorder %s37, 0
      %p394 = por %p392, %p393
      %p395 = scmp.ne.s32.totalorder %s383, %s384
      %p396 = scmp.eq.s32.totalorder %s38, 1
      %p397 = por %p395, %p396
      %p399 = scmp.ne.s32.totalorder %s384, %s398
      %p400 = scmp.eq.s32.totalorder %s38, 0
      %p401 = por %p399, %p400
      %s403 = sadd.s32 %s402, 1
      %p406 = scmp.eq.s32.totalorder %s32, 1
      %p407 = scmp.ne.s32.totalorder %s402, %s404
      %p408 = scmp.eq.s32.totalorder %s32, 0
      %p409 = por %p407, %p408
      %p410 = scmp.ne.s32.totalorder %s402, %s404
      %p411 = scmp.eq.s32.totalorder %s37, 1
      %p412 = por %p410, %p411
      %p413 = scmp.ne.s32.totalorder %s404, %s405
      %p414 = scmp.eq.s32.totalorder %s37, 0
      %p415 = por %p413, %p414
      %p416 = scmp.ne.s32.totalorder %s404, %s405
      %p417 = scmp.eq.s32.totalorder %s38, 1
      %p418 = por %p416, %p417
      %p420 = scmp.ne.s32.totalorder %s405, %s419
      %p421 = scmp.eq.s32.totalorder %s38, 0
      %p422 = por %p420, %p421
      %s424 = sadd.s32 %s423, 1
      %p427 = scmp.eq.s32.totalorder %s32, 1
      %p428 = scmp.ne.s32.totalorder %s423, %s425
      %p429 = scmp.eq.s32.totalorder %s32, 0
      %p430 = por %p428, %p429
      %p431 = scmp.ne.s32.totalorder %s423, %s425
      %p432 = scmp.eq.s32.totalorder %s37, 1
      %p433 = por %p431, %p432
      %p434 = scmp.ne.s32.totalorder %s425, %s426
      %p435 = scmp.eq.s32.totalorder %s37, 0
      %p436 = por %p434, %p435
      %p437 = scmp.ne.s32.totalorder %s425, %s426
      %p438 = scmp.eq.s32.totalorder %s38, 1
      %p439 = por %p437, %p438
      %p441 = scmp.ne.s32.totalorder %s426, %s440
      %p442 = scmp.eq.s32.totalorder %s38, 0
      %p443 = por %p441, %p442
      %s445 = sadd.s32 %s444, 1
      %p448 = scmp.eq.s32.totalorder %s32, 1
      %p449 = scmp.ne.s32.totalorder %s444, %s446
      %p450 = scmp.eq.s32.totalorder %s32, 0
      %p451 = por %p449, %p450
      %p452 = scmp.ne.s32.totalorder %s444, %s446
      %p453 = scmp.eq.s32.totalorder %s37, 1
      %p454 = por %p452, %p453
      %p455 = scmp.ne.s32.totalorder %s446, %s447
      %p456 = scmp.eq.s32.totalorder %s37, 0
      %p457 = por %p455, %p456
      %p458 = scmp.ne.s32.totalorder %s446, %s447
      %p459 = scmp.eq.s32.totalorder %s38, 1
      %p460 = por %p458, %p459
      %p462 = scmp.ne.s32.totalorder %s447, %s461
      %p463 = scmp.eq.s32.totalorder %s38, 0
      %p464 = por %p462, %p463
      %s466 = sadd.s32 %s465, 1
      %p469 = scmp.eq.s32.totalorder %s32, 1
      %p470 = scmp.ne.s32.totalorder %s465, %s467
      %p471 = scmp.eq.s32.totalorder %s32, 0
      %p472 = por %p470, %p471
      %p473 = scmp.ne.s32.totalorder %s465, %s467
      %p474 = scmp.eq.s32.totalorder %s37, 1
      %p475 = por %p473, %p474
      %p476 = scmp.ne.s32.totalorder %s467, %s468
      %p477 = scmp.eq.s32.totalorder %s37, 0
      %p478 = por %p476, %p477
      %p479 = scmp.ne.s32.totalorder %s467, %s468
      %p480 = scmp.eq.s32.totalorder %s38, 1
      %p481 = por %p479, %p480
      %p483 = scmp.ne.s32.totalorder %s468, %s482
      %p484 = scmp.eq.s32.totalorder %s38, 0
      %p485 = por %p483, %p484
      %s487 = sadd.s32 %s486, 1
      %p490 = scmp.eq.s32.totalorder %s32, 1
      %p491 = scmp.ne.s32.totalorder %s486, %s488
      %p492 = scmp.eq.s32.totalorder %s32, 0
      %p493 = por %p491, %p492
      %p494 = scmp.ne.s32.totalorder %s486, %s488
      %p495 = scmp.eq.s32.totalorder %s37, 1
      %p496 = por %p494, %p495
      %p497 = scmp.ne.s32.totalorder %s488, %s489
      %p498 = scmp.eq.s32.totalorder %s37, 0
      %p499 = por %p497, %p498
      %p500 = scmp.ne.s32.totalorder %s488, %s489
      %p501 = scmp.eq.s32.totalorder %s38, 1
      %p502 = por %p500, %p501
      %p504 = scmp.ne.s32.totalorder %s489, %s503
      %p505 = scmp.eq.s32.totalorder %s38, 0
      %p506 = por %p504, %p505
      %s508 = sadd.s32 %s507, 1
      %p511 = scmp.eq.s32.totalorder %s32, 1
      %p512 = scmp.ne.s32.totalorder %s507, %s509
      %p513 = scmp.eq.s32.totalorder %s32, 0
      %p514 = por %p512, %p513
      %p515 = scmp.ne.s32.totalorder %s507, %s509
      %p516 = scmp.eq.s32.totalorder %s37, 1
      %p517 = por %p515, %p516
      %p518 = scmp.ne.s32.totalorder %s509, %s510
      %p519 = scmp.eq.s32.totalorder %s37, 0
      %p520 = por %p518, %p519
      %p521 = scmp.ne.s32.totalorder %s509, %s510
      %p522 = scmp.eq.s32.totalorder %s38, 1
      %p523 = por %p521, %p522
      %p525 = scmp.ne.s32.totalorder %s510, %s524
      %p526 = scmp.eq.s32.totalorder %s38, 0
      %p527 = por %p525, %p526
      %s528 = ssub.s32 %s32, %s39
      %p529 = scmp.eq.s32.totalorder %s528, 0
      %s531 = sadd.s32 %s530, 1
      %s532 = scalar_select %p529, %s530, %s531
      %p535 = pneg %p529
      %p536 = scmp.eq.s32.totalorder %s32, 1
      %p537 = por %p535, %p536
      %p538 = scmp.ne.s32.totalorder %s530, %s533
      %p539 = scmp.eq.s32.totalorder %s32, 0
      %p540 = por %p538, %p539
      %p541 = scmp.ne.s32.totalorder %s530, %s533
      %p542 = scmp.eq.s32.totalorder %s37, 1
      %p543 = por %p541, %p542
      %p544 = scmp.ne.s32.totalorder %s533, %s534
      %p545 = scmp.eq.s32.totalorder %s37, 0
      %p546 = por %p544, %p545
      %p547 = scmp.ne.s32.totalorder %s533, %s534
      %p548 = scmp.eq.s32.totalorder %s38, 1
      %p549 = por %p547, %p548
      %p551 = scmp.ne.s32.totalorder %s534, %s550
      %p552 = scmp.eq.s32.totalorder %s38, 0
      %p553 = por %p551, %p552
      %p554 = scmp.le.s32.totalorder 1, %s32
      %p555 = scmp.lt.s32.totalorder %s32, 3
      %p556 = pnand %p554, %p555
      %p557 = pneg %p556
      // Predicated region
      $region9: #{feature_modifier_forward.1} parent=5 // pred_check
        _
      $region10: #{feature_modifier_forward.1} parent=5 // pred_check_branch
        %559 = sbr.rel (%p556) target = $region12
      $region11: #{feature_modifier_forward.1} parent=5 // pred_region
        %s560 = ssub.s32 %s32, 1
        // Predicated region
        $region13: #{feature_modifier_forward.1} parent=11 // pred_check
          %p561 = pneg %p79
        $region14: #{feature_modifier_forward.1} parent=11 // pred_check_branch
          %563 = sbr.rel (%p561) target = $region16
        $region15: #{feature_modifier_forward.1} parent=11 // pred_region
          _
        $region16: #{feature_modifier_forward.1} parent=11 // pred_fallthru
          _
        // Predicated region
        $region17: #{feature_modifier_forward.1} parent=11 // pred_check
          %p564 = pneg %p100
        $region18: #{feature_modifier_forward.1} parent=11 // pred_check_branch
          %566 = sbr.rel (%p564) target = $region20
        $region19: #{feature_modifier_forward.1} parent=11 // pred_region
          _
        $region20: #{feature_modifier_forward.1} parent=11 // pred_fallthru
          _
        // Predicated region
        $region21: #{feature_modifier_forward.1} parent=11 // pred_check
          %p567 = pneg %p121
        $region22: #{feature_modifier_forward.1} parent=11 // pred_check_branch
          %569 = sbr.rel (%p567) target = $region24
        $region23: #{feature_modifier_forward.1} parent=11 // pred_region
          _
        $region24: #{feature_modifier_forward.1} parent=11 // pred_fallthru
          _
        // Predicated region
        $region25: #{feature_modifier_forward.1} parent=11 // pred_check
          %p570 = pneg %p142
        $region26: #{feature_modifier_forward.1} parent=11 // pred_check_branch
          %572 = sbr.rel (%p570) target = $region28
        $region27: #{feature_modifier_forward.1} parent=11 // pred_region
          _
        $region28: #{feature_modifier_forward.1} parent=11 // pred_fallthru
          _
        // Predicated region
        $region29: #{feature_modifier_forward.1} parent=11 // pred_check
          %p573 = pneg %p163
        $region30: #{feature_modifier_forward.1} parent=11 // pred_check_branch
          %575 = sbr.rel (%p573) target = $region32
        $region31: #{feature_modifier_forward.1} parent=11 // pred_region
          _
        $region32: #{feature_modifier_forward.1} parent=11 // pred_fallthru
          _
        // Predicated region
        $region33: #{feature_modifier_forward.1} parent=11 // pred_check
          %p576 = pneg %p184
        $region34: #{feature_modifier_forward.1} parent=11 // pred_check_branch
          %578 = sbr.rel (%p576) target = $region36
        $region35: #{feature_modifier_forward.1} parent=11 // pred_region
          _
        $region36: #{feature_modifier_forward.1} parent=11 // pred_fallthru
          _
        // Predicated region
        $region37: #{feature_modifier_forward.1} parent=11 // pred_check
          %p579 = pneg %p205
        $region38: #{feature_modifier_forward.1} parent=11 // pred_check_branch
          %581 = sbr.rel (%p579) target = $region40
        $region39: #{feature_modifier_forward.1} parent=11 // pred_region
          _
        $region40: #{feature_modifier_forward.1} parent=11 // pred_fallthru
          _
        // Predicated region
        $region41: #{feature_modifier_forward.1} parent=11 // pred_check
          %p582 = pneg %p226
        $region42: #{feature_modifier_forward.1} parent=11 // pred_check_branch
          %584 = sbr.rel (%p582) target = $region44
        $region43: #{feature_modifier_forward.1} parent=11 // pred_region
          _
        $region44: #{feature_modifier_forward.1} parent=11 // pred_fallthru
          _
        // Predicated region
        $region45: #{feature_modifier_forward.1} parent=11 // pred_check
          %p585 = pneg %p247
        $region46: #{feature_modifier_forward.1} parent=11 // pred_check_branch
          %587 = sbr.rel (%p585) target = $region48
        $region47: #{feature_modifier_forward.1} parent=11 // pred_region
          _
        $region48: #{feature_modifier_forward.1} parent=11 // pred_fallthru
          _
        // Predicated region
        $region49: #{feature_modifier_forward.1} parent=11 // pred_check
          %p588 = pneg %p268
        $region50: #{feature_modifier_forward.1} parent=11 // pred_check_branch
          %590 = sbr.rel (%p588) target = $region52
        $region51: #{feature_modifier_forward.1} parent=11 // pred_region
          _
        $region52: #{feature_modifier_forward.1} parent=11 // pred_fallthru
          _
        // Predicated region
        $region53: #{feature_modifier_forward.1} parent=11 // pred_check
          %p591 = pneg %p289
        $region54: #{feature_modifier_forward.1} parent=11 // pred_check_branch
          %593 = sbr.rel (%p591) target = $region56
        $region55: #{feature_modifier_forward.1} parent=11 // pred_region
          _
        $region56: #{feature_modifier_forward.1} parent=11 // pred_fallthru
          _
        // Predicated region
        $region57: #{feature_modifier_forward.1} parent=11 // pred_check
          %p594 = pneg %p310
        $region58: #{feature_modifier_forward.1} parent=11 // pred_check_branch
          %596 = sbr.rel (%p594) target = $region60
        $region59: #{feature_modifier_forward.1} parent=11 // pred_region
          _
        $region60: #{feature_modifier_forward.1} parent=11 // pred_fallthru
          _
        // Predicated region
        $region61: #{feature_modifier_forward.1} parent=11 // pred_check
          %p597 = pneg %p331
        $region62: #{feature_modifier_forward.1} parent=11 // pred_check_branch
          %599 = sbr.rel (%p597) target = $region64
        $region63: #{feature_modifier_forward.1} parent=11 // pred_region
          _
        $region64: #{feature_modifier_forward.1} parent=11 // pred_fallthru
          _
        // Predicated region
        $region65: #{feature_modifier_forward.1} parent=11 // pred_check
          %p600 = pneg %p352
        $region66: #{feature_modifier_forward.1} parent=11 // pred_check_branch
          %602 = sbr.rel (%p600) target = $region68
        $region67: #{feature_modifier_forward.1} parent=11 // pred_region
          _
        $region68: #{feature_modifier_forward.1} parent=11 // pred_fallthru
          _
        // Predicated region
        $region69: #{feature_modifier_forward.1} parent=11 // pred_check
          %p603 = pneg %p373
        $region70: #{feature_modifier_forward.1} parent=11 // pred_check_branch
          %605 = sbr.rel (%p603) target = $region72
        $region71: #{feature_modifier_forward.1} parent=11 // pred_region
          _
        $region72: #{feature_modifier_forward.1} parent=11 // pred_fallthru
          _
        // Predicated region
        $region73: #{feature_modifier_forward.1} parent=11 // pred_check
          %p606 = pneg %p394
        $region74: #{feature_modifier_forward.1} parent=11 // pred_check_branch
          %608 = sbr.rel (%p606) target = $region76
        $region75: #{feature_modifier_forward.1} parent=11 // pred_region
          _
        $region76: #{feature_modifier_forward.1} parent=11 // pred_fallthru
          _
        // Predicated region
        $region77: #{feature_modifier_forward.1} parent=11 // pred_check
          %p609 = pneg %p415
        $region78: #{feature_modifier_forward.1} parent=11 // pred_check_branch
          %611 = sbr.rel (%p609) target = $region80
        $region79: #{feature_modifier_forward.1} parent=11 // pred_region
          _
        $region80: #{feature_modifier_forward.1} parent=11 // pred_fallthru
          _
        // Predicated region
        $region81: #{feature_modifier_forward.1} parent=11 // pred_check
          %p612 = pneg %p436
        $region82: #{feature_modifier_forward.1} parent=11 // pred_check_branch
          %614 = sbr.rel (%p612) target = $region84
        $region83: #{feature_modifier_forward.1} parent=11 // pred_region
          _
        $region84: #{feature_modifier_forward.1} parent=11 // pred_fallthru
          _
        // Predicated region
        $region85: #{feature_modifier_forward.1} parent=11 // pred_check
          %p615 = pneg %p457
        $region86: #{feature_modifier_forward.1} parent=11 // pred_check_branch
          %617 = sbr.rel (%p615) target = $region88
        $region87: #{feature_modifier_forward.1} parent=11 // pred_region
          _
        $region88: #{feature_modifier_forward.1} parent=11 // pred_fallthru
          _
        // Predicated region
        $region89: #{feature_modifier_forward.1} parent=11 // pred_check
          %p618 = pneg %p478
        $region90: #{feature_modifier_forward.1} parent=11 // pred_check_branch
          %620 = sbr.rel (%p618) target = $region92
        $region91: #{feature_modifier_forward.1} parent=11 // pred_region
          _
        $region92: #{feature_modifier_forward.1} parent=11 // pred_fallthru
          _
        // Predicated region
        $region93: #{feature_modifier_forward.1} parent=11 // pred_check
          %p621 = pneg %p499
        $region94: #{feature_modifier_forward.1} parent=11 // pred_check_branch
          %623 = sbr.rel (%p621) target = $region96
        $region95: #{feature_modifier_forward.1} parent=11 // pred_region
          _
        $region96: #{feature_modifier_forward.1} parent=11 // pred_fallthru
          _
        // Predicated region
        $region97: #{feature_modifier_forward.1} parent=11 // pred_check
          %p624 = pneg %p520
        $region98: #{feature_modifier_forward.1} parent=11 // pred_check_branch
          %626 = sbr.rel (%p624) target = $region100
        $region99: #{feature_modifier_forward.1} parent=11 // pred_region
          _
        $region100: #{feature_modifier_forward.1} parent=11 // pred_fallthru
          _
      $region12: #{feature_modifier_forward.1} parent=5 // pred_fallthru
        _
      %p627 = scmp.lt.s32.totalorder %s32, 2
      // Predicated region
      $region101: #{feature_modifier_forward.1} parent=5 // pred_check
        %p628 = pneg %p627
      $region102: #{feature_modifier_forward.1} parent=5 // pred_check_branch
        %630 = sbr.rel (%p628) target = $region104
      $region103: #{feature_modifier_forward.1} parent=5 // pred_region
        // Predicated region
        $region105: #{feature_modifier_forward.1} parent=103 // pred_check
          %p631 = pneg %p52
        $region106: #{feature_modifier_forward.1} parent=103 // pred_check_branch
          %633 = sbr.rel (%p631) target = $region108
        $region107: #{feature_modifier_forward.1} parent=103 // pred_region
          %s634 = smul.u32 8, %s32
          %p635 = scmp.lt.s32.totalorder %s634, 15
          %s636 = scalar_select %p635, %s634, 15
          %s637 = smul.addr %s636, 4
          %s638 = scalar_lea.vmem %s0, %s637
          %s639 = smul.u32 8, %s32
        $region108: #{feature_modifier_forward.1} parent=103 // pred_fallthru
          _
      $region104: #{feature_modifier_forward.1} parent=5 // pred_fallthru
        _
      %p640 = scmp.le.s32.totalorder 1, %s32
      %p641 = scmp.lt.s32.totalorder %s32, 3
      %p642 = pnand %p640, %p641
      %p643 = pneg %p642
      // Predicated region
      $region109: #{feature_modifier_forward.1} parent=5 // pred_check
        _
      $region110: #{feature_modifier_forward.1} parent=5 // pred_check_branch
        %645 = sbr.rel (%p642) target = $region112
      $region111: #{feature_modifier_forward.1} parent=5 // pred_region
        %s646 = ssub.s32 %s32, 1
        %s647 = smul.u32 8, %s37
        %p648 = scmp.lt.s32.totalorder %s647, 15
        %s649 = scalar_select %p648, %s647, 15
        %s650 = smul.addr %s649, 4
        %s651 = scalar_lea.vmem %s0, %s650
        %p652 = pneg %p58
        %p653 = pneg %p55
        %p654 = pneg %p79
        %p655 = pneg %p76
        %p656 = pneg %p100
        %p657 = pneg %p97
        %p658 = pneg %p121
        %p659 = pneg %p118
        %p660 = pneg %p142
        %p661 = pneg %p139
        %p662 = pneg %p163
        %p663 = pneg %p160
        %p664 = pneg %p184
        %p665 = pneg %p181
        %p666 = pneg %p205
        %p667 = pneg %p202
        %p668 = pneg %p226
        %p669 = pneg %p223
        %p670 = pneg %p247
        %p671 = pneg %p244
        %p672 = pneg %p268
        %p673 = pneg %p265
        %p674 = pneg %p289
        %p675 = pneg %p286
        %p676 = pneg %p310
        %p677 = pneg %p307
        %p678 = pneg %p331
        %p679 = pneg %p328
        %p680 = pneg %p352
        %p681 = pneg %p349
        %p682 = pneg %p373
        %p683 = pneg %p370
        %p684 = pneg %p394
        %p685 = pneg %p391
        %p686 = pneg %p415
        %p687 = pneg %p412
        %p688 = pneg %p436
        %p689 = pneg %p433
        %p690 = pneg %p457
        %p691 = pneg %p454
        %p692 = pneg %p478
        %p693 = pneg %p475
        %p694 = pneg %p499
        %p695 = pneg %p496
        %p696 = pneg %p520
        %p697 = pneg %p517
        %p698 = pneg %p546
        %p699 = pneg %p543
        %s700 = sand.u32 %s533, 1
        %s701 = scalar_lea.sflag [#allocation9], %s700
        %s702 = sand.u32 %s533, 1
        %s703 = smul.addr %s702, 64
        %s704 = scalar_lea.vmem [#allocation8], %s703
        %s705 = smul.u32 8, %s37
        %p706 = scmp.lt.s32.totalorder %s705, 15
        %s707 = scalar_select %p706, %s705, 15
        %s708 = smul.addr %s707, 4
        %s709 = scalar_lea.vmem %s0, %s708
        %s710 = smul.u32 8, %s37
        %s711 = smul.u32 8, %s37
        %vm713 = vcmask 130048
        %714 = vst.msk [vmem:[#allocation2] sm:$0xff] %vm713, 0.0
        %715 = vst.msk [vmem:[#allocation2 + $0x8] sm:$0xff] %vm713, 0.0
        %716 = vst.msk [vmem:[#allocation2 + $0x10] sm:$0xff] %vm713, 0.0
        %717 = vst.msk [vmem:[#allocation2 + $0x18] sm:$0xff] %vm713, 0.0
        %718 = vst.msk [vmem:[#allocation2 + $0x20] sm:$0xff] %vm713, 0.0
        %719 = vst.msk [vmem:[#allocation2 + $0x28] sm:$0xff] %vm713, 0.0
        %720 = vst.msk [vmem:[#allocation2 + $0x70] sm:$0xff] %vm713, 0.0
        %721 = vst.msk [vmem:[#allocation2 + $0x78] sm:$0xff] %vm713, 0.0
        %722 = vst.msk [vmem:[#allocation2 + $0x80] sm:$0xff] %vm713, 0.0
        %723 = vst.msk [vmem:[#allocation2 + $0x88] sm:$0xff] %vm713, 0.0
        %724 = vst.msk [vmem:[#allocation2 + $0x90] sm:$0xff] %vm713, 0.0
        %725 = vst.msk [vmem:[#allocation2 + $0x98] sm:$0xff] %vm713, 0.0
        %726 = vst [vmem:[#allocation4] sm:$0xff] 0.0
        %727 = vst [vmem:[#allocation4 + $0x8] sm:$0xff] 0.0
        %728 = vst [vmem:[#allocation4 + $0x10] sm:$0xff] 0.0
        %729 = vst [vmem:[#allocation4 + $0x18] sm:$0xff] 0.0
        %730 = vst [vmem:[#allocation4 + $0x20] sm:$0xff] 0.0
        %731 = vst [vmem:[#allocation4 + $0x28] sm:$0xff] 0.0
        %732 = vst [vmem:[#allocation4 + $0x70] sm:$0xff] 0.0
        %733 = vst [vmem:[#allocation4 + $0x78] sm:$0xff] 0.0
        %734 = vst [vmem:[#allocation4 + $0x80] sm:$0xff] 0.0
        %735 = vst [vmem:[#allocation4 + $0x88] sm:$0xff] 0.0
        %736 = vst [vmem:[#allocation4 + $0x90] sm:$0xff] 0.0
        %737 = vst [vmem:[#allocation4 + $0x98] sm:$0xff] 0.0
        %738 = vst.msk [vmem:[#allocation6] sm:$0xff] %vm713, 0.0
        %739 = vst.msk [vmem:[#allocation6 + $0x8] sm:$0xff] %vm713, 0.0
        %740 = vst.msk [vmem:[#allocation6 + $0x10] sm:$0xff] %vm713, 0.0
        %741 = vst.msk [vmem:[#allocation6 + $0x18] sm:$0xff] %vm713, 0.0
        %742 = vst.msk [vmem:[#allocation6 + $0x20] sm:$0xff] %vm713, 0.0
        %743 = vst.msk [vmem:[#allocation6 + $0x28] sm:$0xff] %vm713, 0.0
        %744 = vst.msk [vmem:[#allocation6 + $0x70] sm:$0xff] %vm713, 0.0
        %745 = vst.msk [vmem:[#allocation6 + $0x78] sm:$0xff] %vm713, 0.0
        %746 = vst.msk [vmem:[#allocation6 + $0x80] sm:$0xff] %vm713, 0.0
        %747 = vst.msk [vmem:[#allocation6 + $0x88] sm:$0xff] %vm713, 0.0
        %748 = vst.msk [vmem:[#allocation6 + $0x90] sm:$0xff] %vm713, 0.0
        %749 = vst.msk [vmem:[#allocation6 + $0x98] sm:$0xff] %vm713, 0.0
        %750 = vst [vmem:[#allocation3] sm:$0xff] 0
        %751 = vst [vmem:[#allocation3 + $0x8] sm:$0xff] 0
        %752 = vst [vmem:[#allocation3 + $0x10] sm:$0xff] 0
        %753 = vst [vmem:[#allocation3 + $0x18] sm:$0xff] 0
        %754 = vst [vmem:[#allocation3 + $0x20] sm:$0xff] 0
        %755 = vst [vmem:[#allocation3 + $0x28] sm:$0xff] 0
        %756 = vst [vmem:[#allocation3 + $0x30] sm:$0xff] 0
        %757 = vst [vmem:[#allocation3 + $0x38] sm:$0xff] 0
        %758 = vst [vmem:[#allocation3 + $0x40] sm:$0xff] 0
        %759 = vst [vmem:[#allocation3 + $0x48] sm:$0xff] 0
        %760 = vst [vmem:[#allocation3 + $0x50] sm:$0xff] 0
        %761 = vst [vmem:[#allocation3 + $0x58] sm:$0xff] 0
        %762 = vst [vmem:[#allocation3 + $0x60] sm:$0xff] 0
        %763 = vst [vmem:[#allocation3 + $0x68] sm:$0xff] 0
        %764 = vst [vmem:[#allocation3 + $0x70] sm:$0xff] 0
        %765 = vst [vmem:[#allocation3 + $0x78] sm:$0xff] 0
        %766 = vst [vmem:[#allocation3 + $0x80] sm:$0xff] 0
        %767 = vst [vmem:[#allocation3 + $0x88] sm:$0xff] 0
        %768 = vst [vmem:[#allocation3 + $0x90] sm:$0xff] 0
        %769 = vst [vmem:[#allocation3 + $0x98] sm:$0xff] 0
        %770 = vst [vmem:[#allocation3 + $0xa0] sm:$0xff] 0
        %771 = vst [vmem:[#allocation3 + $0xa8] sm:$0xff] 0
        %772 = vst [vmem:[#allocation3 + $0xb0] sm:$0xff] 0
        %773 = vst [vmem:[#allocation3 + $0xb8] sm:$0xff] 0
        %774 = vst [vmem:[#allocation3 + $0xc0] sm:$0xff] 0
        %775 = vst [vmem:[#allocation3 + $0xc8] sm:$0xff] 0
        %776 = vst [vmem:[#allocation3 + $0xd0] sm:$0xff] 0
        %777 = vst [vmem:[#allocation3 + $0xd8] sm:$0xff] 0
        %778 = vst [vmem:[#allocation3 + $0xe0] sm:$0xff] 0
        %779 = vst [vmem:[#allocation3 + $0xe8] sm:$0xff] 0
        %780 = vst [vmem:[#allocation3 + $0xf0] sm:$0xff] 0
        %781 = vst [vmem:[#allocation3 + $0xf8] sm:$0xff] 0
        %782 = vst [vmem:[#allocation3 + $0x100] sm:$0xff] 0
        %783 = vst [vmem:[#allocation3 + $0x108] sm:$0xff] 0
        %784 = vst [vmem:[#allocation3 + $0x110] sm:$0xff] 0
        %785 = vst [vmem:[#allocation3 + $0x118] sm:$0xff] 0
        %786 = vst [vmem:[#allocation7] sm:$0xff] 0
        %787 = vst [vmem:[#allocation7 + $0x8] sm:$0xff] 0
        %788 = vst [vmem:[#allocation7 + $0x10] sm:$0xff] 0
        %789 = vst [vmem:[#allocation7 + $0x18] sm:$0xff] 0
        %790 = vst [vmem:[#allocation7 + $0x20] sm:$0xff] 0
        %791 = vst [vmem:[#allocation7 + $0x28] sm:$0xff] 0
        %792 = vst [vmem:[#allocation7 + $0x30] sm:$0xff] 0
        %793 = vst [vmem:[#allocation7 + $0x38] sm:$0xff] 0
        %794 = vst [vmem:[#allocation7 + $0x40] sm:$0xff] 0
        %795 = vst [vmem:[#allocation7 + $0x48] sm:$0xff] 0
        %796 = vst [vmem:[#allocation7 + $0x50] sm:$0xff] 0
        %797 = vst [vmem:[#allocation7 + $0x58] sm:$0xff] 0
        %798 = vst [vmem:[#allocation7 + $0x60] sm:$0xff] 0
        %799 = vst [vmem:[#allocation7 + $0x68] sm:$0xff] 0
        %800 = vst [vmem:[#allocation7 + $0x70] sm:$0xff] 0
        %801 = vst [vmem:[#allocation7 + $0x78] sm:$0xff] 0
        %802 = vst [vmem:[#allocation7 + $0x80] sm:$0xff] 0
        %803 = vst [vmem:[#allocation7 + $0x88] sm:$0xff] 0
        %804 = vst [vmem:[#allocation7 + $0x90] sm:$0xff] 0
        %805 = vst [vmem:[#allocation7 + $0x98] sm:$0xff] 0
        %806 = vst [vmem:[#allocation7 + $0xa0] sm:$0xff] 0
        %807 = vst [vmem:[#allocation7 + $0xa8] sm:$0xff] 0
        %808 = vst [vmem:[#allocation7 + $0xb0] sm:$0xff] 0
        %809 = vst [vmem:[#allocation7 + $0xb8] sm:$0xff] 0
        %810 = vst [vmem:[#allocation7 + $0xc0] sm:$0xff] 0
        %811 = vst [vmem:[#allocation7 + $0xc8] sm:$0xff] 0
        %812 = vst [vmem:[#allocation7 + $0xd0] sm:$0xff] 0
        %813 = vst [vmem:[#allocation7 + $0xd8] sm:$0xff] 0
        %814 = vst [vmem:[#allocation7 + $0xe0] sm:$0xff] 0
        %815 = vst [vmem:[#allocation7 + $0xe8] sm:$0xff] 0
        %816 = vst [vmem:[#allocation7 + $0xf0] sm:$0xff] 0
        %817 = vst [vmem:[#allocation7 + $0xf8] sm:$0xff] 0
        %818 = vst [vmem:[#allocation7 + $0x100] sm:$0xff] 0
        %819 = vst [vmem:[#allocation7 + $0x108] sm:$0xff] 0
        %820 = vst [vmem:[#allocation7 + $0x110] sm:$0xff] 0
        %821 = vst [vmem:[#allocation7 + $0x118] sm:$0xff] 0
        %v822 = vld [vmem:[%s709] sm:$0xf]
        %v823 = vld [vmem:[%s709 + $0x4] sm:$0xf]
        %v824 = vld [vmem:[%s709 + $0x8] sm:$0xf]
        %v825 = vld [vmem:[%s709 + $0xc] sm:$0xf]
        %v826 = vld [vmem:[%s709 + $0x10] sm:$0xf]
        %v827 = vld [vmem:[%s709 + $0x14] sm:$0xf]
        %v828 = vld [vmem:[%s709 + $0x18] sm:$0xf]
        %v829 = vld [vmem:[%s709 + $0x1c] sm:$0xf]
        %v830 = vld [vmem:[%s1] sm:$0xf]
        %v831 = vld [vmem:[%s1 + $0x4] sm:$0xf]
        %v832 = vld [vmem:[%s1 + $0x8] sm:$0xf]
        %v833 = vld [vmem:[%s1 + $0xc] sm:$0xf]
        %v834 = vld [vmem:[%s1 + $0x10] sm:$0xf]
        %v835 = vld [vmem:[%s1 + $0x14] sm:$0xf]
        %v836 = vld [vmem:[%s1 + $0x18] sm:$0xf]
        %v837 = vld [vmem:[%s1 + $0x1c] sm:$0xf]
        %v838 = vld [vmem:[%s2] sm:$0x1]
        %v840 = vlaneseq
        %v841 = vshrl.u32 %v840, 7
        %v842 = vsub.s32 0, %v841
        %v843 = vrot.slane %v838, %v842
        %v853 = vunpack.c.l.b16 %v822
        %v854 = vunpack.c.l.b16 %v823
        %v855 = vunpack.c.l.b16 %v824
        %v856 = vunpack.c.l.b16 %v825
        %v857 = vunpack.c.l.b16 %v826
        %v858 = vunpack.c.l.b16 %v827
        %v859 = vunpack.c.l.b16 %v828
        %v860 = vunpack.c.l.b16 %v829
        %v861 = vpack.c.b16 %v854, %v853
        %v862 = vpack.c.b16 %v856, %v855
        %v863 = vpack.c.b16 %v858, %v857
        %v864 = vpack.c.b16 %v860, %v859
        %v873 = vunpack.c.l.b16 %v830
        %v874 = vunpack.c.l.b16 %v831
        %v875 = vunpack.c.l.b16 %v832
        %v876 = vunpack.c.l.b16 %v833
        %v877 = vunpack.c.l.b16 %v834
        %v878 = vunpack.c.l.b16 %v835
        %v879 = vunpack.c.l.b16 %v836
        %v880 = vunpack.c.l.b16 %v837
        %v881 = vpack.c.b16 %v874, %v873
        %v882 = vpack.c.b16 %v876, %v875
        %v883 = vpack.c.b16 %v878, %v877
        %v884 = vpack.c.b16 %v880, %v879
        %vm889 = vcmask 523264
        %v891 = vsel %vm889, %v861, 0
        %v894 = vsel %vm889, %v862, 0
        %v897 = vsel %vm889, %v863, 0
        %v900 = vsel %vm889, %v864, 0
        %902 = vmatprep.subr.bf16.mxu0 0
        %903 = vmatpush1.bf16.msra.mxu0 %v881
        %904 = vmatprep.subr.bf16.mxu0 0
        %905 = vmatpush1.bf16.msra.mxu0 %v882
        %906 = vmatprep.subr.bf16.mxu0 0
        %907 = vmatpush1.bf16.msra.mxu0 %v883
        %908 = vmatprep.subr.bf16.mxu0 0
        %909 = vmatpush1.bf16.msra.mxu0 %v884
        %910 = vmatprep.subr.bf16.mxu0 0
        %911 = vmatpush1.bf16.msra.mxu0 0
        %912 = vmatprep.subr.bf16.mxu0 0
        %913 = vmatpush1.bf16.msra.mxu0 0
        %914 = vmatprep.subr.bf16.mxu0 0
        %915 = vmatpush1.bf16.msra.mxu0 0
        %916 = vmatprep.subr.bf16.mxu0 0
        %917 = vmatpush1.bf16.msra.mxu0 0
        %918 = vmatprep.subr.bf16.mxu0 0
        %919 = vmatpush1.bf16.msra.mxu0 0
        %920 = vmatprep.subr.bf16.mxu0 0
        %921 = vmatpush1.bf16.msra.mxu0 0
        %922 = vmatprep.subr.bf16.mxu0 0
        %923 = vmatpush1.bf16.msra.mxu0 0
        %924 = vmatprep.subr.bf16.mxu0 0
        %925 = vmatpush1.bf16.msra.mxu0 0
        %926 = vmatprep.subr.bf16.mxu0 0
        %927 = vmatpush1.bf16.msra.mxu0 0
        %928 = vmatprep.subr.bf16.mxu0 0
        %929 = vmatpush1.bf16.msra.mxu0 0
        %930 = vmatprep.subr.bf16.mxu0 0
        %931 = vmatpush1.bf16.msra.mxu0 0
        %932 = vmatprep.subr.bf16.mxu0 0
        %933 = vmatpush1.bf16.msra.mxu0 0
        %934 = vmatprep.mubr.bf16.mxu0 0
        %935 = vmatmul.mubr.bf16.gmra.mrb[0].mxu0 %v891
        %v936 = vpop.f32.mrb[0].mxu0
        %v937 = vadd.f32 %v843, %v936
        %v938 = vpop.f32.mrb[0].mxu0
        %v939 = vpop.f32.mrb[0].mxu0
        %v940 = vadd.f32 %v843, %v939
        %v941 = vpop.f32.mrb[0].mxu0
        %942 = vmatprep.mubr.bf16.mxu0 0
        %943 = vmatmul.mubr.bf16.gmra.mrb[0].mxu0 %v894
        %v944 = vpop.f32.mrb[0].mxu0
        %v945 = vadd.f32 %v843, %v944
        %v946 = vpop.f32.mrb[0].mxu0
        %v947 = vpop.f32.mrb[0].mxu0
        %v948 = vadd.f32 %v843, %v947
        %v949 = vpop.f32.mrb[0].mxu0
        %950 = vmatprep.mubr.bf16.mxu0 0
        %951 = vmatmul.mubr.bf16.gmra.mrb[0].mxu0 %v897
        %v952 = vpop.f32.mrb[0].mxu0
        %v953 = vadd.f32 %v843, %v952
        %v954 = vpop.f32.mrb[0].mxu0
        %v955 = vpop.f32.mrb[0].mxu0
        %v956 = vadd.f32 %v843, %v955
        %v957 = vpop.f32.mrb[0].mxu0
        %958 = vmatprep.mubr.bf16.mxu0 0
        %959 = vmatmul.mubr.bf16.gmra.mrb[0].mxu0 %v900
        %v960 = vpop.f32.mrb[0].mxu0
        %v961 = vadd.f32 %v843, %v960
        %v962 = vpop.f32.mrb[0].mxu0
        %v963 = vpop.f32.mrb[0].mxu0
        %v964 = vadd.f32 %v843, %v963
        %v965 = vpop.f32.mrb[0].mxu0
        %966 = vdwg.mxu0
        %967 = vst.msk [vmem:[#allocation2 + $0x30] sm:$0xff] %vm713, %v937
        %968 = vst.msk [vmem:[#allocation2 + $0x38] sm:$0xff] %vm713, %v940
        %969 = vst.msk [vmem:[#allocation2 + $0x40] sm:$0xff] %vm713, %v945
        %970 = vst.msk [vmem:[#allocation2 + $0x48] sm:$0xff] %vm713, %v948
        %971 = vst.msk [vmem:[#allocation2 + $0x50] sm:$0xff] %vm713, %v953
        %972 = vst.msk [vmem:[#allocation2 + $0x58] sm:$0xff] %vm713, %v956
        %973 = vst.msk [vmem:[#allocation2 + $0x60] sm:$0xff] %vm713, %v961
        %974 = vst.msk [vmem:[#allocation2 + $0x68] sm:$0xff] %vm713, %v964
        %v975 = vlaneseq
        %v976 = vshrl.u32 %v975, 7
        %v977 = vadd.s32 %v976, 8
        %v978 = vadd.s32 %v976, 16
        %v979 = vadd.s32 %v976, 24
        %v980 = vadd.s32 %v976, 32
        %v981 = vadd.s32 %v976, 40
        %v982 = vadd.s32 %v976, 48
        %v983 = vadd.s32 %v976, 56
        %v984 = vand.u32 %v976, 7
        %v985 = vand.u32 %v977, 7
        %v986 = vand.u32 %v978, 7
        %v987 = vand.u32 %v979, 7
        %v988 = vand.u32 %v980, 7
        %v989 = vand.u32 %v981, 7
        %v990 = vand.u32 %v982, 7
        %v991 = vand.u32 %v983, 7
        %vm992 = vcmp.ge.s32.totalorder %v984, 4
        %vm993 = vcmp.ge.s32.totalorder %v985, 4
        %vm994 = vcmp.ge.s32.totalorder %v986, 4
        %vm995 = vcmp.ge.s32.totalorder %v987, 4
        %vm996 = vcmp.ge.s32.totalorder %v988, 4
        %vm997 = vcmp.ge.s32.totalorder %v989, 4
        %vm998 = vcmp.ge.s32.totalorder %v990, 4
        %vm999 = vcmp.ge.s32.totalorder %v991, 4
        %vm1000 = vcmp.lt.s32.totalorder %v984, 4
        %vm1001 = vcmp.lt.s32.totalorder %v985, 4
        %vm1002 = vcmp.lt.s32.totalorder %v986, 4
        %vm1003 = vcmp.lt.s32.totalorder %v987, 4
        %vm1004 = vcmp.lt.s32.totalorder %v988, 4
        %vm1005 = vcmp.lt.s32.totalorder %v989, 4
        %vm1006 = vcmp.lt.s32.totalorder %v990, 4
        %vm1007 = vcmp.lt.s32.totalorder %v991, 4
        %v1008 = vld [vmem:[#allocation2 + $0xc] sm:$0xff]
        %v1009 = vld [vmem:[#allocation2 + $0x14] sm:$0xff]
        %v1010 = vld [vmem:[#allocation2 + $0x1c] sm:$0xff]
        %v1011 = vld [vmem:[#allocation2 + $0x24] sm:$0xff]
        %v1012 = vld [vmem:[#allocation2 + $0x2c] sm:$0xff]
        %v1013 = vld [vmem:[#allocation2 + $0x34] sm:$0xff]
        %v1014 = vld [vmem:[#allocation2 + $0x3c] sm:$0xff]
        %v1015 = vld [vmem:[#allocation2 + $0x44] sm:$0xff]
        %v1016 = vsel %vm992, %v1008, 0.0
        %v1017 = vsel %vm993, %v1009, 0.0
        %v1018 = vsel %vm994, %v1010, 0.0
        %v1019 = vsel %vm995, %v1011, 0.0
        %v1020 = vsel %vm996, %v1012, 0.0
        %v1021 = vsel %vm997, %v1013, 0.0
        %v1022 = vsel %vm998, %v1014, 0.0
        %v1023 = vsel %vm999, %v1015, 0.0
        %v1024 = vpack.c.bf16 %v1017, %v1016
        %v1025 = vpack.c.bf16 %v1019, %v1018
        %v1026 = vpack.c.bf16 %v1021, %v1020
        %v1027 = vpack.c.bf16 %v1023, %v1022
        %1028 = vst.msk [vmem:[#allocation3] sm:$0xff] %vm713, %v1024
        %1029 = vst.msk [vmem:[#allocation3 + $0x48] sm:$0xff] %vm713, %v1025
        %1030 = vst.msk [vmem:[#allocation3 + $0x90] sm:$0xff] %vm713, %v1026
        %1031 = vst.msk [vmem:[#allocation3 + $0xd8] sm:$0xff] %vm713, %v1027
        %v1032 = vld [vmem:[#allocation2 + $0x10] sm:$0xff]
        %v1033 = vld [vmem:[#allocation2 + $0x18] sm:$0xff]
        %v1034 = vld [vmem:[#allocation2 + $0x20] sm:$0xff]
        %v1035 = vld [vmem:[#allocation2 + $0x28] sm:$0xff]
        %v1036 = vld [vmem:[#allocation2 + $0x30] sm:$0xff]
        %v1037 = vld [vmem:[#allocation2 + $0x38] sm:$0xff]
        %v1038 = vld [vmem:[#allocation2 + $0x40] sm:$0xff]
        %v1039 = vld [vmem:[#allocation2 + $0x48] sm:$0xff]
        %v1040 = vpack.c.bf16 %v1033, %v1032
        %v1041 = vpack.c.bf16 %v1035, %v1034
        %v1042 = vpack.c.bf16 %v1037, %v1036
        %v1043 = vpack.c.bf16 %v1039, %v1038
        %1044 = vst.msk [vmem:[#allocation3 + $0x8] sm:$0xff] %vm713, %v1040
        %1045 = vst.msk [vmem:[#allocation3 + $0x50] sm:$0xff] %vm713, %v1041
        %1046 = vst.msk [vmem:[#allocation3 + $0x98] sm:$0xff] %vm713, %v1042
        %1047 = vst.msk [vmem:[#allocation3 + $0xe0] sm:$0xff] %vm713, %v1043
        %v1048 = vld [vmem:[#allocation2 + $0x14] sm:$0xff]
        %v1049 = vld [vmem:[#allocation2 + $0x1c] sm:$0xff]
        %v1050 = vld [vmem:[#allocation2 + $0x24] sm:$0xff]
        %v1051 = vld [vmem:[#allocation2 + $0x2c] sm:$0xff]
        %v1052 = vld [vmem:[#allocation2 + $0x34] sm:$0xff]
        %v1053 = vld [vmem:[#allocation2 + $0x3c] sm:$0xff]
        %v1054 = vld [vmem:[#allocation2 + $0x44] sm:$0xff]
        %v1055 = vld [vmem:[#allocation2 + $0x4c] sm:$0xff]
        %v1056 = vsel %vm1000, %v1048, 0.0
        %v1057 = vsel %vm1001, %v1049, 0.0
        %v1058 = vsel %vm1002, %v1050, 0.0
        %v1059 = vsel %vm1003, %v1051, 0.0
        %v1060 = vsel %vm1004, %v1052, 0.0
        %v1061 = vsel %vm1005, %v1053, 0.0
        %v1062 = vsel %vm1006, %v1054, 0.0
        %v1063 = vsel %vm1007, %v1055, 0.0
        %v1064 = vpack.c.bf16 %v1057, %v1056
        %v1065 = vpack.c.bf16 %v1059, %v1058
        %v1066 = vpack.c.bf16 %v1061, %v1060
        %v1067 = vpack.c.bf16 %v1063, %v1062
        %1068 = vst.msk [vmem:[#allocation3 + $0x10] sm:$0xff] %vm713, %v1064
        %1069 = vst.msk [vmem:[#allocation3 + $0x58] sm:$0xff] %vm713, %v1065
        %1070 = vst.msk [vmem:[#allocation3 + $0xa0] sm:$0xff] %vm713, %v1066
        %1071 = vst.msk [vmem:[#allocation3 + $0xe8] sm:$0xff] %vm713, %v1067
        %v1072 = vld [vmem:[#allocation2 + $0x2c] sm:$0xff]
        %v1073 = vld [vmem:[#allocation2 + $0x34] sm:$0xff]
        %v1074 = vld [vmem:[#allocation2 + $0x3c] sm:$0xff]
        %v1075 = vld [vmem:[#allocation2 + $0x44] sm:$0xff]
        %v1076 = vld [vmem:[#allocation2 + $0x4c] sm:$0xff]
        %v1077 = vld [vmem:[#allocation2 + $0x54] sm:$0xff]
        %v1078 = vld [vmem:[#allocation2 + $0x5c] sm:$0xff]
        %v1079 = vld [vmem:[#allocation2 + $0x64] sm:$0xff]
        %v1080 = vsel %vm992, %v1072, 0.0
        %v1081 = vsel %vm993, %v1073, 0.0
        %v1082 = vsel %vm994, %v1074, 0.0
        %v1083 = vsel %vm995, %v1075, 0.0
        %v1084 = vsel %vm996, %v1076, 0.0
        %v1085 = vsel %vm997, %v1077, 0.0
        %v1086 = vsel %vm998, %v1078, 0.0
        %v1087 = vsel %vm999, %v1079, 0.0
        %v1088 = vpack.c.bf16 %v1081, %v1080
        %v1089 = vpack.c.bf16 %v1083, %v1082
        %v1090 = vpack.c.bf16 %v1085, %v1084
        %v1091 = vpack.c.bf16 %v1087, %v1086
        %1092 = vst.msk [vmem:[#allocation3 + $0x18] sm:$0xff] %vm713, %v1088
        %1093 = vst.msk [vmem:[#allocation3 + $0x60] sm:$0xff] %vm713, %v1089
        %1094 = vst.msk [vmem:[#allocation3 + $0xa8] sm:$0xff] %vm713, %v1090
        %1095 = vst.msk [vmem:[#allocation3 + $0xf0] sm:$0xff] %vm713, %v1091
        %v1096 = vld [vmem:[#allocation2 + $0x30] sm:$0xff]
        %v1097 = vld [vmem:[#allocation2 + $0x38] sm:$0xff]
        %v1098 = vld [vmem:[#allocation2 + $0x40] sm:$0xff]
        %v1099 = vld [vmem:[#allocation2 + $0x48] sm:$0xff]
        %v1100 = vld [vmem:[#allocation2 + $0x50] sm:$0xff]
        %v1101 = vld [vmem:[#allocation2 + $0x58] sm:$0xff]
        %v1102 = vld [vmem:[#allocation2 + $0x60] sm:$0xff]
        %v1103 = vld [vmem:[#allocation2 + $0x68] sm:$0xff]
        %v1104 = vpack.c.bf16 %v1097, %v1096
        %v1105 = vpack.c.bf16 %v1099, %v1098
        %v1106 = vpack.c.bf16 %v1101, %v1100
        %v1107 = vpack.c.bf16 %v1103, %v1102
        %1108 = vst.msk [vmem:[#allocation3 + $0x20] sm:$0xff] %vm713, %v1104
        %1109 = vst.msk [vmem:[#allocation3 + $0x68] sm:$0xff] %vm713, %v1105
        %1110 = vst.msk [vmem:[#allocation3 + $0xb0] sm:$0xff] %vm713, %v1106
        %1111 = vst.msk [vmem:[#allocation3 + $0xf8] sm:$0xff] %vm713, %v1107
        %v1112 = vld [vmem:[#allocation2 + $0x34] sm:$0xff]
        %v1113 = vld [vmem:[#allocation2 + $0x3c] sm:$0xff]
        %v1114 = vld [vmem:[#allocation2 + $0x44] sm:$0xff]
        %v1115 = vld [vmem:[#allocation2 + $0x4c] sm:$0xff]
        %v1116 = vld [vmem:[#allocation2 + $0x54] sm:$0xff]
        %v1117 = vld [vmem:[#allocation2 + $0x5c] sm:$0xff]
        %v1118 = vld [vmem:[#allocation2 + $0x64] sm:$0xff]
        %v1119 = vld [vmem:[#allocation2 + $0x6c] sm:$0xff]
        %v1120 = vsel %vm1000, %v1112, 0.0
        %v1121 = vsel %vm1001, %v1113, 0.0
        %v1122 = vsel %vm1002, %v1114, 0.0
        %v1123 = vsel %vm1003, %v1115, 0.0
        %v1124 = vsel %vm1004, %v1116, 0.0
        %v1125 = vsel %vm1005, %v1117, 0.0
        %v1126 = vsel %vm1006, %v1118, 0.0
        %v1127 = vsel %vm1007, %v1119, 0.0
        %v1128 = vpack.c.bf16 %v1121, %v1120
        %v1129 = vpack.c.bf16 %v1123, %v1122
        %v1130 = vpack.c.bf16 %v1125, %v1124
        %v1131 = vpack.c.bf16 %v1127, %v1126
        %1132 = vst.msk [vmem:[#allocation3 + $0x28] sm:$0xff] %vm713, %v1128
        %1133 = vst.msk [vmem:[#allocation3 + $0x70] sm:$0xff] %vm713, %v1129
        %1134 = vst.msk [vmem:[#allocation3 + $0xb8] sm:$0xff] %vm713, %v1130
        %1135 = vst.msk [vmem:[#allocation3 + $0x100] sm:$0xff] %vm713, %v1131
        %v1136 = vld [vmem:[#allocation2 + $0x4c] sm:$0xff]
        %v1137 = vld [vmem:[#allocation2 + $0x54] sm:$0xff]
        %v1138 = vld [vmem:[#allocation2 + $0x5c] sm:$0xff]
        %v1139 = vld [vmem:[#allocation2 + $0x64] sm:$0xff]
        %v1140 = vld [vmem:[#allocation2 + $0x6c] sm:$0xff]
        %v1141 = vld [vmem:[#allocation2 + $0x74] sm:$0xff]
        %v1142 = vld [vmem:[#allocation2 + $0x7c] sm:$0xff]
        %v1143 = vld [vmem:[#allocation2 + $0x84] sm:$0xff]
        %v1144 = vsel %vm992, %v1136, 0.0
        %v1145 = vsel %vm993, %v1137, 0.0
        %v1146 = vsel %vm994, %v1138, 0.0
        %v1147 = vsel %vm995, %v1139, 0.0
        %v1148 = vsel %vm996, %v1140, 0.0
        %v1149 = vsel %vm997, %v1141, 0.0
        %v1150 = vsel %vm998, %v1142, 0.0
        %v1151 = vsel %vm999, %v1143, 0.0
        %v1152 = vpack.c.bf16 %v1145, %v1144
        %v1153 = vpack.c.bf16 %v1147, %v1146
        %v1154 = vpack.c.bf16 %v1149, %v1148
        %v1155 = vpack.c.bf16 %v1151, %v1150
        %1156 = vst.msk [vmem:[#allocation3 + $0x30] sm:$0xff] %vm713, %v1152
        %1157 = vst.msk [vmem:[#allocation3 + $0x78] sm:$0xff] %vm713, %v1153
        %1158 = vst.msk [vmem:[#allocation3 + $0xc0] sm:$0xff] %vm713, %v1154
        %1159 = vst.msk [vmem:[#allocation3 + $0x108] sm:$0xff] %vm713, %v1155
        %v1160 = vld [vmem:[#allocation2 + $0x50] sm:$0xff]
        %v1161 = vld [vmem:[#allocation2 + $0x58] sm:$0xff]
        %v1162 = vld [vmem:[#allocation2 + $0x60] sm:$0xff]
        %v1163 = vld [vmem:[#allocation2 + $0x68] sm:$0xff]
        %v1164 = vld [vmem:[#allocation2 + $0x70] sm:$0xff]
        %v1165 = vld [vmem:[#allocation2 + $0x78] sm:$0xff]
        %v1166 = vld [vmem:[#allocation2 + $0x80] sm:$0xff]
        %v1167 = vld [vmem:[#allocation2 + $0x88] sm:$0xff]
        %v1168 = vpack.c.bf16 %v1161, %v1160
        %v1169 = vpack.c.bf16 %v1163, %v1162
        %v1170 = vpack.c.bf16 %v1165, %v1164
        %v1171 = vpack.c.bf16 %v1167, %v1166
        %1172 = vst.msk [vmem:[#allocation3 + $0x38] sm:$0xff] %vm713, %v1168
        %1173 = vst.msk [vmem:[#allocation3 + $0x80] sm:$0xff] %vm713, %v1169
        %1174 = vst.msk [vmem:[#allocation3 + $0xc8] sm:$0xff] %vm713, %v1170
        %1175 = vst.msk [vmem:[#allocation3 + $0x110] sm:$0xff] %vm713, %v1171
        %v1176 = vld [vmem:[#allocation2 + $0x54] sm:$0xff]
        %v1177 = vld [vmem:[#allocation2 + $0x5c] sm:$0xff]
        %v1178 = vld [vmem:[#allocation2 + $0x64] sm:$0xff]
        %v1179 = vld [vmem:[#allocation2 + $0x6c] sm:$0xff]
        %v1180 = vld [vmem:[#allocation2 + $0x74] sm:$0xff]
        %v1181 = vld [vmem:[#allocation2 + $0x7c] sm:$0xff]
        %v1182 = vld [vmem:[#allocation2 + $0x84] sm:$0xff]
        %v1183 = vld [vmem:[#allocation2 + $0x8c] sm:$0xff]
        %v1184 = vsel %vm1000, %v1176, 0.0
        %v1185 = vsel %vm1001, %v1177, 0.0
        %v1186 = vsel %vm1002, %v1178, 0.0
        %v1187 = vsel %vm1003, %v1179, 0.0
        %v1188 = vsel %vm1004, %v1180, 0.0
        %v1189 = vsel %vm1005, %v1181, 0.0
        %v1190 = vsel %vm1006, %v1182, 0.0
        %v1191 = vsel %vm1007, %v1183, 0.0
        %v1192 = vpack.c.bf16 %v1185, %v1184
        %v1193 = vpack.c.bf16 %v1187, %v1186
        %v1194 = vpack.c.bf16 %v1189, %v1188
        %v1195 = vpack.c.bf16 %v1191, %v1190
        %1196 = vst.msk [vmem:[#allocation3 + $0x40] sm:$0xff] %vm713, %v1192
        %1197 = vst.msk [vmem:[#allocation3 + $0x88] sm:$0xff] %vm713, %v1193
        %1198 = vst.msk [vmem:[#allocation3 + $0xd0] sm:$0xff] %vm713, %v1194
        %1199 = vst.msk [vmem:[#allocation3 + $0x118] sm:$0xff] %vm713, %v1195
        %v1200 = vld [vmem:[#allocation3] sm:$0xff]
        %v1201 = vld [vmem:[#allocation3 + $0x8] sm:$0xff]
        %v1202 = vld [vmem:[#allocation3 + $0x10] sm:$0xff]
        %v1203 = vld [vmem:[#allocation3 + $0x18] sm:$0xff]
        %v1204 = vld [vmem:[#allocation3 + $0x20] sm:$0xff]
        %v1205 = vld [vmem:[#allocation3 + $0x28] sm:$0xff]
        %v1206 = vld [vmem:[#allocation3 + $0x30] sm:$0xff]
        %v1207 = vld [vmem:[#allocation3 + $0x38] sm:$0xff]
        %v1208 = vld [vmem:[#allocation3 + $0x40] sm:$0xff]
        %v1209 = vld [vmem:[#allocation3 + $0x48] sm:$0xff]
        %v1210 = vld [vmem:[#allocation3 + $0x50] sm:$0xff]
        %v1211 = vld [vmem:[#allocation3 + $0x58] sm:$0xff]
        %v1212 = vld [vmem:[#allocation3 + $0x60] sm:$0xff]
        %v1213 = vld [vmem:[#allocation3 + $0x68] sm:$0xff]
        %v1214 = vld [vmem:[#allocation3 + $0x70] sm:$0xff]
        %v1215 = vld [vmem:[#allocation3 + $0x78] sm:$0xff]
        %v1216 = vld [vmem:[#allocation3 + $0x80] sm:$0xff]
        %v1217 = vld [vmem:[#allocation3 + $0x88] sm:$0xff]
        %v1218 = vld [vmem:[#allocation3 + $0x90] sm:$0xff]
        %v1219 = vld [vmem:[#allocation3 + $0x98] sm:$0xff]
        %v1220 = vld [vmem:[#allocation3 + $0xa0] sm:$0xff]
        %v1221 = vld [vmem:[#allocation3 + $0xa8] sm:$0xff]
        %v1222 = vld [vmem:[#allocation3 + $0xb0] sm:$0xff]
        %v1223 = vld [vmem:[#allocation3 + $0xb8] sm:$0xff]
        %v1224 = vld [vmem:[#allocation3 + $0xc0] sm:$0xff]
        %v1225 = vld [vmem:[#allocation3 + $0xc8] sm:$0xff]
        %v1226 = vld [vmem:[#allocation3 + $0xd0] sm:$0xff]
        %v1227 = vld [vmem:[#allocation3 + $0xd8] sm:$0xff]
        %v1228 = vld [vmem:[#allocation3 + $0xe0] sm:$0xff]
        %v1229 = vld [vmem:[#allocation3 + $0xe8] sm:$0xff]
        %v1230 = vld [vmem:[#allocation3 + $0xf0] sm:$0xff]
        %v1231 = vld [vmem:[#allocation3 + $0xf8] sm:$0xff]
        %v1232 = vld [vmem:[#allocation3 + $0x100] sm:$0xff]
        %v1233 = vld [vmem:[#allocation3 + $0x108] sm:$0xff]
        %v1234 = vld [vmem:[#allocation3 + $0x110] sm:$0xff]
        %v1235 = vld [vmem:[#allocation3 + $0x118] sm:$0xff]
        %v1236 = vld [vmem:[%s3] sm:$0xf]
        %v1237 = vld [vmem:[%s3 + $0x4] sm:$0xf]
        %v1238 = vld [vmem:[%s3 + $0x8] sm:$0xf]
        %v1239 = vld [vmem:[%s3 + $0xc] sm:$0xf]
        %v1240 = vld [vmem:[%s3 + $0x10] sm:$0xf]
        %v1241 = vld [vmem:[%s3 + $0x14] sm:$0xf]
        %v1242 = vld [vmem:[%s3 + $0x18] sm:$0xf]
        %v1243 = vld [vmem:[%s3 + $0x1c] sm:$0xf]
        %v1244 = vld [vmem:[%s3 + $0x20] sm:$0xf]
        %v1245 = vld [vmem:[%s3 + $0x24] sm:$0xf]
        %v1246 = vld [vmem:[%s3 + $0x28] sm:$0xf]
        %v1247 = vld [vmem:[%s3 + $0x2c] sm:$0xf]
        %v1248 = vld [vmem:[%s3 + $0x30] sm:$0xf]
        %v1249 = vld [vmem:[%s3 + $0x34] sm:$0xf]
        %v1250 = vld [vmem:[%s3 + $0x38] sm:$0xf]
        %v1251 = vld [vmem:[%s3 + $0x3c] sm:$0xf]
        %v1252 = vld [vmem:[%s3 + $0x40] sm:$0xf]
        %v1253 = vld [vmem:[%s3 + $0x44] sm:$0xf]
        %v1254 = vld [vmem:[%s3 + $0x48] sm:$0xf]
        %v1255 = vld [vmem:[%s3 + $0x4c] sm:$0xf]
        %v1256 = vld [vmem:[%s3 + $0x50] sm:$0xf]
        %v1257 = vld [vmem:[%s3 + $0x54] sm:$0xf]
        %v1258 = vld [vmem:[%s3 + $0x58] sm:$0xf]
        %v1259 = vld [vmem:[%s3 + $0x5c] sm:$0xf]
        %v1260 = vld [vmem:[%s3 + $0x60] sm:$0xf]
        %v1261 = vld [vmem:[%s3 + $0x64] sm:$0xf]
        %v1262 = vld [vmem:[%s3 + $0x68] sm:$0xf]
        %v1263 = vld [vmem:[%s3 + $0x6c] sm:$0xf]
        %v1264 = vld [vmem:[%s3 + $0x70] sm:$0xf]
        %v1265 = vld [vmem:[%s3 + $0x74] sm:$0xf]
        %v1266 = vld [vmem:[%s3 + $0x78] sm:$0xf]
        %v1267 = vld [vmem:[%s3 + $0x7c] sm:$0xf]
        %v1268 = vld [vmem:[%s3 + $0x80] sm:$0xf]
        %v1269 = vld [vmem:[%s3 + $0x84] sm:$0xf]
        %v1270 = vld [vmem:[%s3 + $0x88] sm:$0xf]
        %v1271 = vld [vmem:[%s3 + $0x8c] sm:$0xf]
        %v1272 = vld [vmem:[%s3 + $0x90] sm:$0xf]
        %v1273 = vld [vmem:[%s3 + $0x94] sm:$0xf]
        %v1274 = vld [vmem:[%s3 + $0x98] sm:$0xf]
        %v1275 = vld [vmem:[%s3 + $0x9c] sm:$0xf]
        %v1276 = vld [vmem:[%s3 + $0xa0] sm:$0xf]
        %v1277 = vld [vmem:[%s3 + $0xa4] sm:$0xf]
        %v1278 = vld [vmem:[%s3 + $0xa8] sm:$0xf]
        %v1279 = vld [vmem:[%s3 + $0xac] sm:$0xf]
        %v1280 = vld [vmem:[%s3 + $0xb0] sm:$0xf]
        %v1281 = vld [vmem:[%s3 + $0xb4] sm:$0xf]
        %v1282 = vld [vmem:[%s3 + $0xb8] sm:$0xf]
        %v1283 = vld [vmem:[%s3 + $0xbc] sm:$0xf]
        %v1284 = vld [vmem:[%s3 + $0xc0] sm:$0xf]
        %v1285 = vld [vmem:[%s3 + $0xc4] sm:$0xf]
        %v1286 = vld [vmem:[%s3 + $0xc8] sm:$0xf]
        %v1287 = vld [vmem:[%s3 + $0xcc] sm:$0xf]
        %v1288 = vld [vmem:[%s3 + $0xd0] sm:$0xf]
        %v1289 = vld [vmem:[%s3 + $0xd4] sm:$0xf]
        %v1290 = vld [vmem:[%s3 + $0xd8] sm:$0xf]
        %v1291 = vld [vmem:[%s3 + $0xdc] sm:$0xf]
        %v1292 = vld [vmem:[%s3 + $0xe0] sm:$0xf]
        %v1293 = vld [vmem:[%s3 + $0xe4] sm:$0xf]
        %v1294 = vld [vmem:[%s3 + $0xe8] sm:$0xf]
        %v1295 = vld [vmem:[%s3 + $0xec] sm:$0xf]
        %v1296 = vld [vmem:[%s3 + $0xf0] sm:$0xf]
        %v1297 = vld [vmem:[%s3 + $0xf4] sm:$0xf]
        %v1298 = vld [vmem:[%s3 + $0xf8] sm:$0xf]
        %v1299 = vld [vmem:[%s3 + $0xfc] sm:$0xf]
        %v1300 = vld [vmem:[%s3 + $0x100] sm:$0xf]
        %v1301 = vld [vmem:[%s3 + $0x104] sm:$0xf]
        %v1302 = vld [vmem:[%s3 + $0x108] sm:$0xf]
        %v1303 = vld [vmem:[%s3 + $0x10c] sm:$0xf]
        %v1304 = vld [vmem:[%s3 + $0x110] sm:$0xf]
        %v1305 = vld [vmem:[%s3 + $0x114] sm:$0xf]
        %v1306 = vld [vmem:[%s3 + $0x118] sm:$0xf]
        %v1307 = vld [vmem:[%s3 + $0x11c] sm:$0xf]
        %v1308 = vld [vmem:[%s3 + $0x120] sm:$0xf]
        %v1309 = vld [vmem:[%s3 + $0x124] sm:$0xf]
        %v1310 = vld [vmem:[%s3 + $0x128] sm:$0xf]
        %v1311 = vld [vmem:[%s3 + $0x12c] sm:$0xf]
        %v1312 = vld [vmem:[%s3 + $0x130] sm:$0xf]
        %v1313 = vld [vmem:[%s3 + $0x134] sm:$0xf]
        %v1314 = vld [vmem:[%s3 + $0x138] sm:$0xf]
        %v1315 = vld [vmem:[%s3 + $0x13c] sm:$0xf]
        %v1316 = vld [vmem:[%s3 + $0x140] sm:$0xf]
        %v1317 = vld [vmem:[%s3 + $0x144] sm:$0xf]
        %v1318 = vld [vmem:[%s3 + $0x148] sm:$0xf]
        %v1319 = vld [vmem:[%s3 + $0x14c] sm:$0xf]
        %v1320 = vld [vmem:[%s3 + $0x150] sm:$0xf]
        %v1321 = vld [vmem:[%s3 + $0x154] sm:$0xf]
        %v1322 = vld [vmem:[%s3 + $0x158] sm:$0xf]
        %v1323 = vld [vmem:[%s3 + $0x15c] sm:$0xf]
        %v1324 = vld [vmem:[%s3 + $0x160] sm:$0xf]
        %v1325 = vld [vmem:[%s3 + $0x164] sm:$0xf]
        %v1326 = vld [vmem:[%s3 + $0x168] sm:$0xf]
        %v1327 = vld [vmem:[%s3 + $0x16c] sm:$0xf]
        %v1328 = vld [vmem:[%s3 + $0x170] sm:$0xf]
        %v1329 = vld [vmem:[%s3 + $0x174] sm:$0xf]
        %v1330 = vld [vmem:[%s3 + $0x178] sm:$0xf]
        %v1331 = vld [vmem:[%s3 + $0x17c] sm:$0xf]
        %v1332 = vld [vmem:[%s3 + $0x180] sm:$0xf]
        %v1333 = vld [vmem:[%s3 + $0x184] sm:$0xf]
        %v1334 = vld [vmem:[%s3 + $0x188] sm:$0xf]
        %v1335 = vld [vmem:[%s3 + $0x18c] sm:$0xf]
        %v1336 = vld [vmem:[%s3 + $0x190] sm:$0xf]
        %v1337 = vld [vmem:[%s3 + $0x194] sm:$0xf]
        %v1338 = vld [vmem:[%s3 + $0x198] sm:$0xf]
        %v1339 = vld [vmem:[%s3 + $0x19c] sm:$0xf]
        %v1340 = vld [vmem:[%s3 + $0x1a0] sm:$0xf]
        %v1341 = vld [vmem:[%s3 + $0x1a4] sm:$0xf]
        %v1342 = vld [vmem:[%s3 + $0x1a8] sm:$0xf]
        %v1343 = vld [vmem:[%s3 + $0x1ac] sm:$0xf]
        %v1344 = vld [vmem:[%s3 + $0x1b0] sm:$0xf]
        %v1345 = vld [vmem:[%s3 + $0x1b4] sm:$0xf]
        %v1346 = vld [vmem:[%s3 + $0x1b8] sm:$0xf]
        %v1347 = vld [vmem:[%s3 + $0x1bc] sm:$0xf]
        %v1348 = vld [vmem:[%s3 + $0x1c0] sm:$0xf]
        %v1349 = vld [vmem:[%s3 + $0x1c4] sm:$0xf]
        %v1350 = vld [vmem:[%s3 + $0x1c8] sm:$0xf]
        %v1351 = vld [vmem:[%s3 + $0x1cc] sm:$0xf]
        %v1352 = vld [vmem:[%s3 + $0x1d0] sm:$0xf]
        %v1353 = vld [vmem:[%s3 + $0x1d4] sm:$0xf]
        %v1354 = vld [vmem:[%s3 + $0x1d8] sm:$0xf]
        %v1355 = vld [vmem:[%s3 + $0x1dc] sm:$0xf]
        %v1356 = vld [vmem:[%s3 + $0x1e0] sm:$0xf]
        %v1357 = vld [vmem:[%s3 + $0x1e4] sm:$0xf]
        %v1358 = vld [vmem:[%s3 + $0x1e8] sm:$0xf]
        %v1359 = vld [vmem:[%s3 + $0x1ec] sm:$0xf]
        %v1360 = vld [vmem:[%s3 + $0x1f0] sm:$0xf]
        %v1361 = vld [vmem:[%s3 + $0x1f4] sm:$0xf]
        %v1362 = vld [vmem:[%s3 + $0x1f8] sm:$0xf]
        %v1363 = vld [vmem:[%s3 + $0x1fc] sm:$0xf]
        %v1364 = vld [vmem:[%s3 + $0x200] sm:$0xf]
        %v1365 = vld [vmem:[%s3 + $0x204] sm:$0xf]
        %v1366 = vld [vmem:[%s3 + $0x208] sm:$0xf]
        %v1367 = vld [vmem:[%s3 + $0x20c] sm:$0xf]
        %v1368 = vld [vmem:[%s3 + $0x210] sm:$0xf]
        %v1369 = vld [vmem:[%s3 + $0x214] sm:$0xf]
        %v1370 = vld [vmem:[%s3 + $0x218] sm:$0xf]
        %v1371 = vld [vmem:[%s3 + $0x21c] sm:$0xf]
        %v1372 = vld [vmem:[%s3 + $0x220] sm:$0xf]
        %v1373 = vld [vmem:[%s3 + $0x224] sm:$0xf]
        %v1374 = vld [vmem:[%s3 + $0x228] sm:$0xf]
        %v1375 = vld [vmem:[%s3 + $0x22c] sm:$0xf]
        %v1376 = vld [vmem:[%s3 + $0x230] sm:$0xf]
        %v1377 = vld [vmem:[%s3 + $0x234] sm:$0xf]
        %v1378 = vld [vmem:[%s3 + $0x238] sm:$0xf]
        %v1379 = vld [vmem:[%s3 + $0x23c] sm:$0xf]
        %v1380 = vld [vmem:[%s4] sm:$0x1]
        %v1382 = vlaneseq
        %v1383 = vshrl.u32 %v1382, 7
        %v1384 = vsub.s32 0, %v1383
        %v1385 = vrot.slane %v1380, %v1384
        %v1531 = vunpack.c.l.b16 %v1236
        %v1532 = vunpack.c.l.b16 %v1237
        %v1533 = vunpack.c.l.b16 %v1238
        %v1534 = vunpack.c.l.b16 %v1239
        %v1535 = vunpack.c.l.b16 %v1240
        %v1536 = vunpack.c.l.b16 %v1241
        %v1537 = vunpack.c.l.b16 %v1242
        %v1538 = vunpack.c.l.b16 %v1243
        %v1539 = vunpack.c.l.b16 %v1244
        %v1540 = vunpack.c.l.b16 %v1245
        %v1541 = vunpack.c.l.b16 %v1246
        %v1542 = vunpack.c.l.b16 %v1247
        %v1543 = vunpack.c.l.b16 %v1248
        %v1544 = vunpack.c.l.b16 %v1249
        %v1545 = vunpack.c.l.b16 %v1250
        %v1546 = vunpack.c.l.b16 %v1251
        %v1547 = vunpack.c.l.b16 %v1252
        %v1548 = vunpack.c.l.b16 %v1253
        %v1549 = vunpack.c.l.b16 %v1254
        %v1550 = vunpack.c.l.b16 %v1255
        %v1551 = vunpack.c.l.b16 %v1256
        %v1552 = vunpack.c.l.b16 %v1257
        %v1553 = vunpack.c.l.b16 %v1258
        %v1554 = vunpack.c.l.b16 %v1259
        %v1555 = vunpack.c.l.b16 %v1260
        %v1556 = vunpack.c.l.b16 %v1261
        %v1557 = vunpack.c.l.b16 %v1262
        %v1558 = vunpack.c.l.b16 %v1263
        %v1559 = vunpack.c.l.b16 %v1264
        %v1560 = vunpack.c.l.b16 %v1265
        %v1561 = vunpack.c.l.b16 %v1266
        %v1562 = vunpack.c.l.b16 %v1267
        %v1563 = vunpack.c.l.b16 %v1268
        %v1564 = vunpack.c.l.b16 %v1269
        %v1565 = vunpack.c.l.b16 %v1270
        %v1566 = vunpack.c.l.b16 %v1271
        %v1567 = vunpack.c.l.b16 %v1272
        %v1568 = vunpack.c.l.b16 %v1273
        %v1569 = vunpack.c.l.b16 %v1274
        %v1570 = vunpack.c.l.b16 %v1275
        %v1571 = vunpack.c.l.b16 %v1276
        %v1572 = vunpack.c.l.b16 %v1277
        %v1573 = vunpack.c.l.b16 %v1278
        %v1574 = vunpack.c.l.b16 %v1279
        %v1575 = vunpack.c.l.b16 %v1280
        %v1576 = vunpack.c.l.b16 %v1281
        %v1577 = vunpack.c.l.b16 %v1282
        %v1578 = vunpack.c.l.b16 %v1283
        %v1579 = vunpack.c.l.b16 %v1284
        %v1580 = vunpack.c.l.b16 %v1285
        %v1581 = vunpack.c.l.b16 %v1286
        %v1582 = vunpack.c.l.b16 %v1287
        %v1583 = vunpack.c.l.b16 %v1288
        %v1584 = vunpack.c.l.b16 %v1289
        %v1585 = vunpack.c.l.b16 %v1290
        %v1586 = vunpack.c.l.b16 %v1291
        %v1587 = vunpack.c.l.b16 %v1292
        %v1588 = vunpack.c.l.b16 %v1293
        %v1589 = vunpack.c.l.b16 %v1294
        %v1590 = vunpack.c.l.b16 %v1295
        %v1591 = vunpack.c.l.b16 %v1296
        %v1592 = vunpack.c.l.b16 %v1297
        %v1593 = vunpack.c.l.b16 %v1298
        %v1594 = vunpack.c.l.b16 %v1299
        %v1595 = vunpack.c.l.b16 %v1300
        %v1596 = vunpack.c.l.b16 %v1301
        %v1597 = vunpack.c.l.b16 %v1302
        %v1598 = vunpack.c.l.b16 %v1303
        %v1599 = vunpack.c.l.b16 %v1304
        %v1600 = vunpack.c.l.b16 %v1305
        %v1601 = vunpack.c.l.b16 %v1306
        %v1602 = vunpack.c.l.b16 %v1307
        %v1603 = vunpack.c.l.b16 %v1308
        %v1604 = vunpack.c.l.b16 %v1309
        %v1605 = vunpack.c.l.b16 %v1310
        %v1606 = vunpack.c.l.b16 %v1311
        %v1607 = vunpack.c.l.b16 %v1312
        %v1608 = vunpack.c.l.b16 %v1313
        %v1609 = vunpack.c.l.b16 %v1314
        %v1610 = vunpack.c.l.b16 %v1315
        %v1611 = vunpack.c.l.b16 %v1316
        %v1612 = vunpack.c.l.b16 %v1317
        %v1613 = vunpack.c.l.b16 %v1318
        %v1614 = vunpack.c.l.b16 %v1319
        %v1615 = vunpack.c.l.b16 %v1320
        %v1616 = vunpack.c.l.b16 %v1321
        %v1617 = vunpack.c.l.b16 %v1322
        %v1618 = vunpack.c.l.b16 %v1323
        %v1619 = vunpack.c.l.b16 %v1324
        %v1620 = vunpack.c.l.b16 %v1325
        %v1621 = vunpack.c.l.b16 %v1326
        %v1622 = vunpack.c.l.b16 %v1327
        %v1623 = vunpack.c.l.b16 %v1328
        %v1624 = vunpack.c.l.b16 %v1329
        %v1625 = vunpack.c.l.b16 %v1330
        %v1626 = vunpack.c.l.b16 %v1331
        %v1627 = vunpack.c.l.b16 %v1332
        %v1628 = vunpack.c.l.b16 %v1333
        %v1629 = vunpack.c.l.b16 %v1334
        %v1630 = vunpack.c.l.b16 %v1335
        %v1631 = vunpack.c.l.b16 %v1336
        %v1632 = vunpack.c.l.b16 %v1337
        %v1633 = vunpack.c.l.b16 %v1338
        %v1634 = vunpack.c.l.b16 %v1339
        %v1635 = vunpack.c.l.b16 %v1340
        %v1636 = vunpack.c.l.b16 %v1341
        %v1637 = vunpack.c.l.b16 %v1342
        %v1638 = vunpack.c.l.b16 %v1343
        %v1639 = vunpack.c.l.b16 %v1344
        %v1640 = vunpack.c.l.b16 %v1345
        %v1641 = vunpack.c.l.b16 %v1346
        %v1642 = vunpack.c.l.b16 %v1347
        %v1643 = vunpack.c.l.b16 %v1348
        %v1644 = vunpack.c.l.b16 %v1349
        %v1645 = vunpack.c.l.b16 %v1350
        %v1646 = vunpack.c.l.b16 %v1351
        %v1647 = vunpack.c.l.b16 %v1352
        %v1648 = vunpack.c.l.b16 %v1353
        %v1649 = vunpack.c.l.b16 %v1354
        %v1650 = vunpack.c.l.b16 %v1355
        %v1651 = vunpack.c.l.b16 %v1356
        %v1652 = vunpack.c.l.b16 %v1357
        %v1653 = vunpack.c.l.b16 %v1358
        %v1654 = vunpack.c.l.b16 %v1359
        %v1655 = vunpack.c.l.b16 %v1360
        %v1656 = vunpack.c.l.b16 %v1361
        %v1657 = vunpack.c.l.b16 %v1362
        %v1658 = vunpack.c.l.b16 %v1363
        %v1659 = vunpack.c.l.b16 %v1364
        %v1660 = vunpack.c.l.b16 %v1365
        %v1661 = vunpack.c.l.b16 %v1366
        %v1662 = vunpack.c.l.b16 %v1367
        %v1663 = vunpack.c.l.b16 %v1368
        %v1664 = vunpack.c.l.b16 %v1369
        %v1665 = vunpack.c.l.b16 %v1370
        %v1666 = vunpack.c.l.b16 %v1371
        %v1667 = vunpack.c.l.b16 %v1372
        %v1668 = vunpack.c.l.b16 %v1373
        %v1669 = vunpack.c.l.b16 %v1374
        %v1670 = vunpack.c.l.b16 %v1375
        %v1671 = vunpack.c.l.b16 %v1376
        %v1672 = vunpack.c.l.b16 %v1377
        %v1673 = vunpack.c.l.b16 %v1378
        %v1674 = vunpack.c.l.b16 %v1379
        %v1675 = vpack.c.b16 %v1532, %v1531
        %v1676 = vpack.c.b16 %v1534, %v1533
        %v1677 = vpack.c.b16 %v1536, %v1535
        %v1678 = vpack.c.b16 %v1538, %v1537
        %v1679 = vpack.c.b16 %v1540, %v1539
        %v1680 = vpack.c.b16 %v1542, %v1541
        %v1681 = vpack.c.b16 %v1544, %v1543
        %v1682 = vpack.c.b16 %v1546, %v1545
        %v1683 = vpack.c.b16 %v1548, %v1547
        %v1684 = vpack.c.b16 %v1550, %v1549
        %v1685 = vpack.c.b16 %v1552, %v1551
        %v1686 = vpack.c.b16 %v1554, %v1553
        %v1687 = vpack.c.b16 %v1556, %v1555
        %v1688 = vpack.c.b16 %v1558, %v1557
        %v1689 = vpack.c.b16 %v1560, %v1559
        %v1690 = vpack.c.b16 %v1562, %v1561
        %v1691 = vpack.c.b16 %v1564, %v1563
        %v1692 = vpack.c.b16 %v1566, %v1565
        %v1693 = vpack.c.b16 %v1568, %v1567
        %v1694 = vpack.c.b16 %v1570, %v1569
        %v1695 = vpack.c.b16 %v1572, %v1571
        %v1696 = vpack.c.b16 %v1574, %v1573
        %v1697 = vpack.c.b16 %v1576, %v1575
        %v1698 = vpack.c.b16 %v1578, %v1577
        %v1699 = vpack.c.b16 %v1580, %v1579
        %v1700 = vpack.c.b16 %v1582, %v1581
        %v1701 = vpack.c.b16 %v1584, %v1583
        %v1702 = vpack.c.b16 %v1586, %v1585
        %v1703 = vpack.c.b16 %v1588, %v1587
        %v1704 = vpack.c.b16 %v1590, %v1589
        %v1705 = vpack.c.b16 %v1592, %v1591
        %v1706 = vpack.c.b16 %v1594, %v1593
        %v1707 = vpack.c.b16 %v1596, %v1595
        %v1708 = vpack.c.b16 %v1598, %v1597
        %v1709 = vpack.c.b16 %v1600, %v1599
        %v1710 = vpack.c.b16 %v1602, %v1601
        %v1711 = vpack.c.b16 %v1604, %v1603
        %v1712 = vpack.c.b16 %v1606, %v1605
        %v1713 = vpack.c.b16 %v1608, %v1607
        %v1714 = vpack.c.b16 %v1610, %v1609
        %v1715 = vpack.c.b16 %v1612, %v1611
        %v1716 = vpack.c.b16 %v1614, %v1613
        %v1717 = vpack.c.b16 %v1616, %v1615
        %v1718 = vpack.c.b16 %v1618, %v1617
        %v1719 = vpack.c.b16 %v1620, %v1619
        %v1720 = vpack.c.b16 %v1622, %v1621
        %v1721 = vpack.c.b16 %v1624, %v1623
        %v1722 = vpack.c.b16 %v1626, %v1625
        %v1723 = vpack.c.b16 %v1628, %v1627
        %v1724 = vpack.c.b16 %v1630, %v1629
        %v1725 = vpack.c.b16 %v1632, %v1631
        %v1726 = vpack.c.b16 %v1634, %v1633
        %v1727 = vpack.c.b16 %v1636, %v1635
        %v1728 = vpack.c.b16 %v1638, %v1637
        %v1729 = vpack.c.b16 %v1640, %v1639
        %v1730 = vpack.c.b16 %v1642, %v1641
        %v1731 = vpack.c.b16 %v1644, %v1643
        %v1732 = vpack.c.b16 %v1646, %v1645
        %v1733 = vpack.c.b16 %v1648, %v1647
        %v1734 = vpack.c.b16 %v1650, %v1649
        %v1735 = vpack.c.b16 %v1652, %v1651
        %v1736 = vpack.c.b16 %v1654, %v1653
        %v1737 = vpack.c.b16 %v1656, %v1655
        %v1738 = vpack.c.b16 %v1658, %v1657
        %v1739 = vpack.c.b16 %v1660, %v1659
        %v1740 = vpack.c.b16 %v1662, %v1661
        %v1741 = vpack.c.b16 %v1664, %v1663
        %v1742 = vpack.c.b16 %v1666, %v1665
        %v1743 = vpack.c.b16 %v1668, %v1667
        %v1744 = vpack.c.b16 %v1670, %v1669
        %v1745 = vpack.c.b16 %v1672, %v1671
        %v1746 = vpack.c.b16 %v1674, %v1673
        %1819 = vmatprep.subr.bf16.mxu0 0
        %1820 = vmatpush1.bf16.msra.mxu0 %v1675
        %1821 = vmatprep.subr.bf16.mxu0 0
        %1822 = vmatpush1.bf16.msra.mxu0 %v1676
        %1823 = vmatprep.subr.bf16.mxu0 0
        %1824 = vmatpush1.bf16.msra.mxu0 %v1677
        %1825 = vmatprep.subr.bf16.mxu0 0
        %1826 = vmatpush1.bf16.msra.mxu0 %v1678
        %1827 = vmatprep.subr.bf16.mxu0 0
        %1828 = vmatpush1.bf16.msra.mxu0 %v1679
        %1829 = vmatprep.subr.bf16.mxu0 0
        %1830 = vmatpush1.bf16.msra.mxu0 %v1680
        %1831 = vmatprep.subr.bf16.mxu0 0
        %1832 = vmatpush1.bf16.msra.mxu0 %v1681
        %1833 = vmatprep.subr.bf16.mxu0 0
        %1834 = vmatpush1.bf16.msra.mxu0 %v1682
        %1835 = vmatprep.subr.bf16.mxu0 0
        %1836 = vmatpush1.bf16.msra.mxu0 %v1683
        %1837 = vmatprep.subr.bf16.mxu0 0
        %1838 = vmatpush1.bf16.msra.mxu0 %v1684
        %1839 = vmatprep.subr.bf16.mxu0 0
        %1840 = vmatpush1.bf16.msra.mxu0 %v1685
        %1841 = vmatprep.subr.bf16.mxu0 0
        %1842 = vmatpush1.bf16.msra.mxu0 %v1686
        %1843 = vmatprep.subr.bf16.mxu0 0
        %1844 = vmatpush1.bf16.msra.mxu0 %v1687
        %1845 = vmatprep.subr.bf16.mxu0 0
        %1846 = vmatpush1.bf16.msra.mxu0 %v1688
        %1847 = vmatprep.subr.bf16.mxu0 0
        %1848 = vmatpush1.bf16.msra.mxu0 %v1689
        %1849 = vmatprep.subr.bf16.mxu0 0
        %1850 = vmatpush1.bf16.msra.mxu0 %v1690
        %1851 = vmatprep.mubr.bf16.mxu0 %v1201
        %1852 = vmatmul.mubr.bf16.gmra.mrb[0].mxu0 %v1200
        %v1853 = vpop.f32.mrb[0].mxu0
        %v1854 = vadd.f32 %v1385, %v1853
        %v1855 = vpop.f32.mrb[0].mxu0
        %v1856 = vpop.f32.mrb[0].mxu0
        %v1857 = vadd.f32 %v1385, %v1856
        %v1858 = vpop.f32.mrb[0].mxu0
        %1859 = vmatprep.mubr.bf16.mxu0 %v1210
        %1860 = vmatmul.mubr.bf16.gmra.mrb[0].mxu0 %v1209
        %v1861 = vpop.f32.mrb[0].mxu0
        %v1862 = vadd.f32 %v1385, %v1861
        %v1863 = vpop.f32.mrb[0].mxu0
        %v1864 = vpop.f32.mrb[0].mxu0
        %v1865 = vadd.f32 %v1385, %v1864
        %v1866 = vpop.f32.mrb[0].mxu0
        %1867 = vmatprep.mubr.bf16.mxu0 %v1219
        %1868 = vmatmul.mubr.bf16.gmra.mrb[0].mxu0 %v1218
        %v1869 = vpop.f32.mrb[0].mxu0
        %v1870 = vadd.f32 %v1385, %v1869
        %v1871 = vpop.f32.mrb[0].mxu0
        %v1872 = vpop.f32.mrb[0].mxu0
        %v1873 = vadd.f32 %v1385, %v1872
        %v1874 = vpop.f32.mrb[0].mxu0
        %1875 = vmatprep.mubr.bf16.mxu0 %v1228
        %1876 = vmatmul.mubr.bf16.gmra.mrb[0].mxu0 %v1227
        %v1877 = vpop.f32.mrb[0].mxu0
        %v1878 = vadd.f32 %v1385, %v1877
        %v1879 = vpop.f32.mrb[0].mxu0
        %v1880 = vpop.f32.mrb[0].mxu0
        %v1881 = vadd.f32 %v1385, %v1880
        %v1882 = vpop.f32.mrb[0].mxu0
        %1883 = vdwg.mxu0
        %1884 = vmatprep.subr.bf16.mxu0 0
        %1885 = vmatpush1.bf16.msra.mxu0 %v1691
        %1886 = vmatprep.subr.bf16.mxu0 0
        %1887 = vmatpush1.bf16.msra.mxu0 %v1692
        %1888 = vmatprep.subr.bf16.mxu0 0
        %1889 = vmatpush1.bf16.msra.mxu0 %v1693
        %1890 = vmatprep.subr.bf16.mxu0 0
        %1891 = vmatpush1.bf16.msra.mxu0 %v1694
        %1892 = vmatprep.subr.bf16.mxu0 0
        %1893 = vmatpush1.bf16.msra.mxu0 %v1695
        %1894 = vmatprep.subr.bf16.mxu0 0
        %1895 = vmatpush1.bf16.msra.mxu0 %v1696
        %1896 = vmatprep.subr.bf16.mxu0 0
        %1897 = vmatpush1.bf16.msra.mxu0 %v1697
        %1898 = vmatprep.subr.bf16.mxu0 0
        %1899 = vmatpush1.bf16.msra.mxu0 %v1698
        %1900 = vmatprep.subr.bf16.mxu0 0
        %1901 = vmatpush1.bf16.msra.mxu0 %v1699
        %1902 = vmatprep.subr.bf16.mxu0 0
        %1903 = vmatpush1.bf16.msra.mxu0 %v1700
        %1904 = vmatprep.subr.bf16.mxu0 0
        %1905 = vmatpush1.bf16.msra.mxu0 %v1701
        %1906 = vmatprep.subr.bf16.mxu0 0
        %1907 = vmatpush1.bf16.msra.mxu0 %v1702
        %1908 = vmatprep.subr.bf16.mxu0 0
        %1909 = vmatpush1.bf16.msra.mxu0 %v1703
        %1910 = vmatprep.subr.bf16.mxu0 0
        %1911 = vmatpush1.bf16.msra.mxu0 %v1704
        %1912 = vmatprep.subr.bf16.mxu0 0
        %1913 = vmatpush1.bf16.msra.mxu0 %v1705
        %1914 = vmatprep.subr.bf16.mxu0 0
        %1915 = vmatpush1.bf16.msra.mxu0 %v1706
        %1916 = vmatprep.mubr.bf16.mxu0 %v1203
        %1917 = vmatmul.mubr.bf16.gmra.mrb[0].mxu0 %v1202
        %v1918 = vpop.f32.mrb[0].mxu0
        %v1919 = vadd.f32 %v1854, %v1918
        %v1920 = vpop.f32.mrb[0].mxu0
        %v1921 = vpop.f32.mrb[0].mxu0
        %v1922 = vadd.f32 %v1857, %v1921
        %v1923 = vpop.f32.mrb[0].mxu0
        %1924 = vmatprep.mubr.bf16.mxu0 %v1212
        %1925 = vmatmul.mubr.bf16.gmra.mrb[0].mxu0 %v1211
        %v1926 = vpop.f32.mrb[0].mxu0
        %v1927 = vadd.f32 %v1862, %v1926
        %v1928 = vpop.f32.mrb[0].mxu0
        %v1929 = vpop.f32.mrb[0].mxu0
        %v1930 = vadd.f32 %v1865, %v1929
        %v1931 = vpop.f32.mrb[0].mxu0
        %1932 = vmatprep.mubr.bf16.mxu0 %v1221
        %1933 = vmatmul.mubr.bf16.gmra.mrb[0].mxu0 %v1220
        %v1934 = vpop.f32.mrb[0].mxu0
        %v1935 = vadd.f32 %v1870, %v1934
        %v1936 = vpop.f32.mrb[0].mxu0
        %v1937 = vpop.f32.mrb[0].mxu0
        %v1938 = vadd.f32 %v1873, %v1937
        %v1939 = vpop.f32.mrb[0].mxu0
        %1940 = vmatprep.mubr.bf16.mxu0 %v1230
        %1941 = vmatmul.mubr.bf16.gmra.mrb[0].mxu0 %v1229
        %v1942 = vpop.f32.mrb[0].mxu0
        %v1943 = vadd.f32 %v1878, %v1942
        %v1944 = vpop.f32.mrb[0].mxu0
        %v1945 = vpop.f32.mrb[0].mxu0
        %v1946 = vadd.f32 %v1881, %v1945
        %v1947 = vpop.f32.mrb[0].mxu0
        %1948 = vdwg.mxu0
        %1949 = vmatprep.subr.bf16.mxu0 0
        %1950 = vmatpush1.bf16.msra.mxu0 %v1707
        %1951 = vmatprep.subr.bf16.mxu0 0
        %1952 = vmatpush1.bf16.msra.mxu0 %v1708
        %1953 = vmatprep.subr.bf16.mxu0 0
        %1954 = vmatpush1.bf16.msra.mxu0 %v1709
        %1955 = vmatprep.subr.bf16.mxu0 0
        %1956 = vmatpush1.bf16.msra.mxu0 %v1710
        %1957 = vmatprep.subr.bf16.mxu0 0
        %1958 = vmatpush1.bf16.msra.mxu0 %v1711
        %1959 = vmatprep.subr.bf16.mxu0 0
        %1960 = vmatpush1.bf16.msra.mxu0 %v1712
        %1961 = vmatprep.subr.bf16.mxu0 0
        %1962 = vmatpush1.bf16.msra.mxu0 %v1713
        %1963 = vmatprep.subr.bf16.mxu0 0
        %1964 = vmatpush1.bf16.msra.mxu0 %v1714
        %1965 = vmatprep.subr.bf16.mxu0 0
        %1966 = vmatpush1.bf16.msra.mxu0 %v1715
        %1967 = vmatprep.subr.bf16.mxu0 0
        %1968 = vmatpush1.bf16.msra.mxu0 %v1716
        %1969 = vmatprep.subr.bf16.mxu0 0
        %1970 = vmatpush1.bf16.msra.mxu0 %v1717
        %1971 = vmatprep.subr.bf16.mxu0 0
        %1972 = vmatpush1.bf16.msra.mxu0 %v1718
        %1973 = vmatprep.subr.bf16.mxu0 0
        %1974 = vmatpush1.bf16.msra.mxu0 %v1719
        %1975 = vmatprep.subr.bf16.mxu0 0
        %1976 = vmatpush1.bf16.msra.mxu0 %v1720
        %1977 = vmatprep.subr.bf16.mxu0 0
        %1978 = vmatpush1.bf16.msra.mxu0 %v1721
        %1979 = vmatprep.subr.bf16.mxu0 0
        %1980 = vmatpush1.bf16.msra.mxu0 %v1722
        %1981 = vmatprep.mubr.bf16.mxu0 %v1205
        %1982 = vmatmul.mubr.bf16.gmra.mrb[0].mxu0 %v1204
        %v1983 = vpop.f32.mrb[0].mxu0
        %v1984 = vadd.f32 %v1919, %v1983
        %v1985 = vpop.f32.mrb[0].mxu0
        %v1986 = vpop.f32.mrb[0].mxu0
        %v1987 = vadd.f32 %v1922, %v1986
        %v1988 = vpop.f32.mrb[0].mxu0
        %1989 = vmatprep.mubr.bf16.mxu0 %v1214
        %1990 = vmatmul.mubr.bf16.gmra.mrb[0].mxu0 %v1213
        %v1991 = vpop.f32.mrb[0].mxu0
        %v1992 = vadd.f32 %v1927, %v1991
        %v1993 = vpop.f32.mrb[0].mxu0
        %v1994 = vpop.f32.mrb[0].mxu0
        %v1995 = vadd.f32 %v1930, %v1994
        %v1996 = vpop.f32.mrb[0].mxu0
        %1997 = vmatprep.mubr.bf16.mxu0 %v1223
        %1998 = vmatmul.mubr.bf16.gmra.mrb[0].mxu0 %v1222
        %v1999 = vpop.f32.mrb[0].mxu0
        %v2000 = vadd.f32 %v1935, %v1999
        %v2001 = vpop.f32.mrb[0].mxu0
        %v2002 = vpop.f32.mrb[0].mxu0
        %v2003 = vadd.f32 %v1938, %v2002
        %v2004 = vpop.f32.mrb[0].mxu0
        %2005 = vmatprep.mubr.bf16.mxu0 %v1232
        %2006 = vmatmul.mubr.bf16.gmra.mrb[0].mxu0 %v1231
        %v2007 = vpop.f32.mrb[0].mxu0
        %v2008 = vadd.f32 %v1943, %v2007
        %v2009 = vpop.f32.mrb[0].mxu0
        %v2010 = vpop.f32.mrb[0].mxu0
        %v2011 = vadd.f32 %v1946, %v2010
        %v2012 = vpop.f32.mrb[0].mxu0
        %2013 = vdwg.mxu0
        %2014 = vmatprep.subr.bf16.mxu0 0
        %2015 = vmatpush1.bf16.msra.mxu0 %v1723
        %2016 = vmatprep.subr.bf16.mxu0 0
        %2017 = vmatpush1.bf16.msra.mxu0 %v1724
        %2018 = vmatprep.subr.bf16.mxu0 0
        %2019 = vmatpush1.bf16.msra.mxu0 %v1725
        %2020 = vmatprep.subr.bf16.mxu0 0
        %2021 = vmatpush1.bf16.msra.mxu0 %v1726
        %2022 = vmatprep.subr.bf16.mxu0 0
        %2023 = vmatpush1.bf16.msra.mxu0 %v1727
        %2024 = vmatprep.subr.bf16.mxu0 0
        %2025 = vmatpush1.bf16.msra.mxu0 %v1728
        %2026 = vmatprep.subr.bf16.mxu0 0
        %2027 = vmatpush1.bf16.msra.mxu0 %v1729
        %2028 = vmatprep.subr.bf16.mxu0 0
        %2029 = vmatpush1.bf16.msra.mxu0 %v1730
        %2030 = vmatprep.subr.bf16.mxu0 0
        %2031 = vmatpush1.bf16.msra.mxu0 %v1731
        %2032 = vmatprep.subr.bf16.mxu0 0
        %2033 = vmatpush1.bf16.msra.mxu0 %v1732
        %2034 = vmatprep.subr.bf16.mxu0 0
        %2035 = vmatpush1.bf16.msra.mxu0 %v1733
        %2036 = vmatprep.subr.bf16.mxu0 0
        %2037 = vmatpush1.bf16.msra.mxu0 %v1734
        %2038 = vmatprep.subr.bf16.mxu0 0
        %2039 = vmatpush1.bf16.msra.mxu0 %v1735
        %2040 = vmatprep.subr.bf16.mxu0 0
        %2041 = vmatpush1.bf16.msra.mxu0 %v1736
        %2042 = vmatprep.subr.bf16.mxu0 0
        %2043 = vmatpush1.bf16.msra.mxu0 %v1737
        %2044 = vmatprep.subr.bf16.mxu0 0
        %2045 = vmatpush1.bf16.msra.mxu0 %v1738
        %2046 = vmatprep.mubr.bf16.mxu0 %v1207
        %2047 = vmatmul.mubr.bf16.gmra.mrb[0].mxu0 %v1206
        %v2048 = vpop.f32.mrb[0].mxu0
        %v2049 = vadd.f32 %v1984, %v2048
        %v2050 = vpop.f32.mrb[0].mxu0
        %v2051 = vpop.f32.mrb[0].mxu0
        %v2052 = vadd.f32 %v1987, %v2051
        %v2053 = vpop.f32.mrb[0].mxu0
        %2054 = vmatprep.mubr.bf16.mxu0 %v1216
        %2055 = vmatmul.mubr.bf16.gmra.mrb[0].mxu0 %v1215
        %v2056 = vpop.f32.mrb[0].mxu0
        %v2057 = vadd.f32 %v1992, %v2056
        %v2058 = vpop.f32.mrb[0].mxu0
        %v2059 = vpop.f32.mrb[0].mxu0
        %v2060 = vadd.f32 %v1995, %v2059
        %v2061 = vpop.f32.mrb[0].mxu0
        %2062 = vmatprep.mubr.bf16.mxu0 %v1225
        %2063 = vmatmul.mubr.bf16.gmra.mrb[0].mxu0 %v1224
        %v2064 = vpop.f32.mrb[0].mxu0
        %v2065 = vadd.f32 %v2000, %v2064
        %v2066 = vpop.f32.mrb[0].mxu0
        %v2067 = vpop.f32.mrb[0].mxu0
        %v2068 = vadd.f32 %v2003, %v2067
        %v2069 = vpop.f32.mrb[0].mxu0
        %2070 = vmatprep.mubr.bf16.mxu0 %v1234
        %2071 = vmatmul.mubr.bf16.gmra.mrb[0].mxu0 %v1233
        %v2072 = vpop.f32.mrb[0].mxu0
        %v2073 = vadd.f32 %v2008, %v2072
        %v2074 = vpop.f32.mrb[0].mxu0
        %v2075 = vpop.f32.mrb[0].mxu0
        %v2076 = vadd.f32 %v2011, %v2075
        %v2077 = vpop.f32.mrb[0].mxu0
        %2078 = vdwg.mxu0
        %2079 = vmatprep.subr.bf16.mxu0 0
        %2080 = vmatpush1.bf16.msra.mxu0 %v1739
        %2081 = vmatprep.subr.bf16.mxu0 0
        %2082 = vmatpush1.bf16.msra.mxu0 %v1740
        %2083 = vmatprep.subr.bf16.mxu0 0
        %2084 = vmatpush1.bf16.msra.mxu0 %v1741
        %2085 = vmatprep.subr.bf16.mxu0 0
        %2086 = vmatpush1.bf16.msra.mxu0 %v1742
        %2087 = vmatprep.subr.bf16.mxu0 0
        %2088 = vmatpush1.bf16.msra.mxu0 %v1743
        %2089 = vmatprep.subr.bf16.mxu0 0
        %2090 = vmatpush1.bf16.msra.mxu0 %v1744
        %2091 = vmatprep.subr.bf16.mxu0 0
        %2092 = vmatpush1.bf16.msra.mxu0 %v1745
        %2093 = vmatprep.subr.bf16.mxu0 0
        %2094 = vmatpush1.bf16.msra.mxu0 %v1746
        %2095 = vmatprep.subr.bf16.mxu0 0
        %2096 = vmatpush1.bf16.msra.mxu0 0
        %2097 = vmatprep.subr.bf16.mxu0 0
        %2098 = vmatpush1.bf16.msra.mxu0 0
        %2099 = vmatprep.subr.bf16.mxu0 0
        %2100 = vmatpush1.bf16.msra.mxu0 0
        %2101 = vmatprep.subr.bf16.mxu0 0
        %2102 = vmatpush1.bf16.msra.mxu0 0
        %2103 = vmatprep.subr.bf16.mxu0 0
        %2104 = vmatpush1.bf16.msra.mxu0 0
        %2105 = vmatprep.subr.bf16.mxu0 0
        %2106 = vmatpush1.bf16.msra.mxu0 0
        %2107 = vmatprep.subr.bf16.mxu0 0
        %2108 = vmatpush1.bf16.msra.mxu0 0
        %2109 = vmatprep.subr.bf16.mxu0 0
        %2110 = vmatpush1.bf16.msra.mxu0 0
        %2111 = vmatprep.mubr.bf16.mxu0 0
        %2112 = vmatmul.mubr.bf16.gmra.mrb[0].mxu0 %v1208
        %v2113 = vpop.f32.mrb[0].mxu0
        %v2114 = vadd.f32 %v2049, %v2113
        %v2115 = vpop.f32.mrb[0].mxu0
        %v2116 = vpop.f32.mrb[0].mxu0
        %v2117 = vadd.f32 %v2052, %v2116
        %v2118 = vpop.f32.mrb[0].mxu0
        %2119 = vmatprep.mubr.bf16.mxu0 0
        %2120 = vmatmul.mubr.bf16.gmra.mrb[0].mxu0 %v1217
        %v2121 = vpop.f32.mrb[0].mxu0
        %v2122 = vadd.f32 %v2057, %v2121
        %v2123 = vpop.f32.mrb[0].mxu0
        %v2124 = vpop.f32.mrb[0].mxu0
        %v2125 = vadd.f32 %v2060, %v2124
        %v2126 = vpop.f32.mrb[0].mxu0
        %2127 = vmatprep.mubr.bf16.mxu0 0
        %2128 = vmatmul.mubr.bf16.gmra.mrb[0].mxu0 %v1226
        %v2129 = vpop.f32.mrb[0].mxu0
        %v2130 = vadd.f32 %v2065, %v2129
        %v2131 = vpop.f32.mrb[0].mxu0
        %v2132 = vpop.f32.mrb[0].mxu0
        %v2133 = vadd.f32 %v2068, %v2132
        %v2134 = vpop.f32.mrb[0].mxu0
        %2135 = vmatprep.mubr.bf16.mxu0 0
        %2136 = vmatmul.mubr.bf16.gmra.mrb[0].mxu0 %v1235
        %v2137 = vpop.f32.mrb[0].mxu0
        %v2138 = vadd.f32 %v2073, %v2137
        %v2139 = vpop.f32.mrb[0].mxu0
        %v2140 = vpop.f32.mrb[0].mxu0
        %v2141 = vadd.f32 %v2076, %v2140
        %v2142 = vpop.f32.mrb[0].mxu0
        %2143 = vdwg.mxu0
        %v2144 = vadd.f32 %v937, %v2114
        %v2145 = vadd.f32 %v940, %v2117
        %v2146 = vadd.f32 %v945, %v2122
        %v2147 = vadd.f32 %v948, %v2125
        %v2148 = vadd.f32 %v953, %v2130
        %v2149 = vadd.f32 %v956, %v2133
        %v2150 = vadd.f32 %v961, %v2138
        %v2151 = vadd.f32 %v964, %v2141
        %v2152 = vpack.c.bf16 %v2145, %v2144
        %v2153 = vpack.c.bf16 %v2147, %v2146
        %v2154 = vpack.c.bf16 %v2149, %v2148
        %v2155 = vpack.c.bf16 %v2151, %v2150
        %v2156 = vld [vmem:[%s5] sm:$0xf]
        %v2157 = vld [vmem:[%s5 + $0x4] sm:$0xf]
        %v2158 = vld [vmem:[%s6] sm:$0x1]
        %v2160 = vlaneseq
        %v2161 = vshrl.u32 %v2160, 7
        %v2162 = vsub.s32 0, %v2161
        %v2163 = vrot.slane %v2158, %v2162
        %v2167 = vunpack.c.l.b16 %v2156
        %v2168 = vunpack.c.l.b16 %v2157
        %v2169 = vpack.c.b16 %v2168, %v2167
        %v2172 = vsel %vm713, %v2152, 0
        %v2175 = vsel %vm713, %v2153, 0
        %v2178 = vsel %vm713, %v2154, 0
        %v2181 = vsel %vm713, %v2155, 0
        %2183 = vmatprep.subr.bf16.mxu0 0
        %2184 = vmatpush1.bf16.msra.mxu0 %v2169
        %2185 = vmatprep.subr.bf16.mxu0 0
        %2186 = vmatpush1.bf16.msra.mxu0 0
        %2187 = vmatprep.subr.bf16.mxu0 0
        %2188 = vmatpush1.bf16.msra.mxu0 0
        %2189 = vmatprep.subr.bf16.mxu0 0
        %2190 = vmatpush1.bf16.msra.mxu0 0
        %2191 = vmatprep.subr.bf16.mxu0 0
        %2192 = vmatpush1.bf16.msra.mxu0 0
        %2193 = vmatprep.subr.bf16.mxu0 0
        %2194 = vmatpush1.bf16.msra.mxu0 0
        %2195 = vmatprep.subr.bf16.mxu0 0
        %2196 = vmatpush1.bf16.msra.mxu0 0
        %2197 = vmatprep.subr.bf16.mxu0 0
        %2198 = vmatpush1.bf16.msra.mxu0 0
        %2199 = vmatprep.subr.bf16.mxu0 0
        %2200 = vmatpush1.bf16.msra.mxu0 0
        %2201 = vmatprep.subr.bf16.mxu0 0
        %2202 = vmatpush1.bf16.msra.mxu0 0
        %2203 = vmatprep.subr.bf16.mxu0 0
        %2204 = vmatpush1.bf16.msra.mxu0 0
        %2205 = vmatprep.subr.bf16.mxu0 0
        %2206 = vmatpush1.bf16.msra.mxu0 0
        %2207 = vmatprep.subr.bf16.mxu0 0
        %2208 = vmatpush1.bf16.msra.mxu0 0
        %2209 = vmatprep.subr.bf16.mxu0 0
        %2210 = vmatpush1.bf16.msra.mxu0 0
        %2211 = vmatprep.subr.bf16.mxu0 0
        %2212 = vmatpush1.bf16.msra.mxu0 0
        %2213 = vmatprep.subr.bf16.mxu0 0
        %2214 = vmatpush1.bf16.msra.mxu0 0
        %2215 = vmatprep.mubr.bf16.mxu0 0
        %2216 = vmatmul.mubr.bf16.gmra.mrb[0].mxu0 %v2172
        %v2217 = vpop.f32.mrb[0].mxu0
        %v2218 = vadd.f32 %v2163, %v2217
        %v2219 = vpop.f32.mrb[0].mxu0
        %v2220 = vpop.f32.mrb[0].mxu0
        %v2221 = vadd.f32 %v2163, %v2220
        %v2222 = vpop.f32.mrb[0].mxu0
        %2223 = vmatprep.mubr.bf16.mxu0 0
        %2224 = vmatmul.mubr.bf16.gmra.mrb[0].mxu0 %v2175
        %v2225 = vpop.f32.mrb[0].mxu0
        %v2226 = vadd.f32 %v2163, %v2225
        %v2227 = vpop.f32.mrb[0].mxu0
        %v2228 = vpop.f32.mrb[0].mxu0
        %v2229 = vadd.f32 %v2163, %v2228
        %v2230 = vpop.f32.mrb[0].mxu0
        %2231 = vmatprep.mubr.bf16.mxu0 0
        %2232 = vmatmul.mubr.bf16.gmra.mrb[0].mxu0 %v2178
        %v2233 = vpop.f32.mrb[0].mxu0
        %v2234 = vadd.f32 %v2163, %v2233
        %v2235 = vpop.f32.mrb[0].mxu0
        %v2236 = vpop.f32.mrb[0].mxu0
        %v2237 = vadd.f32 %v2163, %v2236
        %v2238 = vpop.f32.mrb[0].mxu0
        %2239 = vmatprep.mubr.bf16.mxu0 0
        %2240 = vmatmul.mubr.bf16.gmra.mrb[0].mxu0 %v2181
        %v2241 = vpop.f32.mrb[0].mxu0
        %v2242 = vadd.f32 %v2163, %v2241
        %v2243 = vpop.f32.mrb[0].mxu0
        %v2244 = vpop.f32.mrb[0].mxu0
        %v2245 = vadd.f32 %v2163, %v2244
        %v2246 = vpop.f32.mrb[0].mxu0
        %2247 = vdwg.mxu0
        %v2248 = vmax.f32 %v2218, 0.0
        %v2249 = vmax.f32 %v2221, 0.0
        %v2250 = vmax.f32 %v2226, 0.0
        %v2251 = vmax.f32 %v2229, 0.0
        %v2252 = vmax.f32 %v2234, 0.0
        %v2253 = vmax.f32 %v2237, 0.0
        %v2254 = vmax.f32 %v2242, 0.0
        %v2255 = vmax.f32 %v2245, 0.0
        %v2256 = vpack.c.bf16 %v2249, %v2248
        %v2257 = vpack.c.bf16 %v2251, %v2250
        %v2258 = vpack.c.bf16 %v2253, %v2252
        %v2259 = vpack.c.bf16 %v2255, %v2254
        %v2260 = vld [vmem:[%s7] sm:$0xff]
        %v2261 = vld [vmem:[%s7 + $0x8] sm:$0xff]
        %v2262 = vld [vmem:[%s7 + $0x10] sm:$0xff]
        %v2263 = vld [vmem:[%s7 + $0x18] sm:$0xff]
        %v2264 = vld [vmem:[%s7 + $0x20] sm:$0xff]
        %v2265 = vld [vmem:[%s7 + $0x28] sm:$0xff]
        %v2266 = vld [vmem:[%s7 + $0x30] sm:$0xff]
        %v2267 = vld [vmem:[%s7 + $0x38] sm:$0xff]
        %v2268 = vld [vmem:[%s7 + $0x40] sm:$0xff]
        %v2269 = vld [vmem:[%s7 + $0x48] sm:$0xff]
        %v2270 = vld [vmem:[%s7 + $0x50] sm:$0xff]
        %v2271 = vld [vmem:[%s7 + $0x58] sm:$0xff]
        %v2272 = vld [vmem:[%s7 + $0x60] sm:$0xff]
        %v2273 = vld [vmem:[%s7 + $0x68] sm:$0xff]
        %v2274 = vld [vmem:[%s7 + $0x70] sm:$0xff]
        %v2275 = vld [vmem:[%s7 + $0x78] sm:$0xff]
        %v2276 = vld [vmem:[%s8] sm:$0xf]
        %v2278 = vlaneseq
        %v2279 = vshrl.u32 %v2278, 7
        %v2280 = vsub.s32 0, %v2279
        %v2281 = vrot.slane %v2276, %v2280
        %v2282 = vlaneseq
        %v2283 = vshrl.u32 %v2282, 7
        %v2284 = vsub.s32 1, %v2283
        %v2285 = vrot.slane %v2276, %v2284
        %v2286 = vlaneseq
        %v2287 = vshrl.u32 %v2286, 7
        %v2288 = vsub.s32 2, %v2287
        %v2289 = vrot.slane %v2276, %v2288
        %v2290 = vlaneseq
        %v2291 = vshrl.u32 %v2290, 7
        %v2292 = vsub.s32 3, %v2291
        %v2293 = vrot.slane %v2276, %v2292
        %v2314 = vunpack.c.l.b16 %v2260
        %v2315 = vunpack.c.h.b16 %v2260
        %v2316 = vunpack.c.l.b16 %v2261
        %v2317 = vunpack.c.h.b16 %v2261
        %v2318 = vunpack.c.l.b16 %v2262
        %v2319 = vunpack.c.h.b16 %v2262
        %v2320 = vunpack.c.l.b16 %v2263
        %v2321 = vunpack.c.h.b16 %v2263
        %v2322 = vunpack.c.l.b16 %v2264
        %v2323 = vunpack.c.h.b16 %v2264
        %v2324 = vunpack.c.l.b16 %v2265
        %v2325 = vunpack.c.h.b16 %v2265
        %v2326 = vunpack.c.l.b16 %v2266
        %v2327 = vunpack.c.h.b16 %v2266
        %v2328 = vunpack.c.l.b16 %v2267
        %v2329 = vunpack.c.h.b16 %v2267
        %v2330 = vunpack.c.l.b16 %v2268
        %v2331 = vunpack.c.h.b16 %v2268
        %v2332 = vunpack.c.l.b16 %v2269
        %v2333 = vunpack.c.h.b16 %v2269
        %v2334 = vunpack.c.l.b16 %v2270
        %v2335 = vunpack.c.h.b16 %v2270
        %v2336 = vunpack.c.l.b16 %v2271
        %v2337 = vunpack.c.h.b16 %v2271
        %v2338 = vunpack.c.l.b16 %v2272
        %v2339 = vunpack.c.h.b16 %v2272
        %v2340 = vunpack.c.l.b16 %v2273
        %v2341 = vunpack.c.h.b16 %v2273
        %v2342 = vunpack.c.l.b16 %v2274
        %v2343 = vunpack.c.h.b16 %v2274
        %v2344 = vunpack.c.l.b16 %v2275
        %v2345 = vunpack.c.h.b16 %v2275
        %v2346 = vpack.c.b16 %v2318, %v2314
        %v2347 = vpack.c.b16 %v2319, %v2315
        %v2348 = vpack.c.b16 %v2320, %v2316
        %v2349 = vpack.c.b16 %v2321, %v2317
        %v2350 = vpack.c.b16 %v2326, %v2322
        %v2351 = vpack.c.b16 %v2327, %v2323
        %v2352 = vpack.c.b16 %v2328, %v2324
        %v2353 = vpack.c.b16 %v2329, %v2325
        %v2354 = vpack.c.b16 %v2334, %v2330
        %v2355 = vpack.c.b16 %v2335, %v2331
        %v2356 = vpack.c.b16 %v2336, %v2332
        %v2357 = vpack.c.b16 %v2337, %v2333
        %v2358 = vpack.c.b16 %v2342, %v2338
        %v2359 = vpack.c.b16 %v2343, %v2339
        %v2360 = vpack.c.b16 %v2344, %v2340
        %v2361 = vpack.c.b16 %v2345, %v2341
        %v2379 = vsel %vm889, %v2256, 0
        %v2382 = vsel %vm889, %v2257, 0
        %v2385 = vsel %vm889, %v2258, 0
        %v2388 = vsel %vm889, %v2259, 0
        %2390 = vmatprep.subr.bf16.mxu0 %v2347
        %2391 = vmatpush1.bf16.msra.mxu0 %v2346
        %2392 = vmatprep.subr.bf16.mxu0 %v2351
        %2393 = vmatpush1.bf16.msra.mxu0 %v2350
        %2394 = vmatprep.subr.bf16.mxu0 %v2355
        %2395 = vmatpush1.bf16.msra.mxu0 %v2354
        %2396 = vmatprep.subr.bf16.mxu0 %v2359
        %2397 = vmatpush1.bf16.msra.mxu0 %v2358
        %2398 = vmatprep.subr.bf16.mxu0 0
        %2399 = vmatpush1.bf16.msra.mxu0 0
        %2400 = vmatprep.subr.bf16.mxu0 0
        %2401 = vmatpush1.bf16.msra.mxu0 0
        %2402 = vmatprep.subr.bf16.mxu0 0
        %2403 = vmatpush1.bf16.msra.mxu0 0
        %2404 = vmatprep.subr.bf16.mxu0 0
        %2405 = vmatpush1.bf16.msra.mxu0 0
        %2406 = vmatprep.subr.bf16.mxu0 0
        %2407 = vmatpush1.bf16.msra.mxu0 0
        %2408 = vmatprep.subr.bf16.mxu0 0
        %2409 = vmatpush1.bf16.msra.mxu0 0
        %2410 = vmatprep.subr.bf16.mxu0 0
        %2411 = vmatpush1.bf16.msra.mxu0 0
        %2412 = vmatprep.subr.bf16.mxu0 0
        %2413 = vmatpush1.bf16.msra.mxu0 0
        %2414 = vmatprep.subr.bf16.mxu0 0
        %2415 = vmatpush1.bf16.msra.mxu0 0
        %2416 = vmatprep.subr.bf16.mxu0 0
        %2417 = vmatpush1.bf16.msra.mxu0 0
        %2418 = vmatprep.subr.bf16.mxu0 0
        %2419 = vmatpush1.bf16.msra.mxu0 0
        %2420 = vmatprep.subr.bf16.mxu0 0
        %2421 = vmatpush1.bf16.msra.mxu0 0
        %2422 = vmatprep.mubr.bf16.mxu0 0
        %2423 = vmatmul.mubr.bf16.gmra.mrb[0].mxu0 %v2379
        %v2424 = vpop.f32.mrb[0].mxu0
        %v2425 = vadd.f32 %v2281, %v2424
        %v2426 = vpop.f32.mrb[0].mxu0
        %v2427 = vadd.f32 %v2285, %v2426
        %v2428 = vpop.f32.mrb[0].mxu0
        %v2429 = vadd.f32 %v2281, %v2428
        %v2430 = vpop.f32.mrb[0].mxu0
        %v2431 = vadd.f32 %v2285, %v2430
        %2432 = vmatprep.mubr.bf16.mxu0 0
        %2433 = vmatmul.mubr.bf16.gmra.mrb[0].mxu0 %v2382
        %v2434 = vpop.f32.mrb[0].mxu0
        %v2435 = vadd.f32 %v2281, %v2434
        %v2436 = vpop.f32.mrb[0].mxu0
        %v2437 = vadd.f32 %v2285, %v2436
        %v2438 = vpop.f32.mrb[0].mxu0
        %v2439 = vadd.f32 %v2281, %v2438
        %v2440 = vpop.f32.mrb[0].mxu0
        %v2441 = vadd.f32 %v2285, %v2440
        %2442 = vmatprep.mubr.bf16.mxu0 0
        %2443 = vmatmul.mubr.bf16.gmra.mrb[0].mxu0 %v2385
        %v2444 = vpop.f32.mrb[0].mxu0
        %v2445 = vadd.f32 %v2281, %v2444
        %v2446 = vpop.f32.mrb[0].mxu0
        %v2447 = vadd.f32 %v2285, %v2446
        %v2448 = vpop.f32.mrb[0].mxu0
        %v2449 = vadd.f32 %v2281, %v2448
        %v2450 = vpop.f32.mrb[0].mxu0
        %v2451 = vadd.f32 %v2285, %v2450
        %2452 = vmatprep.mubr.bf16.mxu0 0
        %2453 = vmatmul.mubr.bf16.gmra.mrb[0].mxu0 %v2388
        %v2454 = vpop.f32.mrb[0].mxu0
        %v2455 = vadd.f32 %v2281, %v2454
        %v2456 = vpop.f32.mrb[0].mxu0
        %v2457 = vadd.f32 %v2285, %v2456
        %v2458 = vpop.f32.mrb[0].mxu0
        %v2459 = vadd.f32 %v2281, %v2458
        %v2460 = vpop.f32.mrb[0].mxu0
        %v2461 = vadd.f32 %v2285, %v2460
        %2462 = vdwg.mxu0
        %2463 = vmatprep.subr.bf16.mxu0 %v2349
        %2464 = vmatpush1.bf16.msra.mxu0 %v2348
        %2465 = vmatprep.subr.bf16.mxu0 %v2353
        %2466 = vmatpush1.bf16.msra.mxu0 %v2352
        %2467 = vmatprep.subr.bf16.mxu0 %v2357
        %2468 = vmatpush1.bf16.msra.mxu0 %v2356
        %2469 = vmatprep.subr.bf16.mxu0 %v2361
        %2470 = vmatpush1.bf16.msra.mxu0 %v2360
        %2471 = vmatprep.subr.bf16.mxu0 0
        %2472 = vmatpush1.bf16.msra.mxu0 0
        %2473 = vmatprep.subr.bf16.mxu0 0
        %2474 = vmatpush1.bf16.msra.mxu0 0
        %2475 = vmatprep.subr.bf16.mxu0 0
        %2476 = vmatpush1.bf16.msra.mxu0 0
        %2477 = vmatprep.subr.bf16.mxu0 0
        %2478 = vmatpush1.bf16.msra.mxu0 0
        %2479 = vmatprep.subr.bf16.mxu0 0
        %2480 = vmatpush1.bf16.msra.mxu0 0
        %2481 = vmatprep.subr.bf16.mxu0 0
        %2482 = vmatpush1.bf16.msra.mxu0 0
        %2483 = vmatprep.subr.bf16.mxu0 0
        %2484 = vmatpush1.bf16.msra.mxu0 0
        %2485 = vmatprep.subr.bf16.mxu0 0
        %2486 = vmatpush1.bf16.msra.mxu0 0
        %2487 = vmatprep.subr.bf16.mxu0 0
        %2488 = vmatpush1.bf16.msra.mxu0 0
        %2489 = vmatprep.subr.bf16.mxu0 0
        %2490 = vmatpush1.bf16.msra.mxu0 0
        %2491 = vmatprep.subr.bf16.mxu0 0
        %2492 = vmatpush1.bf16.msra.mxu0 0
        %2493 = vmatprep.subr.bf16.mxu0 0
        %2494 = vmatpush1.bf16.msra.mxu0 0
        %2495 = vmatprep.mubr.bf16.mxu0 0
        %2496 = vmatmul.mubr.bf16.gmra.mrb[0].mxu0 %v2379
        %v2497 = vpop.f32.mrb[0].mxu0
        %v2498 = vadd.f32 %v2289, %v2497
        %v2499 = vpop.f32.mrb[0].mxu0
        %v2500 = vadd.f32 %v2293, %v2499
        %v2501 = vpop.f32.mrb[0].mxu0
        %v2502 = vadd.f32 %v2289, %v2501
        %v2503 = vpop.f32.mrb[0].mxu0
        %v2504 = vadd.f32 %v2293, %v2503
        %2505 = vmatprep.mubr.bf16.mxu0 0
        %2506 = vmatmul.mubr.bf16.gmra.mrb[0].mxu0 %v2382
        %v2507 = vpop.f32.mrb[0].mxu0
        %v2508 = vadd.f32 %v2289, %v2507
        %v2509 = vpop.f32.mrb[0].mxu0
        %v2510 = vadd.f32 %v2293, %v2509
        %v2511 = vpop.f32.mrb[0].mxu0
        %v2512 = vadd.f32 %v2289, %v2511
        %v2513 = vpop.f32.mrb[0].mxu0
        %v2514 = vadd.f32 %v2293, %v2513
        %2515 = vmatprep.mubr.bf16.mxu0 0
        %2516 = vmatmul.mubr.bf16.gmra.mrb[0].mxu0 %v2385
        %v2517 = vpop.f32.mrb[0].mxu0
        %v2518 = vadd.f32 %v2289, %v2517
        %v2519 = vpop.f32.mrb[0].mxu0
        %v2520 = vadd.f32 %v2293, %v2519
        %v2521 = vpop.f32.mrb[0].mxu0
        %v2522 = vadd.f32 %v2289, %v2521
        %v2523 = vpop.f32.mrb[0].mxu0
        %v2524 = vadd.f32 %v2293, %v2523
        %2525 = vmatprep.mubr.bf16.mxu0 0
        %2526 = vmatmul.mubr.bf16.gmra.mrb[0].mxu0 %v2388
        %v2527 = vpop.f32.mrb[0].mxu0
        %v2528 = vadd.f32 %v2289, %v2527
        %v2529 = vpop.f32.mrb[0].mxu0
        %v2530 = vadd.f32 %v2293, %v2529
        %v2531 = vpop.f32.mrb[0].mxu0
        %v2532 = vadd.f32 %v2289, %v2531
        %v2533 = vpop.f32.mrb[0].mxu0
        %v2534 = vadd.f32 %v2293, %v2533
        %2535 = vdwg.mxu0
        %v2536 = vpack.c.bf16 %v2429, %v2425
        %v2537 = vpack.c.bf16 %v2431, %v2427
        %v2538 = vpack.c.bf16 %v2502, %v2498
        %v2539 = vpack.c.bf16 %v2504, %v2500
        %v2540 = vpack.c.bf16 %v2439, %v2435
        %v2541 = vpack.c.bf16 %v2441, %v2437
        %v2542 = vpack.c.bf16 %v2512, %v2508
        %v2543 = vpack.c.bf16 %v2514, %v2510
        %v2544 = vpack.c.bf16 %v2449, %v2445
        %v2545 = vpack.c.bf16 %v2451, %v2447
        %v2546 = vpack.c.bf16 %v2522, %v2518
        %v2547 = vpack.c.bf16 %v2524, %v2520
        %v2548 = vpack.c.bf16 %v2459, %v2455
        %v2549 = vpack.c.bf16 %v2461, %v2457
        %v2550 = vpack.c.bf16 %v2532, %v2528
        %v2551 = vpack.c.bf16 %v2534, %v2530
        %v2552 = vld [vmem:[%s9] sm:$0xf]
        %v2553 = vld [vmem:[%s9 + $0x4] sm:$0xf]
        %v2554 = vld [vmem:[%s9 + $0x8] sm:$0xf]
        %v2555 = vld [vmem:[%s9 + $0xc] sm:$0xf]
        %v2556 = vld [vmem:[%s9 + $0x10] sm:$0xf]
        %v2557 = vld [vmem:[%s9 + $0x14] sm:$0xf]
        %v2558 = vld [vmem:[%s9 + $0x18] sm:$0xf]
        %v2559 = vld [vmem:[%s9 + $0x1c] sm:$0xf]
        %v2560 = vld [vmem:[%s9 + $0x20] sm:$0xf]
        %v2561 = vld [vmem:[%s9 + $0x24] sm:$0xf]
        %v2562 = vld [vmem:[%s9 + $0x28] sm:$0xf]
        %v2563 = vld [vmem:[%s9 + $0x2c] sm:$0xf]
        %v2564 = vld [vmem:[%s9 + $0x30] sm:$0xf]
        %v2565 = vld [vmem:[%s9 + $0x34] sm:$0xf]
        %v2566 = vld [vmem:[%s9 + $0x38] sm:$0xf]
        %v2567 = vld [vmem:[%s9 + $0x3c] sm:$0xf]
        %v2568 = vld [vmem:[%s9 + $0x40] sm:$0xf]
        %v2569 = vld [vmem:[%s9 + $0x44] sm:$0xf]
        %v2570 = vld [vmem:[%s9 + $0x48] sm:$0xf]
        %v2571 = vld [vmem:[%s9 + $0x4c] sm:$0xf]
        %v2572 = vld [vmem:[%s9 + $0x50] sm:$0xf]
        %v2573 = vld [vmem:[%s9 + $0x54] sm:$0xf]
        %v2574 = vld [vmem:[%s9 + $0x58] sm:$0xf]
        %v2575 = vld [vmem:[%s9 + $0x5c] sm:$0xf]
        %v2576 = vld [vmem:[%s9 + $0x60] sm:$0xf]
        %v2577 = vld [vmem:[%s9 + $0x64] sm:$0xf]
        %v2578 = vld [vmem:[%s9 + $0x68] sm:$0xf]
        %v2579 = vld [vmem:[%s9 + $0x6c] sm:$0xf]
        %v2580 = vld [vmem:[%s9 + $0x70] sm:$0xf]
        %v2581 = vld [vmem:[%s9 + $0x74] sm:$0xf]
        %v2582 = vld [vmem:[%s9 + $0x78] sm:$0xf]
        %v2583 = vld [vmem:[%s9 + $0x7c] sm:$0xf]
        %v2584 = vld [vmem:[%s9 + $0x80] sm:$0xf]
        %v2585 = vld [vmem:[%s9 + $0x84] sm:$0xf]
        %v2586 = vld [vmem:[%s9 + $0x88] sm:$0xf]
        %v2587 = vld [vmem:[%s9 + $0x8c] sm:$0xf]
        %v2588 = vld [vmem:[%s9 + $0x90] sm:$0xf]
        %v2589 = vld [vmem:[%s9 + $0x94] sm:$0xf]
        %v2590 = vld [vmem:[%s9 + $0x98] sm:$0xf]
        %v2591 = vld [vmem:[%s9 + $0x9c] sm:$0xf]
        %v2592 = vld [vmem:[%s9 + $0xa0] sm:$0xf]
        %v2593 = vld [vmem:[%s9 + $0xa4] sm:$0xf]
        %v2594 = vld [vmem:[%s9 + $0xa8] sm:$0xf]
        %v2595 = vld [vmem:[%s9 + $0xac] sm:$0xf]
        %v2596 = vld [vmem:[%s9 + $0xb0] sm:$0xf]
        %v2597 = vld [vmem:[%s9 + $0xb4] sm:$0xf]
        %v2598 = vld [vmem:[%s9 + $0xb8] sm:$0xf]
        %v2599 = vld [vmem:[%s9 + $0xbc] sm:$0xf]
        %v2600 = vld [vmem:[%s9 + $0xc0] sm:$0xf]
        %v2601 = vld [vmem:[%s9 + $0xc4] sm:$0xf]
        %v2602 = vld [vmem:[%s9 + $0xc8] sm:$0xf]
        %v2603 = vld [vmem:[%s9 + $0xcc] sm:$0xf]
        %v2604 = vld [vmem:[%s9 + $0xd0] sm:$0xf]
        %v2605 = vld [vmem:[%s9 + $0xd4] sm:$0xf]
        %v2606 = vld [vmem:[%s9 + $0xd8] sm:$0xf]
        %v2607 = vld [vmem:[%s9 + $0xdc] sm:$0xf]
        %v2608 = vld [vmem:[%s9 + $0xe0] sm:$0xf]
        %v2609 = vld [vmem:[%s9 + $0xe4] sm:$0xf]
        %v2610 = vld [vmem:[%s9 + $0xe8] sm:$0xf]
        %v2611 = vld [vmem:[%s9 + $0xec] sm:$0xf]
        %v2612 = vld [vmem:[%s9 + $0xf0] sm:$0xf]
        %v2613 = vld [vmem:[%s9 + $0xf4] sm:$0xf]
        %v2614 = vld [vmem:[%s9 + $0xf8] sm:$0xf]
        %v2615 = vld [vmem:[%s9 + $0xfc] sm:$0xf]
        %v2616 = vld [vmem:[%s10] sm:$0x1]
        %v2618 = vlaneseq
        %v2619 = vshrl.u32 %v2618, 7
        %v2620 = vsub.s32 0, %v2619
        %v2621 = vrot.slane %v2616, %v2620
        %v2687 = vunpack.c.l.b16 %v2552
        %v2688 = vunpack.c.l.b16 %v2553
        %v2689 = vunpack.c.l.b16 %v2554
        %v2690 = vunpack.c.l.b16 %v2555
        %v2691 = vunpack.c.l.b16 %v2556
        %v2692 = vunpack.c.l.b16 %v2557
        %v2693 = vunpack.c.l.b16 %v2558
        %v2694 = vunpack.c.l.b16 %v2559
        %v2695 = vunpack.c.l.b16 %v2560
        %v2696 = vunpack.c.l.b16 %v2561
        %v2697 = vunpack.c.l.b16 %v2562
        %v2698 = vunpack.c.l.b16 %v2563
        %v2699 = vunpack.c.l.b16 %v2564
        %v2700 = vunpack.c.l.b16 %v2565
        %v2701 = vunpack.c.l.b16 %v2566
        %v2702 = vunpack.c.l.b16 %v2567
        %v2703 = vunpack.c.l.b16 %v2568
        %v2704 = vunpack.c.l.b16 %v2569
        %v2705 = vunpack.c.l.b16 %v2570
        %v2706 = vunpack.c.l.b16 %v2571
        %v2707 = vunpack.c.l.b16 %v2572
        %v2708 = vunpack.c.l.b16 %v2573
        %v2709 = vunpack.c.l.b16 %v2574
        %v2710 = vunpack.c.l.b16 %v2575
        %v2711 = vunpack.c.l.b16 %v2576
        %v2712 = vunpack.c.l.b16 %v2577
        %v2713 = vunpack.c.l.b16 %v2578
        %v2714 = vunpack.c.l.b16 %v2579
        %v2715 = vunpack.c.l.b16 %v2580
        %v2716 = vunpack.c.l.b16 %v2581
        %v2717 = vunpack.c.l.b16 %v2582
        %v2718 = vunpack.c.l.b16 %v2583
        %v2719 = vunpack.c.l.b16 %v2584
        %v2720 = vunpack.c.l.b16 %v2585
        %v2721 = vunpack.c.l.b16 %v2586
        %v2722 = vunpack.c.l.b16 %v2587
        %v2723 = vunpack.c.l.b16 %v2588
        %v2724 = vunpack.c.l.b16 %v2589
        %v2725 = vunpack.c.l.b16 %v2590
        %v2726 = vunpack.c.l.b16 %v2591
        %v2727 = vunpack.c.l.b16 %v2592
        %v2728 = vunpack.c.l.b16 %v2593
        %v2729 = vunpack.c.l.b16 %v2594
        %v2730 = vunpack.c.l.b16 %v2595
        %v2731 = vunpack.c.l.b16 %v2596
        %v2732 = vunpack.c.l.b16 %v2597
        %v2733 = vunpack.c.l.b16 %v2598
        %v2734 = vunpack.c.l.b16 %v2599
        %v2735 = vunpack.c.l.b16 %v2600
        %v2736 = vunpack.c.l.b16 %v2601
        %v2737 = vunpack.c.l.b16 %v2602
        %v2738 = vunpack.c.l.b16 %v2603
        %v2739 = vunpack.c.l.b16 %v2604
        %v2740 = vunpack.c.l.b16 %v2605
        %v2741 = vunpack.c.l.b16 %v2606
        %v2742 = vunpack.c.l.b16 %v2607
        %v2743 = vunpack.c.l.b16 %v2608
        %v2744 = vunpack.c.l.b16 %v2609
        %v2745 = vunpack.c.l.b16 %v2610
        %v2746 = vunpack.c.l.b16 %v2611
        %v2747 = vunpack.c.l.b16 %v2612
        %v2748 = vunpack.c.l.b16 %v2613
        %v2749 = vunpack.c.l.b16 %v2614
        %v2750 = vunpack.c.l.b16 %v2615
        %v2751 = vpack.c.b16 %v2688, %v2687
        %v2752 = vpack.c.b16 %v2690, %v2689
        %v2753 = vpack.c.b16 %v2692, %v2691
        %v2754 = vpack.c.b16 %v2694, %v2693
        %v2755 = vpack.c.b16 %v2696, %v2695
        %v2756 = vpack.c.b16 %v2698, %v2697
        %v2757 = vpack.c.b16 %v2700, %v2699
        %v2758 = vpack.c.b16 %v2702, %v2701
        %v2759 = vpack.c.b16 %v2704, %v2703
        %v2760 = vpack.c.b16 %v2706, %v2705
        %v2761 = vpack.c.b16 %v2708, %v2707
        %v2762 = vpack.c.b16 %v2710, %v2709
        %v2763 = vpack.c.b16 %v2712, %v2711
        %v2764 = vpack.c.b16 %v2714, %v2713
        %v2765 = vpack.c.b16 %v2716, %v2715
        %v2766 = vpack.c.b16 %v2718, %v2717
        %v2767 = vpack.c.b16 %v2720, %v2719
        %v2768 = vpack.c.b16 %v2722, %v2721
        %v2769 = vpack.c.b16 %v2724, %v2723
        %v2770 = vpack.c.b16 %v2726, %v2725
        %v2771 = vpack.c.b16 %v2728, %v2727
        %v2772 = vpack.c.b16 %v2730, %v2729
        %v2773 = vpack.c.b16 %v2732, %v2731
        %v2774 = vpack.c.b16 %v2734, %v2733
        %v2775 = vpack.c.b16 %v2736, %v2735
        %v2776 = vpack.c.b16 %v2738, %v2737
        %v2777 = vpack.c.b16 %v2740, %v2739
        %v2778 = vpack.c.b16 %v2742, %v2741
        %v2779 = vpack.c.b16 %v2744, %v2743
        %v2780 = vpack.c.b16 %v2746, %v2745
        %v2781 = vpack.c.b16 %v2748, %v2747
        %v2782 = vpack.c.b16 %v2750, %v2749
        %2815 = vmatprep.subr.bf16.mxu0 0
        %2816 = vmatpush1.bf16.msra.mxu0 %v2751
        %2817 = vmatprep.subr.bf16.mxu0 0
        %2818 = vmatpush1.bf16.msra.mxu0 %v2752
        %2819 = vmatprep.subr.bf16.mxu0 0
        %2820 = vmatpush1.bf16.msra.mxu0 %v2753
        %2821 = vmatprep.subr.bf16.mxu0 0
        %2822 = vmatpush1.bf16.msra.mxu0 %v2754
        %2823 = vmatprep.subr.bf16.mxu0 0
        %2824 = vmatpush1.bf16.msra.mxu0 %v2755
        %2825 = vmatprep.subr.bf16.mxu0 0
        %2826 = vmatpush1.bf16.msra.mxu0 %v2756
        %2827 = vmatprep.subr.bf16.mxu0 0
        %2828 = vmatpush1.bf16.msra.mxu0 %v2757
        %2829 = vmatprep.subr.bf16.mxu0 0
        %2830 = vmatpush1.bf16.msra.mxu0 %v2758
        %2831 = vmatprep.subr.bf16.mxu0 0
        %2832 = vmatpush1.bf16.msra.mxu0 %v2759
        %2833 = vmatprep.subr.bf16.mxu0 0
        %2834 = vmatpush1.bf16.msra.mxu0 %v2760
        %2835 = vmatprep.subr.bf16.mxu0 0
        %2836 = vmatpush1.bf16.msra.mxu0 %v2761
        %2837 = vmatprep.subr.bf16.mxu0 0
        %2838 = vmatpush1.bf16.msra.mxu0 %v2762
        %2839 = vmatprep.subr.bf16.mxu0 0
        %2840 = vmatpush1.bf16.msra.mxu0 %v2763
        %2841 = vmatprep.subr.bf16.mxu0 0
        %2842 = vmatpush1.bf16.msra.mxu0 %v2764
        %2843 = vmatprep.subr.bf16.mxu0 0
        %2844 = vmatpush1.bf16.msra.mxu0 %v2765
        %2845 = vmatprep.subr.bf16.mxu0 0
        %2846 = vmatpush1.bf16.msra.mxu0 %v2766
        %2847 = vmatprep.mubr.bf16.mxu0 %v2537
        %2848 = vmatmul.mubr.bf16.gmra.mrb[0].mxu0 %v2536
        %v2849 = vpop.f32.mrb[0].mxu0
        %v2850 = vadd.f32 %v2621, %v2849
        %v2851 = vpop.f32.mrb[0].mxu0
        %v2852 = vpop.f32.mrb[0].mxu0
        %v2853 = vadd.f32 %v2621, %v2852
        %v2854 = vpop.f32.mrb[0].mxu0
        %2855 = vmatprep.mubr.bf16.mxu0 %v2541
        %2856 = vmatmul.mubr.bf16.gmra.mrb[0].mxu0 %v2540
        %v2857 = vpop.f32.mrb[0].mxu0
        %v2858 = vadd.f32 %v2621, %v2857
        %v2859 = vpop.f32.mrb[0].mxu0
        %v2860 = vpop.f32.mrb[0].mxu0
        %v2861 = vadd.f32 %v2621, %v2860
        %v2862 = vpop.f32.mrb[0].mxu0
        %2863 = vmatprep.mubr.bf16.mxu0 %v2545
        %2864 = vmatmul.mubr.bf16.gmra.mrb[0].mxu0 %v2544
        %v2865 = vpop.f32.mrb[0].mxu0
        %v2866 = vadd.f32 %v2621, %v2865
        %v2867 = vpop.f32.mrb[0].mxu0
        %v2868 = vpop.f32.mrb[0].mxu0
        %v2869 = vadd.f32 %v2621, %v2868
        %v2870 = vpop.f32.mrb[0].mxu0
        %2871 = vmatprep.mubr.bf16.mxu0 %v2549
        %2872 = vmatmul.mubr.bf16.gmra.mrb[0].mxu0 %v2548
        %v2873 = vpop.f32.mrb[0].mxu0
        %v2874 = vadd.f32 %v2621, %v2873
        %v2875 = vpop.f32.mrb[0].mxu0
        %v2876 = vpop.f32.mrb[0].mxu0
        %v2877 = vadd.f32 %v2621, %v2876
        %v2878 = vpop.f32.mrb[0].mxu0
        %2879 = vdwg.mxu0
        %2880 = vmatprep.subr.bf16.mxu0 0
        %2881 = vmatpush1.bf16.msra.mxu0 %v2767
        %2882 = vmatprep.subr.bf16.mxu0 0
        %2883 = vmatpush1.bf16.msra.mxu0 %v2768
        %2884 = vmatprep.subr.bf16.mxu0 0
        %2885 = vmatpush1.bf16.msra.mxu0 %v2769
        %2886 = vmatprep.subr.bf16.mxu0 0
        %2887 = vmatpush1.bf16.msra.mxu0 %v2770
        %2888 = vmatprep.subr.bf16.mxu0 0
        %2889 = vmatpush1.bf16.msra.mxu0 %v2771
        %2890 = vmatprep.subr.bf16.mxu0 0
        %2891 = vmatpush1.bf16.msra.mxu0 %v2772
        %2892 = vmatprep.subr.bf16.mxu0 0
        %2893 = vmatpush1.bf16.msra.mxu0 %v2773
        %2894 = vmatprep.subr.bf16.mxu0 0
        %2895 = vmatpush1.bf16.msra.mxu0 %v2774
        %2896 = vmatprep.subr.bf16.mxu0 0
        %2897 = vmatpush1.bf16.msra.mxu0 %v2775
        %2898 = vmatprep.subr.bf16.mxu0 0
        %2899 = vmatpush1.bf16.msra.mxu0 %v2776
        %2900 = vmatprep.subr.bf16.mxu0 0
        %2901 = vmatpush1.bf16.msra.mxu0 %v2777
        %2902 = vmatprep.subr.bf16.mxu0 0
        %2903 = vmatpush1.bf16.msra.mxu0 %v2778
        %2904 = vmatprep.subr.bf16.mxu0 0
        %2905 = vmatpush1.bf16.msra.mxu0 %v2779
        %2906 = vmatprep.subr.bf16.mxu0 0
        %2907 = vmatpush1.bf16.msra.mxu0 %v2780
        %2908 = vmatprep.subr.bf16.mxu0 0
        %2909 = vmatpush1.bf16.msra.mxu0 %v2781
        %2910 = vmatprep.subr.bf16.mxu0 0
        %2911 = vmatpush1.bf16.msra.mxu0 %v2782
        %2912 = vmatprep.mubr.bf16.mxu0 %v2539
        %2913 = vmatmul.mubr.bf16.gmra.mrb[0].mxu0 %v2538
        %v2914 = vpop.f32.mrb[0].mxu0
        %v2915 = vadd.f32 %v2850, %v2914
        %v2916 = vpop.f32.mrb[0].mxu0
        %v2917 = vpop.f32.mrb[0].mxu0
        %v2918 = vadd.f32 %v2853, %v2917
        %v2919 = vpop.f32.mrb[0].mxu0
        %2920 = vmatprep.mubr.bf16.mxu0 %v2543
        %2921 = vmatmul.mubr.bf16.gmra.mrb[0].mxu0 %v2542
        %v2922 = vpop.f32.mrb[0].mxu0
        %v2923 = vadd.f32 %v2858, %v2922
        %v2924 = vpop.f32.mrb[0].mxu0
        %v2925 = vpop.f32.mrb[0].mxu0
        %v2926 = vadd.f32 %v2861, %v2925
        %v2927 = vpop.f32.mrb[0].mxu0
        %2928 = vmatprep.mubr.bf16.mxu0 %v2547
        %2929 = vmatmul.mubr.bf16.gmra.mrb[0].mxu0 %v2546
        %v2930 = vpop.f32.mrb[0].mxu0
        %v2931 = vadd.f32 %v2866, %v2930
        %v2932 = vpop.f32.mrb[0].mxu0
        %v2933 = vpop.f32.mrb[0].mxu0
        %v2934 = vadd.f32 %v2869, %v2933
        %v2935 = vpop.f32.mrb[0].mxu0
        %2936 = vmatprep.mubr.bf16.mxu0 %v2551
        %2937 = vmatmul.mubr.bf16.gmra.mrb[0].mxu0 %v2550
        %v2938 = vpop.f32.mrb[0].mxu0
        %v2939 = vadd.f32 %v2874, %v2938
        %v2940 = vpop.f32.mrb[0].mxu0
        %v2941 = vpop.f32.mrb[0].mxu0
        %v2942 = vadd.f32 %v2877, %v2941
        %v2943 = vpop.f32.mrb[0].mxu0
        %2944 = vdwg.mxu0
        %2945 = vst [vmem:[#allocation4 + $0x30] sm:$0xff] %v2915
        %2946 = vst [vmem:[#allocation4 + $0x38] sm:$0xff] %v2918
        %2947 = vst [vmem:[#allocation4 + $0x40] sm:$0xff] %v2923
        %2948 = vst [vmem:[#allocation4 + $0x48] sm:$0xff] %v2926
        %2949 = vst [vmem:[#allocation4 + $0x50] sm:$0xff] %v2931
        %2950 = vst [vmem:[#allocation4 + $0x58] sm:$0xff] %v2934
        %2951 = vst [vmem:[#allocation4 + $0x60] sm:$0xff] %v2939
        %2952 = vst [vmem:[#allocation4 + $0x68] sm:$0xff] %v2942
        %v2953 = vld [vmem:[#allocation4 + $0xc] sm:$0xff]
        %v2954 = vld [vmem:[#allocation4 + $0x14] sm:$0xff]
        %v2955 = vld [vmem:[#allocation4 + $0x1c] sm:$0xff]
        %v2956 = vld [vmem:[#allocation4 + $0x24] sm:$0xff]
        %v2957 = vld [vmem:[#allocation4 + $0x2c] sm:$0xff]
        %v2958 = vld [vmem:[#allocation4 + $0x34] sm:$0xff]
        %v2959 = vld [vmem:[#allocation4 + $0x3c] sm:$0xff]
        %v2960 = vld [vmem:[#allocation4 + $0x44] sm:$0xff]
        %v2961 = vsel %vm992, %v2953, 0.0
        %v2962 = vsel %vm993, %v2954, 0.0
        %v2963 = vsel %vm994, %v2955, 0.0
        %v2964 = vsel %vm995, %v2956, 0.0
        %v2965 = vsel %vm996, %v2957, 0.0
        %v2966 = vsel %vm997, %v2958, 0.0
        %v2967 = vsel %vm998, %v2959, 0.0
        %v2968 = vsel %vm999, %v2960, 0.0
        %v2969 = vpack.c.bf16 %v2962, %v2961
        %v2970 = vpack.c.bf16 %v2964, %v2963
        %v2971 = vpack.c.bf16 %v2966, %v2965
        %v2972 = vpack.c.bf16 %v2968, %v2967
        %2973 = vst [vmem:[#allocation5] sm:$0xff] %v2969
        %2974 = vst [vmem:[#allocation5 + $0x48] sm:$0xff] %v2970
        %2975 = vst [vmem:[#allocation5 + $0x90] sm:$0xff] %v2971
        %2976 = vst [vmem:[#allocation5 + $0xd8] sm:$0xff] %v2972
        %v2977 = vld [vmem:[#allocation4 + $0x10] sm:$0xff]
        %v2978 = vld [vmem:[#allocation4 + $0x18] sm:$0xff]
        %v2979 = vld [vmem:[#allocation4 + $0x20] sm:$0xff]
        %v2980 = vld [vmem:[#allocation4 + $0x28] sm:$0xff]
        %v2981 = vld [vmem:[#allocation4 + $0x30] sm:$0xff]
        %v2982 = vld [vmem:[#allocation4 + $0x38] sm:$0xff]
        %v2983 = vld [vmem:[#allocation4 + $0x40] sm:$0xff]
        %v2984 = vld [vmem:[#allocation4 + $0x48] sm:$0xff]
        %v2985 = vpack.c.bf16 %v2978, %v2977
        %v2986 = vpack.c.bf16 %v2980, %v2979
        %v2987 = vpack.c.bf16 %v2982, %v2981
        %v2988 = vpack.c.bf16 %v2984, %v2983
        %2989 = vst [vmem:[#allocation5 + $0x8] sm:$0xff] %v2985
        %2990 = vst [vmem:[#allocation5 + $0x50] sm:$0xff] %v2986
        %2991 = vst [vmem:[#allocation5 + $0x98] sm:$0xff] %v2987
        %2992 = vst [vmem:[#allocation5 + $0xe0] sm:$0xff] %v2988
        %v2993 = vld [vmem:[#allocation4 + $0x14] sm:$0xff]
        %v2994 = vld [vmem:[#allocation4 + $0x1c] sm:$0xff]
        %v2995 = vld [vmem:[#allocation4 + $0x24] sm:$0xff]
        %v2996 = vld [vmem:[#allocation4 + $0x2c] sm:$0xff]
        %v2997 = vld [vmem:[#allocation4 + $0x34] sm:$0xff]
        %v2998 = vld [vmem:[#allocation4 + $0x3c] sm:$0xff]
        %v2999 = vld [vmem:[#allocation4 + $0x44] sm:$0xff]
        %v3000 = vld [vmem:[#allocation4 + $0x4c] sm:$0xff]
        %v3001 = vsel %vm1000, %v2993, 0.0
        %v3002 = vsel %vm1001, %v2994, 0.0
        %v3003 = vsel %vm1002, %v2995, 0.0
        %v3004 = vsel %vm1003, %v2996, 0.0
        %v3005 = vsel %vm1004, %v2997, 0.0
        %v3006 = vsel %vm1005, %v2998, 0.0
        %v3007 = vsel %vm1006, %v2999, 0.0
        %v3008 = vsel %vm1007, %v3000, 0.0
        %v3009 = vpack.c.bf16 %v3002, %v3001
        %v3010 = vpack.c.bf16 %v3004, %v3003
        %v3011 = vpack.c.bf16 %v3006, %v3005
        %v3012 = vpack.c.bf16 %v3008, %v3007
        %3013 = vst [vmem:[#allocation5 + $0x10] sm:$0xff] %v3009
        %3014 = vst [vmem:[#allocation5 + $0x58] sm:$0xff] %v3010
        %3015 = vst [vmem:[#allocation5 + $0xa0] sm:$0xff] %v3011
        %3016 = vst [vmem:[#allocation5 + $0xe8] sm:$0xff] %v3012
        %v3017 = vld [vmem:[#allocation4 + $0x2c] sm:$0xff]
        %v3018 = vld [vmem:[#allocation4 + $0x34] sm:$0xff]
        %v3019 = vld [vmem:[#allocation4 + $0x3c] sm:$0xff]
        %v3020 = vld [vmem:[#allocation4 + $0x44] sm:$0xff]
        %v3021 = vld [vmem:[#allocation4 + $0x4c] sm:$0xff]
        %v3022 = vld [vmem:[#allocation4 + $0x54] sm:$0xff]
        %v3023 = vld [vmem:[#allocation4 + $0x5c] sm:$0xff]
        %v3024 = vld [vmem:[#allocation4 + $0x64] sm:$0xff]
        %v3025 = vsel %vm992, %v3017, 0.0
        %v3026 = vsel %vm993, %v3018, 0.0
        %v3027 = vsel %vm994, %v3019, 0.0
        %v3028 = vsel %vm995, %v3020, 0.0
        %v3029 = vsel %vm996, %v3021, 0.0
        %v3030 = vsel %vm997, %v3022, 0.0
        %v3031 = vsel %vm998, %v3023, 0.0
        %v3032 = vsel %vm999, %v3024, 0.0
        %v3033 = vpack.c.bf16 %v3026, %v3025
        %v3034 = vpack.c.bf16 %v3028, %v3027
        %v3035 = vpack.c.bf16 %v3030, %v3029
        %v3036 = vpack.c.bf16 %v3032, %v3031
        %3037 = vst [vmem:[#allocation5 + $0x18] sm:$0xff] %v3033
        %3038 = vst [vmem:[#allocation5 + $0x60] sm:$0xff] %v3034
        %3039 = vst [vmem:[#allocation5 + $0xa8] sm:$0xff] %v3035
        %3040 = vst [vmem:[#allocation5 + $0xf0] sm:$0xff] %v3036
        %v3041 = vld [vmem:[#allocation4 + $0x30] sm:$0xff]
        %v3042 = vld [vmem:[#allocation4 + $0x38] sm:$0xff]
        %v3043 = vld [vmem:[#allocation4 + $0x40] sm:$0xff]
        %v3044 = vld [vmem:[#allocation4 + $0x48] sm:$0xff]
        %v3045 = vld [vmem:[#allocation4 + $0x50] sm:$0xff]
        %v3046 = vld [vmem:[#allocation4 + $0x58] sm:$0xff]
        %v3047 = vld [vmem:[#allocation4 + $0x60] sm:$0xff]
        %v3048 = vld [vmem:[#allocation4 + $0x68] sm:$0xff]
        %v3049 = vpack.c.bf16 %v3042, %v3041
        %v3050 = vpack.c.bf16 %v3044, %v3043
        %v3051 = vpack.c.bf16 %v3046, %v3045
        %v3052 = vpack.c.bf16 %v3048, %v3047
        %3053 = vst [vmem:[#allocation5 + $0x20] sm:$0xff] %v3049
        %3054 = vst [vmem:[#allocation5 + $0x68] sm:$0xff] %v3050
        %3055 = vst [vmem:[#allocation5 + $0xb0] sm:$0xff] %v3051
        %3056 = vst [vmem:[#allocation5 + $0xf8] sm:$0xff] %v3052
        %v3057 = vld [vmem:[#allocation4 + $0x34] sm:$0xff]
        %v3058 = vld [vmem:[#allocation4 + $0x3c] sm:$0xff]
        %v3059 = vld [vmem:[#allocation4 + $0x44] sm:$0xff]
        %v3060 = vld [vmem:[#allocation4 + $0x4c] sm:$0xff]
        %v3061 = vld [vmem:[#allocation4 + $0x54] sm:$0xff]
        %v3062 = vld [vmem:[#allocation4 + $0x5c] sm:$0xff]
        %v3063 = vld [vmem:[#allocation4 + $0x64] sm:$0xff]
        %v3064 = vld [vmem:[#allocation4 + $0x6c] sm:$0xff]
        %v3065 = vsel %vm1000, %v3057, 0.0
        %v3066 = vsel %vm1001, %v3058, 0.0
        %v3067 = vsel %vm1002, %v3059, 0.0
        %v3068 = vsel %vm1003, %v3060, 0.0
        %v3069 = vsel %vm1004, %v3061, 0.0
        %v3070 = vsel %vm1005, %v3062, 0.0
        %v3071 = vsel %vm1006, %v3063, 0.0
        %v3072 = vsel %vm1007, %v3064, 0.0
        %v3073 = vpack.c.bf16 %v3066, %v3065
        %v3074 = vpack.c.bf16 %v3068, %v3067
        %v3075 = vpack.c.bf16 %v3070, %v3069
        %v3076 = vpack.c.bf16 %v3072, %v3071
        %3077 = vst [vmem:[#allocation5 + $0x28] sm:$0xff] %v3073
        %3078 = vst [vmem:[#allocation5 + $0x70] sm:$0xff] %v3074
        %3079 = vst [vmem:[#allocation5 + $0xb8] sm:$0xff] %v3075
        %3080 = vst [vmem:[#allocation5 + $0x100] sm:$0xff] %v3076
        %v3081 = vld [vmem:[#allocation4 + $0x4c] sm:$0xff]
        %v3082 = vld [vmem:[#allocation4 + $0x54] sm:$0xff]
        %v3083 = vld [vmem:[#allocation4 + $0x5c] sm:$0xff]
        %v3084 = vld [vmem:[#allocation4 + $0x64] sm:$0xff]
        %v3085 = vld [vmem:[#allocation4 + $0x6c] sm:$0xff]
        %v3086 = vld [vmem:[#allocation4 + $0x74] sm:$0xff]
        %v3087 = vld [vmem:[#allocation4 + $0x7c] sm:$0xff]
        %v3088 = vld [vmem:[#allocation4 + $0x84] sm:$0xff]
        %v3089 = vsel %vm992, %v3081, 0.0
        %v3090 = vsel %vm993, %v3082, 0.0
        %v3091 = vsel %vm994, %v3083, 0.0
        %v3092 = vsel %vm995, %v3084, 0.0
        %v3093 = vsel %vm996, %v3085, 0.0
        %v3094 = vsel %vm997, %v3086, 0.0
        %v3095 = vsel %vm998, %v3087, 0.0
        %v3096 = vsel %vm999, %v3088, 0.0
        %v3097 = vpack.c.bf16 %v3090, %v3089
        %v3098 = vpack.c.bf16 %v3092, %v3091
        %v3099 = vpack.c.bf16 %v3094, %v3093
        %v3100 = vpack.c.bf16 %v3096, %v3095
        %3101 = vst [vmem:[#allocation5 + $0x30] sm:$0xff] %v3097
        %3102 = vst [vmem:[#allocation5 + $0x78] sm:$0xff] %v3098
        %3103 = vst [vmem:[#allocation5 + $0xc0] sm:$0xff] %v3099
        %3104 = vst [vmem:[#allocation5 + $0x108] sm:$0xff] %v3100
        %v3105 = vld [vmem:[#allocation4 + $0x50] sm:$0xff]
        %v3106 = vld [vmem:[#allocation4 + $0x58] sm:$0xff]
        %v3107 = vld [vmem:[#allocation4 + $0x60] sm:$0xff]
        %v3108 = vld [vmem:[#allocation4 + $0x68] sm:$0xff]
        %v3109 = vld [vmem:[#allocation4 + $0x70] sm:$0xff]
        %v3110 = vld [vmem:[#allocation4 + $0x78] sm:$0xff]
        %v3111 = vld [vmem:[#allocation4 + $0x80] sm:$0xff]
        %v3112 = vld [vmem:[#allocation4 + $0x88] sm:$0xff]
        %v3113 = vpack.c.bf16 %v3106, %v3105
        %v3114 = vpack.c.bf16 %v3108, %v3107
        %v3115 = vpack.c.bf16 %v3110, %v3109
        %v3116 = vpack.c.bf16 %v3112, %v3111
        %3117 = vst [vmem:[#allocation5 + $0x38] sm:$0xff] %v3113
        %3118 = vst [vmem:[#allocation5 + $0x80] sm:$0xff] %v3114
        %3119 = vst [vmem:[#allocation5 + $0xc8] sm:$0xff] %v3115
        %3120 = vst [vmem:[#allocation5 + $0x110] sm:$0xff] %v3116
        %v3121 = vld [vmem:[#allocation4 + $0x54] sm:$0xff]
        %v3122 = vld [vmem:[#allocation4 + $0x5c] sm:$0xff]
        %v3123 = vld [vmem:[#allocation4 + $0x64] sm:$0xff]
        %v3124 = vld [vmem:[#allocation4 + $0x6c] sm:$0xff]
        %v3125 = vld [vmem:[#allocation4 + $0x74] sm:$0xff]
        %v3126 = vld [vmem:[#allocation4 + $0x7c] sm:$0xff]
        %v3127 = vld [vmem:[#allocation4 + $0x84] sm:$0xff]
        %v3128 = vld [vmem:[#allocation4 + $0x8c] sm:$0xff]
        %v3129 = vsel %vm1000, %v3121, 0.0
        %v3130 = vsel %vm1001, %v3122, 0.0
        %v3131 = vsel %vm1002, %v3123, 0.0
        %v3132 = vsel %vm1003, %v3124, 0.0
        %v3133 = vsel %vm1004, %v3125, 0.0
        %v3134 = vsel %vm1005, %v3126, 0.0
        %v3135 = vsel %vm1006, %v3127, 0.0
        %v3136 = vsel %vm1007, %v3128, 0.0
        %v3137 = vpack.c.bf16 %v3130, %v3129
        %v3138 = vpack.c.bf16 %v3132, %v3131
        %v3139 = vpack.c.bf16 %v3134, %v3133
        %v3140 = vpack.c.bf16 %v3136, %v3135
        %3141 = vst [vmem:[#allocation5 + $0x40] sm:$0xff] %v3137
        %3142 = vst [vmem:[#allocation5 + $0x88] sm:$0xff] %v3138
        %3143 = vst [vmem:[#allocation5 + $0xd0] sm:$0xff] %v3139
        %3144 = vst [vmem:[#allocation5 + $0x118] sm:$0xff] %v3140
        %v3145 = vld [vmem:[#allocation5] sm:$0xff]
        %v3146 = vld [vmem:[#allocation5 + $0x8] sm:$0xff]
        %v3147 = vld [vmem:[#allocation5 + $0x10] sm:$0xff]
        %v3148 = vld [vmem:[#allocation5 + $0x18] sm:$0xff]
        %v3149 = vld [vmem:[#allocation5 + $0x20] sm:$0xff]
        %v3150 = vld [vmem:[#allocation5 + $0x28] sm:$0xff]
        %v3151 = vld [vmem:[#allocation5 + $0x30] sm:$0xff]
        %v3152 = vld [vmem:[#allocation5 + $0x38] sm:$0xff]
        %v3153 = vld [vmem:[#allocation5 + $0x40] sm:$0xff]
        %v3154 = vld [vmem:[#allocation5 + $0x48] sm:$0xff]
        %v3155 = vld [vmem:[#allocation5 + $0x50] sm:$0xff]
        %v3156 = vld [vmem:[#allocation5 + $0x58] sm:$0xff]
        %v3157 = vld [vmem:[#allocation5 + $0x60] sm:$0xff]
        %v3158 = vld [vmem:[#allocation5 + $0x68] sm:$0xff]
        %v3159 = vld [vmem:[#allocation5 + $0x70] sm:$0xff]
        %v3160 = vld [vmem:[#allocation5 + $0x78] sm:$0xff]
        %v3161 = vld [vmem:[#allocation5 + $0x80] sm:$0xff]
        %v3162 = vld [vmem:[#allocation5 + $0x88] sm:$0xff]
        %v3163 = vld [vmem:[#allocation5 + $0x90] sm:$0xff]
        %v3164 = vld [vmem:[#allocation5 + $0x98] sm:$0xff]
        %v3165 = vld [vmem:[#allocation5 + $0xa0] sm:$0xff]
        %v3166 = vld [vmem:[#allocation5 + $0xa8] sm:$0xff]
        %v3167 = vld [vmem:[#allocation5 + $0xb0] sm:$0xff]
        %v3168 = vld [vmem:[#allocation5 + $0xb8] sm:$0xff]
        %v3169 = vld [vmem:[#allocation5 + $0xc0] sm:$0xff]
        %v3170 = vld [vmem:[#allocation5 + $0xc8] sm:$0xff]
        %v3171 = vld [vmem:[#allocation5 + $0xd0] sm:$0xff]
        %v3172 = vld [vmem:[#allocation5 + $0xd8] sm:$0xff]
        %v3173 = vld [vmem:[#allocation5 + $0xe0] sm:$0xff]
        %v3174 = vld [vmem:[#allocation5 + $0xe8] sm:$0xff]
        %v3175 = vld [vmem:[#allocation5 + $0xf0] sm:$0xff]
        %v3176 = vld [vmem:[#allocation5 + $0xf8] sm:$0xff]
        %v3177 = vld [vmem:[#allocation5 + $0x100] sm:$0xff]
        %v3178 = vld [vmem:[#allocation5 + $0x108] sm:$0xff]
        %v3179 = vld [vmem:[#allocation5 + $0x110] sm:$0xff]
        %v3180 = vld [vmem:[#allocation5 + $0x118] sm:$0xff]
        %v3181 = vld [vmem:[%s11] sm:$0xf]
        %v3182 = vld [vmem:[%s11 + $0x4] sm:$0xf]
        %v3183 = vld [vmem:[%s11 + $0x8] sm:$0xf]
        %v3184 = vld [vmem:[%s11 + $0xc] sm:$0xf]
        %v3185 = vld [vmem:[%s11 + $0x10] sm:$0xf]
        %v3186 = vld [vmem:[%s11 + $0x14] sm:$0xf]
        %v3187 = vld [vmem:[%s11 + $0x18] sm:$0xf]
        %v3188 = vld [vmem:[%s11 + $0x1c] sm:$0xf]
        %v3189 = vld [vmem:[%s11 + $0x20] sm:$0xf]
        %v3190 = vld [vmem:[%s11 + $0x24] sm:$0xf]
        %v3191 = vld [vmem:[%s11 + $0x28] sm:$0xf]
        %v3192 = vld [vmem:[%s11 + $0x2c] sm:$0xf]
        %v3193 = vld [vmem:[%s11 + $0x30] sm:$0xf]
        %v3194 = vld [vmem:[%s11 + $0x34] sm:$0xf]
        %v3195 = vld [vmem:[%s11 + $0x38] sm:$0xf]
        %v3196 = vld [vmem:[%s11 + $0x3c] sm:$0xf]
        %v3197 = vld [vmem:[%s11 + $0x40] sm:$0xf]
        %v3198 = vld [vmem:[%s11 + $0x44] sm:$0xf]
        %v3199 = vld [vmem:[%s11 + $0x48] sm:$0xf]
        %v3200 = vld [vmem:[%s11 + $0x4c] sm:$0xf]
        %v3201 = vld [vmem:[%s11 + $0x50] sm:$0xf]
        %v3202 = vld [vmem:[%s11 + $0x54] sm:$0xf]
        %v3203 = vld [vmem:[%s11 + $0x58] sm:$0xf]
        %v3204 = vld [vmem:[%s11 + $0x5c] sm:$0xf]
        %v3205 = vld [vmem:[%s11 + $0x60] sm:$0xf]
        %v3206 = vld [vmem:[%s11 + $0x64] sm:$0xf]
        %v3207 = vld [vmem:[%s11 + $0x68] sm:$0xf]
        %v3208 = vld [vmem:[%s11 + $0x6c] sm:$0xf]
        %v3209 = vld [vmem:[%s11 + $0x70] sm:$0xf]
        %v3210 = vld [vmem:[%s11 + $0x74] sm:$0xf]
        %v3211 = vld [vmem:[%s11 + $0x78] sm:$0xf]
        %v3212 = vld [vmem:[%s11 + $0x7c] sm:$0xf]
        %v3213 = vld [vmem:[%s11 + $0x80] sm:$0xf]
        %v3214 = vld [vmem:[%s11 + $0x84] sm:$0xf]
        %v3215 = vld [vmem:[%s11 + $0x88] sm:$0xf]
        %v3216 = vld [vmem:[%s11 + $0x8c] sm:$0xf]
        %v3217 = vld [vmem:[%s11 + $0x90] sm:$0xf]
        %v3218 = vld [vmem:[%s11 + $0x94] sm:$0xf]
        %v3219 = vld [vmem:[%s11 + $0x98] sm:$0xf]
        %v3220 = vld [vmem:[%s11 + $0x9c] sm:$0xf]
        %v3221 = vld [vmem:[%s11 + $0xa0] sm:$0xf]
        %v3222 = vld [vmem:[%s11 + $0xa4] sm:$0xf]
        %v3223 = vld [vmem:[%s11 + $0xa8] sm:$0xf]
        %v3224 = vld [vmem:[%s11 + $0xac] sm:$0xf]
        %v3225 = vld [vmem:[%s11 + $0xb0] sm:$0xf]
        %v3226 = vld [vmem:[%s11 + $0xb4] sm:$0xf]
        %v3227 = vld [vmem:[%s11 + $0xb8] sm:$0xf]
        %v3228 = vld [vmem:[%s11 + $0xbc] sm:$0xf]
        %v3229 = vld [vmem:[%s11 + $0xc0] sm:$0xf]
        %v3230 = vld [vmem:[%s11 + $0xc4] sm:$0xf]
        %v3231 = vld [vmem:[%s11 + $0xc8] sm:$0xf]
        %v3232 = vld [vmem:[%s11 + $0xcc] sm:$0xf]
        %v3233 = vld [vmem:[%s11 + $0xd0] sm:$0xf]
        %v3234 = vld [vmem:[%s11 + $0xd4] sm:$0xf]
        %v3235 = vld [vmem:[%s11 + $0xd8] sm:$0xf]
        %v3236 = vld [vmem:[%s11 + $0xdc] sm:$0xf]
        %v3237 = vld [vmem:[%s11 + $0xe0] sm:$0xf]
        %v3238 = vld [vmem:[%s11 + $0xe4] sm:$0xf]
        %v3239 = vld [vmem:[%s11 + $0xe8] sm:$0xf]
        %v3240 = vld [vmem:[%s11 + $0xec] sm:$0xf]
        %v3241 = vld [vmem:[%s11 + $0xf0] sm:$0xf]
        %v3242 = vld [vmem:[%s11 + $0xf4] sm:$0xf]
        %v3243 = vld [vmem:[%s11 + $0xf8] sm:$0xf]
        %v3244 = vld [vmem:[%s11 + $0xfc] sm:$0xf]
        %v3245 = vld [vmem:[%s11 + $0x100] sm:$0xf]
        %v3246 = vld [vmem:[%s11 + $0x104] sm:$0xf]
        %v3247 = vld [vmem:[%s11 + $0x108] sm:$0xf]
        %v3248 = vld [vmem:[%s11 + $0x10c] sm:$0xf]
        %v3249 = vld [vmem:[%s11 + $0x110] sm:$0xf]
        %v3250 = vld [vmem:[%s11 + $0x114] sm:$0xf]
        %v3251 = vld [vmem:[%s11 + $0x118] sm:$0xf]
        %v3252 = vld [vmem:[%s11 + $0x11c] sm:$0xf]
        %v3253 = vld [vmem:[%s11 + $0x120] sm:$0xf]
        %v3254 = vld [vmem:[%s11 + $0x124] sm:$0xf]
        %v3255 = vld [vmem:[%s11 + $0x128] sm:$0xf]
        %v3256 = vld [vmem:[%s11 + $0x12c] sm:$0xf]
        %v3257 = vld [vmem:[%s11 + $0x130] sm:$0xf]
        %v3258 = vld [vmem:[%s11 + $0x134] sm:$0xf]
        %v3259 = vld [vmem:[%s11 + $0x138] sm:$0xf]
        %v3260 = vld [vmem:[%s11 + $0x13c] sm:$0xf]
        %v3261 = vld [vmem:[%s11 + $0x140] sm:$0xf]
        %v3262 = vld [vmem:[%s11 + $0x144] sm:$0xf]
        %v3263 = vld [vmem:[%s11 + $0x148] sm:$0xf]
        %v3264 = vld [vmem:[%s11 + $0x14c] sm:$0xf]
        %v3265 = vld [vmem:[%s11 + $0x150] sm:$0xf]
        %v3266 = vld [vmem:[%s11 + $0x154] sm:$0xf]
        %v3267 = vld [vmem:[%s11 + $0x158] sm:$0xf]
        %v3268 = vld [vmem:[%s11 + $0x15c] sm:$0xf]
        %v3269 = vld [vmem:[%s11 + $0x160] sm:$0xf]
        %v3270 = vld [vmem:[%s11 + $0x164] sm:$0xf]
        %v3271 = vld [vmem:[%s11 + $0x168] sm:$0xf]
        %v3272 = vld [vmem:[%s11 + $0x16c] sm:$0xf]
        %v3273 = vld [vmem:[%s11 + $0x170] sm:$0xf]
        %v3274 = vld [vmem:[%s11 + $0x174] sm:$0xf]
        %v3275 = vld [vmem:[%s11 + $0x178] sm:$0xf]
        %v3276 = vld [vmem:[%s11 + $0x17c] sm:$0xf]
        %v3277 = vld [vmem:[%s11 + $0x180] sm:$0xf]
        %v3278 = vld [vmem:[%s11 + $0x184] sm:$0xf]
        %v3279 = vld [vmem:[%s11 + $0x188] sm:$0xf]
        %v3280 = vld [vmem:[%s11 + $0x18c] sm:$0xf]
        %v3281 = vld [vmem:[%s11 + $0x190] sm:$0xf]
        %v3282 = vld [vmem:[%s11 + $0x194] sm:$0xf]
        %v3283 = vld [vmem:[%s11 + $0x198] sm:$0xf]
        %v3284 = vld [vmem:[%s11 + $0x19c] sm:$0xf]
        %v3285 = vld [vmem:[%s11 + $0x1a0] sm:$0xf]
        %v3286 = vld [vmem:[%s11 + $0x1a4] sm:$0xf]
        %v3287 = vld [vmem:[%s11 + $0x1a8] sm:$0xf]
        %v3288 = vld [vmem:[%s11 + $0x1ac] sm:$0xf]
        %v3289 = vld [vmem:[%s11 + $0x1b0] sm:$0xf]
        %v3290 = vld [vmem:[%s11 + $0x1b4] sm:$0xf]
        %v3291 = vld [vmem:[%s11 + $0x1b8] sm:$0xf]
        %v3292 = vld [vmem:[%s11 + $0x1bc] sm:$0xf]
        %v3293 = vld [vmem:[%s11 + $0x1c0] sm:$0xf]
        %v3294 = vld [vmem:[%s11 + $0x1c4] sm:$0xf]
        %v3295 = vld [vmem:[%s11 + $0x1c8] sm:$0xf]
        %v3296 = vld [vmem:[%s11 + $0x1cc] sm:$0xf]
        %v3297 = vld [vmem:[%s11 + $0x1d0] sm:$0xf]
        %v3298 = vld [vmem:[%s11 + $0x1d4] sm:$0xf]
        %v3299 = vld [vmem:[%s11 + $0x1d8] sm:$0xf]
        %v3300 = vld [vmem:[%s11 + $0x1dc] sm:$0xf]
        %v3301 = vld [vmem:[%s11 + $0x1e0] sm:$0xf]
        %v3302 = vld [vmem:[%s11 + $0x1e4] sm:$0xf]
        %v3303 = vld [vmem:[%s11 + $0x1e8] sm:$0xf]
        %v3304 = vld [vmem:[%s11 + $0x1ec] sm:$0xf]
        %v3305 = vld [vmem:[%s11 + $0x1f0] sm:$0xf]
        %v3306 = vld [vmem:[%s11 + $0x1f4] sm:$0xf]
        %v3307 = vld [vmem:[%s11 + $0x1f8] sm:$0xf]
        %v3308 = vld [vmem:[%s11 + $0x1fc] sm:$0xf]
        %v3309 = vld [vmem:[%s11 + $0x200] sm:$0xf]
        %v3310 = vld [vmem:[%s11 + $0x204] sm:$0xf]
        %v3311 = vld [vmem:[%s11 + $0x208] sm:$0xf]
        %v3312 = vld [vmem:[%s11 + $0x20c] sm:$0xf]
        %v3313 = vld [vmem:[%s11 + $0x210] sm:$0xf]
        %v3314 = vld [vmem:[%s11 + $0x214] sm:$0xf]
        %v3315 = vld [vmem:[%s11 + $0x218] sm:$0xf]
        %v3316 = vld [vmem:[%s11 + $0x21c] sm:$0xf]
        %v3317 = vld [vmem:[%s11 + $0x220] sm:$0xf]
        %v3318 = vld [vmem:[%s11 + $0x224] sm:$0xf]
        %v3319 = vld [vmem:[%s11 + $0x228] sm:$0xf]
        %v3320 = vld [vmem:[%s11 + $0x22c] sm:$0xf]
        %v3321 = vld [vmem:[%s11 + $0x230] sm:$0xf]
        %v3322 = vld [vmem:[%s11 + $0x234] sm:$0xf]
        %v3323 = vld [vmem:[%s11 + $0x238] sm:$0xf]
        %v3324 = vld [vmem:[%s11 + $0x23c] sm:$0xf]
        %v3325 = vld [vmem:[%s12] sm:$0x1]
        %v3327 = vlaneseq
        %v3328 = vshrl.u32 %v3327, 7
        %v3329 = vsub.s32 0, %v3328
        %v3330 = vrot.slane %v3325, %v3329
        %v3476 = vunpack.c.l.b16 %v3181
        %v3477 = vunpack.c.l.b16 %v3182
        %v3478 = vunpack.c.l.b16 %v3183
        %v3479 = vunpack.c.l.b16 %v3184
        %v3480 = vunpack.c.l.b16 %v3185
        %v3481 = vunpack.c.l.b16 %v3186
        %v3482 = vunpack.c.l.b16 %v3187
        %v3483 = vunpack.c.l.b16 %v3188
        %v3484 = vunpack.c.l.b16 %v3189
        %v3485 = vunpack.c.l.b16 %v3190
        %v3486 = vunpack.c.l.b16 %v3191
        %v3487 = vunpack.c.l.b16 %v3192
        %v3488 = vunpack.c.l.b16 %v3193
        %v3489 = vunpack.c.l.b16 %v3194
        %v3490 = vunpack.c.l.b16 %v3195
        %v3491 = vunpack.c.l.b16 %v3196
        %v3492 = vunpack.c.l.b16 %v3197
        %v3493 = vunpack.c.l.b16 %v3198
        %v3494 = vunpack.c.l.b16 %v3199
        %v3495 = vunpack.c.l.b16 %v3200
        %v3496 = vunpack.c.l.b16 %v3201
        %v3497 = vunpack.c.l.b16 %v3202
        %v3498 = vunpack.c.l.b16 %v3203
        %v3499 = vunpack.c.l.b16 %v3204
        %v3500 = vunpack.c.l.b16 %v3205
        %v3501 = vunpack.c.l.b16 %v3206
        %v3502 = vunpack.c.l.b16 %v3207
        %v3503 = vunpack.c.l.b16 %v3208
        %v3504 = vunpack.c.l.b16 %v3209
        %v3505 = vunpack.c.l.b16 %v3210
        %v3506 = vunpack.c.l.b16 %v3211
        %v3507 = vunpack.c.l.b16 %v3212
        %v3508 = vunpack.c.l.b16 %v3213
        %v3509 = vunpack.c.l.b16 %v3214
        %v3510 = vunpack.c.l.b16 %v3215
        %v3511 = vunpack.c.l.b16 %v3216
        %v3512 = vunpack.c.l.b16 %v3217
        %v3513 = vunpack.c.l.b16 %v3218
        %v3514 = vunpack.c.l.b16 %v3219
        %v3515 = vunpack.c.l.b16 %v3220
        %v3516 = vunpack.c.l.b16 %v3221
        %v3517 = vunpack.c.l.b16 %v3222
        %v3518 = vunpack.c.l.b16 %v3223
        %v3519 = vunpack.c.l.b16 %v3224
        %v3520 = vunpack.c.l.b16 %v3225
        %v3521 = vunpack.c.l.b16 %v3226
        %v3522 = vunpack.c.l.b16 %v3227
        %v3523 = vunpack.c.l.b16 %v3228
        %v3524 = vunpack.c.l.b16 %v3229
        %v3525 = vunpack.c.l.b16 %v3230
        %v3526 = vunpack.c.l.b16 %v3231
        %v3527 = vunpack.c.l.b16 %v3232
        %v3528 = vunpack.c.l.b16 %v3233
        %v3529 = vunpack.c.l.b16 %v3234
        %v3530 = vunpack.c.l.b16 %v3235
        %v3531 = vunpack.c.l.b16 %v3236
        %v3532 = vunpack.c.l.b16 %v3237
        %v3533 = vunpack.c.l.b16 %v3238
        %v3534 = vunpack.c.l.b16 %v3239
        %v3535 = vunpack.c.l.b16 %v3240
        %v3536 = vunpack.c.l.b16 %v3241
        %v3537 = vunpack.c.l.b16 %v3242
        %v3538 = vunpack.c.l.b16 %v3243
        %v3539 = vunpack.c.l.b16 %v3244
        %v3540 = vunpack.c.l.b16 %v3245
        %v3541 = vunpack.c.l.b16 %v3246
        %v3542 = vunpack.c.l.b16 %v3247
        %v3543 = vunpack.c.l.b16 %v3248
        %v3544 = vunpack.c.l.b16 %v3249
        %v3545 = vunpack.c.l.b16 %v3250
        %v3546 = vunpack.c.l.b16 %v3251
        %v3547 = vunpack.c.l.b16 %v3252
        %v3548 = vunpack.c.l.b16 %v3253
        %v3549 = vunpack.c.l.b16 %v3254
        %v3550 = vunpack.c.l.b16 %v3255
        %v3551 = vunpack.c.l.b16 %v3256
        %v3552 = vunpack.c.l.b16 %v3257
        %v3553 = vunpack.c.l.b16 %v3258
        %v3554 = vunpack.c.l.b16 %v3259
        %v3555 = vunpack.c.l.b16 %v3260
        %v3556 = vunpack.c.l.b16 %v3261
        %v3557 = vunpack.c.l.b16 %v3262
        %v3558 = vunpack.c.l.b16 %v3263
        %v3559 = vunpack.c.l.b16 %v3264
        %v3560 = vunpack.c.l.b16 %v3265
        %v3561 = vunpack.c.l.b16 %v3266
        %v3562 = vunpack.c.l.b16 %v3267
        %v3563 = vunpack.c.l.b16 %v3268
        %v3564 = vunpack.c.l.b16 %v3269
        %v3565 = vunpack.c.l.b16 %v3270
        %v3566 = vunpack.c.l.b16 %v3271
        %v3567 = vunpack.c.l.b16 %v3272
        %v3568 = vunpack.c.l.b16 %v3273
        %v3569 = vunpack.c.l.b16 %v3274
        %v3570 = vunpack.c.l.b16 %v3275
        %v3571 = vunpack.c.l.b16 %v3276
        %v3572 = vunpack.c.l.b16 %v3277
        %v3573 = vunpack.c.l.b16 %v3278
        %v3574 = vunpack.c.l.b16 %v3279
        %v3575 = vunpack.c.l.b16 %v3280
        %v3576 = vunpack.c.l.b16 %v3281
        %v3577 = vunpack.c.l.b16 %v3282
        %v3578 = vunpack.c.l.b16 %v3283
        %v3579 = vunpack.c.l.b16 %v3284
        %v3580 = vunpack.c.l.b16 %v3285
        %v3581 = vunpack.c.l.b16 %v3286
        %v3582 = vunpack.c.l.b16 %v3287
        %v3583 = vunpack.c.l.b16 %v3288
        %v3584 = vunpack.c.l.b16 %v3289
        %v3585 = vunpack.c.l.b16 %v3290
        %v3586 = vunpack.c.l.b16 %v3291
        %v3587 = vunpack.c.l.b16 %v3292
        %v3588 = vunpack.c.l.b16 %v3293
        %v3589 = vunpack.c.l.b16 %v3294
        %v3590 = vunpack.c.l.b16 %v3295
        %v3591 = vunpack.c.l.b16 %v3296
        %v3592 = vunpack.c.l.b16 %v3297
        %v3593 = vunpack.c.l.b16 %v3298
        %v3594 = vunpack.c.l.b16 %v3299
        %v3595 = vunpack.c.l.b16 %v3300
        %v3596 = vunpack.c.l.b16 %v3301
        %v3597 = vunpack.c.l.b16 %v3302
        %v3598 = vunpack.c.l.b16 %v3303
        %v3599 = vunpack.c.l.b16 %v3304
        %v3600 = vunpack.c.l.b16 %v3305
        %v3601 = vunpack.c.l.b16 %v3306
        %v3602 = vunpack.c.l.b16 %v3307
        %v3603 = vunpack.c.l.b16 %v3308
        %v3604 = vunpack.c.l.b16 %v3309
        %v3605 = vunpack.c.l.b16 %v3310
        %v3606 = vunpack.c.l.b16 %v3311
        %v3607 = vunpack.c.l.b16 %v3312
        %v3608 = vunpack.c.l.b16 %v3313
        %v3609 = vunpack.c.l.b16 %v3314
        %v3610 = vunpack.c.l.b16 %v3315
        %v3611 = vunpack.c.l.b16 %v3316
        %v3612 = vunpack.c.l.b16 %v3317
        %v3613 = vunpack.c.l.b16 %v3318
        %v3614 = vunpack.c.l.b16 %v3319
        %v3615 = vunpack.c.l.b16 %v3320
        %v3616 = vunpack.c.l.b16 %v3321
        %v3617 = vunpack.c.l.b16 %v3322
        %v3618 = vunpack.c.l.b16 %v3323
        %v3619 = vunpack.c.l.b16 %v3324
        %v3620 = vpack.c.b16 %v3477, %v3476
        %v3621 = vpack.c.b16 %v3479, %v3478
        %v3622 = vpack.c.b16 %v3481, %v3480
        %v3623 = vpack.c.b16 %v3483, %v3482
        %v3624 = vpack.c.b16 %v3485, %v3484
        %v3625 = vpack.c.b16 %v3487, %v3486
        %v3626 = vpack.c.b16 %v3489, %v3488
        %v3627 = vpack.c.b16 %v3491, %v3490
        %v3628 = vpack.c.b16 %v3493, %v3492
        %v3629 = vpack.c.b16 %v3495, %v3494
        %v3630 = vpack.c.b16 %v3497, %v3496
        %v3631 = vpack.c.b16 %v3499, %v3498
        %v3632 = vpack.c.b16 %v3501, %v3500
        %v3633 = vpack.c.b16 %v3503, %v3502
        %v3634 = vpack.c.b16 %v3505, %v3504
        %v3635 = vpack.c.b16 %v3507, %v3506
        %v3636 = vpack.c.b16 %v3509, %v3508
        %v3637 = vpack.c.b16 %v3511, %v3510
        %v3638 = vpack.c.b16 %v3513, %v3512
        %v3639 = vpack.c.b16 %v3515, %v3514
        %v3640 = vpack.c.b16 %v3517, %v3516
        %v3641 = vpack.c.b16 %v3519, %v3518
        %v3642 = vpack.c.b16 %v3521, %v3520
        %v3643 = vpack.c.b16 %v3523, %v3522
        %v3644 = vpack.c.b16 %v3525, %v3524
        %v3645 = vpack.c.b16 %v3527, %v3526
        %v3646 = vpack.c.b16 %v3529, %v3528
        %v3647 = vpack.c.b16 %v3531, %v3530
        %v3648 = vpack.c.b16 %v3533, %v3532
        %v3649 = vpack.c.b16 %v3535, %v3534
        %v3650 = vpack.c.b16 %v3537, %v3536
        %v3651 = vpack.c.b16 %v3539, %v3538
        %v3652 = vpack.c.b16 %v3541, %v3540
        %v3653 = vpack.c.b16 %v3543, %v3542
        %v3654 = vpack.c.b16 %v3545, %v3544
        %v3655 = vpack.c.b16 %v3547, %v3546
        %v3656 = vpack.c.b16 %v3549, %v3548
        %v3657 = vpack.c.b16 %v3551, %v3550
        %v3658 = vpack.c.b16 %v3553, %v3552
        %v3659 = vpack.c.b16 %v3555, %v3554
        %v3660 = vpack.c.b16 %v3557, %v3556
        %v3661 = vpack.c.b16 %v3559, %v3558
        %v3662 = vpack.c.b16 %v3561, %v3560
        %v3663 = vpack.c.b16 %v3563, %v3562
        %v3664 = vpack.c.b16 %v3565, %v3564
        %v3665 = vpack.c.b16 %v3567, %v3566
        %v3666 = vpack.c.b16 %v3569, %v3568
        %v3667 = vpack.c.b16 %v3571, %v3570
        %v3668 = vpack.c.b16 %v3573, %v3572
        %v3669 = vpack.c.b16 %v3575, %v3574
        %v3670 = vpack.c.b16 %v3577, %v3576
        %v3671 = vpack.c.b16 %v3579, %v3578
        %v3672 = vpack.c.b16 %v3581, %v3580
        %v3673 = vpack.c.b16 %v3583, %v3582
        %v3674 = vpack.c.b16 %v3585, %v3584
        %v3675 = vpack.c.b16 %v3587, %v3586
        %v3676 = vpack.c.b16 %v3589, %v3588
        %v3677 = vpack.c.b16 %v3591, %v3590
        %v3678 = vpack.c.b16 %v3593, %v3592
        %v3679 = vpack.c.b16 %v3595, %v3594
        %v3680 = vpack.c.b16 %v3597, %v3596
        %v3681 = vpack.c.b16 %v3599, %v3598
        %v3682 = vpack.c.b16 %v3601, %v3600
        %v3683 = vpack.c.b16 %v3603, %v3602
        %v3684 = vpack.c.b16 %v3605, %v3604
        %v3685 = vpack.c.b16 %v3607, %v3606
        %v3686 = vpack.c.b16 %v3609, %v3608
        %v3687 = vpack.c.b16 %v3611, %v3610
        %v3688 = vpack.c.b16 %v3613, %v3612
        %v3689 = vpack.c.b16 %v3615, %v3614
        %v3690 = vpack.c.b16 %v3617, %v3616
        %v3691 = vpack.c.b16 %v3619, %v3618
        %3764 = vmatprep.subr.bf16.mxu0 0
        %3765 = vmatpush1.bf16.msra.mxu0 %v3620
        %3766 = vmatprep.subr.bf16.mxu0 0
        %3767 = vmatpush1.bf16.msra.mxu0 %v3621
        %3768 = vmatprep.subr.bf16.mxu0 0
        %3769 = vmatpush1.bf16.msra.mxu0 %v3622
        %3770 = vmatprep.subr.bf16.mxu0 0
        %3771 = vmatpush1.bf16.msra.mxu0 %v3623
        %3772 = vmatprep.subr.bf16.mxu0 0
        %3773 = vmatpush1.bf16.msra.mxu0 %v3624
        %3774 = vmatprep.subr.bf16.mxu0 0
        %3775 = vmatpush1.bf16.msra.mxu0 %v3625
        %3776 = vmatprep.subr.bf16.mxu0 0
        %3777 = vmatpush1.bf16.msra.mxu0 %v3626
        %3778 = vmatprep.subr.bf16.mxu0 0
        %3779 = vmatpush1.bf16.msra.mxu0 %v3627
        %3780 = vmatprep.subr.bf16.mxu0 0
        %3781 = vmatpush1.bf16.msra.mxu0 %v3628
        %3782 = vmatprep.subr.bf16.mxu0 0
        %3783 = vmatpush1.bf16.msra.mxu0 %v3629
        %3784 = vmatprep.subr.bf16.mxu0 0
        %3785 = vmatpush1.bf16.msra.mxu0 %v3630
        %3786 = vmatprep.subr.bf16.mxu0 0
        %3787 = vmatpush1.bf16.msra.mxu0 %v3631
        %3788 = vmatprep.subr.bf16.mxu0 0
        %3789 = vmatpush1.bf16.msra.mxu0 %v3632
        %3790 = vmatprep.subr.bf16.mxu0 0
        %3791 = vmatpush1.bf16.msra.mxu0 %v3633
        %3792 = vmatprep.subr.bf16.mxu0 0
        %3793 = vmatpush1.bf16.msra.mxu0 %v3634
        %3794 = vmatprep.subr.bf16.mxu0 0
        %3795 = vmatpush1.bf16.msra.mxu0 %v3635
        %3796 = vmatprep.mubr.bf16.mxu0 %v3146
        %3797 = vmatmul.mubr.bf16.gmra.mrb[0].mxu0 %v3145
        %v3798 = vpop.f32.mrb[0].mxu0
        %v3799 = vadd.f32 %v3330, %v3798
        %v3800 = vpop.f32.mrb[0].mxu0
        %v3801 = vpop.f32.mrb[0].mxu0
        %v3802 = vadd.f32 %v3330, %v3801
        %v3803 = vpop.f32.mrb[0].mxu0
        %3804 = vmatprep.mubr.bf16.mxu0 %v3155
        %3805 = vmatmul.mubr.bf16.gmra.mrb[0].mxu0 %v3154
        %v3806 = vpop.f32.mrb[0].mxu0
        %v3807 = vadd.f32 %v3330, %v3806
        %v3808 = vpop.f32.mrb[0].mxu0
        %v3809 = vpop.f32.mrb[0].mxu0
        %v3810 = vadd.f32 %v3330, %v3809
        %v3811 = vpop.f32.mrb[0].mxu0
        %3812 = vmatprep.mubr.bf16.mxu0 %v3164
        %3813 = vmatmul.mubr.bf16.gmra.mrb[0].mxu0 %v3163
        %v3814 = vpop.f32.mrb[0].mxu0
        %v3815 = vadd.f32 %v3330, %v3814
        %v3816 = vpop.f32.mrb[0].mxu0
        %v3817 = vpop.f32.mrb[0].mxu0
        %v3818 = vadd.f32 %v3330, %v3817
        %v3819 = vpop.f32.mrb[0].mxu0
        %3820 = vmatprep.mubr.bf16.mxu0 %v3173
        %3821 = vmatmul.mubr.bf16.gmra.mrb[0].mxu0 %v3172
        %v3822 = vpop.f32.mrb[0].mxu0
        %v3823 = vadd.f32 %v3330, %v3822
        %v3824 = vpop.f32.mrb[0].mxu0
        %v3825 = vpop.f32.mrb[0].mxu0
        %v3826 = vadd.f32 %v3330, %v3825
        %v3827 = vpop.f32.mrb[0].mxu0
        %3828 = vdwg.mxu0
        %3829 = vmatprep.subr.bf16.mxu0 0
        %3830 = vmatpush1.bf16.msra.mxu0 %v3636
        %3831 = vmatprep.subr.bf16.mxu0 0
        %3832 = vmatpush1.bf16.msra.mxu0 %v3637
        %3833 = vmatprep.subr.bf16.mxu0 0
        %3834 = vmatpush1.bf16.msra.mxu0 %v3638
        %3835 = vmatprep.subr.bf16.mxu0 0
        %3836 = vmatpush1.bf16.msra.mxu0 %v3639
        %3837 = vmatprep.subr.bf16.mxu0 0
        %3838 = vmatpush1.bf16.msra.mxu0 %v3640
        %3839 = vmatprep.subr.bf16.mxu0 0
        %3840 = vmatpush1.bf16.msra.mxu0 %v3641
        %3841 = vmatprep.subr.bf16.mxu0 0
        %3842 = vmatpush1.bf16.msra.mxu0 %v3642
        %3843 = vmatprep.subr.bf16.mxu0 0
        %3844 = vmatpush1.bf16.msra.mxu0 %v3643
        %3845 = vmatprep.subr.bf16.mxu0 0
        %3846 = vmatpush1.bf16.msra.mxu0 %v3644
        %3847 = vmatprep.subr.bf16.mxu0 0
        %3848 = vmatpush1.bf16.msra.mxu0 %v3645
        %3849 = vmatprep.subr.bf16.mxu0 0
        %3850 = vmatpush1.bf16.msra.mxu0 %v3646
        %3851 = vmatprep.subr.bf16.mxu0 0
        %3852 = vmatpush1.bf16.msra.mxu0 %v3647
        %3853 = vmatprep.subr.bf16.mxu0 0
        %3854 = vmatpush1.bf16.msra.mxu0 %v3648
        %3855 = vmatprep.subr.bf16.mxu0 0
        %3856 = vmatpush1.bf16.msra.mxu0 %v3649
        %3857 = vmatprep.subr.bf16.mxu0 0
        %3858 = vmatpush1.bf16.msra.mxu0 %v3650
        %3859 = vmatprep.subr.bf16.mxu0 0
        %3860 = vmatpush1.bf16.msra.mxu0 %v3651
        %3861 = vmatprep.mubr.bf16.mxu0 %v3148
        %3862 = vmatmul.mubr.bf16.gmra.mrb[0].mxu0 %v3147
        %v3863 = vpop.f32.mrb[0].mxu0
        %v3864 = vadd.f32 %v3799, %v3863
        %v3865 = vpop.f32.mrb[0].mxu0
        %v3866 = vpop.f32.mrb[0].mxu0
        %v3867 = vadd.f32 %v3802, %v3866
        %v3868 = vpop.f32.mrb[0].mxu0
        %3869 = vmatprep.mubr.bf16.mxu0 %v3157
        %3870 = vmatmul.mubr.bf16.gmra.mrb[0].mxu0 %v3156
        %v3871 = vpop.f32.mrb[0].mxu0
        %v3872 = vadd.f32 %v3807, %v3871
        %v3873 = vpop.f32.mrb[0].mxu0
        %v3874 = vpop.f32.mrb[0].mxu0
        %v3875 = vadd.f32 %v3810, %v3874
        %v3876 = vpop.f32.mrb[0].mxu0
        %3877 = vmatprep.mubr.bf16.mxu0 %v3166
        %3878 = vmatmul.mubr.bf16.gmra.mrb[0].mxu0 %v3165
        %v3879 = vpop.f32.mrb[0].mxu0
        %v3880 = vadd.f32 %v3815, %v3879
        %v3881 = vpop.f32.mrb[0].mxu0
        %v3882 = vpop.f32.mrb[0].mxu0
        %v3883 = vadd.f32 %v3818, %v3882
        %v3884 = vpop.f32.mrb[0].mxu0
        %3885 = vmatprep.mubr.bf16.mxu0 %v3175
        %3886 = vmatmul.mubr.bf16.gmra.mrb[0].mxu0 %v3174
        %v3887 = vpop.f32.mrb[0].mxu0
        %v3888 = vadd.f32 %v3823, %v3887
        %v3889 = vpop.f32.mrb[0].mxu0
        %v3890 = vpop.f32.mrb[0].mxu0
        %v3891 = vadd.f32 %v3826, %v3890
        %v3892 = vpop.f32.mrb[0].mxu0
        %3893 = vdwg.mxu0
        %3894 = vmatprep.subr.bf16.mxu0 0
        %3895 = vmatpush1.bf16.msra.mxu0 %v3652
        %3896 = vmatprep.subr.bf16.mxu0 0
        %3897 = vmatpush1.bf16.msra.mxu0 %v3653
        %3898 = vmatprep.subr.bf16.mxu0 0
        %3899 = vmatpush1.bf16.msra.mxu0 %v3654
        %3900 = vmatprep.subr.bf16.mxu0 0
        %3901 = vmatpush1.bf16.msra.mxu0 %v3655
        %3902 = vmatprep.subr.bf16.mxu0 0
        %3903 = vmatpush1.bf16.msra.mxu0 %v3656
        %3904 = vmatprep.subr.bf16.mxu0 0
        %3905 = vmatpush1.bf16.msra.mxu0 %v3657
        %3906 = vmatprep.subr.bf16.mxu0 0
        %3907 = vmatpush1.bf16.msra.mxu0 %v3658
        %3908 = vmatprep.subr.bf16.mxu0 0
        %3909 = vmatpush1.bf16.msra.mxu0 %v3659
        %3910 = vmatprep.subr.bf16.mxu0 0
        %3911 = vmatpush1.bf16.msra.mxu0 %v3660
        %3912 = vmatprep.subr.bf16.mxu0 0
        %3913 = vmatpush1.bf16.msra.mxu0 %v3661
        %3914 = vmatprep.subr.bf16.mxu0 0
        %3915 = vmatpush1.bf16.msra.mxu0 %v3662
        %3916 = vmatprep.subr.bf16.mxu0 0
        %3917 = vmatpush1.bf16.msra.mxu0 %v3663
        %3918 = vmatprep.subr.bf16.mxu0 0
        %3919 = vmatpush1.bf16.msra.mxu0 %v3664
        %3920 = vmatprep.subr.bf16.mxu0 0
        %3921 = vmatpush1.bf16.msra.mxu0 %v3665
        %3922 = vmatprep.subr.bf16.mxu0 0
        %3923 = vmatpush1.bf16.msra.mxu0 %v3666
        %3924 = vmatprep.subr.bf16.mxu0 0
        %3925 = vmatpush1.bf16.msra.mxu0 %v3667
        %3926 = vmatprep.mubr.bf16.mxu0 %v3150
        %3927 = vmatmul.mubr.bf16.gmra.mrb[0].mxu0 %v3149
        %v3928 = vpop.f32.mrb[0].mxu0
        %v3929 = vadd.f32 %v3864, %v3928
        %v3930 = vpop.f32.mrb[0].mxu0
        %v3931 = vpop.f32.mrb[0].mxu0
        %v3932 = vadd.f32 %v3867, %v3931
        %v3933 = vpop.f32.mrb[0].mxu0
        %3934 = vmatprep.mubr.bf16.mxu0 %v3159
        %3935 = vmatmul.mubr.bf16.gmra.mrb[0].mxu0 %v3158
        %v3936 = vpop.f32.mrb[0].mxu0
        %v3937 = vadd.f32 %v3872, %v3936
        %v3938 = vpop.f32.mrb[0].mxu0
        %v3939 = vpop.f32.mrb[0].mxu0
        %v3940 = vadd.f32 %v3875, %v3939
        %v3941 = vpop.f32.mrb[0].mxu0
        %3942 = vmatprep.mubr.bf16.mxu0 %v3168
        %3943 = vmatmul.mubr.bf16.gmra.mrb[0].mxu0 %v3167
        %v3944 = vpop.f32.mrb[0].mxu0
        %v3945 = vadd.f32 %v3880, %v3944
        %v3946 = vpop.f32.mrb[0].mxu0
        %v3947 = vpop.f32.mrb[0].mxu0
        %v3948 = vadd.f32 %v3883, %v3947
        %v3949 = vpop.f32.mrb[0].mxu0
        %3950 = vmatprep.mubr.bf16.mxu0 %v3177
        %3951 = vmatmul.mubr.bf16.gmra.mrb[0].mxu0 %v3176
        %v3952 = vpop.f32.mrb[0].mxu0
        %v3953 = vadd.f32 %v3888, %v3952
        %v3954 = vpop.f32.mrb[0].mxu0
        %v3955 = vpop.f32.mrb[0].mxu0
        %v3956 = vadd.f32 %v3891, %v3955
        %v3957 = vpop.f32.mrb[0].mxu0
        %3958 = vdwg.mxu0
        %3959 = vmatprep.subr.bf16.mxu0 0
        %3960 = vmatpush1.bf16.msra.mxu0 %v3668
        %3961 = vmatprep.subr.bf16.mxu0 0
        %3962 = vmatpush1.bf16.msra.mxu0 %v3669
        %3963 = vmatprep.subr.bf16.mxu0 0
        %3964 = vmatpush1.bf16.msra.mxu0 %v3670
        %3965 = vmatprep.subr.bf16.mxu0 0
        %3966 = vmatpush1.bf16.msra.mxu0 %v3671
        %3967 = vmatprep.subr.bf16.mxu0 0
        %3968 = vmatpush1.bf16.msra.mxu0 %v3672
        %3969 = vmatprep.subr.bf16.mxu0 0
        %3970 = vmatpush1.bf16.msra.mxu0 %v3673
        %3971 = vmatprep.subr.bf16.mxu0 0
        %3972 = vmatpush1.bf16.msra.mxu0 %v3674
        %3973 = vmatprep.subr.bf16.mxu0 0
        %3974 = vmatpush1.bf16.msra.mxu0 %v3675
        %3975 = vmatprep.subr.bf16.mxu0 0
        %3976 = vmatpush1.bf16.msra.mxu0 %v3676
        %3977 = vmatprep.subr.bf16.mxu0 0
        %3978 = vmatpush1.bf16.msra.mxu0 %v3677
        %3979 = vmatprep.subr.bf16.mxu0 0
        %3980 = vmatpush1.bf16.msra.mxu0 %v3678
        %3981 = vmatprep.subr.bf16.mxu0 0
        %3982 = vmatpush1.bf16.msra.mxu0 %v3679
        %3983 = vmatprep.subr.bf16.mxu0 0
        %3984 = vmatpush1.bf16.msra.mxu0 %v3680
        %3985 = vmatprep.subr.bf16.mxu0 0
        %3986 = vmatpush1.bf16.msra.mxu0 %v3681
        %3987 = vmatprep.subr.bf16.mxu0 0
        %3988 = vmatpush1.bf16.msra.mxu0 %v3682
        %3989 = vmatprep.subr.bf16.mxu0 0
        %3990 = vmatpush1.bf16.msra.mxu0 %v3683
        %3991 = vmatprep.mubr.bf16.mxu0 %v3152
        %3992 = vmatmul.mubr.bf16.gmra.mrb[0].mxu0 %v3151
        %v3993 = vpop.f32.mrb[0].mxu0
        %v3994 = vadd.f32 %v3929, %v3993
        %v3995 = vpop.f32.mrb[0].mxu0
        %v3996 = vpop.f32.mrb[0].mxu0
        %v3997 = vadd.f32 %v3932, %v3996
        %v3998 = vpop.f32.mrb[0].mxu0
        %3999 = vmatprep.mubr.bf16.mxu0 %v3161
        %4000 = vmatmul.mubr.bf16.gmra.mrb[0].mxu0 %v3160
        %v4001 = vpop.f32.mrb[0].mxu0
        %v4002 = vadd.f32 %v3937, %v4001
        %v4003 = vpop.f32.mrb[0].mxu0
        %v4004 = vpop.f32.mrb[0].mxu0
        %v4005 = vadd.f32 %v3940, %v4004
        %v4006 = vpop.f32.mrb[0].mxu0
        %4007 = vmatprep.mubr.bf16.mxu0 %v3170
        %4008 = vmatmul.mubr.bf16.gmra.mrb[0].mxu0 %v3169
        %v4009 = vpop.f32.mrb[0].mxu0
        %v4010 = vadd.f32 %v3945, %v4009
        %v4011 = vpop.f32.mrb[0].mxu0
        %v4012 = vpop.f32.mrb[0].mxu0
        %v4013 = vadd.f32 %v3948, %v4012
        %v4014 = vpop.f32.mrb[0].mxu0
        %4015 = vmatprep.mubr.bf16.mxu0 %v3179
        %4016 = vmatmul.mubr.bf16.gmra.mrb[0].mxu0 %v3178
        %v4017 = vpop.f32.mrb[0].mxu0
        %v4018 = vadd.f32 %v3953, %v4017
        %v4019 = vpop.f32.mrb[0].mxu0
        %v4020 = vpop.f32.mrb[0].mxu0
        %v4021 = vadd.f32 %v3956, %v4020
        %v4022 = vpop.f32.mrb[0].mxu0
        %4023 = vdwg.mxu0
        %4024 = vmatprep.subr.bf16.mxu0 0
        %4025 = vmatpush1.bf16.msra.mxu0 %v3684
        %4026 = vmatprep.subr.bf16.mxu0 0
        %4027 = vmatpush1.bf16.msra.mxu0 %v3685
        %4028 = vmatprep.subr.bf16.mxu0 0
        %4029 = vmatpush1.bf16.msra.mxu0 %v3686
        %4030 = vmatprep.subr.bf16.mxu0 0
        %4031 = vmatpush1.bf16.msra.mxu0 %v3687
        %4032 = vmatprep.subr.bf16.mxu0 0
        %4033 = vmatpush1.bf16.msra.mxu0 %v3688
        %4034 = vmatprep.subr.bf16.mxu0 0
        %4035 = vmatpush1.bf16.msra.mxu0 %v3689
        %4036 = vmatprep.subr.bf16.mxu0 0
        %4037 = vmatpush1.bf16.msra.mxu0 %v3690
        %4038 = vmatprep.subr.bf16.mxu0 0
        %4039 = vmatpush1.bf16.msra.mxu0 %v3691
        %4040 = vmatprep.subr.bf16.mxu0 0
        %4041 = vmatpush1.bf16.msra.mxu0 0
        %4042 = vmatprep.subr.bf16.mxu0 0
        %4043 = vmatpush1.bf16.msra.mxu0 0
        %4044 = vmatprep.subr.bf16.mxu0 0
        %4045 = vmatpush1.bf16.msra.mxu0 0
        %4046 = vmatprep.subr.bf16.mxu0 0
        %4047 = vmatpush1.bf16.msra.mxu0 0
        %4048 = vmatprep.subr.bf16.mxu0 0
        %4049 = vmatpush1.bf16.msra.mxu0 0
        %4050 = vmatprep.subr.bf16.mxu0 0
        %4051 = vmatpush1.bf16.msra.mxu0 0
        %4052 = vmatprep.subr.bf16.mxu0 0
        %4053 = vmatpush1.bf16.msra.mxu0 0
        %4054 = vmatprep.subr.bf16.mxu0 0
        %4055 = vmatpush1.bf16.msra.mxu0 0
        %4056 = vmatprep.mubr.bf16.mxu0 0
        %4057 = vmatmul.mubr.bf16.gmra.mrb[0].mxu0 %v3153
        %v4058 = vpop.f32.mrb[0].mxu0
        %v4059 = vadd.f32 %v3994, %v4058
        %v4060 = vpop.f32.mrb[0].mxu0
        %v4061 = vpop.f32.mrb[0].mxu0
        %v4062 = vadd.f32 %v3997, %v4061
        %v4063 = vpop.f32.mrb[0].mxu0
        %4064 = vmatprep.mubr.bf16.mxu0 0
        %4065 = vmatmul.mubr.bf16.gmra.mrb[0].mxu0 %v3162
        %v4066 = vpop.f32.mrb[0].mxu0
        %v4067 = vadd.f32 %v4002, %v4066
        %v4068 = vpop.f32.mrb[0].mxu0
        %v4069 = vpop.f32.mrb[0].mxu0
        %v4070 = vadd.f32 %v4005, %v4069
        %v4071 = vpop.f32.mrb[0].mxu0
        %4072 = vmatprep.mubr.bf16.mxu0 0
        %4073 = vmatmul.mubr.bf16.gmra.mrb[0].mxu0 %v3171
        %v4074 = vpop.f32.mrb[0].mxu0
        %v4075 = vadd.f32 %v4010, %v4074
        %v4076 = vpop.f32.mrb[0].mxu0
        %v4077 = vpop.f32.mrb[0].mxu0
        %v4078 = vadd.f32 %v4013, %v4077
        %v4079 = vpop.f32.mrb[0].mxu0
        %4080 = vmatprep.mubr.bf16.mxu0 0
        %4081 = vmatmul.mubr.bf16.gmra.mrb[0].mxu0 %v3180
        %v4082 = vpop.f32.mrb[0].mxu0
        %v4083 = vadd.f32 %v4018, %v4082
        %v4084 = vpop.f32.mrb[0].mxu0
        %v4085 = vpop.f32.mrb[0].mxu0
        %v4086 = vadd.f32 %v4021, %v4085
        %v4087 = vpop.f32.mrb[0].mxu0
        %4088 = vdwg.mxu0
        %v4089 = vadd.f32 %v2915, %v4059
        %v4090 = vadd.f32 %v2918, %v4062
        %v4091 = vadd.f32 %v2923, %v4067
        %v4092 = vadd.f32 %v2926, %v4070
        %v4093 = vadd.f32 %v2931, %v4075
        %v4094 = vadd.f32 %v2934, %v4078
        %v4095 = vadd.f32 %v2939, %v4083
        %v4096 = vadd.f32 %v2942, %v4086
        %v4097 = vpack.c.bf16 %v4090, %v4089
        %v4098 = vpack.c.bf16 %v4092, %v4091
        %v4099 = vpack.c.bf16 %v4094, %v4093
        %v4100 = vpack.c.bf16 %v4096, %v4095
        %v4101 = vld [vmem:[%s13] sm:$0xff]
        %v4102 = vld [vmem:[%s13 + $0x8] sm:$0xff]
        %v4103 = vld [vmem:[%s13 + $0x10] sm:$0xff]
        %v4104 = vld [vmem:[%s13 + $0x18] sm:$0xff]
        %v4105 = vld [vmem:[%s13 + $0x20] sm:$0xff]
        %v4106 = vld [vmem:[%s13 + $0x28] sm:$0xff]
        %v4107 = vld [vmem:[%s13 + $0x30] sm:$0xff]
        %v4108 = vld [vmem:[%s13 + $0x38] sm:$0xff]
        %v4109 = vld [vmem:[%s13 + $0x40] sm:$0xff]
        %v4110 = vld [vmem:[%s13 + $0x48] sm:$0xff]
        %v4111 = vld [vmem:[%s13 + $0x50] sm:$0xff]
        %v4112 = vld [vmem:[%s13 + $0x58] sm:$0xff]
        %v4113 = vld [vmem:[%s13 + $0x60] sm:$0xff]
        %v4114 = vld [vmem:[%s13 + $0x68] sm:$0xff]
        %v4115 = vld [vmem:[%s13 + $0x70] sm:$0xff]
        %v4116 = vld [vmem:[%s13 + $0x78] sm:$0xff]
        %v4117 = vld [vmem:[%s13 + $0x80] sm:$0xff]
        %v4118 = vld [vmem:[%s13 + $0x88] sm:$0xff]
        %v4119 = vld [vmem:[%s13 + $0x90] sm:$0xff]
        %v4120 = vld [vmem:[%s13 + $0x98] sm:$0xff]
        %v4121 = vld [vmem:[%s13 + $0xa0] sm:$0xff]
        %v4122 = vld [vmem:[%s13 + $0xa8] sm:$0xff]
        %v4123 = vld [vmem:[%s13 + $0xb0] sm:$0xff]
        %v4124 = vld [vmem:[%s13 + $0xb8] sm:$0xff]
        %v4125 = vld [vmem:[%s13 + $0xc0] sm:$0xff]
        %v4126 = vld [vmem:[%s13 + $0xc8] sm:$0xff]
        %v4127 = vld [vmem:[%s13 + $0xd0] sm:$0xff]
        %v4128 = vld [vmem:[%s13 + $0xd8] sm:$0xff]
        %v4129 = vld [vmem:[%s13 + $0xe0] sm:$0xff]
        %v4130 = vld [vmem:[%s13 + $0xe8] sm:$0xff]
        %v4131 = vld [vmem:[%s13 + $0xf0] sm:$0xff]
        %v4132 = vld [vmem:[%s13 + $0xf8] sm:$0xff]
        %v4133 = vld [vmem:[%s14] sm:$0xf]
        %v4135 = vlaneseq
        %v4136 = vshrl.u32 %v4135, 7
        %v4137 = vsub.s32 0, %v4136
        %v4138 = vrot.slane %v4133, %v4137
        %v4139 = vlaneseq
        %v4140 = vshrl.u32 %v4139, 7
        %v4141 = vsub.s32 1, %v4140
        %v4142 = vrot.slane %v4133, %v4141
        %v4143 = vlaneseq
        %v4144 = vshrl.u32 %v4143, 7
        %v4145 = vsub.s32 2, %v4144
        %v4146 = vrot.slane %v4133, %v4145
        %v4147 = vlaneseq
        %v4148 = vshrl.u32 %v4147, 7
        %v4149 = vsub.s32 3, %v4148
        %v4150 = vrot.slane %v4133, %v4149
        %v4187 = vunpack.c.l.b16 %v4101
        %v4188 = vunpack.c.h.b16 %v4101
        %v4189 = vunpack.c.l.b16 %v4102
        %v4190 = vunpack.c.h.b16 %v4102
        %v4191 = vunpack.c.l.b16 %v4103
        %v4192 = vunpack.c.h.b16 %v4103
        %v4193 = vunpack.c.l.b16 %v4104
        %v4194 = vunpack.c.h.b16 %v4104
        %v4195 = vunpack.c.l.b16 %v4105
        %v4196 = vunpack.c.h.b16 %v4105
        %v4197 = vunpack.c.l.b16 %v4106
        %v4198 = vunpack.c.h.b16 %v4106
        %v4199 = vunpack.c.l.b16 %v4107
        %v4200 = vunpack.c.h.b16 %v4107
        %v4201 = vunpack.c.l.b16 %v4108
        %v4202 = vunpack.c.h.b16 %v4108
        %v4203 = vunpack.c.l.b16 %v4109
        %v4204 = vunpack.c.h.b16 %v4109
        %v4205 = vunpack.c.l.b16 %v4110
        %v4206 = vunpack.c.h.b16 %v4110
        %v4207 = vunpack.c.l.b16 %v4111
        %v4208 = vunpack.c.h.b16 %v4111
        %v4209 = vunpack.c.l.b16 %v4112
        %v4210 = vunpack.c.h.b16 %v4112
        %v4211 = vunpack.c.l.b16 %v4113
        %v4212 = vunpack.c.h.b16 %v4113
        %v4213 = vunpack.c.l.b16 %v4114
        %v4214 = vunpack.c.h.b16 %v4114
        %v4215 = vunpack.c.l.b16 %v4115
        %v4216 = vunpack.c.h.b16 %v4115
        %v4217 = vunpack.c.l.b16 %v4116
        %v4218 = vunpack.c.h.b16 %v4116
        %v4219 = vunpack.c.l.b16 %v4117
        %v4220 = vunpack.c.h.b16 %v4117
        %v4221 = vunpack.c.l.b16 %v4118
        %v4222 = vunpack.c.h.b16 %v4118
        %v4223 = vunpack.c.l.b16 %v4119
        %v4224 = vunpack.c.h.b16 %v4119
        %v4225 = vunpack.c.l.b16 %v4120
        %v4226 = vunpack.c.h.b16 %v4120
        %v4227 = vunpack.c.l.b16 %v4121
        %v4228 = vunpack.c.h.b16 %v4121
        %v4229 = vunpack.c.l.b16 %v4122
        %v4230 = vunpack.c.h.b16 %v4122
        %v4231 = vunpack.c.l.b16 %v4123
        %v4232 = vunpack.c.h.b16 %v4123
        %v4233 = vunpack.c.l.b16 %v4124
        %v4234 = vunpack.c.h.b16 %v4124
        %v4235 = vunpack.c.l.b16 %v4125
        %v4236 = vunpack.c.h.b16 %v4125
        %v4237 = vunpack.c.l.b16 %v4126
        %v4238 = vunpack.c.h.b16 %v4126
        %v4239 = vunpack.c.l.b16 %v4127
        %v4240 = vunpack.c.h.b16 %v4127
        %v4241 = vunpack.c.l.b16 %v4128
        %v4242 = vunpack.c.h.b16 %v4128
        %v4243 = vunpack.c.l.b16 %v4129
        %v4244 = vunpack.c.h.b16 %v4129
        %v4245 = vunpack.c.l.b16 %v4130
        %v4246 = vunpack.c.h.b16 %v4130
        %v4247 = vunpack.c.l.b16 %v4131
        %v4248 = vunpack.c.h.b16 %v4131
        %v4249 = vunpack.c.l.b16 %v4132
        %v4250 = vunpack.c.h.b16 %v4132
        %v4251 = vpack.c.b16 %v4191, %v4187
        %v4252 = vpack.c.b16 %v4192, %v4188
        %v4253 = vpack.c.b16 %v4193, %v4189
        %v4254 = vpack.c.b16 %v4194, %v4190
        %v4255 = vpack.c.b16 %v4199, %v4195
        %v4256 = vpack.c.b16 %v4200, %v4196
        %v4257 = vpack.c.b16 %v4201, %v4197
        %v4258 = vpack.c.b16 %v4202, %v4198
        %v4259 = vpack.c.b16 %v4207, %v4203
        %v4260 = vpack.c.b16 %v4208, %v4204
        %v4261 = vpack.c.b16 %v4209, %v4205
        %v4262 = vpack.c.b16 %v4210, %v4206
        %v4263 = vpack.c.b16 %v4215, %v4211
        %v4264 = vpack.c.b16 %v4216, %v4212
        %v4265 = vpack.c.b16 %v4217, %v4213
        %v4266 = vpack.c.b16 %v4218, %v4214
        %v4267 = vpack.c.b16 %v4223, %v4219
        %v4268 = vpack.c.b16 %v4224, %v4220
        %v4269 = vpack.c.b16 %v4225, %v4221
        %v4270 = vpack.c.b16 %v4226, %v4222
        %v4271 = vpack.c.b16 %v4231, %v4227
        %v4272 = vpack.c.b16 %v4232, %v4228
        %v4273 = vpack.c.b16 %v4233, %v4229
        %v4274 = vpack.c.b16 %v4234, %v4230
        %v4275 = vpack.c.b16 %v4239, %v4235
        %v4276 = vpack.c.b16 %v4240, %v4236
        %v4277 = vpack.c.b16 %v4241, %v4237
        %v4278 = vpack.c.b16 %v4242, %v4238
        %v4279 = vpack.c.b16 %v4247, %v4243
        %v4280 = vpack.c.b16 %v4248, %v4244
        %v4281 = vpack.c.b16 %v4249, %v4245
        %v4282 = vpack.c.b16 %v4250, %v4246
        %4315 = vmatprep.subr.bf16.mxu0 %v4252
        %4316 = vmatpush1.bf16.msra.mxu0 %v4251
        %4317 = vmatprep.subr.bf16.mxu0 %v4256
        %4318 = vmatpush1.bf16.msra.mxu0 %v4255
        %4319 = vmatprep.subr.bf16.mxu0 %v4260
        %4320 = vmatpush1.bf16.msra.mxu0 %v4259
        %4321 = vmatprep.subr.bf16.mxu0 %v4264
        %4322 = vmatpush1.bf16.msra.mxu0 %v4263
        %4323 = vmatprep.subr.bf16.mxu0 %v4268
        %4324 = vmatpush1.bf16.msra.mxu0 %v4267
        %4325 = vmatprep.subr.bf16.mxu0 %v4272
        %4326 = vmatpush1.bf16.msra.mxu0 %v4271
        %4327 = vmatprep.subr.bf16.mxu0 %v4276
        %4328 = vmatpush1.bf16.msra.mxu0 %v4275
        %4329 = vmatprep.subr.bf16.mxu0 %v4280
        %4330 = vmatpush1.bf16.msra.mxu0 %v4279
        %4331 = vmatprep.subr.bf16.mxu0 0
        %4332 = vmatpush1.bf16.msra.mxu0 0
        %4333 = vmatprep.subr.bf16.mxu0 0
        %4334 = vmatpush1.bf16.msra.mxu0 0
        %4335 = vmatprep.subr.bf16.mxu0 0
        %4336 = vmatpush1.bf16.msra.mxu0 0
        %4337 = vmatprep.subr.bf16.mxu0 0
        %4338 = vmatpush1.bf16.msra.mxu0 0
        %4339 = vmatprep.subr.bf16.mxu0 0
        %4340 = vmatpush1.bf16.msra.mxu0 0
        %4341 = vmatprep.subr.bf16.mxu0 0
        %4342 = vmatpush1.bf16.msra.mxu0 0
        %4343 = vmatprep.subr.bf16.mxu0 0
        %4344 = vmatpush1.bf16.msra.mxu0 0
        %4345 = vmatprep.subr.bf16.mxu0 0
        %4346 = vmatpush1.bf16.msra.mxu0 0
        %4347 = vmatprep.mubr.bf16.mxu0 0
        %4348 = vmatmul.mubr.bf16.gmra.mrb[0].mxu0 %v4097
        %v4349 = vpop.f32.mrb[0].mxu0
        %v4350 = vadd.f32 %v4138, %v4349
        %v4351 = vpop.f32.mrb[0].mxu0
        %v4352 = vadd.f32 %v4142, %v4351
        %v4353 = vpop.f32.mrb[0].mxu0
        %v4354 = vadd.f32 %v4138, %v4353
        %v4355 = vpop.f32.mrb[0].mxu0
        %v4356 = vadd.f32 %v4142, %v4355
        %4357 = vmatprep.mubr.bf16.mxu0 0
        %4358 = vmatmul.mubr.bf16.gmra.mrb[0].mxu0 %v4098
        %v4359 = vpop.f32.mrb[0].mxu0
        %v4360 = vadd.f32 %v4138, %v4359
        %v4361 = vpop.f32.mrb[0].mxu0
        %v4362 = vadd.f32 %v4142, %v4361
        %v4363 = vpop.f32.mrb[0].mxu0
        %v4364 = vadd.f32 %v4138, %v4363
        %v4365 = vpop.f32.mrb[0].mxu0
        %v4366 = vadd.f32 %v4142, %v4365
        %4367 = vmatprep.mubr.bf16.mxu0 0
        %4368 = vmatmul.mubr.bf16.gmra.mrb[0].mxu0 %v4099
        %v4369 = vpop.f32.mrb[0].mxu0
        %v4370 = vadd.f32 %v4138, %v4369
        %v4371 = vpop.f32.mrb[0].mxu0
        %v4372 = vadd.f32 %v4142, %v4371
        %v4373 = vpop.f32.mrb[0].mxu0
        %v4374 = vadd.f32 %v4138, %v4373
        %v4375 = vpop.f32.mrb[0].mxu0
        %v4376 = vadd.f32 %v4142, %v4375
        %4377 = vmatprep.mubr.bf16.mxu0 0
        %4378 = vmatmul.mubr.bf16.gmra.mrb[0].mxu0 %v4100
        %v4379 = vpop.f32.mrb[0].mxu0
        %v4380 = vadd.f32 %v4138, %v4379
        %v4381 = vpop.f32.mrb[0].mxu0
        %v4382 = vadd.f32 %v4142, %v4381
        %v4383 = vpop.f32.mrb[0].mxu0
        %v4384 = vadd.f32 %v4138, %v4383
        %v4385 = vpop.f32.mrb[0].mxu0
        %v4386 = vadd.f32 %v4142, %v4385
        %4387 = vdwg.mxu0
        %4388 = vmatprep.subr.bf16.mxu0 %v4254
        %4389 = vmatpush1.bf16.msra.mxu0 %v4253
        %4390 = vmatprep.subr.bf16.mxu0 %v4258
        %4391 = vmatpush1.bf16.msra.mxu0 %v4257
        %4392 = vmatprep.subr.bf16.mxu0 %v4262
        %4393 = vmatpush1.bf16.msra.mxu0 %v4261
        %4394 = vmatprep.subr.bf16.mxu0 %v4266
        %4395 = vmatpush1.bf16.msra.mxu0 %v4265
        %4396 = vmatprep.subr.bf16.mxu0 %v4270
        %4397 = vmatpush1.bf16.msra.mxu0 %v4269
        %4398 = vmatprep.subr.bf16.mxu0 %v4274
        %4399 = vmatpush1.bf16.msra.mxu0 %v4273
        %4400 = vmatprep.subr.bf16.mxu0 %v4278
        %4401 = vmatpush1.bf16.msra.mxu0 %v4277
        %4402 = vmatprep.subr.bf16.mxu0 %v4282
        %4403 = vmatpush1.bf16.msra.mxu0 %v4281
        %4404 = vmatprep.subr.bf16.mxu0 0
        %4405 = vmatpush1.bf16.msra.mxu0 0
        %4406 = vmatprep.subr.bf16.mxu0 0
        %4407 = vmatpush1.bf16.msra.mxu0 0
        %4408 = vmatprep.subr.bf16.mxu0 0
        %4409 = vmatpush1.bf16.msra.mxu0 0
        %4410 = vmatprep.subr.bf16.mxu0 0
        %4411 = vmatpush1.bf16.msra.mxu0 0
        %4412 = vmatprep.subr.bf16.mxu0 0
        %4413 = vmatpush1.bf16.msra.mxu0 0
        %4414 = vmatprep.subr.bf16.mxu0 0
        %4415 = vmatpush1.bf16.msra.mxu0 0
        %4416 = vmatprep.subr.bf16.mxu0 0
        %4417 = vmatpush1.bf16.msra.mxu0 0
        %4418 = vmatprep.subr.bf16.mxu0 0
        %4419 = vmatpush1.bf16.msra.mxu0 0
        %4420 = vmatprep.mubr.bf16.mxu0 0
        %4421 = vmatmul.mubr.bf16.gmra.mrb[0].mxu0 %v4097
        %v4422 = vpop.f32.mrb[0].mxu0
        %v4423 = vadd.f32 %v4146, %v4422
        %v4424 = vpop.f32.mrb[0].mxu0
        %v4425 = vadd.f32 %v4150, %v4424
        %v4426 = vpop.f32.mrb[0].mxu0
        %v4427 = vadd.f32 %v4146, %v4426
        %v4428 = vpop.f32.mrb[0].mxu0
        %v4429 = vadd.f32 %v4150, %v4428
        %4430 = vmatprep.mubr.bf16.mxu0 0
        %4431 = vmatmul.mubr.bf16.gmra.mrb[0].mxu0 %v4098
        %v4432 = vpop.f32.mrb[0].mxu0
        %v4433 = vadd.f32 %v4146, %v4432
        %v4434 = vpop.f32.mrb[0].mxu0
        %v4435 = vadd.f32 %v4150, %v4434
        %v4436 = vpop.f32.mrb[0].mxu0
        %v4437 = vadd.f32 %v4146, %v4436
        %v4438 = vpop.f32.mrb[0].mxu0
        %v4439 = vadd.f32 %v4150, %v4438
        %4440 = vmatprep.mubr.bf16.mxu0 0
        %4441 = vmatmul.mubr.bf16.gmra.mrb[0].mxu0 %v4099
        %v4442 = vpop.f32.mrb[0].mxu0
        %v4443 = vadd.f32 %v4146, %v4442
        %v4444 = vpop.f32.mrb[0].mxu0
        %v4445 = vadd.f32 %v4150, %v4444
        %v4446 = vpop.f32.mrb[0].mxu0
        %v4447 = vadd.f32 %v4146, %v4446
        %v4448 = vpop.f32.mrb[0].mxu0
        %v4449 = vadd.f32 %v4150, %v4448
        %4450 = vmatprep.mubr.bf16.mxu0 0
        %4451 = vmatmul.mubr.bf16.gmra.mrb[0].mxu0 %v4100
        %v4452 = vpop.f32.mrb[0].mxu0
        %v4453 = vadd.f32 %v4146, %v4452
        %v4454 = vpop.f32.mrb[0].mxu0
        %v4455 = vadd.f32 %v4150, %v4454
        %v4456 = vpop.f32.mrb[0].mxu0
        %v4457 = vadd.f32 %v4146, %v4456
        %v4458 = vpop.f32.mrb[0].mxu0
        %v4459 = vadd.f32 %v4150, %v4458
        %4460 = vdwg.mxu0
        %v4461 = vmax.f32 %v4350, 0.0
        %v4462 = vmax.f32 %v4352, 0.0
        %v4463 = vmax.f32 %v4423, 0.0
        %v4464 = vmax.f32 %v4425, 0.0
        %v4465 = vmax.f32 %v4354, 0.0
        %v4466 = vmax.f32 %v4356, 0.0
        %v4467 = vmax.f32 %v4427, 0.0
        %v4468 = vmax.f32 %v4429, 0.0
        %v4469 = vmax.f32 %v4360, 0.0
        %v4470 = vmax.f32 %v4362, 0.0
        %v4471 = vmax.f32 %v4433, 0.0
        %v4472 = vmax.f32 %v4435, 0.0
        %v4473 = vmax.f32 %v4364, 0.0
        %v4474 = vmax.f32 %v4366, 0.0
        %v4475 = vmax.f32 %v4437, 0.0
        %v4476 = vmax.f32 %v4439, 0.0
        %v4477 = vmax.f32 %v4370, 0.0
        %v4478 = vmax.f32 %v4372, 0.0
        %v4479 = vmax.f32 %v4443, 0.0
        %v4480 = vmax.f32 %v4445, 0.0
        %v4481 = vmax.f32 %v4374, 0.0
        %v4482 = vmax.f32 %v4376, 0.0
        %v4483 = vmax.f32 %v4447, 0.0
        %v4484 = vmax.f32 %v4449, 0.0
        %v4485 = vmax.f32 %v4380, 0.0
        %v4486 = vmax.f32 %v4382, 0.0
        %v4487 = vmax.f32 %v4453, 0.0
        %v4488 = vmax.f32 %v4455, 0.0
        %v4489 = vmax.f32 %v4384, 0.0
        %v4490 = vmax.f32 %v4386, 0.0
        %v4491 = vmax.f32 %v4457, 0.0
        %v4492 = vmax.f32 %v4459, 0.0
        %v4493 = vpack.c.bf16 %v4465, %v4461
        %v4494 = vpack.c.bf16 %v4466, %v4462
        %v4495 = vpack.c.bf16 %v4467, %v4463
        %v4496 = vpack.c.bf16 %v4468, %v4464
        %v4497 = vpack.c.bf16 %v4473, %v4469
        %v4498 = vpack.c.bf16 %v4474, %v4470
        %v4499 = vpack.c.bf16 %v4475, %v4471
        %v4500 = vpack.c.bf16 %v4476, %v4472
        %v4501 = vpack.c.bf16 %v4481, %v4477
        %v4502 = vpack.c.bf16 %v4482, %v4478
        %v4503 = vpack.c.bf16 %v4483, %v4479
        %v4504 = vpack.c.bf16 %v4484, %v4480
        %v4505 = vpack.c.bf16 %v4489, %v4485
        %v4506 = vpack.c.bf16 %v4490, %v4486
        %v4507 = vpack.c.bf16 %v4491, %v4487
        %v4508 = vpack.c.bf16 %v4492, %v4488
        %v4509 = vld [vmem:[%s15] sm:$0xf]
        %v4510 = vld [vmem:[%s15 + $0x4] sm:$0xf]
        %v4511 = vld [vmem:[%s15 + $0x8] sm:$0xf]
        %v4512 = vld [vmem:[%s15 + $0xc] sm:$0xf]
        %v4513 = vld [vmem:[%s15 + $0x10] sm:$0xf]
        %v4514 = vld [vmem:[%s15 + $0x14] sm:$0xf]
        %v4515 = vld [vmem:[%s15 + $0x18] sm:$0xf]
        %v4516 = vld [vmem:[%s15 + $0x1c] sm:$0xf]
        %v4517 = vld [vmem:[%s15 + $0x20] sm:$0xf]
        %v4518 = vld [vmem:[%s15 + $0x24] sm:$0xf]
        %v4519 = vld [vmem:[%s15 + $0x28] sm:$0xf]
        %v4520 = vld [vmem:[%s15 + $0x2c] sm:$0xf]
        %v4521 = vld [vmem:[%s15 + $0x30] sm:$0xf]
        %v4522 = vld [vmem:[%s15 + $0x34] sm:$0xf]
        %v4523 = vld [vmem:[%s15 + $0x38] sm:$0xf]
        %v4524 = vld [vmem:[%s15 + $0x3c] sm:$0xf]
        %v4525 = vld [vmem:[%s15 + $0x40] sm:$0xf]
        %v4526 = vld [vmem:[%s15 + $0x44] sm:$0xf]
        %v4527 = vld [vmem:[%s15 + $0x48] sm:$0xf]
        %v4528 = vld [vmem:[%s15 + $0x4c] sm:$0xf]
        %v4529 = vld [vmem:[%s15 + $0x50] sm:$0xf]
        %v4530 = vld [vmem:[%s15 + $0x54] sm:$0xf]
        %v4531 = vld [vmem:[%s15 + $0x58] sm:$0xf]
        %v4532 = vld [vmem:[%s15 + $0x5c] sm:$0xf]
        %v4533 = vld [vmem:[%s15 + $0x60] sm:$0xf]
        %v4534 = vld [vmem:[%s15 + $0x64] sm:$0xf]
        %v4535 = vld [vmem:[%s15 + $0x68] sm:$0xf]
        %v4536 = vld [vmem:[%s15 + $0x6c] sm:$0xf]
        %v4537 = vld [vmem:[%s15 + $0x70] sm:$0xf]
        %v4538 = vld [vmem:[%s15 + $0x74] sm:$0xf]
        %v4539 = vld [vmem:[%s15 + $0x78] sm:$0xf]
        %v4540 = vld [vmem:[%s15 + $0x7c] sm:$0xf]
        %v4541 = vld [vmem:[%s15 + $0x80] sm:$0xf]
        %v4542 = vld [vmem:[%s15 + $0x84] sm:$0xf]
        %v4543 = vld [vmem:[%s15 + $0x88] sm:$0xf]
        %v4544 = vld [vmem:[%s15 + $0x8c] sm:$0xf]
        %v4545 = vld [vmem:[%s15 + $0x90] sm:$0xf]
        %v4546 = vld [vmem:[%s15 + $0x94] sm:$0xf]
        %v4547 = vld [vmem:[%s15 + $0x98] sm:$0xf]
        %v4548 = vld [vmem:[%s15 + $0x9c] sm:$0xf]
        %v4549 = vld [vmem:[%s15 + $0xa0] sm:$0xf]
        %v4550 = vld [vmem:[%s15 + $0xa4] sm:$0xf]
        %v4551 = vld [vmem:[%s15 + $0xa8] sm:$0xf]
        %v4552 = vld [vmem:[%s15 + $0xac] sm:$0xf]
        %v4553 = vld [vmem:[%s15 + $0xb0] sm:$0xf]
        %v4554 = vld [vmem:[%s15 + $0xb4] sm:$0xf]
        %v4555 = vld [vmem:[%s15 + $0xb8] sm:$0xf]
        %v4556 = vld [vmem:[%s15 + $0xbc] sm:$0xf]
        %v4557 = vld [vmem:[%s15 + $0xc0] sm:$0xf]
        %v4558 = vld [vmem:[%s15 + $0xc4] sm:$0xf]
        %v4559 = vld [vmem:[%s15 + $0xc8] sm:$0xf]
        %v4560 = vld [vmem:[%s15 + $0xcc] sm:$0xf]
        %v4561 = vld [vmem:[%s15 + $0xd0] sm:$0xf]
        %v4562 = vld [vmem:[%s15 + $0xd4] sm:$0xf]
        %v4563 = vld [vmem:[%s15 + $0xd8] sm:$0xf]
        %v4564 = vld [vmem:[%s15 + $0xdc] sm:$0xf]
        %v4565 = vld [vmem:[%s15 + $0xe0] sm:$0xf]
        %v4566 = vld [vmem:[%s15 + $0xe4] sm:$0xf]
        %v4567 = vld [vmem:[%s15 + $0xe8] sm:$0xf]
        %v4568 = vld [vmem:[%s15 + $0xec] sm:$0xf]
        %v4569 = vld [vmem:[%s15 + $0xf0] sm:$0xf]
        %v4570 = vld [vmem:[%s15 + $0xf4] sm:$0xf]
        %v4571 = vld [vmem:[%s15 + $0xf8] sm:$0xf]
        %v4572 = vld [vmem:[%s15 + $0xfc] sm:$0xf]
        %v4573 = vld [vmem:[%s16] sm:$0x1]
        %v4575 = vlaneseq
        %v4576 = vshrl.u32 %v4575, 7
        %v4577 = vsub.s32 0, %v4576
        %v4578 = vrot.slane %v4573, %v4577
        %v4644 = vunpack.c.l.b16 %v4509
        %v4645 = vunpack.c.l.b16 %v4510
        %v4646 = vunpack.c.l.b16 %v4511
        %v4647 = vunpack.c.l.b16 %v4512
        %v4648 = vunpack.c.l.b16 %v4513
        %v4649 = vunpack.c.l.b16 %v4514
        %v4650 = vunpack.c.l.b16 %v4515
        %v4651 = vunpack.c.l.b16 %v4516
        %v4652 = vunpack.c.l.b16 %v4517
        %v4653 = vunpack.c.l.b16 %v4518
        %v4654 = vunpack.c.l.b16 %v4519
        %v4655 = vunpack.c.l.b16 %v4520
        %v4656 = vunpack.c.l.b16 %v4521
        %v4657 = vunpack.c.l.b16 %v4522
        %v4658 = vunpack.c.l.b16 %v4523
        %v4659 = vunpack.c.l.b16 %v4524
        %v4660 = vunpack.c.l.b16 %v4525
        %v4661 = vunpack.c.l.b16 %v4526
        %v4662 = vunpack.c.l.b16 %v4527
        %v4663 = vunpack.c.l.b16 %v4528
        %v4664 = vunpack.c.l.b16 %v4529
        %v4665 = vunpack.c.l.b16 %v4530
        %v4666 = vunpack.c.l.b16 %v4531
        %v4667 = vunpack.c.l.b16 %v4532
        %v4668 = vunpack.c.l.b16 %v4533
        %v4669 = vunpack.c.l.b16 %v4534
        %v4670 = vunpack.c.l.b16 %v4535
        %v4671 = vunpack.c.l.b16 %v4536
        %v4672 = vunpack.c.l.b16 %v4537
        %v4673 = vunpack.c.l.b16 %v4538
        %v4674 = vunpack.c.l.b16 %v4539
        %v4675 = vunpack.c.l.b16 %v4540
        %v4676 = vunpack.c.l.b16 %v4541
        %v4677 = vunpack.c.l.b16 %v4542
        %v4678 = vunpack.c.l.b16 %v4543
        %v4679 = vunpack.c.l.b16 %v4544
        %v4680 = vunpack.c.l.b16 %v4545
        %v4681 = vunpack.c.l.b16 %v4546
        %v4682 = vunpack.c.l.b16 %v4547
        %v4683 = vunpack.c.l.b16 %v4548
        %v4684 = vunpack.c.l.b16 %v4549
        %v4685 = vunpack.c.l.b16 %v4550
        %v4686 = vunpack.c.l.b16 %v4551
        %v4687 = vunpack.c.l.b16 %v4552
        %v4688 = vunpack.c.l.b16 %v4553
        %v4689 = vunpack.c.l.b16 %v4554
        %v4690 = vunpack.c.l.b16 %v4555
        %v4691 = vunpack.c.l.b16 %v4556
        %v4692 = vunpack.c.l.b16 %v4557
        %v4693 = vunpack.c.l.b16 %v4558
        %v4694 = vunpack.c.l.b16 %v4559
        %v4695 = vunpack.c.l.b16 %v4560
        %v4696 = vunpack.c.l.b16 %v4561
        %v4697 = vunpack.c.l.b16 %v4562
        %v4698 = vunpack.c.l.b16 %v4563
        %v4699 = vunpack.c.l.b16 %v4564
        %v4700 = vunpack.c.l.b16 %v4565
        %v4701 = vunpack.c.l.b16 %v4566
        %v4702 = vunpack.c.l.b16 %v4567
        %v4703 = vunpack.c.l.b16 %v4568
        %v4704 = vunpack.c.l.b16 %v4569
        %v4705 = vunpack.c.l.b16 %v4570
        %v4706 = vunpack.c.l.b16 %v4571
        %v4707 = vunpack.c.l.b16 %v4572
        %v4708 = vpack.c.b16 %v4645, %v4644
        %v4709 = vpack.c.b16 %v4647, %v4646
        %v4710 = vpack.c.b16 %v4649, %v4648
        %v4711 = vpack.c.b16 %v4651, %v4650
        %v4712 = vpack.c.b16 %v4653, %v4652
        %v4713 = vpack.c.b16 %v4655, %v4654
        %v4714 = vpack.c.b16 %v4657, %v4656
        %v4715 = vpack.c.b16 %v4659, %v4658
        %v4716 = vpack.c.b16 %v4661, %v4660
        %v4717 = vpack.c.b16 %v4663, %v4662
        %v4718 = vpack.c.b16 %v4665, %v4664
        %v4719 = vpack.c.b16 %v4667, %v4666
        %v4720 = vpack.c.b16 %v4669, %v4668
        %v4721 = vpack.c.b16 %v4671, %v4670
        %v4722 = vpack.c.b16 %v4673, %v4672
        %v4723 = vpack.c.b16 %v4675, %v4674
        %v4724 = vpack.c.b16 %v4677, %v4676
        %v4725 = vpack.c.b16 %v4679, %v4678
        %v4726 = vpack.c.b16 %v4681, %v4680
        %v4727 = vpack.c.b16 %v4683, %v4682
        %v4728 = vpack.c.b16 %v4685, %v4684
        %v4729 = vpack.c.b16 %v4687, %v4686
        %v4730 = vpack.c.b16 %v4689, %v4688
        %v4731 = vpack.c.b16 %v4691, %v4690
        %v4732 = vpack.c.b16 %v4693, %v4692
        %v4733 = vpack.c.b16 %v4695, %v4694
        %v4734 = vpack.c.b16 %v4697, %v4696
        %v4735 = vpack.c.b16 %v4699, %v4698
        %v4736 = vpack.c.b16 %v4701, %v4700
        %v4737 = vpack.c.b16 %v4703, %v4702
        %v4738 = vpack.c.b16 %v4705, %v4704
        %v4739 = vpack.c.b16 %v4707, %v4706
        %4772 = vmatprep.subr.bf16.mxu0 0
        %4773 = vmatpush1.bf16.msra.mxu0 %v4708
        %4774 = vmatprep.subr.bf16.mxu0 0
        %4775 = vmatpush1.bf16.msra.mxu0 %v4709
        %4776 = vmatprep.subr.bf16.mxu0 0
        %4777 = vmatpush1.bf16.msra.mxu0 %v4710
        %4778 = vmatprep.subr.bf16.mxu0 0
        %4779 = vmatpush1.bf16.msra.mxu0 %v4711
        %4780 = vmatprep.subr.bf16.mxu0 0
        %4781 = vmatpush1.bf16.msra.mxu0 %v4712
        %4782 = vmatprep.subr.bf16.mxu0 0
        %4783 = vmatpush1.bf16.msra.mxu0 %v4713
        %4784 = vmatprep.subr.bf16.mxu0 0
        %4785 = vmatpush1.bf16.msra.mxu0 %v4714
        %4786 = vmatprep.subr.bf16.mxu0 0
        %4787 = vmatpush1.bf16.msra.mxu0 %v4715
        %4788 = vmatprep.subr.bf16.mxu0 0
        %4789 = vmatpush1.bf16.msra.mxu0 %v4716
        %4790 = vmatprep.subr.bf16.mxu0 0
        %4791 = vmatpush1.bf16.msra.mxu0 %v4717
        %4792 = vmatprep.subr.bf16.mxu0 0
        %4793 = vmatpush1.bf16.msra.mxu0 %v4718
        %4794 = vmatprep.subr.bf16.mxu0 0
        %4795 = vmatpush1.bf16.msra.mxu0 %v4719
        %4796 = vmatprep.subr.bf16.mxu0 0
        %4797 = vmatpush1.bf16.msra.mxu0 %v4720
        %4798 = vmatprep.subr.bf16.mxu0 0
        %4799 = vmatpush1.bf16.msra.mxu0 %v4721
        %4800 = vmatprep.subr.bf16.mxu0 0
        %4801 = vmatpush1.bf16.msra.mxu0 %v4722
        %4802 = vmatprep.subr.bf16.mxu0 0
        %4803 = vmatpush1.bf16.msra.mxu0 %v4723
        %4804 = vmatprep.mubr.bf16.mxu0 %v4494
        %4805 = vmatmul.mubr.bf16.gmra.mrb[0].mxu0 %v4493
        %v4806 = vpop.f32.mrb[0].mxu0
        %v4807 = vadd.f32 %v4578, %v4806
        %v4808 = vpop.f32.mrb[0].mxu0
        %v4809 = vpop.f32.mrb[0].mxu0
        %v4810 = vadd.f32 %v4578, %v4809
        %v4811 = vpop.f32.mrb[0].mxu0
        %4812 = vmatprep.mubr.bf16.mxu0 %v4498
        %4813 = vmatmul.mubr.bf16.gmra.mrb[0].mxu0 %v4497
        %v4814 = vpop.f32.mrb[0].mxu0
        %v4815 = vadd.f32 %v4578, %v4814
        %v4816 = vpop.f32.mrb[0].mxu0
        %v4817 = vpop.f32.mrb[0].mxu0
        %v4818 = vadd.f32 %v4578, %v4817
        %v4819 = vpop.f32.mrb[0].mxu0
        %4820 = vmatprep.mubr.bf16.mxu0 %v4502
        %4821 = vmatmul.mubr.bf16.gmra.mrb[0].mxu0 %v4501
        %v4822 = vpop.f32.mrb[0].mxu0
        %v4823 = vadd.f32 %v4578, %v4822
        %v4824 = vpop.f32.mrb[0].mxu0
        %v4825 = vpop.f32.mrb[0].mxu0
        %v4826 = vadd.f32 %v4578, %v4825
        %v4827 = vpop.f32.mrb[0].mxu0
        %4828 = vmatprep.mubr.bf16.mxu0 %v4506
        %4829 = vmatmul.mubr.bf16.gmra.mrb[0].mxu0 %v4505
        %v4830 = vpop.f32.mrb[0].mxu0
        %v4831 = vadd.f32 %v4578, %v4830
        %v4832 = vpop.f32.mrb[0].mxu0
        %v4833 = vpop.f32.mrb[0].mxu0
        %v4834 = vadd.f32 %v4578, %v4833
        %v4835 = vpop.f32.mrb[0].mxu0
        %4836 = vdwg.mxu0
        %4837 = vmatprep.subr.bf16.mxu0 0
        %4838 = vmatpush1.bf16.msra.mxu0 %v4724
        %4839 = vmatprep.subr.bf16.mxu0 0
        %4840 = vmatpush1.bf16.msra.mxu0 %v4725
        %4841 = vmatprep.subr.bf16.mxu0 0
        %4842 = vmatpush1.bf16.msra.mxu0 %v4726
        %4843 = vmatprep.subr.bf16.mxu0 0
        %4844 = vmatpush1.bf16.msra.mxu0 %v4727
        %4845 = vmatprep.subr.bf16.mxu0 0
        %4846 = vmatpush1.bf16.msra.mxu0 %v4728
        %4847 = vmatprep.subr.bf16.mxu0 0
        %4848 = vmatpush1.bf16.msra.mxu0 %v4729
        %4849 = vmatprep.subr.bf16.mxu0 0
        %4850 = vmatpush1.bf16.msra.mxu0 %v4730
        %4851 = vmatprep.subr.bf16.mxu0 0
        %4852 = vmatpush1.bf16.msra.mxu0 %v4731
        %4853 = vmatprep.subr.bf16.mxu0 0
        %4854 = vmatpush1.bf16.msra.mxu0 %v4732
        %4855 = vmatprep.subr.bf16.mxu0 0
        %4856 = vmatpush1.bf16.msra.mxu0 %v4733
        %4857 = vmatprep.subr.bf16.mxu0 0
        %4858 = vmatpush1.bf16.msra.mxu0 %v4734
        %4859 = vmatprep.subr.bf16.mxu0 0
        %4860 = vmatpush1.bf16.msra.mxu0 %v4735
        %4861 = vmatprep.subr.bf16.mxu0 0
        %4862 = vmatpush1.bf16.msra.mxu0 %v4736
        %4863 = vmatprep.subr.bf16.mxu0 0
        %4864 = vmatpush1.bf16.msra.mxu0 %v4737
        %4865 = vmatprep.subr.bf16.mxu0 0
        %4866 = vmatpush1.bf16.msra.mxu0 %v4738
        %4867 = vmatprep.subr.bf16.mxu0 0
        %4868 = vmatpush1.bf16.msra.mxu0 %v4739
        %4869 = vmatprep.mubr.bf16.mxu0 %v4496
        %4870 = vmatmul.mubr.bf16.gmra.mrb[0].mxu0 %v4495
        %v4871 = vpop.f32.mrb[0].mxu0
        %v4872 = vadd.f32 %v4807, %v4871
        %v4873 = vpop.f32.mrb[0].mxu0
        %v4874 = vpop.f32.mrb[0].mxu0
        %v4875 = vadd.f32 %v4810, %v4874
        %v4876 = vpop.f32.mrb[0].mxu0
        %4877 = vmatprep.mubr.bf16.mxu0 %v4500
        %4878 = vmatmul.mubr.bf16.gmra.mrb[0].mxu0 %v4499
        %v4879 = vpop.f32.mrb[0].mxu0
        %v4880 = vadd.f32 %v4815, %v4879
        %v4881 = vpop.f32.mrb[0].mxu0
        %v4882 = vpop.f32.mrb[0].mxu0
        %v4883 = vadd.f32 %v4818, %v4882
        %v4884 = vpop.f32.mrb[0].mxu0
        %4885 = vmatprep.mubr.bf16.mxu0 %v4504
        %4886 = vmatmul.mubr.bf16.gmra.mrb[0].mxu0 %v4503
        %v4887 = vpop.f32.mrb[0].mxu0
        %v4888 = vadd.f32 %v4823, %v4887
        %v4889 = vpop.f32.mrb[0].mxu0
        %v4890 = vpop.f32.mrb[0].mxu0
        %v4891 = vadd.f32 %v4826, %v4890
        %v4892 = vpop.f32.mrb[0].mxu0
        %4893 = vmatprep.mubr.bf16.mxu0 %v4508
        %4894 = vmatmul.mubr.bf16.gmra.mrb[0].mxu0 %v4507
        %v4895 = vpop.f32.mrb[0].mxu0
        %v4896 = vadd.f32 %v4831, %v4895
        %v4897 = vpop.f32.mrb[0].mxu0
        %v4898 = vpop.f32.mrb[0].mxu0
        %v4899 = vadd.f32 %v4834, %v4898
        %v4900 = vpop.f32.mrb[0].mxu0
        %4901 = vdwg.mxu0
        %v4902 = vadd.f32 %v4872, %v2248
        %v4903 = vadd.f32 %v4875, %v2249
        %v4904 = vadd.f32 %v4880, %v2250
        %v4905 = vadd.f32 %v4883, %v2251
        %v4906 = vadd.f32 %v4888, %v2252
        %v4907 = vadd.f32 %v4891, %v2253
        %v4908 = vadd.f32 %v4896, %v2254
        %v4909 = vadd.f32 %v4899, %v2255
        %v4910 = vpack.c.bf16 %v4903, %v4902
        %v4911 = vpack.c.bf16 %v4905, %v4904
        %v4912 = vpack.c.bf16 %v4907, %v4906
        %v4913 = vpack.c.bf16 %v4909, %v4908
        %v4914 = vld [vmem:[%s17] sm:$0xf]
        %v4915 = vld [vmem:[%s17 + $0x4] sm:$0xf]
        %v4916 = vld [vmem:[%s17 + $0x8] sm:$0xf]
        %v4917 = vld [vmem:[%s17 + $0xc] sm:$0xf]
        %v4918 = vld [vmem:[%s17 + $0x10] sm:$0xf]
        %v4919 = vld [vmem:[%s17 + $0x14] sm:$0xf]
        %v4920 = vld [vmem:[%s17 + $0x18] sm:$0xf]
        %v4921 = vld [vmem:[%s17 + $0x1c] sm:$0xf]
        %v4922 = vld [vmem:[%s18] sm:$0x1]
        %v4924 = vlaneseq
        %v4925 = vshrl.u32 %v4924, 7
        %v4926 = vsub.s32 0, %v4925
        %v4927 = vrot.slane %v4922, %v4926
        %v4937 = vunpack.c.l.b16 %v4914
        %v4938 = vunpack.c.l.b16 %v4915
        %v4939 = vunpack.c.l.b16 %v4916
        %v4940 = vunpack.c.l.b16 %v4917
        %v4941 = vunpack.c.l.b16 %v4918
        %v4942 = vunpack.c.l.b16 %v4919
        %v4943 = vunpack.c.l.b16 %v4920
        %v4944 = vunpack.c.l.b16 %v4921
        %v4945 = vpack.c.b16 %v4938, %v4937
        %v4946 = vpack.c.b16 %v4940, %v4939
        %v4947 = vpack.c.b16 %v4942, %v4941
        %v4948 = vpack.c.b16 %v4944, %v4943
        %v4954 = vsel %vm889, %v4910, 0
        %v4957 = vsel %vm889, %v4911, 0
        %v4960 = vsel %vm889, %v4912, 0
        %v4963 = vsel %vm889, %v4913, 0
        %4965 = vmatprep.subr.bf16.mxu0 0
        %4966 = vmatpush1.bf16.msra.mxu0 %v4945
        %4967 = vmatprep.subr.bf16.mxu0 0
        %4968 = vmatpush1.bf16.msra.mxu0 %v4946
        %4969 = vmatprep.subr.bf16.mxu0 0
        %4970 = vmatpush1.bf16.msra.mxu0 %v4947
        %4971 = vmatprep.subr.bf16.mxu0 0
        %4972 = vmatpush1.bf16.msra.mxu0 %v4948
        %4973 = vmatprep.subr.bf16.mxu0 0
        %4974 = vmatpush1.bf16.msra.mxu0 0
        %4975 = vmatprep.subr.bf16.mxu0 0
        %4976 = vmatpush1.bf16.msra.mxu0 0
        %4977 = vmatprep.subr.bf16.mxu0 0
        %4978 = vmatpush1.bf16.msra.mxu0 0
        %4979 = vmatprep.subr.bf16.mxu0 0
        %4980 = vmatpush1.bf16.msra.mxu0 0
        %4981 = vmatprep.subr.bf16.mxu0 0
        %4982 = vmatpush1.bf16.msra.mxu0 0
        %4983 = vmatprep.subr.bf16.mxu0 0
        %4984 = vmatpush1.bf16.msra.mxu0 0
        %4985 = vmatprep.subr.bf16.mxu0 0
        %4986 = vmatpush1.bf16.msra.mxu0 0
        %4987 = vmatprep.subr.bf16.mxu0 0
        %4988 = vmatpush1.bf16.msra.mxu0 0
        %4989 = vmatprep.subr.bf16.mxu0 0
        %4990 = vmatpush1.bf16.msra.mxu0 0
        %4991 = vmatprep.subr.bf16.mxu0 0
        %4992 = vmatpush1.bf16.msra.mxu0 0
        %4993 = vmatprep.subr.bf16.mxu0 0
        %4994 = vmatpush1.bf16.msra.mxu0 0
        %4995 = vmatprep.subr.bf16.mxu0 0
        %4996 = vmatpush1.bf16.msra.mxu0 0
        %4997 = vmatprep.mubr.bf16.mxu0 0
        %4998 = vmatmul.mubr.bf16.gmra.mrb[0].mxu0 %v4954
        %v4999 = vpop.f32.mrb[0].mxu0
        %v5000 = vadd.f32 %v4927, %v4999
        %v5001 = vpop.f32.mrb[0].mxu0
        %v5002 = vpop.f32.mrb[0].mxu0
        %v5003 = vadd.f32 %v4927, %v5002
        %v5004 = vpop.f32.mrb[0].mxu0
        %5005 = vmatprep.mubr.bf16.mxu0 0
        %5006 = vmatmul.mubr.bf16.gmra.mrb[0].mxu0 %v4957
        %v5007 = vpop.f32.mrb[0].mxu0
        %v5008 = vadd.f32 %v4927, %v5007
        %v5009 = vpop.f32.mrb[0].mxu0
        %v5010 = vpop.f32.mrb[0].mxu0
        %v5011 = vadd.f32 %v4927, %v5010
        %v5012 = vpop.f32.mrb[0].mxu0
        %5013 = vmatprep.mubr.bf16.mxu0 0
        %5014 = vmatmul.mubr.bf16.gmra.mrb[0].mxu0 %v4960
        %v5015 = vpop.f32.mrb[0].mxu0
        %v5016 = vadd.f32 %v4927, %v5015
        %v5017 = vpop.f32.mrb[0].mxu0
        %v5018 = vpop.f32.mrb[0].mxu0
        %v5019 = vadd.f32 %v4927, %v5018
        %v5020 = vpop.f32.mrb[0].mxu0
        %5021 = vmatprep.mubr.bf16.mxu0 0
        %5022 = vmatmul.mubr.bf16.gmra.mrb[0].mxu0 %v4963
        %v5023 = vpop.f32.mrb[0].mxu0
        %v5024 = vadd.f32 %v4927, %v5023
        %v5025 = vpop.f32.mrb[0].mxu0
        %v5026 = vpop.f32.mrb[0].mxu0
        %v5027 = vadd.f32 %v4927, %v5026
        %v5028 = vpop.f32.mrb[0].mxu0
        %5029 = vdwg.mxu0
        %5030 = vst.msk [vmem:[#allocation6 + $0x30] sm:$0xff] %vm713, %v5000
        %5031 = vst.msk [vmem:[#allocation6 + $0x38] sm:$0xff] %vm713, %v5003
        %5032 = vst.msk [vmem:[#allocation6 + $0x40] sm:$0xff] %vm713, %v5008
        %5033 = vst.msk [vmem:[#allocation6 + $0x48] sm:$0xff] %vm713, %v5011
        %5034 = vst.msk [vmem:[#allocation6 + $0x50] sm:$0xff] %vm713, %v5016
        %5035 = vst.msk [vmem:[#allocation6 + $0x58] sm:$0xff] %vm713, %v5019
        %5036 = vst.msk [vmem:[#allocation6 + $0x60] sm:$0xff] %vm713, %v5024
        %5037 = vst.msk [vmem:[#allocation6 + $0x68] sm:$0xff] %vm713, %v5027
        %v5038 = vld [vmem:[#allocation6 + $0xc] sm:$0xff]
        %v5039 = vld [vmem:[#allocation6 + $0x14] sm:$0xff]
        %v5040 = vld [vmem:[#allocation6 + $0x1c] sm:$0xff]
        %v5041 = vld [vmem:[#allocation6 + $0x24] sm:$0xff]
        %v5042 = vld [vmem:[#allocation6 + $0x2c] sm:$0xff]
        %v5043 = vld [vmem:[#allocation6 + $0x34] sm:$0xff]
        %v5044 = vld [vmem:[#allocation6 + $0x3c] sm:$0xff]
        %v5045 = vld [vmem:[#allocation6 + $0x44] sm:$0xff]
        %v5046 = vsel %vm992, %v5038, 0.0
        %v5047 = vsel %vm993, %v5039, 0.0
        %v5048 = vsel %vm994, %v5040, 0.0
        %v5049 = vsel %vm995, %v5041, 0.0
        %v5050 = vsel %vm996, %v5042, 0.0
        %v5051 = vsel %vm997, %v5043, 0.0
        %v5052 = vsel %vm998, %v5044, 0.0
        %v5053 = vsel %vm999, %v5045, 0.0
        %v5054 = vpack.c.bf16 %v5047, %v5046
        %v5055 = vpack.c.bf16 %v5049, %v5048
        %v5056 = vpack.c.bf16 %v5051, %v5050
        %v5057 = vpack.c.bf16 %v5053, %v5052
        %5058 = vst.msk [vmem:[#allocation7] sm:$0xff] %vm713, %v5054
        %5059 = vst.msk [vmem:[#allocation7 + $0x48] sm:$0xff] %vm713, %v5055
        %5060 = vst.msk [vmem:[#allocation7 + $0x90] sm:$0xff] %vm713, %v5056
        %5061 = vst.msk [vmem:[#allocation7 + $0xd8] sm:$0xff] %vm713, %v5057
        %v5062 = vld [vmem:[#allocation6 + $0x10] sm:$0xff]
        %v5063 = vld [vmem:[#allocation6 + $0x18] sm:$0xff]
        %v5064 = vld [vmem:[#allocation6 + $0x20] sm:$0xff]
        %v5065 = vld [vmem:[#allocation6 + $0x28] sm:$0xff]
        %v5066 = vld [vmem:[#allocation6 + $0x30] sm:$0xff]
        %v5067 = vld [vmem:[#allocation6 + $0x38] sm:$0xff]
        %v5068 = vld [vmem:[#allocation6 + $0x40] sm:$0xff]
        %v5069 = vld [vmem:[#allocation6 + $0x48] sm:$0xff]
        %v5070 = vpack.c.bf16 %v5063, %v5062
        %v5071 = vpack.c.bf16 %v5065, %v5064
        %v5072 = vpack.c.bf16 %v5067, %v5066
        %v5073 = vpack.c.bf16 %v5069, %v5068
        %5074 = vst.msk [vmem:[#allocation7 + $0x8] sm:$0xff] %vm713, %v5070
        %5075 = vst.msk [vmem:[#allocation7 + $0x50] sm:$0xff] %vm713, %v5071
        %5076 = vst.msk [vmem:[#allocation7 + $0x98] sm:$0xff] %vm713, %v5072
        %5077 = vst.msk [vmem:[#allocation7 + $0xe0] sm:$0xff] %vm713, %v5073
        %v5078 = vld [vmem:[#allocation6 + $0x14] sm:$0xff]
        %v5079 = vld [vmem:[#allocation6 + $0x1c] sm:$0xff]
        %v5080 = vld [vmem:[#allocation6 + $0x24] sm:$0xff]
        %v5081 = vld [vmem:[#allocation6 + $0x2c] sm:$0xff]
        %v5082 = vld [vmem:[#allocation6 + $0x34] sm:$0xff]
        %v5083 = vld [vmem:[#allocation6 + $0x3c] sm:$0xff]
        %v5084 = vld [vmem:[#allocation6 + $0x44] sm:$0xff]
        %v5085 = vld [vmem:[#allocation6 + $0x4c] sm:$0xff]
        %v5086 = vsel %vm1000, %v5078, 0.0
        %v5087 = vsel %vm1001, %v5079, 0.0
        %v5088 = vsel %vm1002, %v5080, 0.0
        %v5089 = vsel %vm1003, %v5081, 0.0
        %v5090 = vsel %vm1004, %v5082, 0.0
        %v5091 = vsel %vm1005, %v5083, 0.0
        %v5092 = vsel %vm1006, %v5084, 0.0
        %v5093 = vsel %vm1007, %v5085, 0.0
        %v5094 = vpack.c.bf16 %v5087, %v5086
        %v5095 = vpack.c.bf16 %v5089, %v5088
        %v5096 = vpack.c.bf16 %v5091, %v5090
        %v5097 = vpack.c.bf16 %v5093, %v5092
        %5098 = vst.msk [vmem:[#allocation7 + $0x10] sm:$0xff] %vm713, %v5094
        %5099 = vst.msk [vmem:[#allocation7 + $0x58] sm:$0xff] %vm713, %v5095
        %5100 = vst.msk [vmem:[#allocation7 + $0xa0] sm:$0xff] %vm713, %v5096
        %5101 = vst.msk [vmem:[#allocation7 + $0xe8] sm:$0xff] %vm713, %v5097
        %v5102 = vld [vmem:[#allocation6 + $0x2c] sm:$0xff]
        %v5103 = vld [vmem:[#allocation6 + $0x34] sm:$0xff]
        %v5104 = vld [vmem:[#allocation6 + $0x3c] sm:$0xff]
        %v5105 = vld [vmem:[#allocation6 + $0x44] sm:$0xff]
        %v5106 = vld [vmem:[#allocation6 + $0x4c] sm:$0xff]
        %v5107 = vld [vmem:[#allocation6 + $0x54] sm:$0xff]
        %v5108 = vld [vmem:[#allocation6 + $0x5c] sm:$0xff]
        %v5109 = vld [vmem:[#allocation6 + $0x64] sm:$0xff]
        %v5110 = vsel %vm992, %v5102, 0.0
        %v5111 = vsel %vm993, %v5103, 0.0
        %v5112 = vsel %vm994, %v5104, 0.0
        %v5113 = vsel %vm995, %v5105, 0.0
        %v5114 = vsel %vm996, %v5106, 0.0
        %v5115 = vsel %vm997, %v5107, 0.0
        %v5116 = vsel %vm998, %v5108, 0.0
        %v5117 = vsel %vm999, %v5109, 0.0
        %v5118 = vpack.c.bf16 %v5111, %v5110
        %v5119 = vpack.c.bf16 %v5113, %v5112
        %v5120 = vpack.c.bf16 %v5115, %v5114
        %v5121 = vpack.c.bf16 %v5117, %v5116
        %5122 = vst.msk [vmem:[#allocation7 + $0x18] sm:$0xff] %vm713, %v5118
        %5123 = vst.msk [vmem:[#allocation7 + $0x60] sm:$0xff] %vm713, %v5119
        %5124 = vst.msk [vmem:[#allocation7 + $0xa8] sm:$0xff] %vm713, %v5120
        %5125 = vst.msk [vmem:[#allocation7 + $0xf0] sm:$0xff] %vm713, %v5121
        %v5126 = vld [vmem:[#allocation6 + $0x30] sm:$0xff]
        %v5127 = vld [vmem:[#allocation6 + $0x38] sm:$0xff]
        %v5128 = vld [vmem:[#allocation6 + $0x40] sm:$0xff]
        %v5129 = vld [vmem:[#allocation6 + $0x48] sm:$0xff]
        %v5130 = vld [vmem:[#allocation6 + $0x50] sm:$0xff]
        %v5131 = vld [vmem:[#allocation6 + $0x58] sm:$0xff]
        %v5132 = vld [vmem:[#allocation6 + $0x60] sm:$0xff]
        %v5133 = vld [vmem:[#allocation6 + $0x68] sm:$0xff]
        %v5134 = vpack.c.bf16 %v5127, %v5126
        %v5135 = vpack.c.bf16 %v5129, %v5128
        %v5136 = vpack.c.bf16 %v5131, %v5130
        %v5137 = vpack.c.bf16 %v5133, %v5132
        %5138 = vst.msk [vmem:[#allocation7 + $0x20] sm:$0xff] %vm713, %v5134
        %5139 = vst.msk [vmem:[#allocation7 + $0x68] sm:$0xff] %vm713, %v5135
        %5140 = vst.msk [vmem:[#allocation7 + $0xb0] sm:$0xff] %vm713, %v5136
        %5141 = vst.msk [vmem:[#allocation7 + $0xf8] sm:$0xff] %vm713, %v5137
        %v5142 = vld [vmem:[#allocation6 + $0x34] sm:$0xff]
        %v5143 = vld [vmem:[#allocation6 + $0x3c] sm:$0xff]
        %v5144 = vld [vmem:[#allocation6 + $0x44] sm:$0xff]
        %v5145 = vld [vmem:[#allocation6 + $0x4c] sm:$0xff]
        %v5146 = vld [vmem:[#allocation6 + $0x54] sm:$0xff]
        %v5147 = vld [vmem:[#allocation6 + $0x5c] sm:$0xff]
        %v5148 = vld [vmem:[#allocation6 + $0x64] sm:$0xff]
        %v5149 = vld [vmem:[#allocation6 + $0x6c] sm:$0xff]
        %v5150 = vsel %vm1000, %v5142, 0.0
        %v5151 = vsel %vm1001, %v5143, 0.0
        %v5152 = vsel %vm1002, %v5144, 0.0
        %v5153 = vsel %vm1003, %v5145, 0.0
        %v5154 = vsel %vm1004, %v5146, 0.0
        %v5155 = vsel %vm1005, %v5147, 0.0
        %v5156 = vsel %vm1006, %v5148, 0.0
        %v5157 = vsel %vm1007, %v5149, 0.0
        %v5158 = vpack.c.bf16 %v5151, %v5150
        %v5159 = vpack.c.bf16 %v5153, %v5152
        %v5160 = vpack.c.bf16 %v5155, %v5154
        %v5161 = vpack.c.bf16 %v5157, %v5156
        %5162 = vst.msk [vmem:[#allocation7 + $0x28] sm:$0xff] %vm713, %v5158
        %5163 = vst.msk [vmem:[#allocation7 + $0x70] sm:$0xff] %vm713, %v5159
        %5164 = vst.msk [vmem:[#allocation7 + $0xb8] sm:$0xff] %vm713, %v5160
        %5165 = vst.msk [vmem:[#allocation7 + $0x100] sm:$0xff] %vm713, %v5161
        %v5166 = vld [vmem:[#allocation6 + $0x4c] sm:$0xff]
        %v5167 = vld [vmem:[#allocation6 + $0x54] sm:$0xff]
        %v5168 = vld [vmem:[#allocation6 + $0x5c] sm:$0xff]
        %v5169 = vld [vmem:[#allocation6 + $0x64] sm:$0xff]
        %v5170 = vld [vmem:[#allocation6 + $0x6c] sm:$0xff]
        %v5171 = vld [vmem:[#allocation6 + $0x74] sm:$0xff]
        %v5172 = vld [vmem:[#allocation6 + $0x7c] sm:$0xff]
        %v5173 = vld [vmem:[#allocation6 + $0x84] sm:$0xff]
        %v5174 = vsel %vm992, %v5166, 0.0
        %v5175 = vsel %vm993, %v5167, 0.0
        %v5176 = vsel %vm994, %v5168, 0.0
        %v5177 = vsel %vm995, %v5169, 0.0
        %v5178 = vsel %vm996, %v5170, 0.0
        %v5179 = vsel %vm997, %v5171, 0.0
        %v5180 = vsel %vm998, %v5172, 0.0
        %v5181 = vsel %vm999, %v5173, 0.0
        %v5182 = vpack.c.bf16 %v5175, %v5174
        %v5183 = vpack.c.bf16 %v5177, %v5176
        %v5184 = vpack.c.bf16 %v5179, %v5178
        %v5185 = vpack.c.bf16 %v5181, %v5180
        %5186 = vst.msk [vmem:[#allocation7 + $0x30] sm:$0xff] %vm713, %v5182
        %5187 = vst.msk [vmem:[#allocation7 + $0x78] sm:$0xff] %vm713, %v5183
        %5188 = vst.msk [vmem:[#allocation7 + $0xc0] sm:$0xff] %vm713, %v5184
        %5189 = vst.msk [vmem:[#allocation7 + $0x108] sm:$0xff] %vm713, %v5185
        %v5190 = vld [vmem:[#allocation6 + $0x50] sm:$0xff]
        %v5191 = vld [vmem:[#allocation6 + $0x58] sm:$0xff]
        %v5192 = vld [vmem:[#allocation6 + $0x60] sm:$0xff]
        %v5193 = vld [vmem:[#allocation6 + $0x68] sm:$0xff]
        %v5194 = vld [vmem:[#allocation6 + $0x70] sm:$0xff]
        %v5195 = vld [vmem:[#allocation6 + $0x78] sm:$0xff]
        %v5196 = vld [vmem:[#allocation6 + $0x80] sm:$0xff]
        %v5197 = vld [vmem:[#allocation6 + $0x88] sm:$0xff]
        %v5198 = vpack.c.bf16 %v5191, %v5190
        %v5199 = vpack.c.bf16 %v5193, %v5192
        %v5200 = vpack.c.bf16 %v5195, %v5194
        %v5201 = vpack.c.bf16 %v5197, %v5196
        %5202 = vst.msk [vmem:[#allocation7 + $0x38] sm:$0xff] %vm713, %v5198
        %5203 = vst.msk [vmem:[#allocation7 + $0x80] sm:$0xff] %vm713, %v5199
        %5204 = vst.msk [vmem:[#allocation7 + $0xc8] sm:$0xff] %vm713, %v5200
        %5205 = vst.msk [vmem:[#allocation7 + $0x110] sm:$0xff] %vm713, %v5201
        %v5206 = vld [vmem:[#allocation6 + $0x54] sm:$0xff]
        %v5207 = vld [vmem:[#allocation6 + $0x5c] sm:$0xff]
        %v5208 = vld [vmem:[#allocation6 + $0x64] sm:$0xff]
        %v5209 = vld [vmem:[#allocation6 + $0x6c] sm:$0xff]
        %v5210 = vld [vmem:[#allocation6 + $0x74] sm:$0xff]
        %v5211 = vld [vmem:[#allocation6 + $0x7c] sm:$0xff]
        %v5212 = vld [vmem:[#allocation6 + $0x84] sm:$0xff]
        %v5213 = vld [vmem:[#allocation6 + $0x8c] sm:$0xff]
        %v5214 = vsel %vm1000, %v5206, 0.0
        %v5215 = vsel %vm1001, %v5207, 0.0
        %v5216 = vsel %vm1002, %v5208, 0.0
        %v5217 = vsel %vm1003, %v5209, 0.0
        %v5218 = vsel %vm1004, %v5210, 0.0
        %v5219 = vsel %vm1005, %v5211, 0.0
        %v5220 = vsel %vm1006, %v5212, 0.0
        %v5221 = vsel %vm1007, %v5213, 0.0
        %v5222 = vpack.c.bf16 %v5215, %v5214
        %v5223 = vpack.c.bf16 %v5217, %v5216
        %v5224 = vpack.c.bf16 %v5219, %v5218
        %v5225 = vpack.c.bf16 %v5221, %v5220
        %5226 = vst.msk [vmem:[#allocation7 + $0x40] sm:$0xff] %vm713, %v5222
        %5227 = vst.msk [vmem:[#allocation7 + $0x88] sm:$0xff] %vm713, %v5223
        %5228 = vst.msk [vmem:[#allocation7 + $0xd0] sm:$0xff] %vm713, %v5224
        %5229 = vst.msk [vmem:[#allocation7 + $0x118] sm:$0xff] %vm713, %v5225
        %v5230 = vld [vmem:[#allocation7] sm:$0xff]
        %v5231 = vld [vmem:[#allocation7 + $0x8] sm:$0xff]
        %v5232 = vld [vmem:[#allocation7 + $0x10] sm:$0xff]
        %v5233 = vld [vmem:[#allocation7 + $0x18] sm:$0xff]
        %v5234 = vld [vmem:[#allocation7 + $0x20] sm:$0xff]
        %v5235 = vld [vmem:[#allocation7 + $0x28] sm:$0xff]
        %v5236 = vld [vmem:[#allocation7 + $0x30] sm:$0xff]
        %v5237 = vld [vmem:[#allocation7 + $0x38] sm:$0xff]
        %v5238 = vld [vmem:[#allocation7 + $0x40] sm:$0xff]
        %v5239 = vld [vmem:[#allocation7 + $0x48] sm:$0xff]
        %v5240 = vld [vmem:[#allocation7 + $0x50] sm:$0xff]
        %v5241 = vld [vmem:[#allocation7 + $0x58] sm:$0xff]
        %v5242 = vld [vmem:[#allocation7 + $0x60] sm:$0xff]
        %v5243 = vld [vmem:[#allocation7 + $0x68] sm:$0xff]
        %v5244 = vld [vmem:[#allocation7 + $0x70] sm:$0xff]
        %v5245 = vld [vmem:[#allocation7 + $0x78] sm:$0xff]
        %v5246 = vld [vmem:[#allocation7 + $0x80] sm:$0xff]
        %v5247 = vld [vmem:[#allocation7 + $0x88] sm:$0xff]
        %v5248 = vld [vmem:[#allocation7 + $0x90] sm:$0xff]
        %v5249 = vld [vmem:[#allocation7 + $0x98] sm:$0xff]
        %v5250 = vld [vmem:[#allocation7 + $0xa0] sm:$0xff]
        %v5251 = vld [vmem:[#allocation7 + $0xa8] sm:$0xff]
        %v5252 = vld [vmem:[#allocation7 + $0xb0] sm:$0xff]
        %v5253 = vld [vmem:[#allocation7 + $0xb8] sm:$0xff]
        %v5254 = vld [vmem:[#allocation7 + $0xc0] sm:$0xff]
        %v5255 = vld [vmem:[#allocation7 + $0xc8] sm:$0xff]
        %v5256 = vld [vmem:[#allocation7 + $0xd0] sm:$0xff]
        %v5257 = vld [vmem:[#allocation7 + $0xd8] sm:$0xff]
        %v5258 = vld [vmem:[#allocation7 + $0xe0] sm:$0xff]
        %v5259 = vld [vmem:[#allocation7 + $0xe8] sm:$0xff]
        %v5260 = vld [vmem:[#allocation7 + $0xf0] sm:$0xff]
        %v5261 = vld [vmem:[#allocation7 + $0xf8] sm:$0xff]
        %v5262 = vld [vmem:[#allocation7 + $0x100] sm:$0xff]
        %v5263 = vld [vmem:[#allocation7 + $0x108] sm:$0xff]
        %v5264 = vld [vmem:[#allocation7 + $0x110] sm:$0xff]
        %v5265 = vld [vmem:[#allocation7 + $0x118] sm:$0xff]
        %v5266 = vld [vmem:[%s19] sm:$0xf]
        %v5267 = vld [vmem:[%s19 + $0x4] sm:$0xf]
        %v5268 = vld [vmem:[%s19 + $0x8] sm:$0xf]
        %v5269 = vld [vmem:[%s19 + $0xc] sm:$0xf]
        %v5270 = vld [vmem:[%s19 + $0x10] sm:$0xf]
        %v5271 = vld [vmem:[%s19 + $0x14] sm:$0xf]
        %v5272 = vld [vmem:[%s19 + $0x18] sm:$0xf]
        %v5273 = vld [vmem:[%s19 + $0x1c] sm:$0xf]
        %v5274 = vld [vmem:[%s19 + $0x20] sm:$0xf]
        %v5275 = vld [vmem:[%s19 + $0x24] sm:$0xf]
        %v5276 = vld [vmem:[%s19 + $0x28] sm:$0xf]
        %v5277 = vld [vmem:[%s19 + $0x2c] sm:$0xf]
        %v5278 = vld [vmem:[%s19 + $0x30] sm:$0xf]
        %v5279 = vld [vmem:[%s19 + $0x34] sm:$0xf]
        %v5280 = vld [vmem:[%s19 + $0x38] sm:$0xf]
        %v5281 = vld [vmem:[%s19 + $0x3c] sm:$0xf]
        %v5282 = vld [vmem:[%s19 + $0x40] sm:$0xf]
        %v5283 = vld [vmem:[%s19 + $0x44] sm:$0xf]
        %v5284 = vld [vmem:[%s19 + $0x48] sm:$0xf]
        %v5285 = vld [vmem:[%s19 + $0x4c] sm:$0xf]
        %v5286 = vld [vmem:[%s19 + $0x50] sm:$0xf]
        %v5287 = vld [vmem:[%s19 + $0x54] sm:$0xf]
        %v5288 = vld [vmem:[%s19 + $0x58] sm:$0xf]
        %v5289 = vld [vmem:[%s19 + $0x5c] sm:$0xf]
        %v5290 = vld [vmem:[%s19 + $0x60] sm:$0xf]
        %v5291 = vld [vmem:[%s19 + $0x64] sm:$0xf]
        %v5292 = vld [vmem:[%s19 + $0x68] sm:$0xf]
        %v5293 = vld [vmem:[%s19 + $0x6c] sm:$0xf]
        %v5294 = vld [vmem:[%s19 + $0x70] sm:$0xf]
        %v5295 = vld [vmem:[%s19 + $0x74] sm:$0xf]
        %v5296 = vld [vmem:[%s19 + $0x78] sm:$0xf]
        %v5297 = vld [vmem:[%s19 + $0x7c] sm:$0xf]
        %v5298 = vld [vmem:[%s19 + $0x80] sm:$0xf]
        %v5299 = vld [vmem:[%s19 + $0x84] sm:$0xf]
        %v5300 = vld [vmem:[%s19 + $0x88] sm:$0xf]
        %v5301 = vld [vmem:[%s19 + $0x8c] sm:$0xf]
        %v5302 = vld [vmem:[%s19 + $0x90] sm:$0xf]
        %v5303 = vld [vmem:[%s19 + $0x94] sm:$0xf]
        %v5304 = vld [vmem:[%s19 + $0x98] sm:$0xf]
        %v5305 = vld [vmem:[%s19 + $0x9c] sm:$0xf]
        %v5306 = vld [vmem:[%s19 + $0xa0] sm:$0xf]
        %v5307 = vld [vmem:[%s19 + $0xa4] sm:$0xf]
        %v5308 = vld [vmem:[%s19 + $0xa8] sm:$0xf]
        %v5309 = vld [vmem:[%s19 + $0xac] sm:$0xf]
        %v5310 = vld [vmem:[%s19 + $0xb0] sm:$0xf]
        %v5311 = vld [vmem:[%s19 + $0xb4] sm:$0xf]
        %v5312 = vld [vmem:[%s19 + $0xb8] sm:$0xf]
        %v5313 = vld [vmem:[%s19 + $0xbc] sm:$0xf]
        %v5314 = vld [vmem:[%s19 + $0xc0] sm:$0xf]
        %v5315 = vld [vmem:[%s19 + $0xc4] sm:$0xf]
        %v5316 = vld [vmem:[%s19 + $0xc8] sm:$0xf]
        %v5317 = vld [vmem:[%s19 + $0xcc] sm:$0xf]
        %v5318 = vld [vmem:[%s19 + $0xd0] sm:$0xf]
        %v5319 = vld [vmem:[%s19 + $0xd4] sm:$0xf]
        %v5320 = vld [vmem:[%s19 + $0xd8] sm:$0xf]
        %v5321 = vld [vmem:[%s19 + $0xdc] sm:$0xf]
        %v5322 = vld [vmem:[%s19 + $0xe0] sm:$0xf]
        %v5323 = vld [vmem:[%s19 + $0xe4] sm:$0xf]
        %v5324 = vld [vmem:[%s19 + $0xe8] sm:$0xf]
        %v5325 = vld [vmem:[%s19 + $0xec] sm:$0xf]
        %v5326 = vld [vmem:[%s19 + $0xf0] sm:$0xf]
        %v5327 = vld [vmem:[%s19 + $0xf4] sm:$0xf]
        %v5328 = vld [vmem:[%s19 + $0xf8] sm:$0xf]
        %v5329 = vld [vmem:[%s19 + $0xfc] sm:$0xf]
        %v5330 = vld [vmem:[%s19 + $0x100] sm:$0xf]
        %v5331 = vld [vmem:[%s19 + $0x104] sm:$0xf]
        %v5332 = vld [vmem:[%s19 + $0x108] sm:$0xf]
        %v5333 = vld [vmem:[%s19 + $0x10c] sm:$0xf]
        %v5334 = vld [vmem:[%s19 + $0x110] sm:$0xf]
        %v5335 = vld [vmem:[%s19 + $0x114] sm:$0xf]
        %v5336 = vld [vmem:[%s19 + $0x118] sm:$0xf]
        %v5337 = vld [vmem:[%s19 + $0x11c] sm:$0xf]
        %v5338 = vld [vmem:[%s19 + $0x120] sm:$0xf]
        %v5339 = vld [vmem:[%s19 + $0x124] sm:$0xf]
        %v5340 = vld [vmem:[%s19 + $0x128] sm:$0xf]
        %v5341 = vld [vmem:[%s19 + $0x12c] sm:$0xf]
        %v5342 = vld [vmem:[%s19 + $0x130] sm:$0xf]
        %v5343 = vld [vmem:[%s19 + $0x134] sm:$0xf]
        %v5344 = vld [vmem:[%s19 + $0x138] sm:$0xf]
        %v5345 = vld [vmem:[%s19 + $0x13c] sm:$0xf]
        %v5346 = vld [vmem:[%s19 + $0x140] sm:$0xf]
        %v5347 = vld [vmem:[%s19 + $0x144] sm:$0xf]
        %v5348 = vld [vmem:[%s19 + $0x148] sm:$0xf]
        %v5349 = vld [vmem:[%s19 + $0x14c] sm:$0xf]
        %v5350 = vld [vmem:[%s19 + $0x150] sm:$0xf]
        %v5351 = vld [vmem:[%s19 + $0x154] sm:$0xf]
        %v5352 = vld [vmem:[%s19 + $0x158] sm:$0xf]
        %v5353 = vld [vmem:[%s19 + $0x15c] sm:$0xf]
        %v5354 = vld [vmem:[%s19 + $0x160] sm:$0xf]
        %v5355 = vld [vmem:[%s19 + $0x164] sm:$0xf]
        %v5356 = vld [vmem:[%s19 + $0x168] sm:$0xf]
        %v5357 = vld [vmem:[%s19 + $0x16c] sm:$0xf]
        %v5358 = vld [vmem:[%s19 + $0x170] sm:$0xf]
        %v5359 = vld [vmem:[%s19 + $0x174] sm:$0xf]
        %v5360 = vld [vmem:[%s19 + $0x178] sm:$0xf]
        %v5361 = vld [vmem:[%s19 + $0x17c] sm:$0xf]
        %v5362 = vld [vmem:[%s19 + $0x180] sm:$0xf]
        %v5363 = vld [vmem:[%s19 + $0x184] sm:$0xf]
        %v5364 = vld [vmem:[%s19 + $0x188] sm:$0xf]
        %v5365 = vld [vmem:[%s19 + $0x18c] sm:$0xf]
        %v5366 = vld [vmem:[%s19 + $0x190] sm:$0xf]
        %v5367 = vld [vmem:[%s19 + $0x194] sm:$0xf]
        %v5368 = vld [vmem:[%s19 + $0x198] sm:$0xf]
        %v5369 = vld [vmem:[%s19 + $0x19c] sm:$0xf]
        %v5370 = vld [vmem:[%s19 + $0x1a0] sm:$0xf]
        %v5371 = vld [vmem:[%s19 + $0x1a4] sm:$0xf]
        %v5372 = vld [vmem:[%s19 + $0x1a8] sm:$0xf]
        %v5373 = vld [vmem:[%s19 + $0x1ac] sm:$0xf]
        %v5374 = vld [vmem:[%s19 + $0x1b0] sm:$0xf]
        %v5375 = vld [vmem:[%s19 + $0x1b4] sm:$0xf]
        %v5376 = vld [vmem:[%s19 + $0x1b8] sm:$0xf]
        %v5377 = vld [vmem:[%s19 + $0x1bc] sm:$0xf]
        %v5378 = vld [vmem:[%s19 + $0x1c0] sm:$0xf]
        %v5379 = vld [vmem:[%s19 + $0x1c4] sm:$0xf]
        %v5380 = vld [vmem:[%s19 + $0x1c8] sm:$0xf]
        %v5381 = vld [vmem:[%s19 + $0x1cc] sm:$0xf]
        %v5382 = vld [vmem:[%s19 + $0x1d0] sm:$0xf]
        %v5383 = vld [vmem:[%s19 + $0x1d4] sm:$0xf]
        %v5384 = vld [vmem:[%s19 + $0x1d8] sm:$0xf]
        %v5385 = vld [vmem:[%s19 + $0x1dc] sm:$0xf]
        %v5386 = vld [vmem:[%s19 + $0x1e0] sm:$0xf]
        %v5387 = vld [vmem:[%s19 + $0x1e4] sm:$0xf]
        %v5388 = vld [vmem:[%s19 + $0x1e8] sm:$0xf]
        %v5389 = vld [vmem:[%s19 + $0x1ec] sm:$0xf]
        %v5390 = vld [vmem:[%s19 + $0x1f0] sm:$0xf]
        %v5391 = vld [vmem:[%s19 + $0x1f4] sm:$0xf]
        %v5392 = vld [vmem:[%s19 + $0x1f8] sm:$0xf]
        %v5393 = vld [vmem:[%s19 + $0x1fc] sm:$0xf]
        %v5394 = vld [vmem:[%s19 + $0x200] sm:$0xf]
        %v5395 = vld [vmem:[%s19 + $0x204] sm:$0xf]
        %v5396 = vld [vmem:[%s19 + $0x208] sm:$0xf]
        %v5397 = vld [vmem:[%s19 + $0x20c] sm:$0xf]
        %v5398 = vld [vmem:[%s19 + $0x210] sm:$0xf]
        %v5399 = vld [vmem:[%s19 + $0x214] sm:$0xf]
        %v5400 = vld [vmem:[%s19 + $0x218] sm:$0xf]
        %v5401 = vld [vmem:[%s19 + $0x21c] sm:$0xf]
        %v5402 = vld [vmem:[%s19 + $0x220] sm:$0xf]
        %v5403 = vld [vmem:[%s19 + $0x224] sm:$0xf]
        %v5404 = vld [vmem:[%s19 + $0x228] sm:$0xf]
        %v5405 = vld [vmem:[%s19 + $0x22c] sm:$0xf]
        %v5406 = vld [vmem:[%s19 + $0x230] sm:$0xf]
        %v5407 = vld [vmem:[%s19 + $0x234] sm:$0xf]
        %v5408 = vld [vmem:[%s19 + $0x238] sm:$0xf]
        %v5409 = vld [vmem:[%s19 + $0x23c] sm:$0xf]
        %v5410 = vld [vmem:[%s20] sm:$0x1]
        %v5412 = vlaneseq
        %v5413 = vshrl.u32 %v5412, 7
        %v5414 = vsub.s32 0, %v5413
        %v5415 = vrot.slane %v5410, %v5414
        %v5561 = vunpack.c.l.b16 %v5266
        %v5562 = vunpack.c.l.b16 %v5267
        %v5563 = vunpack.c.l.b16 %v5268
        %v5564 = vunpack.c.l.b16 %v5269
        %v5565 = vunpack.c.l.b16 %v5270
        %v5566 = vunpack.c.l.b16 %v5271
        %v5567 = vunpack.c.l.b16 %v5272
        %v5568 = vunpack.c.l.b16 %v5273
        %v5569 = vunpack.c.l.b16 %v5274
        %v5570 = vunpack.c.l.b16 %v5275
        %v5571 = vunpack.c.l.b16 %v5276
        %v5572 = vunpack.c.l.b16 %v5277
        %v5573 = vunpack.c.l.b16 %v5278
        %v5574 = vunpack.c.l.b16 %v5279
        %v5575 = vunpack.c.l.b16 %v5280
        %v5576 = vunpack.c.l.b16 %v5281
        %v5577 = vunpack.c.l.b16 %v5282
        %v5578 = vunpack.c.l.b16 %v5283
        %v5579 = vunpack.c.l.b16 %v5284
        %v5580 = vunpack.c.l.b16 %v5285
        %v5581 = vunpack.c.l.b16 %v5286
        %v5582 = vunpack.c.l.b16 %v5287
        %v5583 = vunpack.c.l.b16 %v5288
        %v5584 = vunpack.c.l.b16 %v5289
        %v5585 = vunpack.c.l.b16 %v5290
        %v5586 = vunpack.c.l.b16 %v5291
        %v5587 = vunpack.c.l.b16 %v5292
        %v5588 = vunpack.c.l.b16 %v5293
        %v5589 = vunpack.c.l.b16 %v5294
        %v5590 = vunpack.c.l.b16 %v5295
        %v5591 = vunpack.c.l.b16 %v5296
        %v5592 = vunpack.c.l.b16 %v5297
        %v5593 = vunpack.c.l.b16 %v5298
        %v5594 = vunpack.c.l.b16 %v5299
        %v5595 = vunpack.c.l.b16 %v5300
        %v5596 = vunpack.c.l.b16 %v5301
        %v5597 = vunpack.c.l.b16 %v5302
        %v5598 = vunpack.c.l.b16 %v5303
        %v5599 = vunpack.c.l.b16 %v5304
        %v5600 = vunpack.c.l.b16 %v5305
        %v5601 = vunpack.c.l.b16 %v5306
        %v5602 = vunpack.c.l.b16 %v5307
        %v5603 = vunpack.c.l.b16 %v5308
        %v5604 = vunpack.c.l.b16 %v5309
        %v5605 = vunpack.c.l.b16 %v5310
        %v5606 = vunpack.c.l.b16 %v5311
        %v5607 = vunpack.c.l.b16 %v5312
        %v5608 = vunpack.c.l.b16 %v5313
        %v5609 = vunpack.c.l.b16 %v5314
        %v5610 = vunpack.c.l.b16 %v5315
        %v5611 = vunpack.c.l.b16 %v5316
        %v5612 = vunpack.c.l.b16 %v5317
        %v5613 = vunpack.c.l.b16 %v5318
        %v5614 = vunpack.c.l.b16 %v5319
        %v5615 = vunpack.c.l.b16 %v5320
        %v5616 = vunpack.c.l.b16 %v5321
        %v5617 = vunpack.c.l.b16 %v5322
        %v5618 = vunpack.c.l.b16 %v5323
        %v5619 = vunpack.c.l.b16 %v5324
        %v5620 = vunpack.c.l.b16 %v5325
        %v5621 = vunpack.c.l.b16 %v5326
        %v5622 = vunpack.c.l.b16 %v5327
        %v5623 = vunpack.c.l.b16 %v5328
        %v5624 = vunpack.c.l.b16 %v5329
        %v5625 = vunpack.c.l.b16 %v5330
        %v5626 = vunpack.c.l.b16 %v5331
        %v5627 = vunpack.c.l.b16 %v5332
        %v5628 = vunpack.c.l.b16 %v5333
        %v5629 = vunpack.c.l.b16 %v5334
        %v5630 = vunpack.c.l.b16 %v5335
        %v5631 = vunpack.c.l.b16 %v5336
        %v5632 = vunpack.c.l.b16 %v5337
        %v5633 = vunpack.c.l.b16 %v5338
        %v5634 = vunpack.c.l.b16 %v5339
        %v5635 = vunpack.c.l.b16 %v5340
        %v5636 = vunpack.c.l.b16 %v5341
        %v5637 = vunpack.c.l.b16 %v5342
        %v5638 = vunpack.c.l.b16 %v5343
        %v5639 = vunpack.c.l.b16 %v5344
        %v5640 = vunpack.c.l.b16 %v5345
        %v5641 = vunpack.c.l.b16 %v5346
        %v5642 = vunpack.c.l.b16 %v5347
        %v5643 = vunpack.c.l.b16 %v5348
        %v5644 = vunpack.c.l.b16 %v5349
        %v5645 = vunpack.c.l.b16 %v5350
        %v5646 = vunpack.c.l.b16 %v5351
        %v5647 = vunpack.c.l.b16 %v5352
        %v5648 = vunpack.c.l.b16 %v5353
        %v5649 = vunpack.c.l.b16 %v5354
        %v5650 = vunpack.c.l.b16 %v5355
        %v5651 = vunpack.c.l.b16 %v5356
        %v5652 = vunpack.c.l.b16 %v5357
        %v5653 = vunpack.c.l.b16 %v5358
        %v5654 = vunpack.c.l.b16 %v5359
        %v5655 = vunpack.c.l.b16 %v5360
        %v5656 = vunpack.c.l.b16 %v5361
        %v5657 = vunpack.c.l.b16 %v5362
        %v5658 = vunpack.c.l.b16 %v5363
        %v5659 = vunpack.c.l.b16 %v5364
        %v5660 = vunpack.c.l.b16 %v5365
        %v5661 = vunpack.c.l.b16 %v5366
        %v5662 = vunpack.c.l.b16 %v5367
        %v5663 = vunpack.c.l.b16 %v5368
        %v5664 = vunpack.c.l.b16 %v5369
        %v5665 = vunpack.c.l.b16 %v5370
        %v5666 = vunpack.c.l.b16 %v5371
        %v5667 = vunpack.c.l.b16 %v5372
        %v5668 = vunpack.c.l.b16 %v5373
        %v5669 = vunpack.c.l.b16 %v5374
        %v5670 = vunpack.c.l.b16 %v5375
        %v5671 = vunpack.c.l.b16 %v5376
        %v5672 = vunpack.c.l.b16 %v5377
        %v5673 = vunpack.c.l.b16 %v5378
        %v5674 = vunpack.c.l.b16 %v5379
        %v5675 = vunpack.c.l.b16 %v5380
        %v5676 = vunpack.c.l.b16 %v5381
        %v5677 = vunpack.c.l.b16 %v5382
        %v5678 = vunpack.c.l.b16 %v5383
        %v5679 = vunpack.c.l.b16 %v5384
        %v5680 = vunpack.c.l.b16 %v5385
        %v5681 = vunpack.c.l.b16 %v5386
        %v5682 = vunpack.c.l.b16 %v5387
        %v5683 = vunpack.c.l.b16 %v5388
        %v5684 = vunpack.c.l.b16 %v5389
        %v5685 = vunpack.c.l.b16 %v5390
        %v5686 = vunpack.c.l.b16 %v5391
        %v5687 = vunpack.c.l.b16 %v5392
        %v5688 = vunpack.c.l.b16 %v5393
        %v5689 = vunpack.c.l.b16 %v5394
        %v5690 = vunpack.c.l.b16 %v5395
        %v5691 = vunpack.c.l.b16 %v5396
        %v5692 = vunpack.c.l.b16 %v5397
        %v5693 = vunpack.c.l.b16 %v5398
        %v5694 = vunpack.c.l.b16 %v5399
        %v5695 = vunpack.c.l.b16 %v5400
        %v5696 = vunpack.c.l.b16 %v5401
        %v5697 = vunpack.c.l.b16 %v5402
        %v5698 = vunpack.c.l.b16 %v5403
        %v5699 = vunpack.c.l.b16 %v5404
        %v5700 = vunpack.c.l.b16 %v5405
        %v5701 = vunpack.c.l.b16 %v5406
        %v5702 = vunpack.c.l.b16 %v5407
        %v5703 = vunpack.c.l.b16 %v5408
        %v5704 = vunpack.c.l.b16 %v5409
        %v5705 = vpack.c.b16 %v5562, %v5561
        %v5706 = vpack.c.b16 %v5564, %v5563
        %v5707 = vpack.c.b16 %v5566, %v5565
        %v5708 = vpack.c.b16 %v5568, %v5567
        %v5709 = vpack.c.b16 %v5570, %v5569
        %v5710 = vpack.c.b16 %v5572, %v5571
        %v5711 = vpack.c.b16 %v5574, %v5573
        %v5712 = vpack.c.b16 %v5576, %v5575
        %v5713 = vpack.c.b16 %v5578, %v5577
        %v5714 = vpack.c.b16 %v5580, %v5579
        %v5715 = vpack.c.b16 %v5582, %v5581
        %v5716 = vpack.c.b16 %v5584, %v5583
        %v5717 = vpack.c.b16 %v5586, %v5585
        %v5718 = vpack.c.b16 %v5588, %v5587
        %v5719 = vpack.c.b16 %v5590, %v5589
        %v5720 = vpack.c.b16 %v5592, %v5591
        %v5721 = vpack.c.b16 %v5594, %v5593
        %v5722 = vpack.c.b16 %v5596, %v5595
        %v5723 = vpack.c.b16 %v5598, %v5597
        %v5724 = vpack.c.b16 %v5600, %v5599
        %v5725 = vpack.c.b16 %v5602, %v5601
        %v5726 = vpack.c.b16 %v5604, %v5603
        %v5727 = vpack.c.b16 %v5606, %v5605
        %v5728 = vpack.c.b16 %v5608, %v5607
        %v5729 = vpack.c.b16 %v5610, %v5609
        %v5730 = vpack.c.b16 %v5612, %v5611
        %v5731 = vpack.c.b16 %v5614, %v5613
        %v5732 = vpack.c.b16 %v5616, %v5615
        %v5733 = vpack.c.b16 %v5618, %v5617
        %v5734 = vpack.c.b16 %v5620, %v5619
        %v5735 = vpack.c.b16 %v5622, %v5621
        %v5736 = vpack.c.b16 %v5624, %v5623
        %v5737 = vpack.c.b16 %v5626, %v5625
        %v5738 = vpack.c.b16 %v5628, %v5627
        %v5739 = vpack.c.b16 %v5630, %v5629
        %v5740 = vpack.c.b16 %v5632, %v5631
        %v5741 = vpack.c.b16 %v5634, %v5633
        %v5742 = vpack.c.b16 %v5636, %v5635
        %v5743 = vpack.c.b16 %v5638, %v5637
        %v5744 = vpack.c.b16 %v5640, %v5639
        %v5745 = vpack.c.b16 %v5642, %v5641
        %v5746 = vpack.c.b16 %v5644, %v5643
        %v5747 = vpack.c.b16 %v5646, %v5645
        %v5748 = vpack.c.b16 %v5648, %v5647
        %v5749 = vpack.c.b16 %v5650, %v5649
        %v5750 = vpack.c.b16 %v5652, %v5651
        %v5751 = vpack.c.b16 %v5654, %v5653
        %v5752 = vpack.c.b16 %v5656, %v5655
        %v5753 = vpack.c.b16 %v5658, %v5657
        %v5754 = vpack.c.b16 %v5660, %v5659
        %v5755 = vpack.c.b16 %v5662, %v5661
        %v5756 = vpack.c.b16 %v5664, %v5663
        %v5757 = vpack.c.b16 %v5666, %v5665
        %v5758 = vpack.c.b16 %v5668, %v5667
        %v5759 = vpack.c.b16 %v5670, %v5669
        %v5760 = vpack.c.b16 %v5672, %v5671
        %v5761 = vpack.c.b16 %v5674, %v5673
        %v5762 = vpack.c.b16 %v5676, %v5675
        %v5763 = vpack.c.b16 %v5678, %v5677
        %v5764 = vpack.c.b16 %v5680, %v5679
        %v5765 = vpack.c.b16 %v5682, %v5681
        %v5766 = vpack.c.b16 %v5684, %v5683
        %v5767 = vpack.c.b16 %v5686, %v5685
        %v5768 = vpack.c.b16 %v5688, %v5687
        %v5769 = vpack.c.b16 %v5690, %v5689
        %v5770 = vpack.c.b16 %v5692, %v5691
        %v5771 = vpack.c.b16 %v5694, %v5693
        %v5772 = vpack.c.b16 %v5696, %v5695
        %v5773 = vpack.c.b16 %v5698, %v5697
        %v5774 = vpack.c.b16 %v5700, %v5699
        %v5775 = vpack.c.b16 %v5702, %v5701
        %v5776 = vpack.c.b16 %v5704, %v5703
        %5849 = vmatprep.subr.bf16.mxu0 0
        %5850 = vmatpush1.bf16.msra.mxu0 %v5705
        %5851 = vmatprep.subr.bf16.mxu0 0
        %5852 = vmatpush1.bf16.msra.mxu0 %v5706
        %5853 = vmatprep.subr.bf16.mxu0 0
        %5854 = vmatpush1.bf16.msra.mxu0 %v5707
        %5855 = vmatprep.subr.bf16.mxu0 0
        %5856 = vmatpush1.bf16.msra.mxu0 %v5708
        %5857 = vmatprep.subr.bf16.mxu0 0
        %5858 = vmatpush1.bf16.msra.mxu0 %v5709
        %5859 = vmatprep.subr.bf16.mxu0 0
        %5860 = vmatpush1.bf16.msra.mxu0 %v5710
        %5861 = vmatprep.subr.bf16.mxu0 0
        %5862 = vmatpush1.bf16.msra.mxu0 %v5711
        %5863 = vmatprep.subr.bf16.mxu0 0
        %5864 = vmatpush1.bf16.msra.mxu0 %v5712
        %5865 = vmatprep.subr.bf16.mxu0 0
        %5866 = vmatpush1.bf16.msra.mxu0 %v5713
        %5867 = vmatprep.subr.bf16.mxu0 0
        %5868 = vmatpush1.bf16.msra.mxu0 %v5714
        %5869 = vmatprep.subr.bf16.mxu0 0
        %5870 = vmatpush1.bf16.msra.mxu0 %v5715
        %5871 = vmatprep.subr.bf16.mxu0 0
        %5872 = vmatpush1.bf16.msra.mxu0 %v5716
        %5873 = vmatprep.subr.bf16.mxu0 0
        %5874 = vmatpush1.bf16.msra.mxu0 %v5717
        %5875 = vmatprep.subr.bf16.mxu0 0
        %5876 = vmatpush1.bf16.msra.mxu0 %v5718
        %5877 = vmatprep.subr.bf16.mxu0 0
        %5878 = vmatpush1.bf16.msra.mxu0 %v5719
        %5879 = vmatprep.subr.bf16.mxu0 0
        %5880 = vmatpush1.bf16.msra.mxu0 %v5720
        %5881 = vmatprep.mubr.bf16.mxu0 %v5231
        %5882 = vmatmul.mubr.bf16.gmra.mrb[0].mxu0 %v5230
        %v5883 = vpop.f32.mrb[0].mxu0
        %v5884 = vadd.f32 %v5415, %v5883
        %v5885 = vpop.f32.mrb[0].mxu0
        %v5886 = vpop.f32.mrb[0].mxu0
        %v5887 = vadd.f32 %v5415, %v5886
        %v5888 = vpop.f32.mrb[0].mxu0
        %5889 = vmatprep.mubr.bf16.mxu0 %v5240
        %5890 = vmatmul.mubr.bf16.gmra.mrb[0].mxu0 %v5239
        %v5891 = vpop.f32.mrb[0].mxu0
        %v5892 = vadd.f32 %v5415, %v5891
        %v5893 = vpop.f32.mrb[0].mxu0
        %v5894 = vpop.f32.mrb[0].mxu0
        %v5895 = vadd.f32 %v5415, %v5894
        %v5896 = vpop.f32.mrb[0].mxu0
        %5897 = vmatprep.mubr.bf16.mxu0 %v5249
        %5898 = vmatmul.mubr.bf16.gmra.mrb[0].mxu0 %v5248
        %v5899 = vpop.f32.mrb[0].mxu0
        %v5900 = vadd.f32 %v5415, %v5899
        %v5901 = vpop.f32.mrb[0].mxu0
        %v5902 = vpop.f32.mrb[0].mxu0
        %v5903 = vadd.f32 %v5415, %v5902
        %v5904 = vpop.f32.mrb[0].mxu0
        %5905 = vmatprep.mubr.bf16.mxu0 %v5258
        %5906 = vmatmul.mubr.bf16.gmra.mrb[0].mxu0 %v5257
        %v5907 = vpop.f32.mrb[0].mxu0
        %v5908 = vadd.f32 %v5415, %v5907
        %v5909 = vpop.f32.mrb[0].mxu0
        %v5910 = vpop.f32.mrb[0].mxu0
        %v5911 = vadd.f32 %v5415, %v5910
        %v5912 = vpop.f32.mrb[0].mxu0
        %5913 = vdwg.mxu0
        %5914 = vmatprep.subr.bf16.mxu0 0
        %5915 = vmatpush1.bf16.msra.mxu0 %v5721
        %5916 = vmatprep.subr.bf16.mxu0 0
        %5917 = vmatpush1.bf16.msra.mxu0 %v5722
        %5918 = vmatprep.subr.bf16.mxu0 0
        %5919 = vmatpush1.bf16.msra.mxu0 %v5723
        %5920 = vmatprep.subr.bf16.mxu0 0
        %5921 = vmatpush1.bf16.msra.mxu0 %v5724
        %5922 = vmatprep.subr.bf16.mxu0 0
        %5923 = vmatpush1.bf16.msra.mxu0 %v5725
        %5924 = vmatprep.subr.bf16.mxu0 0
        %5925 = vmatpush1.bf16.msra.mxu0 %v5726
        %5926 = vmatprep.subr.bf16.mxu0 0
        %5927 = vmatpush1.bf16.msra.mxu0 %v5727
        %5928 = vmatprep.subr.bf16.mxu0 0
        %5929 = vmatpush1.bf16.msra.mxu0 %v5728
        %5930 = vmatprep.subr.bf16.mxu0 0
        %5931 = vmatpush1.bf16.msra.mxu0 %v5729
        %5932 = vmatprep.subr.bf16.mxu0 0
        %5933 = vmatpush1.bf16.msra.mxu0 %v5730
        %5934 = vmatprep.subr.bf16.mxu0 0
        %5935 = vmatpush1.bf16.msra.mxu0 %v5731
        %5936 = vmatprep.subr.bf16.mxu0 0
        %5937 = vmatpush1.bf16.msra.mxu0 %v5732
        %5938 = vmatprep.subr.bf16.mxu0 0
        %5939 = vmatpush1.bf16.msra.mxu0 %v5733
        %5940 = vmatprep.subr.bf16.mxu0 0
        %5941 = vmatpush1.bf16.msra.mxu0 %v5734
        %5942 = vmatprep.subr.bf16.mxu0 0
        %5943 = vmatpush1.bf16.msra.mxu0 %v5735
        %5944 = vmatprep.subr.bf16.mxu0 0
        %5945 = vmatpush1.bf16.msra.mxu0 %v5736
        %5946 = vmatprep.mubr.bf16.mxu0 %v5233
        %5947 = vmatmul.mubr.bf16.gmra.mrb[0].mxu0 %v5232
        %v5948 = vpop.f32.mrb[0].mxu0
        %v5949 = vadd.f32 %v5884, %v5948
        %v5950 = vpop.f32.mrb[0].mxu0
        %v5951 = vpop.f32.mrb[0].mxu0
        %v5952 = vadd.f32 %v5887, %v5951
        %v5953 = vpop.f32.mrb[0].mxu0
        %5954 = vmatprep.mubr.bf16.mxu0 %v5242
        %5955 = vmatmul.mubr.bf16.gmra.mrb[0].mxu0 %v5241
        %v5956 = vpop.f32.mrb[0].mxu0
        %v5957 = vadd.f32 %v5892, %v5956
        %v5958 = vpop.f32.mrb[0].mxu0
        %v5959 = vpop.f32.mrb[0].mxu0
        %v5960 = vadd.f32 %v5895, %v5959
        %v5961 = vpop.f32.mrb[0].mxu0
        %5962 = vmatprep.mubr.bf16.mxu0 %v5251
        %5963 = vmatmul.mubr.bf16.gmra.mrb[0].mxu0 %v5250
        %v5964 = vpop.f32.mrb[0].mxu0
        %v5965 = vadd.f32 %v5900, %v5964
        %v5966 = vpop.f32.mrb[0].mxu0
        %v5967 = vpop.f32.mrb[0].mxu0
        %v5968 = vadd.f32 %v5903, %v5967
        %v5969 = vpop.f32.mrb[0].mxu0
        %5970 = vmatprep.mubr.bf16.mxu0 %v5260
        %5971 = vmatmul.mubr.bf16.gmra.mrb[0].mxu0 %v5259
        %v5972 = vpop.f32.mrb[0].mxu0
        %v5973 = vadd.f32 %v5908, %v5972
        %v5974 = vpop.f32.mrb[0].mxu0
        %v5975 = vpop.f32.mrb[0].mxu0
        %v5976 = vadd.f32 %v5911, %v5975
        %v5977 = vpop.f32.mrb[0].mxu0
        %5978 = vdwg.mxu0
        %5979 = vmatprep.subr.bf16.mxu0 0
        %5980 = vmatpush1.bf16.msra.mxu0 %v5737
        %5981 = vmatprep.subr.bf16.mxu0 0
        %5982 = vmatpush1.bf16.msra.mxu0 %v5738
        %5983 = vmatprep.subr.bf16.mxu0 0
        %5984 = vmatpush1.bf16.msra.mxu0 %v5739
        %5985 = vmatprep.subr.bf16.mxu0 0
        %5986 = vmatpush1.bf16.msra.mxu0 %v5740
        %5987 = vmatprep.subr.bf16.mxu0 0
        %5988 = vmatpush1.bf16.msra.mxu0 %v5741
        %5989 = vmatprep.subr.bf16.mxu0 0
        %5990 = vmatpush1.bf16.msra.mxu0 %v5742
        %5991 = vmatprep.subr.bf16.mxu0 0
        %5992 = vmatpush1.bf16.msra.mxu0 %v5743
        %5993 = vmatprep.subr.bf16.mxu0 0
        %5994 = vmatpush1.bf16.msra.mxu0 %v5744
        %5995 = vmatprep.subr.bf16.mxu0 0
        %5996 = vmatpush1.bf16.msra.mxu0 %v5745
        %5997 = vmatprep.subr.bf16.mxu0 0
        %5998 = vmatpush1.bf16.msra.mxu0 %v5746
        %5999 = vmatprep.subr.bf16.mxu0 0
        %6000 = vmatpush1.bf16.msra.mxu0 %v5747
        %6001 = vmatprep.subr.bf16.mxu0 0
        %6002 = vmatpush1.bf16.msra.mxu0 %v5748
        %6003 = vmatprep.subr.bf16.mxu0 0
        %6004 = vmatpush1.bf16.msra.mxu0 %v5749
        %6005 = vmatprep.subr.bf16.mxu0 0
        %6006 = vmatpush1.bf16.msra.mxu0 %v5750
        %6007 = vmatprep.subr.bf16.mxu0 0
        %6008 = vmatpush1.bf16.msra.mxu0 %v5751
        %6009 = vmatprep.subr.bf16.mxu0 0
        %6010 = vmatpush1.bf16.msra.mxu0 %v5752
        %6011 = vmatprep.mubr.bf16.mxu0 %v5235
        %6012 = vmatmul.mubr.bf16.gmra.mrb[0].mxu0 %v5234
        %v6013 = vpop.f32.mrb[0].mxu0
        %v6014 = vadd.f32 %v5949, %v6013
        %v6015 = vpop.f32.mrb[0].mxu0
        %v6016 = vpop.f32.mrb[0].mxu0
        %v6017 = vadd.f32 %v5952, %v6016
        %v6018 = vpop.f32.mrb[0].mxu0
        %6019 = vmatprep.mubr.bf16.mxu0 %v5244
        %6020 = vmatmul.mubr.bf16.gmra.mrb[0].mxu0 %v5243
        %v6021 = vpop.f32.mrb[0].mxu0
        %v6022 = vadd.f32 %v5957, %v6021
        %v6023 = vpop.f32.mrb[0].mxu0
        %v6024 = vpop.f32.mrb[0].mxu0
        %v6025 = vadd.f32 %v5960, %v6024
        %v6026 = vpop.f32.mrb[0].mxu0
        %6027 = vmatprep.mubr.bf16.mxu0 %v5253
        %6028 = vmatmul.mubr.bf16.gmra.mrb[0].mxu0 %v5252
        %v6029 = vpop.f32.mrb[0].mxu0
        %v6030 = vadd.f32 %v5965, %v6029
        %v6031 = vpop.f32.mrb[0].mxu0
        %v6032 = vpop.f32.mrb[0].mxu0
        %v6033 = vadd.f32 %v5968, %v6032
        %v6034 = vpop.f32.mrb[0].mxu0
        %6035 = vmatprep.mubr.bf16.mxu0 %v5262
        %6036 = vmatmul.mubr.bf16.gmra.mrb[0].mxu0 %v5261
        %v6037 = vpop.f32.mrb[0].mxu0
        %v6038 = vadd.f32 %v5973, %v6037
        %v6039 = vpop.f32.mrb[0].mxu0
        %v6040 = vpop.f32.mrb[0].mxu0
        %v6041 = vadd.f32 %v5976, %v6040
        %v6042 = vpop.f32.mrb[0].mxu0
        %6043 = vdwg.mxu0
        %6044 = vmatprep.subr.bf16.mxu0 0
        %6045 = vmatpush1.bf16.msra.mxu0 %v5753
        %6046 = vmatprep.subr.bf16.mxu0 0
        %6047 = vmatpush1.bf16.msra.mxu0 %v5754
        %6048 = vmatprep.subr.bf16.mxu0 0
        %6049 = vmatpush1.bf16.msra.mxu0 %v5755
        %6050 = vmatprep.subr.bf16.mxu0 0
        %6051 = vmatpush1.bf16.msra.mxu0 %v5756
        %6052 = vmatprep.subr.bf16.mxu0 0
        %6053 = vmatpush1.bf16.msra.mxu0 %v5757
        %6054 = vmatprep.subr.bf16.mxu0 0
        %6055 = vmatpush1.bf16.msra.mxu0 %v5758
        %6056 = vmatprep.subr.bf16.mxu0 0
        %6057 = vmatpush1.bf16.msra.mxu0 %v5759
        %6058 = vmatprep.subr.bf16.mxu0 0
        %6059 = vmatpush1.bf16.msra.mxu0 %v5760
        %6060 = vmatprep.subr.bf16.mxu0 0
        %6061 = vmatpush1.bf16.msra.mxu0 %v5761
        %6062 = vmatprep.subr.bf16.mxu0 0
        %6063 = vmatpush1.bf16.msra.mxu0 %v5762
        %6064 = vmatprep.subr.bf16.mxu0 0
        %6065 = vmatpush1.bf16.msra.mxu0 %v5763
        %6066 = vmatprep.subr.bf16.mxu0 0
        %6067 = vmatpush1.bf16.msra.mxu0 %v5764
        %6068 = vmatprep.subr.bf16.mxu0 0
        %6069 = vmatpush1.bf16.msra.mxu0 %v5765
        %6070 = vmatprep.subr.bf16.mxu0 0
        %6071 = vmatpush1.bf16.msra.mxu0 %v5766
        %6072 = vmatprep.subr.bf16.mxu0 0
        %6073 = vmatpush1.bf16.msra.mxu0 %v5767
        %6074 = vmatprep.subr.bf16.mxu0 0
        %6075 = vmatpush1.bf16.msra.mxu0 %v5768
        %6076 = vmatprep.mubr.bf16.mxu0 %v5237
        %6077 = vmatmul.mubr.bf16.gmra.mrb[0].mxu0 %v5236
        %v6078 = vpop.f32.mrb[0].mxu0
        %v6079 = vadd.f32 %v6014, %v6078
        %v6080 = vpop.f32.mrb[0].mxu0
        %v6081 = vpop.f32.mrb[0].mxu0
        %v6082 = vadd.f32 %v6017, %v6081
        %v6083 = vpop.f32.mrb[0].mxu0
        %6084 = vmatprep.mubr.bf16.mxu0 %v5246
        %6085 = vmatmul.mubr.bf16.gmra.mrb[0].mxu0 %v5245
        %v6086 = vpop.f32.mrb[0].mxu0
        %v6087 = vadd.f32 %v6022, %v6086
        %v6088 = vpop.f32.mrb[0].mxu0
        %v6089 = vpop.f32.mrb[0].mxu0
        %v6090 = vadd.f32 %v6025, %v6089
        %v6091 = vpop.f32.mrb[0].mxu0
        %6092 = vmatprep.mubr.bf16.mxu0 %v5255
        %6093 = vmatmul.mubr.bf16.gmra.mrb[0].mxu0 %v5254
        %v6094 = vpop.f32.mrb[0].mxu0
        %v6095 = vadd.f32 %v6030, %v6094
        %v6096 = vpop.f32.mrb[0].mxu0
        %v6097 = vpop.f32.mrb[0].mxu0
        %v6098 = vadd.f32 %v6033, %v6097
        %v6099 = vpop.f32.mrb[0].mxu0
        %6100 = vmatprep.mubr.bf16.mxu0 %v5264
        %6101 = vmatmul.mubr.bf16.gmra.mrb[0].mxu0 %v5263
        %v6102 = vpop.f32.mrb[0].mxu0
        %v6103 = vadd.f32 %v6038, %v6102
        %v6104 = vpop.f32.mrb[0].mxu0
        %v6105 = vpop.f32.mrb[0].mxu0
        %v6106 = vadd.f32 %v6041, %v6105
        %v6107 = vpop.f32.mrb[0].mxu0
        %6108 = vdwg.mxu0
        %6109 = vmatprep.subr.bf16.mxu0 0
        %6110 = vmatpush1.bf16.msra.mxu0 %v5769
        %6111 = vmatprep.subr.bf16.mxu0 0
        %6112 = vmatpush1.bf16.msra.mxu0 %v5770
        %6113 = vmatprep.subr.bf16.mxu0 0
        %6114 = vmatpush1.bf16.msra.mxu0 %v5771
        %6115 = vmatprep.subr.bf16.mxu0 0
        %6116 = vmatpush1.bf16.msra.mxu0 %v5772
        %6117 = vmatprep.subr.bf16.mxu0 0
        %6118 = vmatpush1.bf16.msra.mxu0 %v5773
        %6119 = vmatprep.subr.bf16.mxu0 0
        %6120 = vmatpush1.bf16.msra.mxu0 %v5774
        %6121 = vmatprep.subr.bf16.mxu0 0
        %6122 = vmatpush1.bf16.msra.mxu0 %v5775
        %6123 = vmatprep.subr.bf16.mxu0 0
        %6124 = vmatpush1.bf16.msra.mxu0 %v5776
        %6125 = vmatprep.subr.bf16.mxu0 0
        %6126 = vmatpush1.bf16.msra.mxu0 0
        %6127 = vmatprep.subr.bf16.mxu0 0
        %6128 = vmatpush1.bf16.msra.mxu0 0
        %6129 = vmatprep.subr.bf16.mxu0 0
        %6130 = vmatpush1.bf16.msra.mxu0 0
        %6131 = vmatprep.subr.bf16.mxu0 0
        %6132 = vmatpush1.bf16.msra.mxu0 0
        %6133 = vmatprep.subr.bf16.mxu0 0
        %6134 = vmatpush1.bf16.msra.mxu0 0
        %6135 = vmatprep.subr.bf16.mxu0 0
        %6136 = vmatpush1.bf16.msra.mxu0 0
        %6137 = vmatprep.subr.bf16.mxu0 0
        %6138 = vmatpush1.bf16.msra.mxu0 0
        %6139 = vmatprep.subr.bf16.mxu0 0
        %6140 = vmatpush1.bf16.msra.mxu0 0
        %6141 = vmatprep.mubr.bf16.mxu0 0
        %6142 = vmatmul.mubr.bf16.gmra.mrb[0].mxu0 %v5238
        %v6143 = vpop.f32.mrb[0].mxu0
        %v6144 = vadd.f32 %v6079, %v6143
        %v6145 = vpop.f32.mrb[0].mxu0
        %v6146 = vpop.f32.mrb[0].mxu0
        %v6147 = vadd.f32 %v6082, %v6146
        %v6148 = vpop.f32.mrb[0].mxu0
        %6149 = vmatprep.mubr.bf16.mxu0 0
        %6150 = vmatmul.mubr.bf16.gmra.mrb[0].mxu0 %v5247
        %v6151 = vpop.f32.mrb[0].mxu0
        %v6152 = vadd.f32 %v6087, %v6151
        %v6153 = vpop.f32.mrb[0].mxu0
        %v6154 = vpop.f32.mrb[0].mxu0
        %v6155 = vadd.f32 %v6090, %v6154
        %v6156 = vpop.f32.mrb[0].mxu0
        %6157 = vmatprep.mubr.bf16.mxu0 0
        %6158 = vmatmul.mubr.bf16.gmra.mrb[0].mxu0 %v5256
        %v6159 = vpop.f32.mrb[0].mxu0
        %v6160 = vadd.f32 %v6095, %v6159
        %v6161 = vpop.f32.mrb[0].mxu0
        %v6162 = vpop.f32.mrb[0].mxu0
        %v6163 = vadd.f32 %v6098, %v6162
        %v6164 = vpop.f32.mrb[0].mxu0
        %6165 = vmatprep.mubr.bf16.mxu0 0
        %6166 = vmatmul.mubr.bf16.gmra.mrb[0].mxu0 %v5265
        %v6167 = vpop.f32.mrb[0].mxu0
        %v6168 = vadd.f32 %v6103, %v6167
        %v6169 = vpop.f32.mrb[0].mxu0
        %v6170 = vpop.f32.mrb[0].mxu0
        %v6171 = vadd.f32 %v6106, %v6170
        %v6172 = vpop.f32.mrb[0].mxu0
        %6173 = vdwg.mxu0
        %v6174 = vadd.f32 %v5000, %v6144
        %v6175 = vadd.f32 %v5003, %v6147
        %v6176 = vadd.f32 %v5008, %v6152
        %v6177 = vadd.f32 %v5011, %v6155
        %v6178 = vadd.f32 %v5016, %v6160
        %v6179 = vadd.f32 %v5019, %v6163
        %v6180 = vadd.f32 %v5024, %v6168
        %v6181 = vadd.f32 %v5027, %v6171
        %v6182 = vpack.c.bf16 %v6175, %v6174
        %v6183 = vpack.c.bf16 %v6177, %v6176
        %v6184 = vpack.c.bf16 %v6179, %v6178
        %v6185 = vpack.c.bf16 %v6181, %v6180
        %v6186 = vld [vmem:[%s21] sm:$0xf]
        %v6187 = vld [vmem:[%s21 + $0x4] sm:$0xf]
        %v6188 = vld [vmem:[%s22] sm:$0x1]
        %v6190 = vlaneseq
        %v6191 = vshrl.u32 %v6190, 7
        %v6192 = vsub.s32 0, %v6191
        %v6193 = vrot.slane %v6188, %v6192
        %v6197 = vunpack.c.l.b16 %v6186
        %v6198 = vunpack.c.l.b16 %v6187
        %v6199 = vpack.c.b16 %v6198, %v6197
        %v6202 = vsel %vm713, %v6182, 0
        %v6205 = vsel %vm713, %v6183, 0
        %v6208 = vsel %vm713, %v6184, 0
        %v6211 = vsel %vm713, %v6185, 0
        %6213 = vmatprep.subr.bf16.mxu0 0
        %6214 = vmatpush1.bf16.msra.mxu0 %v6199
        %6215 = vmatprep.subr.bf16.mxu0 0
        %6216 = vmatpush1.bf16.msra.mxu0 0
        %6217 = vmatprep.subr.bf16.mxu0 0
        %6218 = vmatpush1.bf16.msra.mxu0 0
        %6219 = vmatprep.subr.bf16.mxu0 0
        %6220 = vmatpush1.bf16.msra.mxu0 0
        %6221 = vmatprep.subr.bf16.mxu0 0
        %6222 = vmatpush1.bf16.msra.mxu0 0
        %6223 = vmatprep.subr.bf16.mxu0 0
        %6224 = vmatpush1.bf16.msra.mxu0 0
        %6225 = vmatprep.subr.bf16.mxu0 0
        %6226 = vmatpush1.bf16.msra.mxu0 0
        %6227 = vmatprep.subr.bf16.mxu0 0
        %6228 = vmatpush1.bf16.msra.mxu0 0
        %6229 = vmatprep.subr.bf16.mxu0 0
        %6230 = vmatpush1.bf16.msra.mxu0 0
        %6231 = vmatprep.subr.bf16.mxu0 0
        %6232 = vmatpush1.bf16.msra.mxu0 0
        %6233 = vmatprep.subr.bf16.mxu0 0
        %6234 = vmatpush1.bf16.msra.mxu0 0
        %6235 = vmatprep.subr.bf16.mxu0 0
        %6236 = vmatpush1.bf16.msra.mxu0 0
        %6237 = vmatprep.subr.bf16.mxu0 0
        %6238 = vmatpush1.bf16.msra.mxu0 0
        %6239 = vmatprep.subr.bf16.mxu0 0
        %6240 = vmatpush1.bf16.msra.mxu0 0
        %6241 = vmatprep.subr.bf16.mxu0 0
        %6242 = vmatpush1.bf16.msra.mxu0 0
        %6243 = vmatprep.subr.bf16.mxu0 0
        %6244 = vmatpush1.bf16.msra.mxu0 0
        %6245 = vmatprep.mubr.bf16.mxu0 0
        %6246 = vmatmul.mubr.bf16.gmra.mrb[0].mxu0 %v6202
        %v6247 = vpop.f32.mrb[0].mxu0
        %v6248 = vadd.f32 %v6193, %v6247
        %v6249 = vpop.f32.mrb[0].mxu0
        %v6250 = vpop.f32.mrb[0].mxu0
        %v6251 = vadd.f32 %v6193, %v6250
        %v6252 = vpop.f32.mrb[0].mxu0
        %6253 = vmatprep.mubr.bf16.mxu0 0
        %6254 = vmatmul.mubr.bf16.gmra.mrb[0].mxu0 %v6205
        %v6255 = vpop.f32.mrb[0].mxu0
        %v6256 = vadd.f32 %v6193, %v6255
        %v6257 = vpop.f32.mrb[0].mxu0
        %v6258 = vpop.f32.mrb[0].mxu0
        %v6259 = vadd.f32 %v6193, %v6258
        %v6260 = vpop.f32.mrb[0].mxu0
        %6261 = vmatprep.mubr.bf16.mxu0 0
        %6262 = vmatmul.mubr.bf16.gmra.mrb[0].mxu0 %v6208
        %v6263 = vpop.f32.mrb[0].mxu0
        %v6264 = vadd.f32 %v6193, %v6263
        %v6265 = vpop.f32.mrb[0].mxu0
        %v6266 = vpop.f32.mrb[0].mxu0
        %v6267 = vadd.f32 %v6193, %v6266
        %v6268 = vpop.f32.mrb[0].mxu0
        %6269 = vmatprep.mubr.bf16.mxu0 0
        %6270 = vmatmul.mubr.bf16.gmra.mrb[0].mxu0 %v6211
        %v6271 = vpop.f32.mrb[0].mxu0
        %v6272 = vadd.f32 %v6193, %v6271
        %v6273 = vpop.f32.mrb[0].mxu0
        %v6274 = vpop.f32.mrb[0].mxu0
        %v6275 = vadd.f32 %v6193, %v6274
        %v6276 = vpop.f32.mrb[0].mxu0
        %6277 = vdwg.mxu0
        %6278 = vst.msk [vmem:[%s704] sm:$0xff] %vm889, %v6248
        %6279 = vst.msk [vmem:[%s704 + $0x8] sm:$0xff] %vm889, %v6251
        %6280 = vst.msk [vmem:[%s704 + $0x10] sm:$0xff] %vm889, %v6256
        %6281 = vst.msk [vmem:[%s704 + $0x18] sm:$0xff] %vm889, %v6259
        %6282 = vst.msk [vmem:[%s704 + $0x20] sm:$0xff] %vm889, %v6264
        %6283 = vst.msk [vmem:[%s704 + $0x28] sm:$0xff] %vm889, %v6267
        %6284 = vst.msk [vmem:[%s704 + $0x30] sm:$0xff] %vm889, %v6272
        %6285 = vst.msk [vmem:[%s704 + $0x38] sm:$0xff] %vm889, %v6275
        %s6286 = sand.u32 %s533, 1
        %s6287 = scalar_lea.sflag [#allocation9], %s6286
        %s6288 = sand.u32 %s533, 1
        %s6289 = smul.addr %s6288, 64
        %s6290 = scalar_lea.vmem [#allocation8], %s6289
        // Predicated region
        $region113: #{feature_modifier_forward.1} parent=111 // pred_check
          %p6291 = pneg %p543
        $region114: #{feature_modifier_forward.1} parent=111 // pred_check_branch
          %6293 = sbr.rel (%p6291) target = $region116
        $region115: #{feature_modifier_forward.1} parent=111 // pred_region
          %s6294 = smul.u32 8, %s37
          %s6296 = ssub.s32 1024, 1024
          %6297 = vsyncadd %s6287, %s6296
          %s6298 = smul.addr %s6294, 128
          %s6299 = scalar_lea.hbm %s23, %s6298
          %s6300 = sshll.u32 %s6290, 4
          %s6301 = int_to_ptr.vmem [resolvable:$true] %s6300
          %6306 = dma.vmem_to_hbm [thread:$0]  %s6301, 1024, %s6299, %s6287, 128, 128, 8
        $region116: #{feature_modifier_forward.1} parent=111 // pred_fallthru
          _
      $region112: #{feature_modifier_forward.1} parent=5 // pred_fallthru
        _
      %p6307 = scmp.le.s32.totalorder 2, %s32
      // Predicated region
      $region117: #{feature_modifier_forward.1} parent=5 // pred_check
        %p6308 = pneg %p6307
      $region118: #{feature_modifier_forward.1} parent=5 // pred_check_branch
        %6310 = sbr.rel (%p6308) target = $region120
      $region119: #{feature_modifier_forward.1} parent=5 // pred_region
        %s6311 = ssub.s32 %s32, 2
        // Predicated region
        $region121: #{feature_modifier_forward.1} parent=119 // pred_check
          %p6312 = pneg %p549
        $region122: #{feature_modifier_forward.1} parent=119 // pred_check_branch
          %6314 = sbr.rel (%p6312) target = $region124
        $region123: #{feature_modifier_forward.1} parent=119 // pred_region
          %s6315 = sand.u32 %s534, 1
          %s6316 = scalar_lea.sflag [#allocation9], %s6315
          %s6317 = sand.u32 %s534, 1
          %s6318 = smul.addr %s6317, 64
          %s6319 = scalar_lea.vmem [#allocation8], %s6318
          %6320 = dma.done %s6316, 1024
        $region124: #{feature_modifier_forward.1} parent=119 // pred_fallthru
          _
      $region120: #{feature_modifier_forward.1} parent=5 // pred_fallthru
        _
    $region6: #{feature_modifier_forward.1} parent=1 // loop_footer
      %s36 = sadd.s32 1, %s32
    $region7: #{feature_modifier_forward.1} parent=1 // loop_footer_branch
      %31 = sbr.rel target = $region3
    $region8: #{feature_modifier_forward.1} parent=1 // loop_exit
      _
    %6321 = vsyncpa [#allocation9], 1
    %s6322 = scalar_lea.sflag [#allocation9], 1
    %6323 = vsyncpa %s6322, 1

</llo_original>
